<compile_context>
chip_gen: v7x
topology: tpu7x:2x2x1
jax: 0.10.0
libtpu: 0.0.40
codegen_flags: <defaults>
</compile_context>

<pallas_src>
import functools

import jax
import jax.numpy as jnp
from jax.experimental import pallas as pl
from jax.experimental.pallas import tpu as pltpu

_EPS = 1e-5


def _vmem_capacity_bytes():
    try:
        info = pltpu.get_tpu_info()
        cap = getattr(info, "vmem_capacity_bytes", None)
        if cap:
            return int(cap)
    except Exception:
        pass
    return 64 * 1024 * 1024            # conservative: v7x per-core VMEM


_VMEM_CAP = _vmem_capacity_bytes()
_VMEM_LIMIT_BYTES = min((_VMEM_CAP * 3) // 4, 100 * 1024 * 1024)
_MAX_M_TILE = 1024 if _VMEM_CAP > 64 * 1024 * 1024 else 512


def _pick_m_tile(m, max_tile=_MAX_M_TILE):
    """Largest multiple-of-8 divisor of m, capped at max_tile."""
    t = min(max_tile, m)
    t -= t % 8
    while t >= 8:
        if m % t == 0:
            return t
        t -= 8
    return m                           # m not a multiple of 8: single block


def _compiler_params(num_grid_axes):
    return pltpu.CompilerParams(
        dimension_semantics=("arbitrary",) * num_grid_axes,
        vmem_limit_bytes=_VMEM_LIMIT_BYTES)


# ----------------------------------------------------------------------------
# Kernels
# ----------------------------------------------------------------------------
def _conv1x1_stats_kernel(x_ref, w_ref, y_ref, stats_ref, acc_ref):
    """Stage A: 1x1 conv (single pass) + per-channel sum/sumsq of the output.

    Conv bias b1 is omitted: it cancels exactly under training-mode BN1.
    """
    i = pl.program_id(0)
    # Per-tile f32 -> bf16 cast of the streamed input (no wrapper-side cast).
    y = jnp.dot(x_ref[...].astype(jnp.bfloat16), w_ref[...],
                preferred_element_type=jnp.float32)
    yb = y.astype(jnp.bfloat16)
    yf = yb.astype(jnp.float32)        # stats over the values actually stored

    @pl.when(i == 0)
    def _init():
        acc_ref[...] = jnp.zeros_like(acc_ref)

    acc_ref[...] += jnp.concatenate(
        [jnp.sum(yf, axis=0, keepdims=True),
         jnp.sum(yf * yf, axis=0, keepdims=True)], axis=0)
    stats_ref[...] = acc_ref[...]      # resident block, flushed once at end
    y_ref[...] = yb


def _conv3x3_stats_kernel(x_ref, a_ref, c_ref, w_ref, y_ref, stats_ref,
                          acc_ref):
    """Stage B: [BN1 affine + ReLU on load] + 3x3 conv (pad=1) + stats.

    Single pass per sample; conv bias b2 omitted (cancels under BN2).
    """
    n = pl.program_id(0)
    _, h, wd, ci = x_ref.shape
    co = y_ref.shape[3]
    rows = (h + 2) * wd

    # BN1 affine + ReLU fused into the load of the raw conv1 output.
    x = x_ref[0].reshape(h * wd, ci).astype(jnp.float32)
    z = jnp.maximum(x * a_ref[...] + c_ref[...], 0.0)

    # One zero image-row of padding top & bottom so every 3x3 tap becomes a
    # row slice at a multiple of W (pack-aligned for bf16) of a column-shifted
    # copy of a single flattened buffer.  The +/-1 column shifts are built
    # once from the (transient) f32 buffer with 32-bit slices/concats, then
    # immediately downcast so the buffers living across the nine MXU matmuls
    # are bf16.
    zpad = jnp.zeros((wd, ci), jnp.float32)
    xp = jnp.concatenate([zpad, z, zpad], axis=0)            # (rows, Ci) f32

    # (rows, 1) column index, broadcast over Ci inside the masks.
    wcol = jax.lax.broadcasted_iota(jnp.int32, (rows, 1), 0) % wd
    zrow = jnp.zeros((1, ci), jnp.float32)

    shifted = []
    for dx in (-1, 0, 1):
        if dx == 0:
            xs = xp
        elif dx == 1:
            xs = jnp.where(wcol < wd - 1,
                           jnp.concatenate([xp[1:], zrow], axis=0), 0.0)
        else:
            xs = jnp.where(wcol >= 1,
                           jnp.concatenate([zrow, xp[:rows - 1]], axis=0), 0.0)
        shifted.append(xs.astype(jnp.bfloat16))

    wv = w_ref[...]                                          # (3, 3, Ci, Co)
    acc = jnp.zeros((h * wd, co), jnp.float32)
    for kx in range(3):
        xs_b = shifted[kx]                                   # dx = kx - 1
        for ky in range(3):
            patch = xs_b[ky * wd:ky * wd + h * wd]           # aligned slice
            acc = acc + jnp.dot(patch, wv[ky, kx],
                                preferred_element_type=jnp.float32)

    yb = acc.astype(jnp.bfloat16)
    yf = yb.astype(jnp.float32)        # stats over the values actually stored

    @pl.when(n == 0)
    def _init():
        acc_ref[...] = jnp.zeros_like(acc_ref)

    acc_ref[...] += jnp.concatenate(
        [jnp.sum(yf, axis=0, keepdims=True),
         jnp.sum(yf * yf, axis=0, keepdims=True)], axis=0)
    stats_ref[...] = acc_ref[...]
    y_ref[...] = yb.reshape(1, h, wd, co)


def _final_kernel(y2_ref, a2_ref, c2_ref, w3_ref, g3_ref, be3_ref,
                  x_ref, ws_ref, bs_ref, o_ref, stat_ref, *, inv_m):
    """Stage C: [BN2 affine + ReLU on load] + 1x1 conv3 + BN3 + shortcut + ReLU.

    Two passes over M: p=0 accumulates BN3 stats, p=1 recomputes the cheap
    matmul and applies BN3 + shortcut.  Conv bias b3 omitted (cancels in BN3).
    """
    p = pl.program_id(0)
    i = pl.program_id(1)

    z2 = jnp.maximum(
        y2_ref[...].astype(jnp.float32) * a2_ref[...] + c2_ref[...], 0.0)
    y3 = jnp.dot(z2.astype(jnp.bfloat16), w3_ref[...],
                 preferred_element_type=jnp.float32)

    @pl.when((p == 0) & (i == 0))
    def _init():
        stat_ref[...] = jnp.zeros_like(stat_ref)
        # Keep the resident output block initialized so a revisit-semantics
        # change can never flush garbage to HBM.
        o_ref[...] = jnp.zeros_like(o_ref)

    @pl.when(p == 0)
    def _accumulate():
        stat_ref[...] += jnp.concatenate(
            [jnp.sum(y3, axis=0, keepdims=True),
             jnp.sum(y3 * y3, axis=0, keepdims=True)], axis=0)

    @pl.when(p == 1)
    def _apply():
        shortcut = jnp.dot(x_ref[...].astype(jnp.bfloat16), ws_ref[...],
                           preferred_element_type=jnp.float32) + bs_ref[...]
        st = stat_ref[...]
        mean = st[0:1, :] * inv_m
        var = jnp.maximum(st[1:2, :] * inv_m - mean * mean, 0.0)
        z = (y3 - mean) * jax.lax.rsqrt(var + _EPS) * g3_ref[...] + be3_ref[...]
        o_ref[...] = jnp.maximum(z + shortcut, 0.0).astype(o_ref.dtype)


# ----------------------------------------------------------------------------
# Pallas wrappers
# ----------------------------------------------------------------------------
def conv1x1_stats(x, w):
    m, k = x.shape
    n = w.shape[1]
    tm = _pick_m_tile(m)
    return pl.pallas_call(
        _conv1x1_stats_kernel,
        out_shape=(jax.ShapeDtypeStruct((m, n), jnp.bfloat16),
                   jax.ShapeDtypeStruct((2, n), jnp.float32)),
        grid=(m // tm,),
        in_specs=[
            pl.BlockSpec((tm, k), lambda i: (i, 0)),
            pl.BlockSpec((k, n), lambda i: (0, 0)),
        ],
        out_specs=[
            pl.BlockSpec((tm, n), lambda i: (i, 0)),
            pl.BlockSpec((2, n), lambda i: (0, 0)),
        ],
        scratch_shapes=[pltpu.VMEM((2, n), jnp.float32)],
        compiler_params=_compiler_params(1),
    )(x, w)


def conv3x3_stats(x_img, scale1, shift1, w2):
    nb, h, wd, ci = x_img.shape
    co = w2.shape[3]
    return pl.pallas_call(
        _conv3x3_stats_kernel,
        out_shape=(jax.ShapeDtypeStruct((nb, h, wd, co), jnp.bfloat16),
                   jax.ShapeDtypeStruct((2, co), jnp.float32)),
        grid=(nb,),
        in_specs=[
            pl.BlockSpec((1, h, wd, ci), lambda n: (n, 0, 0, 0)),
            pl.BlockSpec((1, ci), lambda n: (0, 0)),
            pl.BlockSpec((1, ci), lambda n: (0, 0)),
            pl.BlockSpec((3, 3, ci, co), lambda n: (0, 0, 0, 0)),
        ],
        out_specs=[
            pl.BlockSpec((1, h, wd, co), lambda n: (n, 0, 0, 0)),
            pl.BlockSpec((2, co), lambda n: (0, 0)),
        ],
        scratch_shapes=[pltpu.VMEM((2, co), jnp.float32)],
        compiler_params=_compiler_params(1),
    )(x_img, scale1, shift1, w2)


def conv1x1_bn_add_relu(y2, scale2, shift2, w3, g3, be3, x, ws, bs,
                        *, out_dtype=jnp.float32):
    m, ci = y2.shape
    co = w3.shape[1]
    kf = x.shape[1]
    tm = _pick_m_tile(m)
    kern = functools.partial(_final_kernel, inv_m=1.0 / m)
    return pl.pallas_call(
        kern,
        out_shape=jax.ShapeDtypeStruct((m, co), out_dtype),
        grid=(2, m // tm),
        in_specs=[
            pl.BlockSpec((tm, ci), lambda p, i: (i, 0)),
            pl.BlockSpec((1, ci), lambda p, i: (0, 0)),
            pl.BlockSpec((1, ci), lambda p, i: (0, 0)),
            pl.BlockSpec((ci, co), lambda p, i: (0, 0)),
            pl.BlockSpec((1, co), lambda p, i: (0, 0)),
            pl.BlockSpec((1, co), lambda p, i: (0, 0)),
            # Shortcut input is only consumed in the apply pass; pin its block
            # to 0 during the stats pass so it is streamed from HBM only once.
            pl.BlockSpec((tm, kf), lambda p, i: (p * i, 0)),
            pl.BlockSpec((kf, co), lambda p, i: (0, 0)),
            pl.BlockSpec((1, co), lambda p, i: (0, 0)),
        ],
        out_specs=pl.BlockSpec((tm, co), lambda p, i: (p * i, 0)),
        scratch_shapes=[pltpu.VMEM((2, co), jnp.float32)],
        compiler_params=_compiler_params(2),
    )(y2, scale2, shift2, w3, g3.reshape(1, co), be3.reshape(1, co),
      x, ws, bs.reshape(1, co))


# ----------------------------------------------------------------------------
# BottleneckBlock forward
# ----------------------------------------------------------------------------
def _bn_affine(stats, m, gamma, beta):
    """Per-channel BN -> affine (scale, shift), tiny plain-JAX computation."""
    mean = stats[0] / m
    var = jnp.maximum(stats[1] / m - mean * mean, 0.0)
    scale = gamma * jax.lax.rsqrt(var + _EPS)
    shift = beta - mean * scale
    return (scale.reshape(1, -1).astype(jnp.float32),
            shift.reshape(1, -1).astype(jnp.float32))


def init_params(key, first_channel, in_channels, out_channels):
    ks = jax.random.split(key, 14)
    f32 = jnp.float32
    return {
        # conv1: 1x1, first_channel -> in_channels   (stored as (Cin, Cout))
        "w1": 0.1 * jax.random.normal(ks[0], (first_channel, in_channels), f32),
        "b1": 0.1 * jax.random.normal(ks[1], (in_channels,), f32),
        "g1": 1.0 + 0.1 * jax.random.normal(ks[2], (in_channels,), f32),
        "be1": 0.1 * jax.random.normal(ks[3], (in_channels,), f32),
        # conv2: 3x3, in_channels -> in_channels     (HWIO)
        "w2": 0.1 * jax.random.normal(ks[4], (3, 3, in_channels, in_channels), f32),
        "b2": 0.1 * jax.random.normal(ks[5], (in_channels,), f32),
        "g2": 1.0 + 0.1 * jax.random.normal(ks[6], (in_channels,), f32),
        "be2": 0.1 * jax.random.normal(ks[7], (in_channels,), f32),
        # conv3: 1x1, in_channels -> out_channels
        "w3": 0.1 * jax.random.normal(ks[8], (in_channels, out_channels), f32),
        "b3": 0.1 * jax.random.normal(ks[9], (out_channels,), f32),
        "g3": 1.0 + 0.05 * jax.random.normal(ks[10], (out_channels,), f32),
        "be3": 0.05 * jax.random.normal(ks[11], (out_channels,), f32),
        # shortcut conv1x1: first_channel -> out_channels
        "ws": 0.1 * jax.random.normal(ks[12], (first_channel, out_channels), f32),
        "bs": 0.1 * jax.random.normal(ks[13], (out_channels,), f32),
    }


def bottleneck_forward(x_nchw, params, *, reduce=False):
    # NCHW at the boundary (PyTorch convention), NHWC / (M, C) slabs inside.
    # NOTE: conv biases b1/b2/b3 cancel exactly under training-mode BatchNorm,
    # so the kernels never add them (the f32 reference below does; results
    # agree up to rounding).
    # TODO(synk): the boundary transposes are full-tensor XLA relayouts; feed /
    #             return NHWC directly if the caller can.
    x = jnp.transpose(x_nchw, (0, 2, 3, 1)).astype(jnp.float32)   # NHWC
    if reduce:
        # TODO(synk): fold the stride-2 subsample into stage A's index_map.
        x = x[:, ::2, ::2, :]
    nb, ho, wo, cf = x.shape
    cin = params["w1"].shape[1]
    cout = params["w3"].shape[1]
    m = nb * ho * wo
    xf = x.reshape(m, cf)                       # free leading-dim merge, f32

    w1 = params["w1"].astype(jnp.bfloat16)
    w2 = params["w2"].astype(jnp.bfloat16)
    w3 = params["w3"].astype(jnp.bfloat16)
    ws = params["ws"].astype(jnp.bfloat16)

    # stage A: conv1 (1x1) + per-channel batch stats, single pass.
    y1, st1 = conv1x1_stats(xf, w1)
    a1, c1 = _bn_affine(st1, m, params["g1"], params["be1"])

    # stage B: [BN1 + ReLU on load] + conv2 (3x3, pad=1) + stats, single pass.
    y2, st2 = conv3x3_stats(y1.reshape(nb, ho, wo, cin), a1, c1, w2)
    a2, c2 = _bn_affine(st2, m, params["g2"], params["be2"])

    # stage C: [BN2 + ReLU on load] + conv3 (1x1) + BN3 + shortcut + ReLU.
    out = conv1x1_bn_add_relu(y2.reshape(m, cin), a2, c2, w3,
                              params["g3"], params["be3"],
                              xf, ws, params["bs"])
    return jnp.transpose(out.reshape(nb, ho, wo, cout), (0, 3, 1, 2))   # NCHW


# ----------------------------------------------------------------------------
# Pure-JAX f32 reference (PyTorch training-mode BN semantics)
# ----------------------------------------------------------------------------
def _reference_forward(x_nchw, params, *, reduce=False):
    x = jnp.transpose(x_nchw, (0, 2, 3, 1)).astype(jnp.float32)
    if reduce:
        x = x[:, ::2, ::2, :]

    def bn(y, g, b):
        mean = jnp.mean(y, axis=(0, 1, 2), keepdims=True)
        var = jnp.mean((y - mean) ** 2, axis=(0, 1, 2), keepdims=True)
        return (y - mean) * jax.lax.rsqrt(var + _EPS) * g + b

    y1 = jnp.einsum("nhwc,cd->nhwd", x, params["w1"]) + params["b1"]
    z1 = jax.nn.relu(bn(y1, params["g1"], params["be1"]))
    y2 = jax.lax.conv_general_dilated(
        z1, params["w2"], window_strides=(1, 1), padding="SAME",
        dimension_numbers=("NHWC", "HWIO", "NHWC")) + params["b2"]
    z2 = jax.nn.relu(bn(y2, params["g2"], params["be2"]))
    y3 = jnp.einsum("nhwc,cd->nhwd", z2, params["w3"]) + params["b3"]
    rs = jnp.einsum("nhwc,cd->nhwd", x, params["ws"]) + params["bs"]
    out = jax.nn.relu(bn(y3, params["g3"], params["be3"]) + rs)
    return jnp.transpose(out, (0, 3, 1, 2))


# ----------------------------------------------------------------------------
if __name__ == "__main__":
    key = jax.random.PRNGKey(0)

    def run_case(first_channel, in_channels, out_channels, batch, spatial, k):
        kx, kp = jax.random.split(k)
        x = jax.random.normal(kx, (batch, first_channel, spatial, spatial),
                              jnp.float32)
        params = init_params(kp, first_channel, in_channels, out_channels)
        fwd = jax.jit(functools.partial(bottleneck_forward, reduce=False))
        out = jax.block_until_ready(fwd(x, params))
        assert out.shape == (batch, out_channels, spatial, spatial)
        assert bool(jnp.all(jnp.isfinite(out)))
        ref = _reference_forward(x, params, reduce=False)
        max_err = float(jnp.max(jnp.abs(out - ref)))
        ref_scale = float(jnp.max(jnp.abs(ref))) + 1e-6
        rel = max_err / ref_scale
        assert rel < 0.1, f"relative error too large: {rel}"
        return rel

    k1, k2 = jax.random.split(key)
    run_case(4, 8, 16, 2, 16, k1)       # spec-scale smoke test (2,4,16,16)
    run_case(128, 64, 128, 2, 8, k2)    # lane-dense channel sanity check
    print("KERNEL_OK")
</pallas_src>

<mosaic_0001>
module attributes {stable_mosaic.version = 11 : i64} {
  func.func @_final_kernel(%arg0: i32, %arg1: i32, %arg2: memref<512x8xbf16, #tpu.memory_space<vmem>>, %arg3: memref<1x8xf32, #tpu.memory_space<vmem>>, %arg4: memref<1x8xf32, #tpu.memory_space<vmem>>, %arg5: memref<8x16xbf16, #tpu.memory_space<vmem>>, %arg6: memref<1x16xf32, #tpu.memory_space<vmem>>, %arg7: memref<1x16xf32, #tpu.memory_space<vmem>>, %arg8: memref<512x4xf32, #tpu.memory_space<vmem>>, %arg9: memref<4x16xbf16, #tpu.memory_space<vmem>>, %arg10: memref<1x16xf32, #tpu.memory_space<vmem>>, %arg11: memref<512x16xf32, #tpu.memory_space<vmem>>, %arg12: memref<2x16xf32, #tpu.memory_space<vmem>>) attributes {dimension_semantics = [#tpu.dimension_semantics<arbitrary>, #tpu.dimension_semantics<arbitrary>], iteration_bounds = array<i64: 2, 1>, scalar_prefetch = 0 : i64, scratch_operands = 1 : i64, tpu.core_type = #tpu.core_type<tc>, window_params = [{transform_indices = @transform_0, window_bounds = array<i64: 512, 8>}, {pipeline_mode = #tpu.pipeline_mode<synchronous>, transform_indices = @transform_1, window_bounds = array<i64: 1, 8>}, {pipeline_mode = #tpu.pipeline_mode<synchronous>, transform_indices = @transform_2, window_bounds = array<i64: 1, 8>}, {pipeline_mode = #tpu.pipeline_mode<synchronous>, transform_indices = @transform_3, window_bounds = array<i64: 8, 16>}, {pipeline_mode = #tpu.pipeline_mode<synchronous>, transform_indices = @transform_4, window_bounds = array<i64: 1, 16>}, {pipeline_mode = #tpu.pipeline_mode<synchronous>, transform_indices = @transform_5, window_bounds = array<i64: 1, 16>}, {transform_indices = @transform_6, window_bounds = array<i64: 512, 4>}, {pipeline_mode = #tpu.pipeline_mode<synchronous>, transform_indices = @transform_7, window_bounds = array<i64: 4, 16>}, {pipeline_mode = #tpu.pipeline_mode<synchronous>, transform_indices = @transform_8, window_bounds = array<i64: 1, 16>}, {transform_indices = @transform_9, window_bounds = array<i64: 512, 16>}]} {
    %c0 = arith.constant 0 : index
    %c0_0 = arith.constant 0 : index
    %0 = vector.load %arg2[%c0, %c0_0] : memref<512x8xbf16, #tpu.memory_space<vmem>>, vector<512x8xbf16>
    %1 = arith.extf %0 : vector<512x8xbf16> to vector<512x8xf32>
    %c0_1 = arith.constant 0 : index
    %c0_2 = arith.constant 0 : index
    %2 = vector.load %arg3[%c0_1, %c0_2] : memref<1x8xf32, #tpu.memory_space<vmem>>, vector<1x8xf32>
    %3 = vector.broadcast %2 : vector<1x8xf32> to vector<512x8xf32>
    %4 = arith.mulf %1, %3 : vector<512x8xf32>
    %c0_3 = arith.constant 0 : index
    %c0_4 = arith.constant 0 : index
    %5 = vector.load %arg4[%c0_3, %c0_4] : memref<1x8xf32, #tpu.memory_space<vmem>>, vector<1x8xf32>
    %6 = vector.broadcast %5 : vector<1x8xf32> to vector<512x8xf32>
    %7 = arith.addf %4, %6 : vector<512x8xf32>
    %cst = arith.constant 0.000000e+00 : f32
    %8 = vector.broadcast %cst : f32 to vector<512x8xf32>
    %9 = arith.maximumf %7, %8 : vector<512x8xf32>
    %10 = arith.truncf %9 : vector<512x8xf32> to vector<512x8xbf16>
    %c0_5 = arith.constant 0 : index
    %c0_6 = arith.constant 0 : index
    %11 = vector.load %arg5[%c0_5, %c0_6] : memref<8x16xbf16, #tpu.memory_space<vmem>>, vector<8x16xbf16>
    %cst_7 = arith.constant dense<0.000000e+00> : vector<512x16xf32>
    %12 = tpu.matmul %10, %11, %cst_7 {dimension_numbers = #tpu.dot_dimension_numbers<[1], [0], [0], [1], [0, 0, 1, 1], [], []>} : vector<512x8xbf16>, vector<8x16xbf16>, vector<512x16xf32> -> vector<512x16xf32>
    %c0_i32 = arith.constant 0 : i32
    %13 = arith.cmpi eq, %arg0, %c0_i32 : i32
    %c0_i32_8 = arith.constant 0 : i32
    %14 = arith.cmpi eq, %arg1, %c0_i32_8 : i32
    %15 = arith.andi %13, %14 : i1
    %16 = arith.extui %15 : i1 to i32
    %c0_i32_9 = arith.constant 0 : i32
    %17 = arith.cmpi ne, %16, %c0_i32_9 : i32
    scf.if %17 {
      %cst_13 = arith.constant 0.000000e+00 : f32
      %24 = vector.broadcast %cst_13 : f32 to vector<2x16xf32>
      %c0_14 = arith.constant 0 : index
      %c0_15 = arith.constant 0 : index
      %25 = vector.load %arg12[%c0_14, %c0_15] : memref<2x16xf32, #tpu.memory_space<vmem>>, vector<2x16xf32>
      tpu.vector_store %arg12[%c0_14, %c0_15], %24 {strides = array<i32>} : memref<2x16xf32, #tpu.memory_space<vmem>>, vector<2x16xf32>,
      %cst_16 = arith.constant 0.000000e+00 : f32
      %26 = vector.broadcast %cst_16 : f32 to vector<512x16xf32>
      %c0_17 = arith.constant 0 : index
      %c0_18 = arith.constant 0 : index
      %27 = vector.load %arg11[%c0_17, %c0_18] : memref<512x16xf32, #tpu.memory_space<vmem>>, vector<512x16xf32>
      tpu.vector_store %arg11[%c0_17, %c0_18], %26 {strides = array<i32>} : memref<512x16xf32, #tpu.memory_space<vmem>>, vector<512x16xf32>,
    } else {
    }
    %c0_i32_10 = arith.constant 0 : i32
    %18 = arith.cmpi eq, %arg0, %c0_i32_10 : i32
    %19 = arith.extui %18 : i1 to i32
    %c0_i32_11 = arith.constant 0 : i32
    %20 = arith.cmpi ne, %19, %c0_i32_11 : i32
    scf.if %20 {
      %c0_13 = arith.constant 0 : index
      %c0_14 = arith.constant 0 : index
      %24 = vector.load %arg12[%c0_13, %c0_14] : memref<2x16xf32, #tpu.memory_space<vmem>>, vector<2x16xf32>
      %cst_15 = arith.constant dense<0.000000e+00> : vector<16xf32>
      %25 = vector.multi_reduction <add>, %12, %cst_15 [0] : vector<512x16xf32> to vector<16xf32>
      %26 = vector.shape_cast %25 : vector<16xf32> to vector<1x16xf32>
      %27 = arith.mulf %12, %12 : vector<512x16xf32>
      %cst_16 = arith.constant dense<0.000000e+00> : vector<16xf32>
      %28 = vector.multi_reduction <add>, %27, %cst_16 [0] : vector<512x16xf32> to vector<16xf32>
      %29 = vector.shape_cast %28 : vector<16xf32> to vector<1x16xf32>
      %30 = tpu.concatenate %26, %29 in 0 : vector<1x16xf32>, vector<1x16xf32> -> vector<2x16xf32>
      %31 = arith.addf %24, %30 : vector<2x16xf32>
      %c0_17 = arith.constant 0 : index
      %c0_18 = arith.constant 0 : index
      %32 = vector.load %arg12[%c0_17, %c0_18] : memref<2x16xf32, #tpu.memory_space<vmem>>, vector<2x16xf32>
      tpu.vector_store %arg12[%c0_17, %c0_18], %31 {strides = array<i32>} : memref<2x16xf32, #tpu.memory_space<vmem>>, vector<2x16xf32>,
    } else {
    }
    %c1_i32 = arith.constant 1 : i32
    %21 = arith.cmpi eq, %arg0, %c1_i32 : i32
    %22 = arith.extui %21 : i1 to i32
    %c0_i32_12 = arith.constant 0 : i32
    %23 = arith.cmpi ne, %22, %c0_i32_12 : i32
    scf.if %23 {
      %c0_13 = arith.constant 0 : index
      %c0_14 = arith.constant 0 : index
      %24 = vector.load %arg8[%c0_13, %c0_14] : memref<512x4xf32, #tpu.memory_space<vmem>>, vector<512x4xf32>
      %25 = arith.truncf %24 : vector<512x4xf32> to vector<512x4xbf16>
      %c0_15 = arith.constant 0 : index
      %c0_16 = arith.constant 0 : index
      %26 = vector.load %arg9[%c0_15, %c0_16] : memref<4x16xbf16, #tpu.memory_space<vmem>>, vector<4x16xbf16>
      %cst_17 = arith.constant dense<0.000000e+00> : vector<512x16xf32>
      %27 = tpu.matmul %25, %26, %cst_17 {dimension_numbers = #tpu.dot_dimension_numbers<[1], [0], [0], [1], [0, 0, 1, 1], [], []>} : vector<512x4xbf16>, vector<4x16xbf16>, vector<512x16xf32> -> vector<512x16xf32>
      %c0_18 = arith.constant 0 : index
      %c0_19 = arith.constant 0 : index
      %28 = vector.load %arg10[%c0_18, %c0_19] : memref<1x16xf32, #tpu.memory_space<vmem>>, vector<1x16xf32>
      %29 = vector.broadcast %28 : vector<1x16xf32> to vector<512x16xf32>
      %30 = arith.addf %27, %29 : vector<512x16xf32>
      %c0_20 = arith.constant 0 : index
      %c0_21 = arith.constant 0 : index
      %31 = vector.load %arg12[%c0_20, %c0_21] : memref<2x16xf32, #tpu.memory_space<vmem>>, vector<2x16xf32>
      %32 = vector.extract_strided_slice %31 {offsets = [0, 0], sizes = [1, 16], strides = [1, 1]} : vector<2x16xf32> to vector<1x16xf32>
      %cst_22 = arith.constant 0.001953125 : f32
      %33 = vector.broadcast %cst_22 : f32 to vector<1x16xf32>
      %34 = arith.mulf %32, %33 : vector<1x16xf32>
      %35 = vector.extract_strided_slice %31 {offsets = [1, 0], sizes = [1, 16], strides = [1, 1]} : vector<2x16xf32> to vector<1x16xf32>
      %cst_23 = arith.constant 0.001953125 : f32
      %36 = vector.broadcast %cst_23 : f32 to vector<1x16xf32>
      %37 = arith.mulf %35, %36 : vector<1x16xf32>
      %38 = arith.mulf %34, %34 : vector<1x16xf32>
      %39 = arith.subf %37, %38 : vector<1x16xf32>
      %cst_24 = arith.constant 0.000000e+00 : f32
      %40 = vector.broadcast %cst_24 : f32 to vector<1x16xf32>
      %41 = arith.maximumf %39, %40 : vector<1x16xf32>
      %42 = vector.broadcast %34 : vector<1x16xf32> to vector<512x16xf32>
      %43 = arith.subf %12, %42 : vector<512x16xf32>
      %cst_25 = arith.constant 9.99999974E-6 : f32
      %44 = vector.broadcast %cst_25 : f32 to vector<1x16xf32>
      %45 = arith.addf %41, %44 : vector<1x16xf32>
      %46 = math.rsqrt %45 : vector<1x16xf32>
      %47 = vector.broadcast %46 : vector<1x16xf32> to vector<512x16xf32>
      %48 = arith.mulf %43, %47 : vector<512x16xf32>
      %c0_26 = arith.constant 0 : index
      %c0_27 = arith.constant 0 : index
      %49 = vector.load %arg6[%c0_26, %c0_27] : memref<1x16xf32, #tpu.memory_space<vmem>>, vector<1x16xf32>
      %50 = vector.broadcast %49 : vector<1x16xf32> to vector<512x16xf32>
      %51 = arith.mulf %48, %50 : vector<512x16xf32>
      %c0_28 = arith.constant 0 : index
      %c0_29 = arith.constant 0 : index
      %52 = vector.load %arg7[%c0_28, %c0_29] : memref<1x16xf32, #tpu.memory_space<vmem>>, vector<1x16xf32>
      %53 = vector.broadcast %52 : vector<1x16xf32> to vector<512x16xf32>
      %54 = arith.addf %51, %53 : vector<512x16xf32>
      %55 = arith.addf %54, %30 : vector<512x16xf32>
      %cst_30 = arith.constant 0.000000e+00 : f32
      %56 = vector.broadcast %cst_30 : f32 to vector<512x16xf32>
      %57 = arith.maximumf %55, %56 : vector<512x16xf32>
      %c0_31 = arith.constant 0 : index
      %c0_32 = arith.constant 0 : index
      %58 = vector.load %arg11[%c0_31, %c0_32] : memref<512x16xf32, #tpu.memory_space<vmem>>, vector<512x16xf32>
      tpu.vector_store %arg11[%c0_31, %c0_32], %57 {strides = array<i32>} : memref<512x16xf32, #tpu.memory_space<vmem>>, vector<512x16xf32>,
    } else {
    }
    return
  }
  func.func @transform_0(%arg0: i32, %arg1: i32) -> (i32, i32) {
    %c0_i32 = arith.constant 0 : i32
    %c0_i32_0 = arith.constant 0 : i32
    return %arg1, %c0_i32 : i32, i32
  }
  func.func @transform_1(%arg0: i32, %arg1: i32) -> (i32, i32) {
    %c0_i32 = arith.constant 0 : i32
    %c0_i32_0 = arith.constant 0 : i32
    %c0_i32_1 = arith.constant 0 : i32
    return %c0_i32, %c0_i32_0 : i32, i32
  }
  func.func @transform_2(%arg0: i32, %arg1: i32) -> (i32, i32) {
    %c0_i32 = arith.constant 0 : i32
    %c0_i32_0 = arith.constant 0 : i32
    %c0_i32_1 = arith.constant 0 : i32
    return %c0_i32, %c0_i32_0 : i32, i32
  }
  func.func @transform_3(%arg0: i32, %arg1: i32) -> (i32, i32) {
    %c0_i32 = arith.constant 0 : i32
    %c0_i32_0 = arith.constant 0 : i32
    %c0_i32_1 = arith.constant 0 : i32
    return %c0_i32, %c0_i32_0 : i32, i32
  }
  func.func @transform_4(%arg0: i32, %arg1: i32) -> (i32, i32) {
    %c0_i32 = arith.constant 0 : i32
    %c0_i32_0 = arith.constant 0 : i32
    %c0_i32_1 = arith.constant 0 : i32
    return %c0_i32, %c0_i32_0 : i32, i32
  }
  func.func @transform_5(%arg0: i32, %arg1: i32) -> (i32, i32) {
    %c0_i32 = arith.constant 0 : i32
    %c0_i32_0 = arith.constant 0 : i32
    %c0_i32_1 = arith.constant 0 : i32
    return %c0_i32, %c0_i32_0 : i32, i32
  }
  func.func @transform_6(%arg0: i32, %arg1: i32) -> (i32, i32) {
    %0 = arith.muli %arg0, %arg1 : i32
    %c0_i32 = arith.constant 0 : i32
    %c0_i32_0 = arith.constant 0 : i32
    return %0, %c0_i32 : i32, i32
  }
  func.func @transform_7(%arg0: i32, %arg1: i32) -> (i32, i32) {
    %c0_i32 = arith.constant 0 : i32
    %c0_i32_0 = arith.constant 0 : i32
    %c0_i32_1 = arith.constant 0 : i32
    return %c0_i32, %c0_i32_0 : i32, i32
  }
  func.func @transform_8(%arg0: i32, %arg1: i32) -> (i32, i32) {
    %c0_i32 = arith.constant 0 : i32
    %c0_i32_0 = arith.constant 0 : i32
    %c0_i32_1 = arith.constant 0 : i32
    return %c0_i32, %c0_i32_0 : i32, i32
  }
  func.func @transform_9(%arg0: i32, %arg1: i32) -> (i32, i32) {
    %0 = arith.muli %arg0, %arg1 : i32
    %c0_i32 = arith.constant 0 : i32
    %c0_i32_0 = arith.constant 0 : i32
    return %0, %c0_i32 : i32, i32
  }
}

module attributes {stable_mosaic.version = 11 : i64} {
  func.func @_conv1x1_stats_kernel(%arg0: i32, %arg1: memref<512x4xf32, #tpu.memory_space<vmem>>, %arg2: memref<4x8xbf16, #tpu.memory_space<vmem>>, %arg3: memref<512x8xbf16, #tpu.memory_space<vmem>>, %arg4: memref<2x8xf32, #tpu.memory_space<vmem>>, %arg5: memref<2x8xf32, #tpu.memory_space<vmem>>) attributes {dimension_semantics = [#tpu.dimension_semantics<arbitrary>], iteration_bounds = array<i64: 1>, scalar_prefetch = 0 : i64, scratch_operands = 1 : i64, tpu.core_type = #tpu.core_type<tc>, window_params = [{transform_indices = @transform_0, window_bounds = array<i64: 512, 4>}, {pipeline_mode = #tpu.pipeline_mode<synchronous>, transform_indices = @transform_1, window_bounds = array<i64: 4, 8>}, {transform_indices = @transform_2, window_bounds = array<i64: 512, 8>}, {pipeline_mode = #tpu.pipeline_mode<synchronous>, transform_indices = @transform_3, window_bounds = array<i64: 2, 8>}]} {
    %c0 = arith.constant 0 : index
    %c0_0 = arith.constant 0 : index
    %0 = vector.load %arg1[%c0, %c0_0] : memref<512x4xf32, #tpu.memory_space<vmem>>, vector<512x4xf32>
    %1 = arith.truncf %0 : vector<512x4xf32> to vector<512x4xbf16>
    %c0_1 = arith.constant 0 : index
    %c0_2 = arith.constant 0 : index
    %2 = vector.load %arg2[%c0_1, %c0_2] : memref<4x8xbf16, #tpu.memory_space<vmem>>, vector<4x8xbf16>
    %cst = arith.constant dense<0.000000e+00> : vector<512x8xf32>
    %3 = tpu.matmul %1, %2, %cst {dimension_numbers = #tpu.dot_dimension_numbers<[1], [0], [0], [1], [0, 0, 1, 1], [], []>} : vector<512x4xbf16>, vector<4x8xbf16>, vector<512x8xf32> -> vector<512x8xf32>
    %4 = arith.truncf %3 : vector<512x8xf32> to vector<512x8xbf16>
    %5 = arith.extf %4 : vector<512x8xbf16> to vector<512x8xf32>
    %c0_i32 = arith.constant 0 : i32
    %6 = arith.cmpi eq, %arg0, %c0_i32 : i32
    %7 = arith.extui %6 : i1 to i32
    %c0_i32_3 = arith.constant 0 : i32
    %8 = arith.cmpi ne, %7, %c0_i32_3 : i32
    scf.if %8 {
      %cst_16 = arith.constant 0.000000e+00 : f32
      %21 = vector.broadcast %cst_16 : f32 to vector<2x8xf32>
      %c0_17 = arith.constant 0 : index
      %c0_18 = arith.constant 0 : index
      %22 = vector.load %arg5[%c0_17, %c0_18] : memref<2x8xf32, #tpu.memory_space<vmem>>, vector<2x8xf32>
      tpu.vector_store %arg5[%c0_17, %c0_18], %21 {strides = array<i32>} : memref<2x8xf32, #tpu.memory_space<vmem>>, vector<2x8xf32>,
    } else {
    }
    %c0_4 = arith.constant 0 : index
    %c0_5 = arith.constant 0 : index
    %9 = vector.load %arg5[%c0_4, %c0_5] : memref<2x8xf32, #tpu.memory_space<vmem>>, vector<2x8xf32>
    %cst_6 = arith.constant dense<0.000000e+00> : vector<8xf32>
    %10 = vector.multi_reduction <add>, %5, %cst_6 [0] : vector<512x8xf32> to vector<8xf32>
    %11 = vector.shape_cast %10 : vector<8xf32> to vector<1x8xf32>
    %12 = arith.mulf %5, %5 : vector<512x8xf32>
    %cst_7 = arith.constant dense<0.000000e+00> : vector<8xf32>
    %13 = vector.multi_reduction <add>, %12, %cst_7 [0] : vector<512x8xf32> to vector<8xf32>
    %14 = vector.shape_cast %13 : vector<8xf32> to vector<1x8xf32>
    %15 = tpu.concatenate %11, %14 in 0 : vector<1x8xf32>, vector<1x8xf32> -> vector<2x8xf32>
    %16 = arith.addf %9, %15 : vector<2x8xf32>
    %c0_8 = arith.constant 0 : index
    %c0_9 = arith.constant 0 : index
    %17 = vector.load %arg5[%c0_8, %c0_9] : memref<2x8xf32, #tpu.memory_space<vmem>>, vector<2x8xf32>
    tpu.vector_store %arg5[%c0_8, %c0_9], %16 {strides = array<i32>} : memref<2x8xf32, #tpu.memory_space<vmem>>, vector<2x8xf32>,
    %c0_10 = arith.constant 0 : index
    %c0_11 = arith.constant 0 : index
    %18 = vector.load %arg5[%c0_10, %c0_11] : memref<2x8xf32, #tpu.memory_space<vmem>>, vector<2x8xf32>
    %c0_12 = arith.constant 0 : index
    %c0_13 = arith.constant 0 : index
    %19 = vector.load %arg4[%c0_12, %c0_13] : memref<2x8xf32, #tpu.memory_space<vmem>>, vector<2x8xf32>
    tpu.vector_store %arg4[%c0_12, %c0_13], %18 {strides = array<i32>} : memref<2x8xf32, #tpu.memory_space<vmem>>, vector<2x8xf32>,
    %c0_14 = arith.constant 0 : index
    %c0_15 = arith.constant 0 : index
    %20 = vector.load %arg3[%c0_14, %c0_15] : memref<512x8xbf16, #tpu.memory_space<vmem>>, vector<512x8xbf16>
    tpu.vector_store %arg3[%c0_14, %c0_15], %4 {strides = array<i32>} : memref<512x8xbf16, #tpu.memory_space<vmem>>, vector<512x8xbf16>,
    return
  }
  func.func @transform_0(%arg0: i32) -> (i32, i32) {
    %c0_i32 = arith.constant 0 : i32
    %c0_i32_0 = arith.constant 0 : i32
    return %arg0, %c0_i32 : i32, i32
  }
  func.func @transform_1(%arg0: i32) -> (i32, i32) {
    %c0_i32 = arith.constant 0 : i32
    %c0_i32_0 = arith.constant 0 : i32
    %c0_i32_1 = arith.constant 0 : i32
    return %c0_i32, %c0_i32_0 : i32, i32
  }
  func.func @transform_2(%arg0: i32) -> (i32, i32) {
    %c0_i32 = arith.constant 0 : i32
    %c0_i32_0 = arith.constant 0 : i32
    return %arg0, %c0_i32 : i32, i32
  }
  func.func @transform_3(%arg0: i32) -> (i32, i32) {
    %c0_i32 = arith.constant 0 : i32
    %c0_i32_0 = arith.constant 0 : i32
    %c0_i32_1 = arith.constant 0 : i32
    return %c0_i32, %c0_i32_0 : i32, i32
  }
}

module attributes {stable_mosaic.version = 11 : i64} {
  func.func @_conv3x3_stats_kernel(%arg0: i32, %arg1: memref<1x16x16x8xbf16, #tpu.memory_space<vmem>>, %arg2: memref<1x8xf32, #tpu.memory_space<vmem>>, %arg3: memref<1x8xf32, #tpu.memory_space<vmem>>, %arg4: memref<3x3x8x8xbf16, #tpu.memory_space<vmem>>, %arg5: memref<1x16x16x8xbf16, #tpu.memory_space<vmem>>, %arg6: memref<2x8xf32, #tpu.memory_space<vmem>>, %arg7: memref<2x8xf32, #tpu.memory_space<vmem>>) attributes {dimension_semantics = [#tpu.dimension_semantics<arbitrary>], iteration_bounds = array<i64: 2>, scalar_prefetch = 0 : i64, scratch_operands = 1 : i64, tpu.core_type = #tpu.core_type<tc>, window_params = [{transform_indices = @transform_0, window_bounds = array<i64: 1, 16, 16, 8>}, {pipeline_mode = #tpu.pipeline_mode<synchronous>, transform_indices = @transform_1, window_bounds = array<i64: 1, 8>}, {pipeline_mode = #tpu.pipeline_mode<synchronous>, transform_indices = @transform_2, window_bounds = array<i64: 1, 8>}, {pipeline_mode = #tpu.pipeline_mode<synchronous>, transform_indices = @transform_3, window_bounds = array<i64: 3, 3, 8, 8>}, {transform_indices = @transform_4, window_bounds = array<i64: 1, 16, 16, 8>}, {pipeline_mode = #tpu.pipeline_mode<synchronous>, transform_indices = @transform_5, window_bounds = array<i64: 2, 8>}]} {
    %c0 = arith.constant 0 : index
    %c0_0 = arith.constant 0 : index
    %c0_1 = arith.constant 0 : index
    %c0_2 = arith.constant 0 : index
    %0 = vector.load %arg1[%c0, %c0_0, %c0_1, %c0_2] : memref<1x16x16x8xbf16, #tpu.memory_space<vmem>>, vector<1x16x16x8xbf16>
    %1 = vector.shape_cast %0 : vector<1x16x16x8xbf16> to vector<16x16x8xbf16>
    %2 = vector.shape_cast %1 : vector<16x16x8xbf16> to vector<256x8xbf16>
    %3 = arith.extf %2 : vector<256x8xbf16> to vector<256x8xf32>
    %c0_3 = arith.constant 0 : index
    %c0_4 = arith.constant 0 : index
    %4 = vector.load %arg2[%c0_3, %c0_4] : memref<1x8xf32, #tpu.memory_space<vmem>>, vector<1x8xf32>
    %5 = vector.broadcast %4 : vector<1x8xf32> to vector<256x8xf32>
    %6 = arith.mulf %3, %5 : vector<256x8xf32>
    %c0_5 = arith.constant 0 : index
    %c0_6 = arith.constant 0 : index
    %7 = vector.load %arg3[%c0_5, %c0_6] : memref<1x8xf32, #tpu.memory_space<vmem>>, vector<1x8xf32>
    %8 = vector.broadcast %7 : vector<1x8xf32> to vector<256x8xf32>
    %9 = arith.addf %6, %8 : vector<256x8xf32>
    %cst = arith.constant 0.000000e+00 : f32
    %10 = vector.broadcast %cst : f32 to vector<256x8xf32>
    %11 = arith.maximumf %9, %10 : vector<256x8xf32>
    %cst_7 = arith.constant 0.000000e+00 : f32
    %12 = vector.broadcast %cst_7 : f32 to vector<16x8xf32>
    %13 = tpu.concatenate %12, %11, %12 in 0 : vector<16x8xf32>, vector<256x8xf32>, vector<16x8xf32> -> vector<288x8xf32>
    %14 = tpu.iota {dimensions = array<i32: 0>} : vector<288x1xi32>
    %c16_i32 = arith.constant 16 : i32
    %c0_i32 = arith.constant 0 : i32
    %15 = arith.cmpi eq, %c16_i32, %c0_i32 : i32
    %c1_i32 = arith.constant 1 : i32
    %16 = arith.select %15, %c1_i32, %c16_i32 : i32
    %17 = vector.broadcast %16 : i32 to vector<288x1xi32>
    %18 = arith.remsi %14, %17 : vector<288x1xi32>
    %c0_i32_8 = arith.constant 0 : i32
    %19 = vector.broadcast %c0_i32_8 : i32 to vector<288x1xi32>
    %20 = arith.cmpi ne, %18, %19 : vector<288x1xi32>
    %c0_i32_9 = arith.constant 0 : i32
    %21 = vector.broadcast %c0_i32_9 : i32 to vector<288x1xi32>
    %22 = arith.cmpi slt, %18, %21 : vector<288x1xi32>
    %c0_i32_10 = arith.constant 0 : i32
    %23 = arith.cmpi slt, %16, %c0_i32_10 : i32
    %24 = vector.broadcast %23 : i1 to vector<288x1xi1>
    %25 = vector.broadcast %24 : vector<288x1xi1> to vector<288x1xi1>
    %26 = arith.xori %22, %25 : vector<288x1xi1>
    %27 = arith.andi %26, %20 : vector<288x1xi1>
    %28 = vector.broadcast %16 : i32 to vector<288x1xi32>
    %29 = arith.addi %18, %28 : vector<288x1xi32>
    %30 = arith.select %27, %29, %18 : vector<288x1xi1>, vector<288x1xi32>
    %cst_11 = arith.constant 0.000000e+00 : f32
    %31 = vector.broadcast %cst_11 : f32 to vector<1x8xf32>
    %c1_i32_12 = arith.constant 1 : i32
    %32 = vector.broadcast %c1_i32_12 : i32 to vector<288x1xi32>
    %33 = arith.cmpi sge, %30, %32 : vector<288x1xi32>
    %34 = vector.extract_strided_slice %13 {offsets = [0, 0], sizes = [287, 8], strides = [1, 1]} : vector<288x8xf32> to vector<287x8xf32>
    %35 = tpu.concatenate %31, %34 in 0 : vector<1x8xf32>, vector<287x8xf32> -> vector<288x8xf32>
    %cst_13 = arith.constant 0.000000e+00 : f32
    %36 = vector.shape_cast %33 : vector<288x1xi1> to vector<288x1xi1>
    %37 = vector.broadcast %36 : vector<288x1xi1> to vector<288x8xi1>
    %38 = vector.broadcast %cst_13 : f32 to vector<288x8xf32>
    %39 = arith.select %37, %35, %38 : vector<288x8xi1>, vector<288x8xf32>
    %40 = arith.truncf %39 : vector<288x8xf32> to vector<288x8xbf16>
    %41 = arith.truncf %13 : vector<288x8xf32> to vector<288x8xbf16>
    %c15_i32 = arith.constant 15 : i32
    %42 = vector.broadcast %c15_i32 : i32 to vector<288x1xi32>
    %43 = arith.cmpi slt, %30, %42 : vector<288x1xi32>
    %44 = vector.extract_strided_slice %13 {offsets = [1, 0], sizes = [287, 8], strides = [1, 1]} : vector<288x8xf32> to vector<287x8xf32>
    %45 = tpu.concatenate %44, %31 in 0 : vector<287x8xf32>, vector<1x8xf32> -> vector<288x8xf32>
    %cst_14 = arith.constant 0.000000e+00 : f32
    %46 = vector.shape_cast %43 : vector<288x1xi1> to vector<288x1xi1>
    %47 = vector.broadcast %46 : vector<288x1xi1> to vector<288x8xi1>
    %48 = vector.broadcast %cst_14 : f32 to vector<288x8xf32>
    %49 = arith.select %47, %45, %48 : vector<288x8xi1>, vector<288x8xf32>
    %50 = arith.truncf %49 : vector<288x8xf32> to vector<288x8xbf16>
    %c0_15 = arith.constant 0 : index
    %c0_16 = arith.constant 0 : index
    %c0_17 = arith.constant 0 : index
    %c0_18 = arith.constant 0 : index
    %51 = vector.load %arg4[%c0_15, %c0_16, %c0_17, %c0_18] : memref<3x3x8x8xbf16, #tpu.memory_space<vmem>>, vector<3x3x8x8xbf16>
    %cst_19 = arith.constant 0.000000e+00 : f32
    %52 = vector.broadcast %cst_19 : f32 to vector<256x8xf32>
    %53 = vector.extract_strided_slice %40 {offsets = [0, 0], sizes = [256, 8], strides = [1, 1]} : vector<288x8xbf16> to vector<256x8xbf16>
    %54 = vector.extract_strided_slice %51 {offsets = [0, 0, 0, 0], sizes = [1, 1, 8, 8], strides = [1, 1, 1, 1]} : vector<3x3x8x8xbf16> to vector<1x1x8x8xbf16>
    %55 = vector.shape_cast %54 : vector<1x1x8x8xbf16> to vector<8x8xbf16>
    %cst_20 = arith.constant dense<0.000000e+00> : vector<256x8xf32>
    %56 = tpu.matmul %53, %55, %cst_20 {dimension_numbers = #tpu.dot_dimension_numbers<[1], [0], [0], [1], [0, 0, 1, 1], [], []>} : vector<256x8xbf16>, vector<8x8xbf16>, vector<256x8xf32> -> vector<256x8xf32>
    %57 = arith.addf %52, %56 : vector<256x8xf32>
    %58 = vector.extract_strided_slice %40 {offsets = [16, 0], sizes = [256, 8], strides = [1, 1]} : vector<288x8xbf16> to vector<256x8xbf16>
    %59 = vector.extract_strided_slice %51 {offsets = [1, 0, 0, 0], sizes = [1, 1, 8, 8], strides = [1, 1, 1, 1]} : vector<3x3x8x8xbf16> to vector<1x1x8x8xbf16>
    %60 = vector.shape_cast %59 : vector<1x1x8x8xbf16> to vector<8x8xbf16>
    %cst_21 = arith.constant dense<0.000000e+00> : vector<256x8xf32>
    %61 = tpu.matmul %58, %60, %cst_21 {dimension_numbers = #tpu.dot_dimension_numbers<[1], [0], [0], [1], [0, 0, 1, 1], [], []>} : vector<256x8xbf16>, vector<8x8xbf16>, vector<256x8xf32> -> vector<256x8xf32>
    %62 = arith.addf %57, %61 : vector<256x8xf32>
    %63 = vector.extract_strided_slice %40 {offsets = [32, 0], sizes = [256, 8], strides = [1, 1]} : vector<288x8xbf16> to vector<256x8xbf16>
    %64 = vector.extract_strided_slice %51 {offsets = [2, 0, 0, 0], sizes = [1, 1, 8, 8], strides = [1, 1, 1, 1]} : vector<3x3x8x8xbf16> to vector<1x1x8x8xbf16>
    %65 = vector.shape_cast %64 : vector<1x1x8x8xbf16> to vector<8x8xbf16>
    %cst_22 = arith.constant dense<0.000000e+00> : vector<256x8xf32>
    %66 = tpu.matmul %63, %65, %cst_22 {dimension_numbers = #tpu.dot_dimension_numbers<[1], [0], [0], [1], [0, 0, 1, 1], [], []>} : vector<256x8xbf16>, vector<8x8xbf16>, vector<256x8xf32> -> vector<256x8xf32>
    %67 = arith.addf %62, %66 : vector<256x8xf32>
    %68 = vector.extract_strided_slice %41 {offsets = [0, 0], sizes = [256, 8], strides = [1, 1]} : vector<288x8xbf16> to vector<256x8xbf16>
    %69 = vector.extract_strided_slice %51 {offsets = [0, 1, 0, 0], sizes = [1, 1, 8, 8], strides = [1, 1, 1, 1]} : vector<3x3x8x8xbf16> to vector<1x1x8x8xbf16>
    %70 = vector.shape_cast %69 : vector<1x1x8x8xbf16> to vector<8x8xbf16>
    %cst_23 = arith.constant dense<0.000000e+00> : vector<256x8xf32>
    %71 = tpu.matmul %68, %70, %cst_23 {dimension_numbers = #tpu.dot_dimension_numbers<[1], [0], [0], [1], [0, 0, 1, 1], [], []>} : vector<256x8xbf16>, vector<8x8xbf16>, vector<256x8xf32> -> vector<256x8xf32>
    %72 = arith.addf %67, %71 : vector<256x8xf32>
    %73 = vector.extract_strided_slice %41 {offsets = [16, 0], sizes = [256, 8], strides = [1, 1]} : vector<288x8xbf16> to vector<256x8xbf16>
    %74 = vector.extract_strided_slice %51 {offsets = [1, 1, 0, 0], sizes = [1, 1, 8, 8], strides = [1, 1, 1, 1]} : vector<3x3x8x8xbf16> to vector<1x1x8x8xbf16>
    %75 = vector.shape_cast %74 : vector<1x1x8x8xbf16> to vector<8x8xbf16>
    %cst_24 = arith.constant dense<0.000000e+00> : vector<256x8xf32>
    %76 = tpu.matmul %73, %75, %cst_24 {dimension_numbers = #tpu.dot_dimension_numbers<[1], [0], [0], [1], [0, 0, 1, 1], [], []>} : vector<256x8xbf16>, vector<8x8xbf16>, vector<256x8xf32> -> vector<256x8xf32>
    %77 = arith.addf %72, %76 : vector<256x8xf32>
    %78 = vector.extract_strided_slice %41 {offsets = [32, 0], sizes = [256, 8], strides = [1, 1]} : vector<288x8xbf16> to vector<256x8xbf16>
    %79 = vector.extract_strided_slice %51 {offsets = [2, 1, 0, 0], sizes = [1, 1, 8, 8], strides = [1, 1, 1, 1]} : vector<3x3x8x8xbf16> to vector<1x1x8x8xbf16>
    %80 = vector.shape_cast %79 : vector<1x1x8x8xbf16> to vector<8x8xbf16>
    %cst_25 = arith.constant dense<0.000000e+00> : vector<256x8xf32>
    %81 = tpu.matmul %78, %80, %cst_25 {dimension_numbers = #tpu.dot_dimension_numbers<[1], [0], [0], [1], [0, 0, 1, 1], [], []>} : vector<256x8xbf16>, vector<8x8xbf16>, vector<256x8xf32> -> vector<256x8xf32>
    %82 = arith.addf %77, %81 : vector<256x8xf32>
    %83 = vector.extract_strided_slice %50 {offsets = [0, 0], sizes = [256, 8], strides = [1, 1]} : vector<288x8xbf16> to vector<256x8xbf16>
    %84 = vector.extract_strided_slice %51 {offsets = [0, 2, 0, 0], sizes = [1, 1, 8, 8], strides = [1, 1, 1, 1]} : vector<3x3x8x8xbf16> to vector<1x1x8x8xbf16>
    %85 = vector.shape_cast %84 : vector<1x1x8x8xbf16> to vector<8x8xbf16>
    %cst_26 = arith.constant dense<0.000000e+00> : vector<256x8xf32>
    %86 = tpu.matmul %83, %85, %cst_26 {dimension_numbers = #tpu.dot_dimension_numbers<[1], [0], [0], [1], [0, 0, 1, 1], [], []>} : vector<256x8xbf16>, vector<8x8xbf16>, vector<256x8xf32> -> vector<256x8xf32>
    %87 = arith.addf %82, %86 : vector<256x8xf32>
    %88 = vector.extract_strided_slice %50 {offsets = [16, 0], sizes = [256, 8], strides = [1, 1]} : vector<288x8xbf16> to vector<256x8xbf16>
    %89 = vector.extract_strided_slice %51 {offsets = [1, 2, 0, 0], sizes = [1, 1, 8, 8], strides = [1, 1, 1, 1]} : vector<3x3x8x8xbf16> to vector<1x1x8x8xbf16>
    %90 = vector.shape_cast %89 : vector<1x1x8x8xbf16> to vector<8x8xbf16>
    %cst_27 = arith.constant dense<0.000000e+00> : vector<256x8xf32>
    %91 = tpu.matmul %88, %90, %cst_27 {dimension_numbers = #tpu.dot_dimension_numbers<[1], [0], [0], [1], [0, 0, 1, 1], [], []>} : vector<256x8xbf16>, vector<8x8xbf16>, vector<256x8xf32> -> vector<256x8xf32>
    %92 = arith.addf %87, %91 : vector<256x8xf32>
    %93 = vector.extract_strided_slice %50 {offsets = [32, 0], sizes = [256, 8], strides = [1, 1]} : vector<288x8xbf16> to vector<256x8xbf16>
    %94 = vector.extract_strided_slice %51 {offsets = [2, 2, 0, 0], sizes = [1, 1, 8, 8], strides = [1, 1, 1, 1]} : vector<3x3x8x8xbf16> to vector<1x1x8x8xbf16>
    %95 = vector.shape_cast %94 : vector<1x1x8x8xbf16> to vector<8x8xbf16>
    %cst_28 = arith.constant dense<0.000000e+00> : vector<256x8xf32>
    %96 = tpu.matmul %93, %95, %cst_28 {dimension_numbers = #tpu.dot_dimension_numbers<[1], [0], [0], [1], [0, 0, 1, 1], [], []>} : vector<256x8xbf16>, vector<8x8xbf16>, vector<256x8xf32> -> vector<256x8xf32>
    %97 = arith.addf %92, %96 : vector<256x8xf32>
    %98 = arith.truncf %97 : vector<256x8xf32> to vector<256x8xbf16>
    %99 = arith.extf %98 : vector<256x8xbf16> to vector<256x8xf32>
    %c0_i32_29 = arith.constant 0 : i32
    %100 = arith.cmpi eq, %arg0, %c0_i32_29 : i32
    %101 = arith.extui %100 : i1 to i32
    %c0_i32_30 = arith.constant 0 : i32
    %102 = arith.cmpi ne, %101, %c0_i32_30 : i32
    scf.if %102 {
      %cst_45 = arith.constant 0.000000e+00 : f32
      %116 = vector.broadcast %cst_45 : f32 to vector<2x8xf32>
      %c0_46 = arith.constant 0 : index
      %c0_47 = arith.constant 0 : index
      %117 = vector.load %arg7[%c0_46, %c0_47] : memref<2x8xf32, #tpu.memory_space<vmem>>, vector<2x8xf32>
      tpu.vector_store %arg7[%c0_46, %c0_47], %116 {strides = array<i32>} : memref<2x8xf32, #tpu.memory_space<vmem>>, vector<2x8xf32>,
    } else {
    }
    %c0_31 = arith.constant 0 : index
    %c0_32 = arith.constant 0 : index
    %103 = vector.load %arg7[%c0_31, %c0_32] : memref<2x8xf32, #tpu.memory_space<vmem>>, vector<2x8xf32>
    %cst_33 = arith.constant dense<0.000000e+00> : vector<8xf32>
    %104 = vector.multi_reduction <add>, %99, %cst_33 [0] : vector<256x8xf32> to vector<8xf32>
    %105 = vector.shape_cast %104 : vector<8xf32> to vector<1x8xf32>
    %106 = arith.mulf %99, %99 : vector<256x8xf32>
    %cst_34 = arith.constant dense<0.000000e+00> : vector<8xf32>
    %107 = vector.multi_reduction <add>, %106, %cst_34 [0] : vector<256x8xf32> to vector<8xf32>
    %108 = vector.shape_cast %107 : vector<8xf32> to vector<1x8xf32>
    %109 = tpu.concatenate %105, %108 in 0 : vector<1x8xf32>, vector<1x8xf32> -> vector<2x8xf32>
    %110 = arith.addf %103, %109 : vector<2x8xf32>
    %c0_35 = arith.constant 0 : index
    %c0_36 = arith.constant 0 : index
    %111 = vector.load %arg7[%c0_35, %c0_36] : memref<2x8xf32, #tpu.memory_space<vmem>>, vector<2x8xf32>
    tpu.vector_store %arg7[%c0_35, %c0_36], %110 {strides = array<i32>} : memref<2x8xf32, #tpu.memory_space<vmem>>, vector<2x8xf32>,
    %c0_37 = arith.constant 0 : index
    %c0_38 = arith.constant 0 : index
    %112 = vector.load %arg7[%c0_37, %c0_38] : memref<2x8xf32, #tpu.memory_space<vmem>>, vector<2x8xf32>
    %c0_39 = arith.constant 0 : index
    %c0_40 = arith.constant 0 : index
    %113 = vector.load %arg6[%c0_39, %c0_40] : memref<2x8xf32, #tpu.memory_space<vmem>>, vector<2x8xf32>
    tpu.vector_store %arg6[%c0_39, %c0_40], %112 {strides = array<i32>} : memref<2x8xf32, #tpu.memory_space<vmem>>, vector<2x8xf32>,
    %114 = vector.shape_cast %98 : vector<256x8xbf16> to vector<1x16x16x8xbf16>
    %c0_41 = arith.constant 0 : index
    %c0_42 = arith.constant 0 : index
    %c0_43 = arith.constant 0 : index
    %c0_44 = arith.constant 0 : index
    %115 = vector.load %arg5[%c0_41, %c0_42, %c0_43, %c0_44] : memref<1x16x16x8xbf16, #tpu.memory_space<vmem>>, vector<1x16x16x8xbf16>
    tpu.vector_store %arg5[%c0_41, %c0_42, %c0_43, %c0_44], %114 {strides = array<i32>} : memref<1x16x16x8xbf16, #tpu.memory_space<vmem>>, vector<1x16x16x8xbf16>,
    return
  }
  func.func @transform_0(%arg0: i32) -> (i32, i32, i32, i32) {
    %c0_i32 = arith.constant 0 : i32
    %c0_i32_0 = arith.constant 0 : i32
    %c0_i32_1 = arith.constant 0 : i32
    %c0_i32_2 = arith.constant 0 : i32
    return %arg0, %c0_i32, %c0_i32_0, %c0_i32_1 : i32, i32, i32, i32
  }
  func.func @transform_1(%arg0: i32) -> (i32, i32) {
    %c0_i32 = arith.constant 0 : i32
    %c0_i32_0 = arith.constant 0 : i32
    %c0_i32_1 = arith.constant 0 : i32
    return %c0_i32, %c0_i32_0 : i32, i32
  }
  func.func @transform_2(%arg0: i32) -> (i32, i32) {
    %c0_i32 = arith.constant 0 : i32
    %c0_i32_0 = arith.constant 0 : i32
    %c0_i32_1 = arith.constant 0 : i32
    return %c0_i32, %c0_i32_0 : i32, i32
  }
  func.func @transform_3(%arg0: i32) -> (i32, i32, i32, i32) {
    %c0_i32 = arith.constant 0 : i32
    %c0_i32_0 = arith.constant 0 : i32
    %c0_i32_1 = arith.constant 0 : i32
    %c0_i32_2 = arith.constant 0 : i32
    %c0_i32_3 = arith.constant 0 : i32
    return %c0_i32, %c0_i32_0, %c0_i32_1, %c0_i32_2 : i32, i32, i32, i32
  }
  func.func @transform_4(%arg0: i32) -> (i32, i32, i32, i32) {
    %c0_i32 = arith.constant 0 : i32
    %c0_i32_0 = arith.constant 0 : i32
    %c0_i32_1 = arith.constant 0 : i32
    %c0_i32_2 = arith.constant 0 : i32
    return %arg0, %c0_i32, %c0_i32_0, %c0_i32_1 : i32, i32, i32, i32
  }
  func.func @transform_5(%arg0: i32) -> (i32, i32) {
    %c0_i32 = arith.constant 0 : i32
    %c0_i32_0 = arith.constant 0 : i32
    %c0_i32_1 = arith.constant 0 : i32
    return %c0_i32, %c0_i32_0 : i32, i32
  }
}

</mosaic_0001>

<llo_original>
// kernel: bottleneck_forward.3
$region0: #{bottleneck_forward.3}
  #allocation0 [shape = 'u32[]', space=smem, size = 0x4, offset = 0x4, fixed_abs, tag = 'smem constant byte address 0x4 - core index']
  #allocation1 [shape = 'u32[144,128]{1,0:T(1,128)}', space=vmem, size = 0x12000, scoped, tag = 'internal scratch']
  #allocation2 [shape = 'f32[2,8]{1,0:T(2,128)}', space=vmem, size = 0x400, scoped, tag = 'scratch operand']
  %s0 = inlined_call_operand.vmem [shape: f32[512,4], index: 0, kind: input, shape index: {}]
  %s1 = inlined_call_operand.vmem [shape: bf16[4,8], index: 1, kind: input, shape index: {}]
  %s2 = inlined_call_operand.vmem [shape: bf16[512,8], index: 2, kind: output, shape index: {0}]
  %s3 = inlined_call_operand.vmem [shape: f32[2,8], index: 3, kind: output, shape index: {1}]
  %4 = xla_tuple %s2, %s3
  %s5 = sld [smem:[#allocation0]]
  $region30: #{bottleneck_forward.3} parent=0
    _
  %s7 = ssub.s32 1, %s5
  %s8 = scalar_select 0, %s7, %s5
  // Predicated region
  $region2: #{bottleneck_forward.3} parent=0 // pred_check
    _
  $region3: #{bottleneck_forward.3} parent=0 // pred_check_branch
    %10 = sbr.rel (0) target = $region5
  $region4: #{bottleneck_forward.3} parent=0 // pred_region
    _
  $region5: #{bottleneck_forward.3} parent=0 // pred_fallthru
    _
  // Predicated region
  $region6: #{bottleneck_forward.3} parent=0 // pred_check
    _
  $region7: #{bottleneck_forward.3} parent=0 // pred_check_branch
    %12 = sbr.rel (0) target = $region9
  $region8: #{bottleneck_forward.3} parent=0 // pred_region
    _
  $region9: #{bottleneck_forward.3} parent=0 // pred_fallthru
    _
  %v14 = vld [vmem:[%s0] sm:$0xff]
  %v15 = vld [vmem:[%s0 + $0x8] sm:$0xff]
  %v16 = vld [vmem:[%s0 + $0x10] sm:$0xff]
  %v17 = vld [vmem:[%s0 + $0x18] sm:$0xff]
  %v18 = vld [vmem:[%s0 + $0x20] sm:$0xff]
  %v19 = vld [vmem:[%s0 + $0x28] sm:$0xff]
  %v20 = vld [vmem:[%s0 + $0x30] sm:$0xff]
  %v21 = vld [vmem:[%s0 + $0x38] sm:$0xff]
  %v22 = vld [vmem:[%s0 + $0x40] sm:$0xff]
  %v23 = vld [vmem:[%s0 + $0x48] sm:$0xff]
  %v24 = vld [vmem:[%s0 + $0x50] sm:$0xff]
  %v25 = vld [vmem:[%s0 + $0x58] sm:$0xff]
  %v26 = vld [vmem:[%s0 + $0x60] sm:$0xff]
  %v27 = vld [vmem:[%s0 + $0x68] sm:$0xff]
  %v28 = vld [vmem:[%s0 + $0x70] sm:$0xff]
  %v29 = vld [vmem:[%s0 + $0x78] sm:$0xff]
  %v30 = vld [vmem:[%s0 + $0x80] sm:$0xff]
  %v31 = vld [vmem:[%s0 + $0x88] sm:$0xff]
  %v32 = vld [vmem:[%s0 + $0x90] sm:$0xff]
  %v33 = vld [vmem:[%s0 + $0x98] sm:$0xff]
  %v34 = vld [vmem:[%s0 + $0xa0] sm:$0xff]
  %v35 = vld [vmem:[%s0 + $0xa8] sm:$0xff]
  %v36 = vld [vmem:[%s0 + $0xb0] sm:$0xff]
  %v37 = vld [vmem:[%s0 + $0xb8] sm:$0xff]
  %v38 = vld [vmem:[%s0 + $0xc0] sm:$0xff]
  %v39 = vld [vmem:[%s0 + $0xc8] sm:$0xff]
  %v40 = vld [vmem:[%s0 + $0xd0] sm:$0xff]
  %v41 = vld [vmem:[%s0 + $0xd8] sm:$0xff]
  %v42 = vld [vmem:[%s0 + $0xe0] sm:$0xff]
  %v43 = vld [vmem:[%s0 + $0xe8] sm:$0xff]
  %v44 = vld [vmem:[%s0 + $0xf0] sm:$0xff]
  %v45 = vld [vmem:[%s0 + $0xf8] sm:$0xff]
  %v46 = vld [vmem:[%s0 + $0x100] sm:$0xff]
  %v47 = vld [vmem:[%s0 + $0x108] sm:$0xff]
  %v48 = vld [vmem:[%s0 + $0x110] sm:$0xff]
  %v49 = vld [vmem:[%s0 + $0x118] sm:$0xff]
  %v50 = vld [vmem:[%s0 + $0x120] sm:$0xff]
  %v51 = vld [vmem:[%s0 + $0x128] sm:$0xff]
  %v52 = vld [vmem:[%s0 + $0x130] sm:$0xff]
  %v53 = vld [vmem:[%s0 + $0x138] sm:$0xff]
  %v54 = vld [vmem:[%s0 + $0x140] sm:$0xff]
  %v55 = vld [vmem:[%s0 + $0x148] sm:$0xff]
  %v56 = vld [vmem:[%s0 + $0x150] sm:$0xff]
  %v57 = vld [vmem:[%s0 + $0x158] sm:$0xff]
  %v58 = vld [vmem:[%s0 + $0x160] sm:$0xff]
  %v59 = vld [vmem:[%s0 + $0x168] sm:$0xff]
  %v60 = vld [vmem:[%s0 + $0x170] sm:$0xff]
  %v61 = vld [vmem:[%s0 + $0x178] sm:$0xff]
  %v62 = vld [vmem:[%s0 + $0x180] sm:$0xff]
  %v63 = vld [vmem:[%s0 + $0x188] sm:$0xff]
  %v64 = vld [vmem:[%s0 + $0x190] sm:$0xff]
  %v65 = vld [vmem:[%s0 + $0x198] sm:$0xff]
  %v66 = vld [vmem:[%s0 + $0x1a0] sm:$0xff]
  %v67 = vld [vmem:[%s0 + $0x1a8] sm:$0xff]
  %v68 = vld [vmem:[%s0 + $0x1b0] sm:$0xff]
  %v69 = vld [vmem:[%s0 + $0x1b8] sm:$0xff]
  %v70 = vld [vmem:[%s0 + $0x1c0] sm:$0xff]
  %v71 = vld [vmem:[%s0 + $0x1c8] sm:$0xff]
  %v72 = vld [vmem:[%s0 + $0x1d0] sm:$0xff]
  %v73 = vld [vmem:[%s0 + $0x1d8] sm:$0xff]
  %v74 = vld [vmem:[%s0 + $0x1e0] sm:$0xff]
  %v75 = vld [vmem:[%s0 + $0x1e8] sm:$0xff]
  %v76 = vld [vmem:[%s0 + $0x1f0] sm:$0xff]
  %v77 = vld [vmem:[%s0 + $0x1f8] sm:$0xff]
  %v78 = vpack.c.bf16 %v15, %v14
  %v79 = vpack.c.bf16 %v17, %v16
  %v80 = vpack.c.bf16 %v19, %v18
  %v81 = vpack.c.bf16 %v21, %v20
  %v82 = vpack.c.bf16 %v23, %v22
  %v83 = vpack.c.bf16 %v25, %v24
  %v84 = vpack.c.bf16 %v27, %v26
  %v85 = vpack.c.bf16 %v29, %v28
  %v86 = vpack.c.bf16 %v31, %v30
  %v87 = vpack.c.bf16 %v33, %v32
  %v88 = vpack.c.bf16 %v35, %v34
  %v89 = vpack.c.bf16 %v37, %v36
  %v90 = vpack.c.bf16 %v39, %v38
  %v91 = vpack.c.bf16 %v41, %v40
  %v92 = vpack.c.bf16 %v43, %v42
  %v93 = vpack.c.bf16 %v45, %v44
  %v94 = vpack.c.bf16 %v47, %v46
  %v95 = vpack.c.bf16 %v49, %v48
  %v96 = vpack.c.bf16 %v51, %v50
  %v97 = vpack.c.bf16 %v53, %v52
  %v98 = vpack.c.bf16 %v55, %v54
  %v99 = vpack.c.bf16 %v57, %v56
  %v100 = vpack.c.bf16 %v59, %v58
  %v101 = vpack.c.bf16 %v61, %v60
  %v102 = vpack.c.bf16 %v63, %v62
  %v103 = vpack.c.bf16 %v65, %v64
  %v104 = vpack.c.bf16 %v67, %v66
  %v105 = vpack.c.bf16 %v69, %v68
  %v106 = vpack.c.bf16 %v71, %v70
  %v107 = vpack.c.bf16 %v73, %v72
  %v108 = vpack.c.bf16 %v75, %v74
  %v109 = vpack.c.bf16 %v77, %v76
  %v110 = vld [vmem:[%s1] sm:$0x3]
  %vm111 = vcmask 31744
  %v113 = vsel %vm111, %v78, 0
  %v116 = vsel %vm111, %v79, 0
  %v119 = vsel %vm111, %v80, 0
  %v122 = vsel %vm111, %v81, 0
  %v125 = vsel %vm111, %v82, 0
  %v128 = vsel %vm111, %v83, 0
  %v131 = vsel %vm111, %v84, 0
  %v134 = vsel %vm111, %v85, 0
  %v137 = vsel %vm111, %v86, 0
  %v140 = vsel %vm111, %v87, 0
  %v143 = vsel %vm111, %v88, 0
  %v146 = vsel %vm111, %v89, 0
  %v149 = vsel %vm111, %v90, 0
  %v152 = vsel %vm111, %v91, 0
  %v155 = vsel %vm111, %v92, 0
  %v158 = vsel %vm111, %v93, 0
  %v161 = vsel %vm111, %v94, 0
  %v164 = vsel %vm111, %v95, 0
  %v167 = vsel %vm111, %v96, 0
  %v170 = vsel %vm111, %v97, 0
  %v173 = vsel %vm111, %v98, 0
  %v176 = vsel %vm111, %v99, 0
  %v179 = vsel %vm111, %v100, 0
  %v182 = vsel %vm111, %v101, 0
  %v185 = vsel %vm111, %v102, 0
  %v188 = vsel %vm111, %v103, 0
  %v191 = vsel %vm111, %v104, 0
  %v194 = vsel %vm111, %v105, 0
  %v197 = vsel %vm111, %v106, 0
  %v200 = vsel %vm111, %v107, 0
  %v203 = vsel %vm111, %v108, 0
  %v206 = vsel %vm111, %v109, 0
  %vm208 = vcmask 1041408
  %v210 = vsel %vm208, %v110, 0
  %212 = vmatprep.subr.bf16.mxu0 0
  %213 = vmatpush1.bf16.msra.mxu0 %v210
  %214 = vmatprep.subr.bf16.mxu0 0
  %215 = vmatpush1.bf16.msra.mxu0 0
  %216 = vmatprep.subr.bf16.mxu0 0
  %217 = vmatpush1.bf16.msra.mxu0 0
  %218 = vmatprep.subr.bf16.mxu0 0
  %219 = vmatpush1.bf16.msra.mxu0 0
  %220 = vmatprep.subr.bf16.mxu0 0
  %221 = vmatpush1.bf16.msra.mxu0 0
  %222 = vmatprep.subr.bf16.mxu0 0
  %223 = vmatpush1.bf16.msra.mxu0 0
  %224 = vmatprep.subr.bf16.mxu0 0
  %225 = vmatpush1.bf16.msra.mxu0 0
  %226 = vmatprep.subr.bf16.mxu0 0
  %227 = vmatpush1.bf16.msra.mxu0 0
  %228 = vmatprep.subr.bf16.mxu0 0
  %229 = vmatpush1.bf16.msra.mxu0 0
  %230 = vmatprep.subr.bf16.mxu0 0
  %231 = vmatpush1.bf16.msra.mxu0 0
  %232 = vmatprep.subr.bf16.mxu0 0
  %233 = vmatpush1.bf16.msra.mxu0 0
  %234 = vmatprep.subr.bf16.mxu0 0
  %235 = vmatpush1.bf16.msra.mxu0 0
  %236 = vmatprep.subr.bf16.mxu0 0
  %237 = vmatpush1.bf16.msra.mxu0 0
  %238 = vmatprep.subr.bf16.mxu0 0
  %239 = vmatpush1.bf16.msra.mxu0 0
  %240 = vmatprep.subr.bf16.mxu0 0
  %241 = vmatpush1.bf16.msra.mxu0 0
  %242 = vmatprep.subr.bf16.mxu0 0
  %243 = vmatpush1.bf16.msra.mxu0 0
  %244 = vmatprep.mubr.bf16.mxu0 0
  %245 = vmatmul.mubr.bf16.gmra.mrb[0].mxu0 %v113
  %v246 = vpop.f32.mrb[0].mxu0
  %v247 = vadd.f32 0.0, %v246
  %v248 = vpop.f32.mrb[0].mxu0
  %v249 = vpop.f32.mrb[0].mxu0
  %v250 = vadd.f32 0.0, %v249
  %v251 = vpop.f32.mrb[0].mxu0
  %252 = vmatprep.mubr.bf16.mxu0 0
  %253 = vmatmul.mubr.bf16.gmra.mrb[0].mxu0 %v116
  %v254 = vpop.f32.mrb[0].mxu0
  %v255 = vadd.f32 0.0, %v254
  %v256 = vpop.f32.mrb[0].mxu0
  %v257 = vpop.f32.mrb[0].mxu0
  %v258 = vadd.f32 0.0, %v257
  %v259 = vpop.f32.mrb[0].mxu0
  %260 = vmatprep.mubr.bf16.mxu0 0
  %261 = vmatmul.mubr.bf16.gmra.mrb[0].mxu0 %v119
  %v262 = vpop.f32.mrb[0].mxu0
  %v263 = vadd.f32 0.0, %v262
  %v264 = vpop.f32.mrb[0].mxu0
  %v265 = vpop.f32.mrb[0].mxu0
  %v266 = vadd.f32 0.0, %v265
  %v267 = vpop.f32.mrb[0].mxu0
  %268 = vmatprep.mubr.bf16.mxu0 0
  %269 = vmatmul.mubr.bf16.gmra.mrb[0].mxu0 %v122
  %v270 = vpop.f32.mrb[0].mxu0
  %v271 = vadd.f32 0.0, %v270
  %v272 = vpop.f32.mrb[0].mxu0
  %v273 = vpop.f32.mrb[0].mxu0
  %v274 = vadd.f32 0.0, %v273
  %v275 = vpop.f32.mrb[0].mxu0
  %276 = vmatprep.mubr.bf16.mxu0 0
  %277 = vmatmul.mubr.bf16.gmra.mrb[0].mxu0 %v125
  %v278 = vpop.f32.mrb[0].mxu0
  %v279 = vadd.f32 0.0, %v278
  %v280 = vpop.f32.mrb[0].mxu0
  %v281 = vpop.f32.mrb[0].mxu0
  %v282 = vadd.f32 0.0, %v281
  %v283 = vpop.f32.mrb[0].mxu0
  %284 = vmatprep.mubr.bf16.mxu0 0
  %285 = vmatmul.mubr.bf16.gmra.mrb[0].mxu0 %v128
  %v286 = vpop.f32.mrb[0].mxu0
  %v287 = vadd.f32 0.0, %v286
  %v288 = vpop.f32.mrb[0].mxu0
  %v289 = vpop.f32.mrb[0].mxu0
  %v290 = vadd.f32 0.0, %v289
  %v291 = vpop.f32.mrb[0].mxu0
  %292 = vmatprep.mubr.bf16.mxu0 0
  %293 = vmatmul.mubr.bf16.gmra.mrb[0].mxu0 %v131
  %v294 = vpop.f32.mrb[0].mxu0
  %v295 = vadd.f32 0.0, %v294
  %v296 = vpop.f32.mrb[0].mxu0
  %v297 = vpop.f32.mrb[0].mxu0
  %v298 = vadd.f32 0.0, %v297
  %v299 = vpop.f32.mrb[0].mxu0
  %300 = vmatprep.mubr.bf16.mxu0 0
  %301 = vmatmul.mubr.bf16.gmra.mrb[0].mxu0 %v134
  %v302 = vpop.f32.mrb[0].mxu0
  %v303 = vadd.f32 0.0, %v302
  %v304 = vpop.f32.mrb[0].mxu0
  %v305 = vpop.f32.mrb[0].mxu0
  %v306 = vadd.f32 0.0, %v305
  %v307 = vpop.f32.mrb[0].mxu0
  %308 = vmatprep.mubr.bf16.mxu0 0
  %309 = vmatmul.mubr.bf16.gmra.mrb[0].mxu0 %v137
  %v310 = vpop.f32.mrb[0].mxu0
  %v311 = vadd.f32 0.0, %v310
  %v312 = vpop.f32.mrb[0].mxu0
  %v313 = vpop.f32.mrb[0].mxu0
  %v314 = vadd.f32 0.0, %v313
  %v315 = vpop.f32.mrb[0].mxu0
  %316 = vmatprep.mubr.bf16.mxu0 0
  %317 = vmatmul.mubr.bf16.gmra.mrb[0].mxu0 %v140
  %v318 = vpop.f32.mrb[0].mxu0
  %v319 = vadd.f32 0.0, %v318
  %v320 = vpop.f32.mrb[0].mxu0
  %v321 = vpop.f32.mrb[0].mxu0
  %v322 = vadd.f32 0.0, %v321
  %v323 = vpop.f32.mrb[0].mxu0
  %324 = vmatprep.mubr.bf16.mxu0 0
  %325 = vmatmul.mubr.bf16.gmra.mrb[0].mxu0 %v143
  %v326 = vpop.f32.mrb[0].mxu0
  %v327 = vadd.f32 0.0, %v326
  %v328 = vpop.f32.mrb[0].mxu0
  %v329 = vpop.f32.mrb[0].mxu0
  %v330 = vadd.f32 0.0, %v329
  %v331 = vpop.f32.mrb[0].mxu0
  %332 = vmatprep.mubr.bf16.mxu0 0
  %333 = vmatmul.mubr.bf16.gmra.mrb[0].mxu0 %v146
  %v334 = vpop.f32.mrb[0].mxu0
  %v335 = vadd.f32 0.0, %v334
  %v336 = vpop.f32.mrb[0].mxu0
  %v337 = vpop.f32.mrb[0].mxu0
  %v338 = vadd.f32 0.0, %v337
  %v339 = vpop.f32.mrb[0].mxu0
  %340 = vmatprep.mubr.bf16.mxu0 0
  %341 = vmatmul.mubr.bf16.gmra.mrb[0].mxu0 %v149
  %v342 = vpop.f32.mrb[0].mxu0
  %v343 = vadd.f32 0.0, %v342
  %v344 = vpop.f32.mrb[0].mxu0
  %v345 = vpop.f32.mrb[0].mxu0
  %v346 = vadd.f32 0.0, %v345
  %v347 = vpop.f32.mrb[0].mxu0
  %348 = vmatprep.mubr.bf16.mxu0 0
  %349 = vmatmul.mubr.bf16.gmra.mrb[0].mxu0 %v152
  %v350 = vpop.f32.mrb[0].mxu0
  %v351 = vadd.f32 0.0, %v350
  %v352 = vpop.f32.mrb[0].mxu0
  %v353 = vpop.f32.mrb[0].mxu0
  %v354 = vadd.f32 0.0, %v353
  %v355 = vpop.f32.mrb[0].mxu0
  %356 = vmatprep.mubr.bf16.mxu0 0
  %357 = vmatmul.mubr.bf16.gmra.mrb[0].mxu0 %v155
  %v358 = vpop.f32.mrb[0].mxu0
  %v359 = vadd.f32 0.0, %v358
  %v360 = vpop.f32.mrb[0].mxu0
  %v361 = vpop.f32.mrb[0].mxu0
  %v362 = vadd.f32 0.0, %v361
  %v363 = vpop.f32.mrb[0].mxu0
  %364 = vmatprep.mubr.bf16.mxu0 0
  %365 = vmatmul.mubr.bf16.gmra.mrb[0].mxu0 %v158
  %v366 = vpop.f32.mrb[0].mxu0
  %v367 = vadd.f32 0.0, %v366
  %v368 = vpop.f32.mrb[0].mxu0
  %v369 = vpop.f32.mrb[0].mxu0
  %v370 = vadd.f32 0.0, %v369
  %v371 = vpop.f32.mrb[0].mxu0
  %372 = vmatprep.mubr.bf16.mxu0 0
  %373 = vmatmul.mubr.bf16.gmra.mrb[0].mxu0 %v161
  %v374 = vpop.f32.mrb[0].mxu0
  %v375 = vadd.f32 0.0, %v374
  %v376 = vpop.f32.mrb[0].mxu0
  %v377 = vpop.f32.mrb[0].mxu0
  %v378 = vadd.f32 0.0, %v377
  %v379 = vpop.f32.mrb[0].mxu0
  %380 = vmatprep.mubr.bf16.mxu0 0
  %381 = vmatmul.mubr.bf16.gmra.mrb[0].mxu0 %v164
  %v382 = vpop.f32.mrb[0].mxu0
  %v383 = vadd.f32 0.0, %v382
  %v384 = vpop.f32.mrb[0].mxu0
  %v385 = vpop.f32.mrb[0].mxu0
  %v386 = vadd.f32 0.0, %v385
  %v387 = vpop.f32.mrb[0].mxu0
  %388 = vmatprep.mubr.bf16.mxu0 0
  %389 = vmatmul.mubr.bf16.gmra.mrb[0].mxu0 %v167
  %v390 = vpop.f32.mrb[0].mxu0
  %v391 = vadd.f32 0.0, %v390
  %v392 = vpop.f32.mrb[0].mxu0
  %v393 = vpop.f32.mrb[0].mxu0
  %v394 = vadd.f32 0.0, %v393
  %v395 = vpop.f32.mrb[0].mxu0
  %396 = vmatprep.mubr.bf16.mxu0 0
  %397 = vmatmul.mubr.bf16.gmra.mrb[0].mxu0 %v170
  %v398 = vpop.f32.mrb[0].mxu0
  %v399 = vadd.f32 0.0, %v398
  %v400 = vpop.f32.mrb[0].mxu0
  %v401 = vpop.f32.mrb[0].mxu0
  %v402 = vadd.f32 0.0, %v401
  %v403 = vpop.f32.mrb[0].mxu0
  %404 = vmatprep.mubr.bf16.mxu0 0
  %405 = vmatmul.mubr.bf16.gmra.mrb[0].mxu0 %v173
  %v406 = vpop.f32.mrb[0].mxu0
  %v407 = vadd.f32 0.0, %v406
  %v408 = vpop.f32.mrb[0].mxu0
  %v409 = vpop.f32.mrb[0].mxu0
  %v410 = vadd.f32 0.0, %v409
  %v411 = vpop.f32.mrb[0].mxu0
  %412 = vmatprep.mubr.bf16.mxu0 0
  %413 = vmatmul.mubr.bf16.gmra.mrb[0].mxu0 %v176
  %v414 = vpop.f32.mrb[0].mxu0
  %v415 = vadd.f32 0.0, %v414
  %v416 = vpop.f32.mrb[0].mxu0
  %v417 = vpop.f32.mrb[0].mxu0
  %v418 = vadd.f32 0.0, %v417
  %v419 = vpop.f32.mrb[0].mxu0
  %420 = vmatprep.mubr.bf16.mxu0 0
  %421 = vmatmul.mubr.bf16.gmra.mrb[0].mxu0 %v179
  %v422 = vpop.f32.mrb[0].mxu0
  %v423 = vadd.f32 0.0, %v422
  %v424 = vpop.f32.mrb[0].mxu0
  %v425 = vpop.f32.mrb[0].mxu0
  %v426 = vadd.f32 0.0, %v425
  %v427 = vpop.f32.mrb[0].mxu0
  %428 = vmatprep.mubr.bf16.mxu0 0
  %429 = vmatmul.mubr.bf16.gmra.mrb[0].mxu0 %v182
  %v430 = vpop.f32.mrb[0].mxu0
  %v431 = vadd.f32 0.0, %v430
  %v432 = vpop.f32.mrb[0].mxu0
  %v433 = vpop.f32.mrb[0].mxu0
  %v434 = vadd.f32 0.0, %v433
  %v435 = vpop.f32.mrb[0].mxu0
  %436 = vmatprep.mubr.bf16.mxu0 0
  %437 = vmatmul.mubr.bf16.gmra.mrb[0].mxu0 %v185
  %v438 = vpop.f32.mrb[0].mxu0
  %v439 = vadd.f32 0.0, %v438
  %v440 = vpop.f32.mrb[0].mxu0
  %v441 = vpop.f32.mrb[0].mxu0
  %v442 = vadd.f32 0.0, %v441
  %v443 = vpop.f32.mrb[0].mxu0
  %444 = vmatprep.mubr.bf16.mxu0 0
  %445 = vmatmul.mubr.bf16.gmra.mrb[0].mxu0 %v188
  %v446 = vpop.f32.mrb[0].mxu0
  %v447 = vadd.f32 0.0, %v446
  %v448 = vpop.f32.mrb[0].mxu0
  %v449 = vpop.f32.mrb[0].mxu0
  %v450 = vadd.f32 0.0, %v449
  %v451 = vpop.f32.mrb[0].mxu0
  %452 = vmatprep.mubr.bf16.mxu0 0
  %453 = vmatmul.mubr.bf16.gmra.mrb[0].mxu0 %v191
  %v454 = vpop.f32.mrb[0].mxu0
  %v455 = vadd.f32 0.0, %v454
  %v456 = vpop.f32.mrb[0].mxu0
  %v457 = vpop.f32.mrb[0].mxu0
  %v458 = vadd.f32 0.0, %v457
  %v459 = vpop.f32.mrb[0].mxu0
  %460 = vmatprep.mubr.bf16.mxu0 0
  %461 = vmatmul.mubr.bf16.gmra.mrb[0].mxu0 %v194
  %v462 = vpop.f32.mrb[0].mxu0
  %v463 = vadd.f32 0.0, %v462
  %v464 = vpop.f32.mrb[0].mxu0
  %v465 = vpop.f32.mrb[0].mxu0
  %v466 = vadd.f32 0.0, %v465
  %v467 = vpop.f32.mrb[0].mxu0
  %468 = vmatprep.mubr.bf16.mxu0 0
  %469 = vmatmul.mubr.bf16.gmra.mrb[0].mxu0 %v197
  %v470 = vpop.f32.mrb[0].mxu0
  %v471 = vadd.f32 0.0, %v470
  %v472 = vpop.f32.mrb[0].mxu0
  %v473 = vpop.f32.mrb[0].mxu0
  %v474 = vadd.f32 0.0, %v473
  %v475 = vpop.f32.mrb[0].mxu0
  %476 = vmatprep.mubr.bf16.mxu0 0
  %477 = vmatmul.mubr.bf16.gmra.mrb[0].mxu0 %v200
  %v478 = vpop.f32.mrb[0].mxu0
  %v479 = vadd.f32 0.0, %v478
  %v480 = vpop.f32.mrb[0].mxu0
  %v481 = vpop.f32.mrb[0].mxu0
  %v482 = vadd.f32 0.0, %v481
  %v483 = vpop.f32.mrb[0].mxu0
  %484 = vmatprep.mubr.bf16.mxu0 0
  %485 = vmatmul.mubr.bf16.gmra.mrb[0].mxu0 %v203
  %v486 = vpop.f32.mrb[0].mxu0
  %v487 = vadd.f32 0.0, %v486
  %v488 = vpop.f32.mrb[0].mxu0
  %v489 = vpop.f32.mrb[0].mxu0
  %v490 = vadd.f32 0.0, %v489
  %v491 = vpop.f32.mrb[0].mxu0
  %492 = vmatprep.mubr.bf16.mxu0 0
  %493 = vmatmul.mubr.bf16.gmra.mrb[0].mxu0 %v206
  %v494 = vpop.f32.mrb[0].mxu0
  %v495 = vadd.f32 0.0, %v494
  %v496 = vpop.f32.mrb[0].mxu0
  %v497 = vpop.f32.mrb[0].mxu0
  %v498 = vadd.f32 0.0, %v497
  %v499 = vpop.f32.mrb[0].mxu0
  %500 = vdwg.mxu0
  %v501 = vpack.c.bf16 %v250, %v247
  %v502 = vpack.c.bf16 %v258, %v255
  %v503 = vpack.c.bf16 %v266, %v263
  %v504 = vpack.c.bf16 %v274, %v271
  %v505 = vpack.c.bf16 %v282, %v279
  %v506 = vpack.c.bf16 %v290, %v287
  %v507 = vpack.c.bf16 %v298, %v295
  %v508 = vpack.c.bf16 %v306, %v303
  %v509 = vpack.c.bf16 %v314, %v311
  %v510 = vpack.c.bf16 %v322, %v319
  %v511 = vpack.c.bf16 %v330, %v327
  %v512 = vpack.c.bf16 %v338, %v335
  %v513 = vpack.c.bf16 %v346, %v343
  %v514 = vpack.c.bf16 %v354, %v351
  %v515 = vpack.c.bf16 %v362, %v359
  %v516 = vpack.c.bf16 %v370, %v367
  %v517 = vpack.c.bf16 %v378, %v375
  %v518 = vpack.c.bf16 %v386, %v383
  %v519 = vpack.c.bf16 %v394, %v391
  %v520 = vpack.c.bf16 %v402, %v399
  %v521 = vpack.c.bf16 %v410, %v407
  %v522 = vpack.c.bf16 %v418, %v415
  %v523 = vpack.c.bf16 %v426, %v423
  %v524 = vpack.c.bf16 %v434, %v431
  %v525 = vpack.c.bf16 %v442, %v439
  %v526 = vpack.c.bf16 %v450, %v447
  %v527 = vpack.c.bf16 %v458, %v455
  %v528 = vpack.c.bf16 %v466, %v463
  %v529 = vpack.c.bf16 %v474, %v471
  %v530 = vpack.c.bf16 %v482, %v479
  %v531 = vpack.c.bf16 %v490, %v487
  %v532 = vpack.c.bf16 %v498, %v495
  %v533 = vunpack.c.l.bf16 %v501
  %v534 = vunpack.c.h.bf16 %v501
  %v535 = vunpack.c.l.bf16 %v502
  %v536 = vunpack.c.h.bf16 %v502
  %v537 = vunpack.c.l.bf16 %v503
  %v538 = vunpack.c.h.bf16 %v503
  %v539 = vunpack.c.l.bf16 %v504
  %v540 = vunpack.c.h.bf16 %v504
  %v541 = vunpack.c.l.bf16 %v505
  %v542 = vunpack.c.h.bf16 %v505
  %v543 = vunpack.c.l.bf16 %v506
  %v544 = vunpack.c.h.bf16 %v506
  %v545 = vunpack.c.l.bf16 %v507
  %v546 = vunpack.c.h.bf16 %v507
  %v547 = vunpack.c.l.bf16 %v508
  %v548 = vunpack.c.h.bf16 %v508
  %v549 = vunpack.c.l.bf16 %v509
  %v550 = vunpack.c.h.bf16 %v509
  %v551 = vunpack.c.l.bf16 %v510
  %v552 = vunpack.c.h.bf16 %v510
  %v553 = vunpack.c.l.bf16 %v511
  %v554 = vunpack.c.h.bf16 %v511
  %v555 = vunpack.c.l.bf16 %v512
  %v556 = vunpack.c.h.bf16 %v512
  %v557 = vunpack.c.l.bf16 %v513
  %v558 = vunpack.c.h.bf16 %v513
  %v559 = vunpack.c.l.bf16 %v514
  %v560 = vunpack.c.h.bf16 %v514
  %v561 = vunpack.c.l.bf16 %v515
  %v562 = vunpack.c.h.bf16 %v515
  %v563 = vunpack.c.l.bf16 %v516
  %v564 = vunpack.c.h.bf16 %v516
  %v565 = vunpack.c.l.bf16 %v517
  %v566 = vunpack.c.h.bf16 %v517
  %v567 = vunpack.c.l.bf16 %v518
  %v568 = vunpack.c.h.bf16 %v518
  %v569 = vunpack.c.l.bf16 %v519
  %v570 = vunpack.c.h.bf16 %v519
  %v571 = vunpack.c.l.bf16 %v520
  %v572 = vunpack.c.h.bf16 %v520
  %v573 = vunpack.c.l.bf16 %v521
  %v574 = vunpack.c.h.bf16 %v521
  %v575 = vunpack.c.l.bf16 %v522
  %v576 = vunpack.c.h.bf16 %v522
  %v577 = vunpack.c.l.bf16 %v523
  %v578 = vunpack.c.h.bf16 %v523
  %v579 = vunpack.c.l.bf16 %v524
  %v580 = vunpack.c.h.bf16 %v524
  %v581 = vunpack.c.l.bf16 %v525
  %v582 = vunpack.c.h.bf16 %v525
  %v583 = vunpack.c.l.bf16 %v526
  %v584 = vunpack.c.h.bf16 %v526
  %v585 = vunpack.c.l.bf16 %v527
  %v586 = vunpack.c.h.bf16 %v527
  %v587 = vunpack.c.l.bf16 %v528
  %v588 = vunpack.c.h.bf16 %v528
  %v589 = vunpack.c.l.bf16 %v529
  %v590 = vunpack.c.h.bf16 %v529
  %v591 = vunpack.c.l.bf16 %v530
  %v592 = vunpack.c.h.bf16 %v530
  %v593 = vunpack.c.l.bf16 %v531
  %v594 = vunpack.c.h.bf16 %v531
  %v595 = vunpack.c.l.bf16 %v532
  %v596 = vunpack.c.h.bf16 %v532
  %p597 = scmp.eq.s32.totalorder 0, 0
  // Predicated region
  $region10: #{bottleneck_forward.3} parent=0 // pred_check
    %p598 = pneg %p597
  $region11: #{bottleneck_forward.3} parent=0 // pred_check_branch
    %600 = sbr.rel (%p598) target = $region13
  $region12: #{bottleneck_forward.3} parent=0 // pred_region
    %vm601 = vcmask 58368
    %602 = vst.msk [vmem:[#allocation2] sm:$0x3] %vm601, 0.0
  $region13: #{bottleneck_forward.3} parent=0 // pred_fallthru
    _
  %v603 = vld [vmem:[#allocation2] sm:$0x3]
  %vm604 = vcmask 64512
  %v605 = vsel %vm604, %v533, 0.0
  %v606 = vsel %vm604, %v534, 0.0
  %v607 = vadd.f32 %v605, %v606
  %v608 = vsel %vm604, %v535, 0.0
  %v609 = vadd.f32 %v607, %v608
  %v610 = vsel %vm604, %v536, 0.0
  %v611 = vadd.f32 %v609, %v610
  %v612 = vsel %vm604, %v537, 0.0
  %v613 = vadd.f32 %v611, %v612
  %v614 = vsel %vm604, %v538, 0.0
  %v615 = vadd.f32 %v613, %v614
  %v616 = vsel %vm604, %v539, 0.0
  %v617 = vadd.f32 %v615, %v616
  %v618 = vsel %vm604, %v540, 0.0
  %v619 = vadd.f32 %v617, %v618
  %v620 = vsel %vm604, %v541, 0.0
  %v621 = vadd.f32 %v619, %v620
  %v622 = vsel %vm604, %v542, 0.0
  %v623 = vadd.f32 %v621, %v622
  %v624 = vsel %vm604, %v543, 0.0
  %v625 = vadd.f32 %v623, %v624
  %v626 = vsel %vm604, %v544, 0.0
  %v627 = vadd.f32 %v625, %v626
  %v628 = vsel %vm604, %v545, 0.0
  %v629 = vadd.f32 %v627, %v628
  %v630 = vsel %vm604, %v546, 0.0
  %v631 = vadd.f32 %v629, %v630
  %v632 = vsel %vm604, %v547, 0.0
  %v633 = vadd.f32 %v631, %v632
  %v634 = vsel %vm604, %v548, 0.0
  %v635 = vadd.f32 %v633, %v634
  %v636 = vsel %vm604, %v549, 0.0
  %v637 = vadd.f32 %v635, %v636
  %v638 = vsel %vm604, %v550, 0.0
  %v639 = vadd.f32 %v637, %v638
  %v640 = vsel %vm604, %v551, 0.0
  %v641 = vadd.f32 %v639, %v640
  %v642 = vsel %vm604, %v552, 0.0
  %v643 = vadd.f32 %v641, %v642
  %v644 = vsel %vm604, %v553, 0.0
  %v645 = vadd.f32 %v643, %v644
  %v646 = vsel %vm604, %v554, 0.0
  %v647 = vadd.f32 %v645, %v646
  %v648 = vsel %vm604, %v555, 0.0
  %v649 = vadd.f32 %v647, %v648
  %v650 = vsel %vm604, %v556, 0.0
  %v651 = vadd.f32 %v649, %v650
  %v652 = vsel %vm604, %v557, 0.0
  %v653 = vadd.f32 %v651, %v652
  %v654 = vsel %vm604, %v558, 0.0
  %v655 = vadd.f32 %v653, %v654
  %v656 = vsel %vm604, %v559, 0.0
  %v657 = vadd.f32 %v655, %v656
  %v658 = vsel %vm604, %v560, 0.0
  %v659 = vadd.f32 %v657, %v658
  %v660 = vsel %vm604, %v561, 0.0
  %v661 = vadd.f32 %v659, %v660
  %v662 = vsel %vm604, %v562, 0.0
  %v663 = vadd.f32 %v661, %v662
  %v664 = vsel %vm604, %v563, 0.0
  %v665 = vadd.f32 %v663, %v664
  %v666 = vsel %vm604, %v564, 0.0
  %v667 = vadd.f32 %v665, %v666
  %v668 = vsel %vm604, %v565, 0.0
  %v669 = vadd.f32 %v667, %v668
  %v670 = vsel %vm604, %v566, 0.0
  %v671 = vadd.f32 %v669, %v670
  %v672 = vsel %vm604, %v567, 0.0
  %v673 = vadd.f32 %v671, %v672
  %v674 = vsel %vm604, %v568, 0.0
  %v675 = vadd.f32 %v673, %v674
  %v676 = vsel %vm604, %v569, 0.0
  %v677 = vadd.f32 %v675, %v676
  %v678 = vsel %vm604, %v570, 0.0
  %v679 = vadd.f32 %v677, %v678
  %v680 = vsel %vm604, %v571, 0.0
  %v681 = vadd.f32 %v679, %v680
  %v682 = vsel %vm604, %v572, 0.0
  %v683 = vadd.f32 %v681, %v682
  %v684 = vsel %vm604, %v573, 0.0
  %v685 = vadd.f32 %v683, %v684
  %v686 = vsel %vm604, %v574, 0.0
  %v687 = vadd.f32 %v685, %v686
  %v688 = vsel %vm604, %v575, 0.0
  %v689 = vadd.f32 %v687, %v688
  %v690 = vsel %vm604, %v576, 0.0
  %v691 = vadd.f32 %v689, %v690
  %v692 = vsel %vm604, %v577, 0.0
  %v693 = vadd.f32 %v691, %v692
  %v694 = vsel %vm604, %v578, 0.0
  %v695 = vadd.f32 %v693, %v694
  %v696 = vsel %vm604, %v579, 0.0
  %v697 = vadd.f32 %v695, %v696
  %v698 = vsel %vm604, %v580, 0.0
  %v699 = vadd.f32 %v697, %v698
  %v700 = vsel %vm604, %v581, 0.0
  %v701 = vadd.f32 %v699, %v700
  %v702 = vsel %vm604, %v582, 0.0
  %v703 = vadd.f32 %v701, %v702
  %v704 = vsel %vm604, %v583, 0.0
  %v705 = vadd.f32 %v703, %v704
  %v706 = vsel %vm604, %v584, 0.0
  %v707 = vadd.f32 %v705, %v706
  %v708 = vsel %vm604, %v585, 0.0
  %v709 = vadd.f32 %v707, %v708
  %v710 = vsel %vm604, %v586, 0.0
  %v711 = vadd.f32 %v709, %v710
  %v712 = vsel %vm604, %v587, 0.0
  %v713 = vadd.f32 %v711, %v712
  %v714 = vsel %vm604, %v588, 0.0
  %v715 = vadd.f32 %v713, %v714
  %v716 = vsel %vm604, %v589, 0.0
  %v717 = vadd.f32 %v715, %v716
  %v718 = vsel %vm604, %v590, 0.0
  %v719 = vadd.f32 %v717, %v718
  %v720 = vsel %vm604, %v591, 0.0
  %v721 = vadd.f32 %v719, %v720
  %v722 = vsel %vm604, %v592, 0.0
  %v723 = vadd.f32 %v721, %v722
  %v724 = vsel %vm604, %v593, 0.0
  %v725 = vadd.f32 %v723, %v724
  %v726 = vsel %vm604, %v594, 0.0
  %v727 = vadd.f32 %v725, %v726
  %v728 = vsel %vm604, %v595, 0.0
  %v729 = vadd.f32 %v727, %v728
  %v730 = vsel %vm604, %v596, 0.0
  %v731 = vadd.f32 %v729, %v730
  %v732 = vrot.slane %v731, 4
  %v733 = vadd.f32 %v731, %v732
  %v734 = vrot.slane %v733, 2
  %v735 = vadd.f32 %v733, %v734
  %v736 = vrot.slane %v735, 1
  %v737 = vadd.f32 %v735, %v736
  %v738 = vmul.f32 %v533, %v533
  %v739 = vmul.f32 %v534, %v534
  %v740 = vmul.f32 %v535, %v535
  %v741 = vmul.f32 %v536, %v536
  %v742 = vmul.f32 %v537, %v537
  %v743 = vmul.f32 %v538, %v538
  %v744 = vmul.f32 %v539, %v539
  %v745 = vmul.f32 %v540, %v540
  %v746 = vmul.f32 %v541, %v541
  %v747 = vmul.f32 %v542, %v542
  %v748 = vmul.f32 %v543, %v543
  %v749 = vmul.f32 %v544, %v544
  %v750 = vmul.f32 %v545, %v545
  %v751 = vmul.f32 %v546, %v546
  %v752 = vmul.f32 %v547, %v547
  %v753 = vmul.f32 %v548, %v548
  %v754 = vmul.f32 %v549, %v549
  %v755 = vmul.f32 %v550, %v550
  %v756 = vmul.f32 %v551, %v551
  %v757 = vmul.f32 %v552, %v552
  %v758 = vmul.f32 %v553, %v553
  %v759 = vmul.f32 %v554, %v554
  %v760 = vmul.f32 %v555, %v555
  %v761 = vmul.f32 %v556, %v556
  %v762 = vmul.f32 %v557, %v557
  %v763 = vmul.f32 %v558, %v558
  %v764 = vmul.f32 %v559, %v559
  %v765 = vmul.f32 %v560, %v560
  %v766 = vmul.f32 %v561, %v561
  %v767 = vmul.f32 %v562, %v562
  %v768 = vmul.f32 %v563, %v563
  %v769 = vmul.f32 %v564, %v564
  %v770 = vmul.f32 %v565, %v565
  %v771 = vmul.f32 %v566, %v566
  %v772 = vmul.f32 %v567, %v567
  %v773 = vmul.f32 %v568, %v568
  %v774 = vmul.f32 %v569, %v569
  %v775 = vmul.f32 %v570, %v570
  %v776 = vmul.f32 %v571, %v571
  %v777 = vmul.f32 %v572, %v572
  %v778 = vmul.f32 %v573, %v573
  %v779 = vmul.f32 %v574, %v574
  %v780 = vmul.f32 %v575, %v575
  %v781 = vmul.f32 %v576, %v576
  %v782 = vmul.f32 %v577, %v577
  %v783 = vmul.f32 %v578, %v578
  %v784 = vmul.f32 %v579, %v579
  %v785 = vmul.f32 %v580, %v580
  %v786 = vmul.f32 %v581, %v581
  %v787 = vmul.f32 %v582, %v582
  %v788 = vmul.f32 %v583, %v583
  %v789 = vmul.f32 %v584, %v584
  %v790 = vmul.f32 %v585, %v585
  %v791 = vmul.f32 %v586, %v586
  %v792 = vmul.f32 %v587, %v587
  %v793 = vmul.f32 %v588, %v588
  %v794 = vmul.f32 %v589, %v589
  %v795 = vmul.f32 %v590, %v590
  %v796 = vmul.f32 %v591, %v591
  %v797 = vmul.f32 %v592, %v592
  %v798 = vmul.f32 %v593, %v593
  %v799 = vmul.f32 %v594, %v594
  %v800 = vmul.f32 %v595, %v595
  %v801 = vmul.f32 %v596, %v596
  %v802 = vsel %vm604, %v738, 0.0
  %v803 = vsel %vm604, %v739, 0.0
  %v804 = vadd.f32 %v802, %v803
  %v805 = vsel %vm604, %v740, 0.0
  %v806 = vadd.f32 %v804, %v805
  %v807 = vsel %vm604, %v741, 0.0
  %v808 = vadd.f32 %v806, %v807
  %v809 = vsel %vm604, %v742, 0.0
  %v810 = vadd.f32 %v808, %v809
  %v811 = vsel %vm604, %v743, 0.0
  %v812 = vadd.f32 %v810, %v811
  %v813 = vsel %vm604, %v744, 0.0
  %v814 = vadd.f32 %v812, %v813
  %v815 = vsel %vm604, %v745, 0.0
  %v816 = vadd.f32 %v814, %v815
  %v817 = vsel %vm604, %v746, 0.0
  %v818 = vadd.f32 %v816, %v817
  %v819 = vsel %vm604, %v747, 0.0
  %v820 = vadd.f32 %v818, %v819
  %v821 = vsel %vm604, %v748, 0.0
  %v822 = vadd.f32 %v820, %v821
  %v823 = vsel %vm604, %v749, 0.0
  %v824 = vadd.f32 %v822, %v823
  %v825 = vsel %vm604, %v750, 0.0
  %v826 = vadd.f32 %v824, %v825
  %v827 = vsel %vm604, %v751, 0.0
  %v828 = vadd.f32 %v826, %v827
  %v829 = vsel %vm604, %v752, 0.0
  %v830 = vadd.f32 %v828, %v829
  %v831 = vsel %vm604, %v753, 0.0
  %v832 = vadd.f32 %v830, %v831
  %v833 = vsel %vm604, %v754, 0.0
  %v834 = vadd.f32 %v832, %v833
  %v835 = vsel %vm604, %v755, 0.0
  %v836 = vadd.f32 %v834, %v835
  %v837 = vsel %vm604, %v756, 0.0
  %v838 = vadd.f32 %v836, %v837
  %v839 = vsel %vm604, %v757, 0.0
  %v840 = vadd.f32 %v838, %v839
  %v841 = vsel %vm604, %v758, 0.0
  %v842 = vadd.f32 %v840, %v841
  %v843 = vsel %vm604, %v759, 0.0
  %v844 = vadd.f32 %v842, %v843
  %v845 = vsel %vm604, %v760, 0.0
  %v846 = vadd.f32 %v844, %v845
  %v847 = vsel %vm604, %v761, 0.0
  %v848 = vadd.f32 %v846, %v847
  %v849 = vsel %vm604, %v762, 0.0
  %v850 = vadd.f32 %v848, %v849
  %v851 = vsel %vm604, %v763, 0.0
  %v852 = vadd.f32 %v850, %v851
  %v853 = vsel %vm604, %v764, 0.0
  %v854 = vadd.f32 %v852, %v853
  %v855 = vsel %vm604, %v765, 0.0
  %v856 = vadd.f32 %v854, %v855
  %v857 = vsel %vm604, %v766, 0.0
  %v858 = vadd.f32 %v856, %v857
  %v859 = vsel %vm604, %v767, 0.0
  %v860 = vadd.f32 %v858, %v859
  %v861 = vsel %vm604, %v768, 0.0
  %v862 = vadd.f32 %v860, %v861
  %v863 = vsel %vm604, %v769, 0.0
  %v864 = vadd.f32 %v862, %v863
  %v865 = vsel %vm604, %v770, 0.0
  %v866 = vadd.f32 %v864, %v865
  %v867 = vsel %vm604, %v771, 0.0
  %v868 = vadd.f32 %v866, %v867
  %v869 = vsel %vm604, %v772, 0.0
  %v870 = vadd.f32 %v868, %v869
  %v871 = vsel %vm604, %v773, 0.0
  %v872 = vadd.f32 %v870, %v871
  %v873 = vsel %vm604, %v774, 0.0
  %v874 = vadd.f32 %v872, %v873
  %v875 = vsel %vm604, %v775, 0.0
  %v876 = vadd.f32 %v874, %v875
  %v877 = vsel %vm604, %v776, 0.0
  %v878 = vadd.f32 %v876, %v877
  %v879 = vsel %vm604, %v777, 0.0
  %v880 = vadd.f32 %v878, %v879
  %v881 = vsel %vm604, %v778, 0.0
  %v882 = vadd.f32 %v880, %v881
  %v883 = vsel %vm604, %v779, 0.0
  %v884 = vadd.f32 %v882, %v883
  %v885 = vsel %vm604, %v780, 0.0
  %v886 = vadd.f32 %v884, %v885
  %v887 = vsel %vm604, %v781, 0.0
  %v888 = vadd.f32 %v886, %v887
  %v889 = vsel %vm604, %v782, 0.0
  %v890 = vadd.f32 %v888, %v889
  %v891 = vsel %vm604, %v783, 0.0
  %v892 = vadd.f32 %v890, %v891
  %v893 = vsel %vm604, %v784, 0.0
  %v894 = vadd.f32 %v892, %v893
  %v895 = vsel %vm604, %v785, 0.0
  %v896 = vadd.f32 %v894, %v895
  %v897 = vsel %vm604, %v786, 0.0
  %v898 = vadd.f32 %v896, %v897
  %v899 = vsel %vm604, %v787, 0.0
  %v900 = vadd.f32 %v898, %v899
  %v901 = vsel %vm604, %v788, 0.0
  %v902 = vadd.f32 %v900, %v901
  %v903 = vsel %vm604, %v789, 0.0
  %v904 = vadd.f32 %v902, %v903
  %v905 = vsel %vm604, %v790, 0.0
  %v906 = vadd.f32 %v904, %v905
  %v907 = vsel %vm604, %v791, 0.0
  %v908 = vadd.f32 %v906, %v907
  %v909 = vsel %vm604, %v792, 0.0
  %v910 = vadd.f32 %v908, %v909
  %v911 = vsel %vm604, %v793, 0.0
  %v912 = vadd.f32 %v910, %v911
  %v913 = vsel %vm604, %v794, 0.0
  %v914 = vadd.f32 %v912, %v913
  %v915 = vsel %vm604, %v795, 0.0
  %v916 = vadd.f32 %v914, %v915
  %v917 = vsel %vm604, %v796, 0.0
  %v918 = vadd.f32 %v916, %v917
  %v919 = vsel %vm604, %v797, 0.0
  %v920 = vadd.f32 %v918, %v919
  %v921 = vsel %vm604, %v798, 0.0
  %v922 = vadd.f32 %v920, %v921
  %v923 = vsel %vm604, %v799, 0.0
  %v924 = vadd.f32 %v922, %v923
  %v925 = vsel %vm604, %v800, 0.0
  %v926 = vadd.f32 %v924, %v925
  %v927 = vsel %vm604, %v801, 0.0
  %v928 = vadd.f32 %v926, %v927
  %v929 = vrot.slane %v928, 4
  %v930 = vadd.f32 %v928, %v929
  %v931 = vrot.slane %v930, 2
  %v932 = vadd.f32 %v930, %v931
  %v933 = vrot.slane %v932, 1
  %v934 = vadd.f32 %v932, %v933
  %vm935 = vcmask 1040384
  %v936 = vsel %vm935, %v737, %v934
  %v937 = vadd.f32 %v603, %v936
  %vm938 = vcmask 58368
  %939 = vst.msk [vmem:[#allocation2] sm:$0x3] %vm938, %v937
  %v940 = vld [vmem:[#allocation2] sm:$0x3]
  %941 = vst.msk [vmem:[%s3] sm:$0x3] %vm938, %v940
  %v974 = vunpack.c.l.b16 %v501
  %v975 = vunpack.c.h.b16 %v501
  %v976 = vunpack.c.l.b16 %v502
  %v977 = vunpack.c.h.b16 %v502
  %v978 = vunpack.c.l.b16 %v503
  %v979 = vunpack.c.h.b16 %v503
  %v980 = vunpack.c.l.b16 %v504
  %v981 = vunpack.c.h.b16 %v504
  %v982 = vunpack.c.l.b16 %v505
  %v983 = vunpack.c.h.b16 %v505
  %v984 = vunpack.c.l.b16 %v506
  %v985 = vunpack.c.h.b16 %v506
  %v986 = vunpack.c.l.b16 %v507
  %v987 = vunpack.c.h.b16 %v507
  %v988 = vunpack.c.l.b16 %v508
  %v989 = vunpack.c.h.b16 %v508
  %v990 = vunpack.c.l.b16 %v509
  %v991 = vunpack.c.h.b16 %v509
  %v992 = vunpack.c.l.b16 %v510
  %v993 = vunpack.c.h.b16 %v510
  %v994 = vunpack.c.l.b16 %v511
  %v995 = vunpack.c.h.b16 %v511
  %v996 = vunpack.c.l.b16 %v512
  %v997 = vunpack.c.h.b16 %v512
  %v998 = vunpack.c.l.b16 %v513
  %v999 = vunpack.c.h.b16 %v513
  %v1000 = vunpack.c.l.b16 %v514
  %v1001 = vunpack.c.h.b16 %v514
  %v1002 = vunpack.c.l.b16 %v515
  %v1003 = vunpack.c.h.b16 %v515
  %v1004 = vunpack.c.l.b16 %v516
  %v1005 = vunpack.c.h.b16 %v516
  %v1006 = vunpack.c.l.b16 %v517
  %v1007 = vunpack.c.h.b16 %v517
  %v1008 = vunpack.c.l.b16 %v518
  %v1009 = vunpack.c.h.b16 %v518
  %v1010 = vunpack.c.l.b16 %v519
  %v1011 = vunpack.c.h.b16 %v519
  %v1012 = vunpack.c.l.b16 %v520
  %v1013 = vunpack.c.h.b16 %v520
  %v1014 = vunpack.c.l.b16 %v521
  %v1015 = vunpack.c.h.b16 %v521
  %v1016 = vunpack.c.l.b16 %v522
  %v1017 = vunpack.c.h.b16 %v522
  %v1018 = vunpack.c.l.b16 %v523
  %v1019 = vunpack.c.h.b16 %v523
  %v1020 = vunpack.c.l.b16 %v524
  %v1021 = vunpack.c.h.b16 %v524
  %v1022 = vunpack.c.l.b16 %v525
  %v1023 = vunpack.c.h.b16 %v525
  %v1024 = vunpack.c.l.b16 %v526
  %v1025 = vunpack.c.h.b16 %v526
  %v1026 = vunpack.c.l.b16 %v527
  %v1027 = vunpack.c.h.b16 %v527
  %v1028 = vunpack.c.l.b16 %v528
  %v1029 = vunpack.c.h.b16 %v528
  %v1030 = vunpack.c.l.b16 %v529
  %v1031 = vunpack.c.h.b16 %v529
  %v1032 = vunpack.c.l.b16 %v530
  %v1033 = vunpack.c.h.b16 %v530
  %v1034 = vunpack.c.l.b16 %v531
  %v1035 = vunpack.c.h.b16 %v531
  %v1036 = vunpack.c.l.b16 %v532
  %v1037 = vunpack.c.h.b16 %v532
  %v1038 = vpack.c.b16 %v974, %v974
  %v1039 = vpack.c.b16 %v975, %v975
  %v1040 = vpack.c.b16 %v976, %v976
  %v1041 = vpack.c.b16 %v977, %v977
  %v1042 = vpack.c.b16 %v978, %v978
  %v1043 = vpack.c.b16 %v979, %v979
  %v1044 = vpack.c.b16 %v980, %v980
  %v1045 = vpack.c.b16 %v981, %v981
  %v1046 = vpack.c.b16 %v982, %v982
  %v1047 = vpack.c.b16 %v983, %v983
  %v1048 = vpack.c.b16 %v984, %v984
  %v1049 = vpack.c.b16 %v985, %v985
  %v1050 = vpack.c.b16 %v986, %v986
  %v1051 = vpack.c.b16 %v987, %v987
  %v1052 = vpack.c.b16 %v988, %v988
  %v1053 = vpack.c.b16 %v989, %v989
  %v1054 = vpack.c.b16 %v990, %v990
  %v1055 = vpack.c.b16 %v991, %v991
  %v1056 = vpack.c.b16 %v992, %v992
  %v1057 = vpack.c.b16 %v993, %v993
  %v1058 = vpack.c.b16 %v994, %v994
  %v1059 = vpack.c.b16 %v995, %v995
  %v1060 = vpack.c.b16 %v996, %v996
  %v1061 = vpack.c.b16 %v997, %v997
  %v1062 = vpack.c.b16 %v998, %v998
  %v1063 = vpack.c.b16 %v999, %v999
  %v1064 = vpack.c.b16 %v1000, %v1000
  %v1065 = vpack.c.b16 %v1001, %v1001
  %v1066 = vpack.c.b16 %v1002, %v1002
  %v1067 = vpack.c.b16 %v1003, %v1003
  %v1068 = vpack.c.b16 %v1004, %v1004
  %v1069 = vpack.c.b16 %v1005, %v1005
  %v1070 = vpack.c.b16 %v1006, %v1006
  %v1071 = vpack.c.b16 %v1007, %v1007
  %v1072 = vpack.c.b16 %v1008, %v1008
  %v1073 = vpack.c.b16 %v1009, %v1009
  %v1074 = vpack.c.b16 %v1010, %v1010
  %v1075 = vpack.c.b16 %v1011, %v1011
  %v1076 = vpack.c.b16 %v1012, %v1012
  %v1077 = vpack.c.b16 %v1013, %v1013
  %v1078 = vpack.c.b16 %v1014, %v1014
  %v1079 = vpack.c.b16 %v1015, %v1015
  %v1080 = vpack.c.b16 %v1016, %v1016
  %v1081 = vpack.c.b16 %v1017, %v1017
  %v1082 = vpack.c.b16 %v1018, %v1018
  %v1083 = vpack.c.b16 %v1019, %v1019
  %v1084 = vpack.c.b16 %v1020, %v1020
  %v1085 = vpack.c.b16 %v1021, %v1021
  %v1086 = vpack.c.b16 %v1022, %v1022
  %v1087 = vpack.c.b16 %v1023, %v1023
  %v1088 = vpack.c.b16 %v1024, %v1024
  %v1089 = vpack.c.b16 %v1025, %v1025
  %v1090 = vpack.c.b16 %v1026, %v1026
  %v1091 = vpack.c.b16 %v1027, %v1027
  %v1092 = vpack.c.b16 %v1028, %v1028
  %v1093 = vpack.c.b16 %v1029, %v1029
  %v1094 = vpack.c.b16 %v1030, %v1030
  %v1095 = vpack.c.b16 %v1031, %v1031
  %v1096 = vpack.c.b16 %v1032, %v1032
  %v1097 = vpack.c.b16 %v1033, %v1033
  %v1098 = vpack.c.b16 %v1034, %v1034
  %v1099 = vpack.c.b16 %v1035, %v1035
  %v1100 = vpack.c.b16 %v1036, %v1036
  %v1101 = vpack.c.b16 %v1037, %v1037
  %vm1166 = vcmask 60416
  %1167 = vst.msk [vmem:[%s2] sm:$0xf] %vm1166, %v1038
  %1168 = vst.msk [vmem:[%s2 + $0x4] sm:$0xf] %vm1166, %v1039
  %1169 = vst.msk [vmem:[%s2 + $0x8] sm:$0xf] %vm1166, %v1040
  %1170 = vst.msk [vmem:[%s2 + $0xc] sm:$0xf] %vm1166, %v1041
  %1171 = vst.msk [vmem:[%s2 + $0x10] sm:$0xf] %vm1166, %v1042
  %1172 = vst.msk [vmem:[%s2 + $0x14] sm:$0xf] %vm1166, %v1043
  %1173 = vst.msk [vmem:[%s2 + $0x18] sm:$0xf] %vm1166, %v1044
  %1174 = vst.msk [vmem:[%s2 + $0x1c] sm:$0xf] %vm1166, %v1045
  %1175 = vst.msk [vmem:[%s2 + $0x20] sm:$0xf] %vm1166, %v1046
  %1176 = vst.msk [vmem:[%s2 + $0x24] sm:$0xf] %vm1166, %v1047
  %1177 = vst.msk [vmem:[%s2 + $0x28] sm:$0xf] %vm1166, %v1048
  %1178 = vst.msk [vmem:[%s2 + $0x2c] sm:$0xf] %vm1166, %v1049
  %1179 = vst.msk [vmem:[%s2 + $0x30] sm:$0xf] %vm1166, %v1050
  %1180 = vst.msk [vmem:[%s2 + $0x34] sm:$0xf] %vm1166, %v1051
  %1181 = vst.msk [vmem:[%s2 + $0x38] sm:$0xf] %vm1166, %v1052
  %1182 = vst.msk [vmem:[%s2 + $0x3c] sm:$0xf] %vm1166, %v1053
  %1183 = vst.msk [vmem:[%s2 + $0x40] sm:$0xf] %vm1166, %v1054
  %1184 = vst.msk [vmem:[%s2 + $0x44] sm:$0xf] %vm1166, %v1055
  %1185 = vst.msk [vmem:[%s2 + $0x48] sm:$0xf] %vm1166, %v1056
  %1186 = vst.msk [vmem:[%s2 + $0x4c] sm:$0xf] %vm1166, %v1057
  %1187 = vst.msk [vmem:[%s2 + $0x50] sm:$0xf] %vm1166, %v1058
  %1188 = vst.msk [vmem:[%s2 + $0x54] sm:$0xf] %vm1166, %v1059
  %1189 = vst.msk [vmem:[%s2 + $0x58] sm:$0xf] %vm1166, %v1060
  %1190 = vst.msk [vmem:[%s2 + $0x5c] sm:$0xf] %vm1166, %v1061
  %1191 = vst.msk [vmem:[%s2 + $0x60] sm:$0xf] %vm1166, %v1062
  %1192 = vst.msk [vmem:[%s2 + $0x64] sm:$0xf] %vm1166, %v1063
  %1193 = vst.msk [vmem:[%s2 + $0x68] sm:$0xf] %vm1166, %v1064
  %1194 = vst.msk [vmem:[%s2 + $0x6c] sm:$0xf] %vm1166, %v1065
  %1195 = vst.msk [vmem:[%s2 + $0x70] sm:$0xf] %vm1166, %v1066
  %1196 = vst.msk [vmem:[%s2 + $0x74] sm:$0xf] %vm1166, %v1067
  %1197 = vst.msk [vmem:[%s2 + $0x78] sm:$0xf] %vm1166, %v1068
  %1198 = vst.msk [vmem:[%s2 + $0x7c] sm:$0xf] %vm1166, %v1069
  %1199 = vst.msk [vmem:[%s2 + $0x80] sm:$0xf] %vm1166, %v1070
  %1200 = vst.msk [vmem:[%s2 + $0x84] sm:$0xf] %vm1166, %v1071
  %1201 = vst.msk [vmem:[%s2 + $0x88] sm:$0xf] %vm1166, %v1072
  %1202 = vst.msk [vmem:[%s2 + $0x8c] sm:$0xf] %vm1166, %v1073
  %1203 = vst.msk [vmem:[%s2 + $0x90] sm:$0xf] %vm1166, %v1074
  %1204 = vst.msk [vmem:[%s2 + $0x94] sm:$0xf] %vm1166, %v1075
  %1205 = vst.msk [vmem:[%s2 + $0x98] sm:$0xf] %vm1166, %v1076
  %1206 = vst.msk [vmem:[%s2 + $0x9c] sm:$0xf] %vm1166, %v1077
  %1207 = vst.msk [vmem:[%s2 + $0xa0] sm:$0xf] %vm1166, %v1078
  %1208 = vst.msk [vmem:[%s2 + $0xa4] sm:$0xf] %vm1166, %v1079
  %1209 = vst.msk [vmem:[%s2 + $0xa8] sm:$0xf] %vm1166, %v1080
  %1210 = vst.msk [vmem:[%s2 + $0xac] sm:$0xf] %vm1166, %v1081
  %1211 = vst.msk [vmem:[%s2 + $0xb0] sm:$0xf] %vm1166, %v1082
  %1212 = vst.msk [vmem:[%s2 + $0xb4] sm:$0xf] %vm1166, %v1083
  %1213 = vst.msk [vmem:[%s2 + $0xb8] sm:$0xf] %vm1166, %v1084
  %1214 = vst.msk [vmem:[%s2 + $0xbc] sm:$0xf] %vm1166, %v1085
  %1215 = vst.msk [vmem:[%s2 + $0xc0] sm:$0xf] %vm1166, %v1086
  %1216 = vst.msk [vmem:[%s2 + $0xc4] sm:$0xf] %vm1166, %v1087
  %1217 = vst.msk [vmem:[%s2 + $0xc8] sm:$0xf] %vm1166, %v1088
  %1218 = vst.msk [vmem:[%s2 + $0xcc] sm:$0xf] %vm1166, %v1089
  %1219 = vst.msk [vmem:[%s2 + $0xd0] sm:$0xf] %vm1166, %v1090
  %1220 = vst.msk [vmem:[%s2 + $0xd4] sm:$0xf] %vm1166, %v1091
  %1221 = vst.msk [vmem:[%s2 + $0xd8] sm:$0xf] %vm1166, %v1092
  %1222 = vst.msk [vmem:[%s2 + $0xdc] sm:$0xf] %vm1166, %v1093
  %1223 = vst.msk [vmem:[%s2 + $0xe0] sm:$0xf] %vm1166, %v1094
  %1224 = vst.msk [vmem:[%s2 + $0xe4] sm:$0xf] %vm1166, %v1095
  %1225 = vst.msk [vmem:[%s2 + $0xe8] sm:$0xf] %vm1166, %v1096
  %1226 = vst.msk [vmem:[%s2 + $0xec] sm:$0xf] %vm1166, %v1097
  %1227 = vst.msk [vmem:[%s2 + $0xf0] sm:$0xf] %vm1166, %v1098
  %1228 = vst.msk [vmem:[%s2 + $0xf4] sm:$0xf] %vm1166, %v1099
  %1229 = vst.msk [vmem:[%s2 + $0xf8] sm:$0xf] %vm1166, %v1100
  %1230 = vst.msk [vmem:[%s2 + $0xfc] sm:$0xf] %vm1166, %v1101
  // Predicated region
  $region14: #{bottleneck_forward.3} parent=0 // pred_check
    _
  $region15: #{bottleneck_forward.3} parent=0 // pred_check_branch
    %1232 = sbr.rel (0) target = $region17
  $region16: #{bottleneck_forward.3} parent=0 // pred_region
    _
  $region17: #{bottleneck_forward.3} parent=0 // pred_fallthru
    _
  // Predicated region
  $region18: #{bottleneck_forward.3} parent=0 // pred_check
    _
  $region19: #{bottleneck_forward.3} parent=0 // pred_check_branch
    %1234 = sbr.rel (0) target = $region21
  $region20: #{bottleneck_forward.3} parent=0 // pred_region
    _
  $region21: #{bottleneck_forward.3} parent=0 // pred_fallthru
    _
  // Predicated region
  $region22: #{bottleneck_forward.3} parent=0 // pred_check
    _
  $region23: #{bottleneck_forward.3} parent=0 // pred_check_branch
    %1236 = sbr.rel (0) target = $region25
  $region24: #{bottleneck_forward.3} parent=0 // pred_region
    _
  $region25: #{bottleneck_forward.3} parent=0 // pred_fallthru
    _
  // Predicated region
  $region26: #{bottleneck_forward.3} parent=0 // pred_check
    _
  $region27: #{bottleneck_forward.3} parent=0 // pred_check_branch
    %1238 = sbr.rel (0) target = $region29
  $region28: #{bottleneck_forward.3} parent=0 // pred_region
    _
  $region29: #{bottleneck_forward.3} parent=0 // pred_fallthru
    _

// kernel: bottleneck_forward.5
$region0: #{bottleneck_forward.5}
  #allocation0 [shape = 'u32[]', space=smem, size = 0x4, offset = 0x4, fixed_abs, tag = 'smem constant byte address 0x4 - core index']
  #allocation1 [shape = 'u32[144,128]{1,0:T(1,128)}', space=vmem, size = 0x12000, scoped, tag = 'internal scratch']
  #allocation2 [shape = 'f32[2,16]{1,0:T(2,128)}', space=vmem, size = 0x400, scoped, tag = 'scratch operand']
  %s0 = inlined_call_operand.vmem [shape: bf16[512,8], index: 0, kind: input, shape index: {}]
  %s1 = inlined_call_operand.vmem [shape: f32[1,8], index: 1, kind: input, shape index: {}]
  %s2 = inlined_call_operand.vmem [shape: f32[1,8], index: 2, kind: input, shape index: {}]
  %s3 = inlined_call_operand.vmem [shape: bf16[8,16], index: 3, kind: input, shape index: {}]
  %s4 = inlined_call_operand.vmem [shape: f32[1,16], index: 4, kind: input, shape index: {}]
  %s5 = inlined_call_operand.vmem [shape: f32[1,16], index: 5, kind: input, shape index: {}]
  %s6 = inlined_call_operand.vmem [shape: f32[512,4], index: 6, kind: input, shape index: {}]
  %s7 = inlined_call_operand.vmem [shape: bf16[4,16], index: 7, kind: input, shape index: {}]
  %s8 = inlined_call_operand.vmem [shape: f32[1,16], index: 8, kind: input, shape index: {}]
  %s9 = inlined_call_operand.vmem [shape: f32[512,16], index: 9, kind: output, shape index: {}]
  %s10 = sld [smem:[#allocation0]]
  $region81: #{bottleneck_forward.5} parent=0
    _
  %s12 = ssub.s32 1, %s10
  %s13 = scalar_select 0, %s12, %s10
  loop: start=0, step=1, limit=4
  $region2: #{bottleneck_forward.5} parent=0 // loop_pre_header
    _
  $region3: #{bottleneck_forward.5} parent=0 // loop_header
    %s15 = sphi 0, %s19
    %p16 = scmp.ge.s32.totalorder %s15, 4
    %s22 = sphi 0, %s34
    %s23 = sphi 0, %s30
    %s24 = sphi 0, %s22
    %s25 = sphi 0, %s23
    %s26 = sphi 0, %s24
    %s27 = sphi 0, %s25
    %s37 = sphi 0, %s39
    %s40 = sphi 0, %s37
    %s41 = sphi 0, %s40
    %s57 = sphi 0, %s41
    %s61 = sphi 0, %s61
    %s63 = sphi 0, %s61
    %s64 = sphi 0, %s63
    %s78 = sphi 0, %s64
    %s82 = sphi 0, %s82
    %s84 = sphi 0, %s82
    %s85 = sphi 0, %s84
    %s99 = sphi 0, %s85
    %s103 = sphi 0, %s103
    %s105 = sphi 0, %s103
    %s106 = sphi 0, %s105
    %s120 = sphi 0, %s106
    %s124 = sphi 0, %s124
    %s126 = sphi 0, %s124
    %s127 = sphi 0, %s126
    %s141 = sphi 0, %s127
    %s145 = sphi 0, %s145
    %s147 = sphi 0, %s145
    %s148 = sphi 0, %s147
    %s162 = sphi 0, %s148
    %s170 = sphi 0, %s172
    %s173 = sphi 0, %s170
    %s174 = sphi 0, %s173
    %s190 = sphi 0, %s174
    %s194 = sphi 0, %s194
    %s196 = sphi 0, %s194
    %s197 = sphi 0, %s196
    %s211 = sphi 0, %s197
    %s215 = sphi 0, %s215
    %s217 = sphi 0, %s215
    %s218 = sphi 0, %s217
    %s232 = sphi 0, %s218
    %s240 = sphi 0, %s242
    %s243 = sphi 0, %s240
    %s244 = sphi 0, %s243
    %s260 = sphi 0, %s244
  $region4: #{bottleneck_forward.5} parent=0 // loop_header_branch
    %18 = sbr.rel (%p16) target = $region8
  $region5: #{bottleneck_forward.5} parent=0 // loop_body
    %s20 = ssub.s32 %s15, 1
    %s21 = ssub.s32 %s15, 2
    %s28 = sadd.s32 1, %s23
    %p29 = scmp.ge.s32.totalorder %s28, 1
    %s30 = scalar_select %p29, 0, %s28
    %s31 = sadd.s32 1, %s22
    %s32 = scalar_select %p29, %s31, %s22
    %p33 = scmp.ge.s32.totalorder %s32, 2
    %s34 = scalar_select %p33, 0, %s32
    %s35 = ssub.s32 %s23, %s30
    %p36 = scmp.eq.s32.totalorder %s35, 0
    %s38 = sadd.s32 %s37, 1
    %s39 = scalar_select %p36, %s37, %s38
    %p42 = pneg %p36
    %p43 = scmp.eq.s32.totalorder %s15, 1
    %p44 = por %p42, %p43
    %p45 = scmp.ne.s32.totalorder %s37, %s40
    %p46 = scmp.eq.s32.totalorder %s15, 0
    %p47 = por %p45, %p46
    %p48 = scmp.ne.s32.totalorder %s37, %s40
    %p49 = scmp.eq.s32.totalorder %s20, 1
    %p50 = por %p48, %p49
    %p51 = scmp.ne.s32.totalorder %s40, %s41
    %p52 = scmp.eq.s32.totalorder %s20, 0
    %p53 = por %p51, %p52
    %p54 = scmp.ne.s32.totalorder %s40, %s41
    %p55 = scmp.eq.s32.totalorder %s21, 1
    %p56 = por %p54, %p55
    %p58 = scmp.ne.s32.totalorder %s41, %s57
    %p59 = scmp.eq.s32.totalorder %s21, 0
    %p60 = por %p58, %p59
    %s62 = sadd.s32 %s61, 1
    %p65 = scmp.eq.s32.totalorder %s15, 1
    %p66 = scmp.ne.s32.totalorder %s61, %s63
    %p67 = scmp.eq.s32.totalorder %s15, 0
    %p68 = por %p66, %p67
    %p69 = scmp.ne.s32.totalorder %s61, %s63
    %p70 = scmp.eq.s32.totalorder %s20, 1
    %p71 = por %p69, %p70
    %p72 = scmp.ne.s32.totalorder %s63, %s64
    %p73 = scmp.eq.s32.totalorder %s20, 0
    %p74 = por %p72, %p73
    %p75 = scmp.ne.s32.totalorder %s63, %s64
    %p76 = scmp.eq.s32.totalorder %s21, 1
    %p77 = por %p75, %p76
    %p79 = scmp.ne.s32.totalorder %s64, %s78
    %p80 = scmp.eq.s32.totalorder %s21, 0
    %p81 = por %p79, %p80
    %s83 = sadd.s32 %s82, 1
    %p86 = scmp.eq.s32.totalorder %s15, 1
    %p87 = scmp.ne.s32.totalorder %s82, %s84
    %p88 = scmp.eq.s32.totalorder %s15, 0
    %p89 = por %p87, %p88
    %p90 = scmp.ne.s32.totalorder %s82, %s84
    %p91 = scmp.eq.s32.totalorder %s20, 1
    %p92 = por %p90, %p91
    %p93 = scmp.ne.s32.totalorder %s84, %s85
    %p94 = scmp.eq.s32.totalorder %s20, 0
    %p95 = por %p93, %p94
    %p96 = scmp.ne.s32.totalorder %s84, %s85
    %p97 = scmp.eq.s32.totalorder %s21, 1
    %p98 = por %p96, %p97
    %p100 = scmp.ne.s32.totalorder %s85, %s99
    %p101 = scmp.eq.s32.totalorder %s21, 0
    %p102 = por %p100, %p101
    %s104 = sadd.s32 %s103, 1
    %p107 = scmp.eq.s32.totalorder %s15, 1
    %p108 = scmp.ne.s32.totalorder %s103, %s105
    %p109 = scmp.eq.s32.totalorder %s15, 0
    %p110 = por %p108, %p109
    %p111 = scmp.ne.s32.totalorder %s103, %s105
    %p112 = scmp.eq.s32.totalorder %s20, 1
    %p113 = por %p111, %p112
    %p114 = scmp.ne.s32.totalorder %s105, %s106
    %p115 = scmp.eq.s32.totalorder %s20, 0
    %p116 = por %p114, %p115
    %p117 = scmp.ne.s32.totalorder %s105, %s106
    %p118 = scmp.eq.s32.totalorder %s21, 1
    %p119 = por %p117, %p118
    %p121 = scmp.ne.s32.totalorder %s106, %s120
    %p122 = scmp.eq.s32.totalorder %s21, 0
    %p123 = por %p121, %p122
    %s125 = sadd.s32 %s124, 1
    %p128 = scmp.eq.s32.totalorder %s15, 1
    %p129 = scmp.ne.s32.totalorder %s124, %s126
    %p130 = scmp.eq.s32.totalorder %s15, 0
    %p131 = por %p129, %p130
    %p132 = scmp.ne.s32.totalorder %s124, %s126
    %p133 = scmp.eq.s32.totalorder %s20, 1
    %p134 = por %p132, %p133
    %p135 = scmp.ne.s32.totalorder %s126, %s127
    %p136 = scmp.eq.s32.totalorder %s20, 0
    %p137 = por %p135, %p136
    %p138 = scmp.ne.s32.totalorder %s126, %s127
    %p139 = scmp.eq.s32.totalorder %s21, 1
    %p140 = por %p138, %p139
    %p142 = scmp.ne.s32.totalorder %s127, %s141
    %p143 = scmp.eq.s32.totalorder %s21, 0
    %p144 = por %p142, %p143
    %s146 = sadd.s32 %s145, 1
    %p149 = scmp.eq.s32.totalorder %s15, 1
    %p150 = scmp.ne.s32.totalorder %s145, %s147
    %p151 = scmp.eq.s32.totalorder %s15, 0
    %p152 = por %p150, %p151
    %p153 = scmp.ne.s32.totalorder %s145, %s147
    %p154 = scmp.eq.s32.totalorder %s20, 1
    %p155 = por %p153, %p154
    %p156 = scmp.ne.s32.totalorder %s147, %s148
    %p157 = scmp.eq.s32.totalorder %s20, 0
    %p158 = por %p156, %p157
    %p159 = scmp.ne.s32.totalorder %s147, %s148
    %p160 = scmp.eq.s32.totalorder %s21, 1
    %p161 = por %p159, %p160
    %p163 = scmp.ne.s32.totalorder %s148, %s162
    %p164 = scmp.eq.s32.totalorder %s21, 0
    %p165 = por %p163, %p164
    %s166 = smul.u32 %s22, %s23
    %s167 = smul.u32 %s34, %s30
    %s168 = ssub.s32 %s166, %s167
    %p169 = scmp.eq.s32.totalorder %s168, 0
    %s171 = sadd.s32 %s170, 1
    %s172 = scalar_select %p169, %s170, %s171
    %p175 = pneg %p169
    %p176 = scmp.eq.s32.totalorder %s15, 1
    %p177 = por %p175, %p176
    %p178 = scmp.ne.s32.totalorder %s170, %s173
    %p179 = scmp.eq.s32.totalorder %s15, 0
    %p180 = por %p178, %p179
    %p181 = scmp.ne.s32.totalorder %s170, %s173
    %p182 = scmp.eq.s32.totalorder %s20, 1
    %p183 = por %p181, %p182
    %p184 = scmp.ne.s32.totalorder %s173, %s174
    %p185 = scmp.eq.s32.totalorder %s20, 0
    %p186 = por %p184, %p185
    %p187 = scmp.ne.s32.totalorder %s173, %s174
    %p188 = scmp.eq.s32.totalorder %s21, 1
    %p189 = por %p187, %p188
    %p191 = scmp.ne.s32.totalorder %s174, %s190
    %p192 = scmp.eq.s32.totalorder %s21, 0
    %p193 = por %p191, %p192
    %s195 = sadd.s32 %s194, 1
    %p198 = scmp.eq.s32.totalorder %s15, 1
    %p199 = scmp.ne.s32.totalorder %s194, %s196
    %p200 = scmp.eq.s32.totalorder %s15, 0
    %p201 = por %p199, %p200
    %p202 = scmp.ne.s32.totalorder %s194, %s196
    %p203 = scmp.eq.s32.totalorder %s20, 1
    %p204 = por %p202, %p203
    %p205 = scmp.ne.s32.totalorder %s196, %s197
    %p206 = scmp.eq.s32.totalorder %s20, 0
    %p207 = por %p205, %p206
    %p208 = scmp.ne.s32.totalorder %s196, %s197
    %p209 = scmp.eq.s32.totalorder %s21, 1
    %p210 = por %p208, %p209
    %p212 = scmp.ne.s32.totalorder %s197, %s211
    %p213 = scmp.eq.s32.totalorder %s21, 0
    %p214 = por %p212, %p213
    %s216 = sadd.s32 %s215, 1
    %p219 = scmp.eq.s32.totalorder %s15, 1
    %p220 = scmp.ne.s32.totalorder %s215, %s217
    %p221 = scmp.eq.s32.totalorder %s15, 0
    %p222 = por %p220, %p221
    %p223 = scmp.ne.s32.totalorder %s215, %s217
    %p224 = scmp.eq.s32.totalorder %s20, 1
    %p225 = por %p223, %p224
    %p226 = scmp.ne.s32.totalorder %s217, %s218
    %p227 = scmp.eq.s32.totalorder %s20, 0
    %p228 = por %p226, %p227
    %p229 = scmp.ne.s32.totalorder %s217, %s218
    %p230 = scmp.eq.s32.totalorder %s21, 1
    %p231 = por %p229, %p230
    %p233 = scmp.ne.s32.totalorder %s218, %s232
    %p234 = scmp.eq.s32.totalorder %s21, 0
    %p235 = por %p233, %p234
    %s236 = smul.u32 %s22, %s23
    %s237 = smul.u32 %s34, %s30
    %s238 = ssub.s32 %s236, %s237
    %p239 = scmp.eq.s32.totalorder %s238, 0
    %s241 = sadd.s32 %s240, 1
    %s242 = scalar_select %p239, %s240, %s241
    %p245 = pneg %p239
    %p246 = scmp.eq.s32.totalorder %s15, 1
    %p247 = por %p245, %p246
    %p248 = scmp.ne.s32.totalorder %s240, %s243
    %p249 = scmp.eq.s32.totalorder %s15, 0
    %p250 = por %p248, %p249
    %p251 = scmp.ne.s32.totalorder %s240, %s243
    %p252 = scmp.eq.s32.totalorder %s20, 1
    %p253 = por %p251, %p252
    %p254 = scmp.ne.s32.totalorder %s243, %s244
    %p255 = scmp.eq.s32.totalorder %s20, 0
    %p256 = por %p254, %p255
    %p257 = scmp.ne.s32.totalorder %s243, %s244
    %p258 = scmp.eq.s32.totalorder %s21, 1
    %p259 = por %p257, %p258
    %p261 = scmp.ne.s32.totalorder %s244, %s260
    %p262 = scmp.eq.s32.totalorder %s21, 0
    %p263 = por %p261, %p262
    %p264 = scmp.le.s32.totalorder 1, %s15
    %p265 = scmp.lt.s32.totalorder %s15, 3
    %p266 = pnand %p264, %p265
    %p267 = pneg %p266
    // Predicated region
    $region9: #{bottleneck_forward.5} parent=5 // pred_check
      _
    $region10: #{bottleneck_forward.5} parent=5 // pred_check_branch
      %269 = sbr.rel (%p266) target = $region12
    $region11: #{bottleneck_forward.5} parent=5 // pred_region
      %s270 = ssub.s32 %s15, 1
      // Predicated region
      $region13: #{bottleneck_forward.5} parent=11 // pred_check
        %p271 = pneg %p53
      $region14: #{bottleneck_forward.5} parent=11 // pred_check_branch
        %273 = sbr.rel (%p271) target = $region16
      $region15: #{bottleneck_forward.5} parent=11 // pred_region
        %s274 = smul.u32 64, %s25
        %p275 = scmp.lt.s32.totalorder %s274, 63
        %s276 = scalar_select %p275, %s274, 63
        %s277 = smul.addr %s276, 4
        %s278 = scalar_lea.vmem %s0, %s277
        %s279 = smul.u32 64, %s25
      $region16: #{bottleneck_forward.5} parent=11 // pred_fallthru
        _
      // Predicated region
      $region17: #{bottleneck_forward.5} parent=11 // pred_check
        %p280 = pneg %p74
      $region18: #{bottleneck_forward.5} parent=11 // pred_check_branch
        %282 = sbr.rel (%p280) target = $region20
      $region19: #{bottleneck_forward.5} parent=11 // pred_region
        _
      $region20: #{bottleneck_forward.5} parent=11 // pred_fallthru
        _
      // Predicated region
      $region21: #{bottleneck_forward.5} parent=11 // pred_check
        %p283 = pneg %p95
      $region22: #{bottleneck_forward.5} parent=11 // pred_check_branch
        %285 = sbr.rel (%p283) target = $region24
      $region23: #{bottleneck_forward.5} parent=11 // pred_region
        _
      $region24: #{bottleneck_forward.5} parent=11 // pred_fallthru
        _
      // Predicated region
      $region25: #{bottleneck_forward.5} parent=11 // pred_check
        %p286 = pneg %p116
      $region26: #{bottleneck_forward.5} parent=11 // pred_check_branch
        %288 = sbr.rel (%p286) target = $region28
      $region27: #{bottleneck_forward.5} parent=11 // pred_region
        _
      $region28: #{bottleneck_forward.5} parent=11 // pred_fallthru
        _
      // Predicated region
      $region29: #{bottleneck_forward.5} parent=11 // pred_check
        %p289 = pneg %p137
      $region30: #{bottleneck_forward.5} parent=11 // pred_check_branch
        %291 = sbr.rel (%p289) target = $region32
      $region31: #{bottleneck_forward.5} parent=11 // pred_region
        _
      $region32: #{bottleneck_forward.5} parent=11 // pred_fallthru
        _
      // Predicated region
      $region33: #{bottleneck_forward.5} parent=11 // pred_check
        %p292 = pneg %p158
      $region34: #{bottleneck_forward.5} parent=11 // pred_check_branch
        %294 = sbr.rel (%p292) target = $region36
      $region35: #{bottleneck_forward.5} parent=11 // pred_region
        _
      $region36: #{bottleneck_forward.5} parent=11 // pred_fallthru
        _
      // Predicated region
      $region37: #{bottleneck_forward.5} parent=11 // pred_check
        %p295 = pneg %p207
      $region38: #{bottleneck_forward.5} parent=11 // pred_check_branch
        %297 = sbr.rel (%p295) target = $region40
      $region39: #{bottleneck_forward.5} parent=11 // pred_region
        _
      $region40: #{bottleneck_forward.5} parent=11 // pred_fallthru
        _
      // Predicated region
      $region41: #{bottleneck_forward.5} parent=11 // pred_check
        %p298 = pneg %p228
      $region42: #{bottleneck_forward.5} parent=11 // pred_check_branch
        %300 = sbr.rel (%p298) target = $region44
      $region43: #{bottleneck_forward.5} parent=11 // pred_region
        _
      $region44: #{bottleneck_forward.5} parent=11 // pred_fallthru
        _
    $region12: #{bottleneck_forward.5} parent=5 // pred_fallthru
      _
    %p301 = scmp.lt.s32.totalorder %s15, 2
    // Predicated region
    $region45: #{bottleneck_forward.5} parent=5 // pred_check
      %p302 = pneg %p301
    $region46: #{bottleneck_forward.5} parent=5 // pred_check_branch
      %304 = sbr.rel (%p302) target = $region48
    $region47: #{bottleneck_forward.5} parent=5 // pred_region
      // Predicated region
      $region49: #{bottleneck_forward.5} parent=47 // pred_check
        %p305 = pneg %p180
      $region50: #{bottleneck_forward.5} parent=47 // pred_check_branch
        %307 = sbr.rel (%p305) target = $region52
      $region51: #{bottleneck_forward.5} parent=47 // pred_region
        %s308 = smul.u32 %s22, %s23
        %s309 = smul.u32 64, %s308
        %p310 = scmp.lt.s32.totalorder %s309, 63
        %s311 = scalar_select %p310, %s309, 63
        %s312 = smul.addr %s311, 8
        %s313 = scalar_lea.vmem %s6, %s312
        %s314 = smul.u32 %s22, %s23
        %s315 = smul.u32 64, %s314
      $region52: #{bottleneck_forward.5} parent=47 // pred_fallthru
        _
    $region48: #{bottleneck_forward.5} parent=5 // pred_fallthru
      _
    %p316 = scmp.le.s32.totalorder 1, %s15
    %p317 = scmp.lt.s32.totalorder %s15, 3
    %p318 = pnand %p316, %p317
    %p319 = pneg %p318
    // Predicated region
    $region53: #{bottleneck_forward.5} parent=5 // pred_check
      _
    $region54: #{bottleneck_forward.5} parent=5 // pred_check_branch
      %321 = sbr.rel (%p318) target = $region56
    $region55: #{bottleneck_forward.5} parent=5 // pred_region
      %s322 = ssub.s32 %s15, 1
      %s323 = smul.u32 64, %s25
      %p324 = scmp.lt.s32.totalorder %s323, 63
      %s325 = scalar_select %p324, %s323, 63
      %s326 = smul.addr %s325, 4
      %s327 = scalar_lea.vmem %s0, %s326
      %p328 = pneg %p53
      %p329 = pneg %p50
      %p330 = pneg %p74
      %p331 = pneg %p71
      %p332 = pneg %p95
      %p333 = pneg %p92
      %p334 = pneg %p116
      %p335 = pneg %p113
      %p336 = pneg %p137
      %p337 = pneg %p134
      %p338 = pneg %p158
      %p339 = pneg %p155
      %s340 = smul.u32 %s24, %s25
      %s341 = smul.u32 64, %s340
      %p342 = scmp.lt.s32.totalorder %s341, 63
      %s343 = scalar_select %p342, %s341, 63
      %s344 = smul.addr %s343, 8
      %s345 = scalar_lea.vmem %s6, %s344
      %p346 = pneg %p186
      %p347 = pneg %p183
      %p348 = pneg %p207
      %p349 = pneg %p204
      %p350 = pneg %p228
      %p351 = pneg %p225
      %p352 = pneg %p256
      %p353 = pneg %p253
      %s354 = smul.u32 %s24, %s25
      %s355 = smul.u32 64, %s354
      %p356 = scmp.lt.s32.totalorder %s355, 63
      %s357 = scalar_select %p356, %s355, 63
      %s358 = smul.addr %s357, 8
      %s359 = scalar_lea.vmem %s9, %s358
      %s360 = smul.u32 64, %s25
      %p361 = scmp.lt.s32.totalorder %s360, 63
      %s362 = scalar_select %p361, %s360, 63
      %s363 = smul.addr %s362, 4
      %s364 = scalar_lea.vmem %s0, %s363
      %s365 = smul.u32 64, %s25
      %s366 = smul.u32 %s24, %s25
      %s367 = smul.u32 64, %s366
      %p368 = scmp.lt.s32.totalorder %s367, 63
      %s369 = scalar_select %p368, %s367, 63
      %s370 = smul.addr %s369, 8
      %s371 = scalar_lea.vmem %s6, %s370
      %s372 = smul.u32 %s24, %s25
      %s373 = smul.u32 64, %s372
      %s374 = smul.u32 %s24, %s25
      %s375 = smul.u32 64, %s374
      %p376 = scmp.lt.s32.totalorder %s375, 63
      %s377 = scalar_select %p376, %s375, 63
      %s378 = smul.addr %s377, 8
      %s379 = scalar_lea.vmem %s9, %s378
      %s380 = smul.u32 %s24, %s25
      %s381 = smul.u32 64, %s380
      %v383 = vld [vmem:[%s364] sm:$0xf]
      %v384 = vld [vmem:[%s364 + $0x4] sm:$0xf]
      %v385 = vld [vmem:[%s364 + $0x8] sm:$0xf]
      %v386 = vld [vmem:[%s364 + $0xc] sm:$0xf]
      %v387 = vld [vmem:[%s364 + $0x10] sm:$0xf]
      %v388 = vld [vmem:[%s364 + $0x14] sm:$0xf]
      %v389 = vld [vmem:[%s364 + $0x18] sm:$0xf]
      %v390 = vld [vmem:[%s364 + $0x1c] sm:$0xf]
      %v391 = vld [vmem:[%s364 + $0x20] sm:$0xf]
      %v392 = vld [vmem:[%s364 + $0x24] sm:$0xf]
      %v393 = vld [vmem:[%s364 + $0x28] sm:$0xf]
      %v394 = vld [vmem:[%s364 + $0x2c] sm:$0xf]
      %v395 = vld [vmem:[%s364 + $0x30] sm:$0xf]
      %v396 = vld [vmem:[%s364 + $0x34] sm:$0xf]
      %v397 = vld [vmem:[%s364 + $0x38] sm:$0xf]
      %v398 = vld [vmem:[%s364 + $0x3c] sm:$0xf]
      %v399 = vld [vmem:[%s364 + $0x40] sm:$0xf]
      %v400 = vld [vmem:[%s364 + $0x44] sm:$0xf]
      %v401 = vld [vmem:[%s364 + $0x48] sm:$0xf]
      %v402 = vld [vmem:[%s364 + $0x4c] sm:$0xf]
      %v403 = vld [vmem:[%s364 + $0x50] sm:$0xf]
      %v404 = vld [vmem:[%s364 + $0x54] sm:$0xf]
      %v405 = vld [vmem:[%s364 + $0x58] sm:$0xf]
      %v406 = vld [vmem:[%s364 + $0x5c] sm:$0xf]
      %v407 = vld [vmem:[%s364 + $0x60] sm:$0xf]
      %v408 = vld [vmem:[%s364 + $0x64] sm:$0xf]
      %v409 = vld [vmem:[%s364 + $0x68] sm:$0xf]
      %v410 = vld [vmem:[%s364 + $0x6c] sm:$0xf]
      %v411 = vld [vmem:[%s364 + $0x70] sm:$0xf]
      %v412 = vld [vmem:[%s364 + $0x74] sm:$0xf]
      %v413 = vld [vmem:[%s364 + $0x78] sm:$0xf]
      %v414 = vld [vmem:[%s364 + $0x7c] sm:$0xf]
      %v415 = vld [vmem:[%s364 + $0x80] sm:$0xf]
      %v416 = vld [vmem:[%s364 + $0x84] sm:$0xf]
      %v417 = vld [vmem:[%s364 + $0x88] sm:$0xf]
      %v418 = vld [vmem:[%s364 + $0x8c] sm:$0xf]
      %v419 = vld [vmem:[%s364 + $0x90] sm:$0xf]
      %v420 = vld [vmem:[%s364 + $0x94] sm:$0xf]
      %v421 = vld [vmem:[%s364 + $0x98] sm:$0xf]
      %v422 = vld [vmem:[%s364 + $0x9c] sm:$0xf]
      %v423 = vld [vmem:[%s364 + $0xa0] sm:$0xf]
      %v424 = vld [vmem:[%s364 + $0xa4] sm:$0xf]
      %v425 = vld [vmem:[%s364 + $0xa8] sm:$0xf]
      %v426 = vld [vmem:[%s364 + $0xac] sm:$0xf]
      %v427 = vld [vmem:[%s364 + $0xb0] sm:$0xf]
      %v428 = vld [vmem:[%s364 + $0xb4] sm:$0xf]
      %v429 = vld [vmem:[%s364 + $0xb8] sm:$0xf]
      %v430 = vld [vmem:[%s364 + $0xbc] sm:$0xf]
      %v431 = vld [vmem:[%s364 + $0xc0] sm:$0xf]
      %v432 = vld [vmem:[%s364 + $0xc4] sm:$0xf]
      %v433 = vld [vmem:[%s364 + $0xc8] sm:$0xf]
      %v434 = vld [vmem:[%s364 + $0xcc] sm:$0xf]
      %v435 = vld [vmem:[%s364 + $0xd0] sm:$0xf]
      %v436 = vld [vmem:[%s364 + $0xd4] sm:$0xf]
      %v437 = vld [vmem:[%s364 + $0xd8] sm:$0xf]
      %v438 = vld [vmem:[%s364 + $0xdc] sm:$0xf]
      %v439 = vld [vmem:[%s364 + $0xe0] sm:$0xf]
      %v440 = vld [vmem:[%s364 + $0xe4] sm:$0xf]
      %v441 = vld [vmem:[%s364 + $0xe8] sm:$0xf]
      %v442 = vld [vmem:[%s364 + $0xec] sm:$0xf]
      %v443 = vld [vmem:[%s364 + $0xf0] sm:$0xf]
      %v444 = vld [vmem:[%s364 + $0xf4] sm:$0xf]
      %v445 = vld [vmem:[%s364 + $0xf8] sm:$0xf]
      %v446 = vld [vmem:[%s364 + $0xfc] sm:$0xf]
      %v447 = vunpack.c.l.bf16 %v383
      %v448 = vunpack.c.l.bf16 %v384
      %v449 = vunpack.c.l.bf16 %v385
      %v450 = vunpack.c.l.bf16 %v386
      %v451 = vunpack.c.l.bf16 %v387
      %v452 = vunpack.c.l.bf16 %v388
      %v453 = vunpack.c.l.bf16 %v389
      %v454 = vunpack.c.l.bf16 %v390
      %v455 = vunpack.c.l.bf16 %v391
      %v456 = vunpack.c.l.bf16 %v392
      %v457 = vunpack.c.l.bf16 %v393
      %v458 = vunpack.c.l.bf16 %v394
      %v459 = vunpack.c.l.bf16 %v395
      %v460 = vunpack.c.l.bf16 %v396
      %v461 = vunpack.c.l.bf16 %v397
      %v462 = vunpack.c.l.bf16 %v398
      %v463 = vunpack.c.l.bf16 %v399
      %v464 = vunpack.c.l.bf16 %v400
      %v465 = vunpack.c.l.bf16 %v401
      %v466 = vunpack.c.l.bf16 %v402
      %v467 = vunpack.c.l.bf16 %v403
      %v468 = vunpack.c.l.bf16 %v404
      %v469 = vunpack.c.l.bf16 %v405
      %v470 = vunpack.c.l.bf16 %v406
      %v471 = vunpack.c.l.bf16 %v407
      %v472 = vunpack.c.l.bf16 %v408
      %v473 = vunpack.c.l.bf16 %v409
      %v474 = vunpack.c.l.bf16 %v410
      %v475 = vunpack.c.l.bf16 %v411
      %v476 = vunpack.c.l.bf16 %v412
      %v477 = vunpack.c.l.bf16 %v413
      %v478 = vunpack.c.l.bf16 %v414
      %v479 = vunpack.c.l.bf16 %v415
      %v480 = vunpack.c.l.bf16 %v416
      %v481 = vunpack.c.l.bf16 %v417
      %v482 = vunpack.c.l.bf16 %v418
      %v483 = vunpack.c.l.bf16 %v419
      %v484 = vunpack.c.l.bf16 %v420
      %v485 = vunpack.c.l.bf16 %v421
      %v486 = vunpack.c.l.bf16 %v422
      %v487 = vunpack.c.l.bf16 %v423
      %v488 = vunpack.c.l.bf16 %v424
      %v489 = vunpack.c.l.bf16 %v425
      %v490 = vunpack.c.l.bf16 %v426
      %v491 = vunpack.c.l.bf16 %v427
      %v492 = vunpack.c.l.bf16 %v428
      %v493 = vunpack.c.l.bf16 %v429
      %v494 = vunpack.c.l.bf16 %v430
      %v495 = vunpack.c.l.bf16 %v431
      %v496 = vunpack.c.l.bf16 %v432
      %v497 = vunpack.c.l.bf16 %v433
      %v498 = vunpack.c.l.bf16 %v434
      %v499 = vunpack.c.l.bf16 %v435
      %v500 = vunpack.c.l.bf16 %v436
      %v501 = vunpack.c.l.bf16 %v437
      %v502 = vunpack.c.l.bf16 %v438
      %v503 = vunpack.c.l.bf16 %v439
      %v504 = vunpack.c.l.bf16 %v440
      %v505 = vunpack.c.l.bf16 %v441
      %v506 = vunpack.c.l.bf16 %v442
      %v507 = vunpack.c.l.bf16 %v443
      %v508 = vunpack.c.l.bf16 %v444
      %v509 = vunpack.c.l.bf16 %v445
      %v510 = vunpack.c.l.bf16 %v446
      %v511 = vld [vmem:[%s1] sm:$0x1]
      %v513 = vlaneseq
      %v514 = vshrl.u32 %v513, 7
      %v515 = vsub.s32 0, %v514
      %v516 = vrot.slane %v511, %v515
      %v518 = vmul.f32 %v447, %v516
      %v519 = vmul.f32 %v448, %v516
      %v520 = vmul.f32 %v449, %v516
      %v521 = vmul.f32 %v450, %v516
      %v522 = vmul.f32 %v451, %v516
      %v523 = vmul.f32 %v452, %v516
      %v524 = vmul.f32 %v453, %v516
      %v525 = vmul.f32 %v454, %v516
      %v526 = vmul.f32 %v455, %v516
      %v527 = vmul.f32 %v456, %v516
      %v528 = vmul.f32 %v457, %v516
      %v529 = vmul.f32 %v458, %v516
      %v530 = vmul.f32 %v459, %v516
      %v531 = vmul.f32 %v460, %v516
      %v532 = vmul.f32 %v461, %v516
      %v533 = vmul.f32 %v462, %v516
      %v534 = vmul.f32 %v463, %v516
      %v535 = vmul.f32 %v464, %v516
      %v536 = vmul.f32 %v465, %v516
      %v537 = vmul.f32 %v466, %v516
      %v538 = vmul.f32 %v467, %v516
      %v539 = vmul.f32 %v468, %v516
      %v540 = vmul.f32 %v469, %v516
      %v541 = vmul.f32 %v470, %v516
      %v542 = vmul.f32 %v471, %v516
      %v543 = vmul.f32 %v472, %v516
      %v544 = vmul.f32 %v473, %v516
      %v545 = vmul.f32 %v474, %v516
      %v546 = vmul.f32 %v475, %v516
      %v547 = vmul.f32 %v476, %v516
      %v548 = vmul.f32 %v477, %v516
      %v549 = vmul.f32 %v478, %v516
      %v550 = vmul.f32 %v479, %v516
      %v551 = vmul.f32 %v480, %v516
      %v552 = vmul.f32 %v481, %v516
      %v553 = vmul.f32 %v482, %v516
      %v554 = vmul.f32 %v483, %v516
      %v555 = vmul.f32 %v484, %v516
      %v556 = vmul.f32 %v485, %v516
      %v557 = vmul.f32 %v486, %v516
      %v558 = vmul.f32 %v487, %v516
      %v559 = vmul.f32 %v488, %v516
      %v560 = vmul.f32 %v489, %v516
      %v561 = vmul.f32 %v490, %v516
      %v562 = vmul.f32 %v491, %v516
      %v563 = vmul.f32 %v492, %v516
      %v564 = vmul.f32 %v493, %v516
      %v565 = vmul.f32 %v494, %v516
      %v566 = vmul.f32 %v495, %v516
      %v567 = vmul.f32 %v496, %v516
      %v568 = vmul.f32 %v497, %v516
      %v569 = vmul.f32 %v498, %v516
      %v570 = vmul.f32 %v499, %v516
      %v571 = vmul.f32 %v500, %v516
      %v572 = vmul.f32 %v501, %v516
      %v573 = vmul.f32 %v502, %v516
      %v574 = vmul.f32 %v503, %v516
      %v575 = vmul.f32 %v504, %v516
      %v576 = vmul.f32 %v505, %v516
      %v577 = vmul.f32 %v506, %v516
      %v578 = vmul.f32 %v507, %v516
      %v579 = vmul.f32 %v508, %v516
      %v580 = vmul.f32 %v509, %v516
      %v581 = vmul.f32 %v510, %v516
      %v582 = vld [vmem:[%s2] sm:$0x1]
      %v584 = vlaneseq
      %v585 = vshrl.u32 %v584, 7
      %v586 = vsub.s32 0, %v585
      %v587 = vrot.slane %v582, %v586
      %v589 = vadd.f32 %v518, %v587
      %v590 = vadd.f32 %v519, %v587
      %v591 = vadd.f32 %v520, %v587
      %v592 = vadd.f32 %v521, %v587
      %v593 = vadd.f32 %v522, %v587
      %v594 = vadd.f32 %v523, %v587
      %v595 = vadd.f32 %v524, %v587
      %v596 = vadd.f32 %v525, %v587
      %v597 = vadd.f32 %v526, %v587
      %v598 = vadd.f32 %v527, %v587
      %v599 = vadd.f32 %v528, %v587
      %v600 = vadd.f32 %v529, %v587
      %v601 = vadd.f32 %v530, %v587
      %v602 = vadd.f32 %v531, %v587
      %v603 = vadd.f32 %v532, %v587
      %v604 = vadd.f32 %v533, %v587
      %v605 = vadd.f32 %v534, %v587
      %v606 = vadd.f32 %v535, %v587
      %v607 = vadd.f32 %v536, %v587
      %v608 = vadd.f32 %v537, %v587
      %v609 = vadd.f32 %v538, %v587
      %v610 = vadd.f32 %v539, %v587
      %v611 = vadd.f32 %v540, %v587
      %v612 = vadd.f32 %v541, %v587
      %v613 = vadd.f32 %v542, %v587
      %v614 = vadd.f32 %v543, %v587
      %v615 = vadd.f32 %v544, %v587
      %v616 = vadd.f32 %v545, %v587
      %v617 = vadd.f32 %v546, %v587
      %v618 = vadd.f32 %v547, %v587
      %v619 = vadd.f32 %v548, %v587
      %v620 = vadd.f32 %v549, %v587
      %v621 = vadd.f32 %v550, %v587
      %v622 = vadd.f32 %v551, %v587
      %v623 = vadd.f32 %v552, %v587
      %v624 = vadd.f32 %v553, %v587
      %v625 = vadd.f32 %v554, %v587
      %v626 = vadd.f32 %v555, %v587
      %v627 = vadd.f32 %v556, %v587
      %v628 = vadd.f32 %v557, %v587
      %v629 = vadd.f32 %v558, %v587
      %v630 = vadd.f32 %v559, %v587
      %v631 = vadd.f32 %v560, %v587
      %v632 = vadd.f32 %v561, %v587
      %v633 = vadd.f32 %v562, %v587
      %v634 = vadd.f32 %v563, %v587
      %v635 = vadd.f32 %v564, %v587
      %v636 = vadd.f32 %v565, %v587
      %v637 = vadd.f32 %v566, %v587
      %v638 = vadd.f32 %v567, %v587
      %v639 = vadd.f32 %v568, %v587
      %v640 = vadd.f32 %v569, %v587
      %v641 = vadd.f32 %v570, %v587
      %v642 = vadd.f32 %v571, %v587
      %v643 = vadd.f32 %v572, %v587
      %v644 = vadd.f32 %v573, %v587
      %v645 = vadd.f32 %v574, %v587
      %v646 = vadd.f32 %v575, %v587
      %v647 = vadd.f32 %v576, %v587
      %v648 = vadd.f32 %v577, %v587
      %v649 = vadd.f32 %v578, %v587
      %v650 = vadd.f32 %v579, %v587
      %v651 = vadd.f32 %v580, %v587
      %v652 = vadd.f32 %v581, %v587
      %v653 = vmax.f32 %v589, 0.0
      %v654 = vmax.f32 %v590, 0.0
      %v655 = vmax.f32 %v591, 0.0
      %v656 = vmax.f32 %v592, 0.0
      %v657 = vmax.f32 %v593, 0.0
      %v658 = vmax.f32 %v594, 0.0
      %v659 = vmax.f32 %v595, 0.0
      %v660 = vmax.f32 %v596, 0.0
      %v661 = vmax.f32 %v597, 0.0
      %v662 = vmax.f32 %v598, 0.0
      %v663 = vmax.f32 %v599, 0.0
      %v664 = vmax.f32 %v600, 0.0
      %v665 = vmax.f32 %v601, 0.0
      %v666 = vmax.f32 %v602, 0.0
      %v667 = vmax.f32 %v603, 0.0
      %v668 = vmax.f32 %v604, 0.0
      %v669 = vmax.f32 %v605, 0.0
      %v670 = vmax.f32 %v606, 0.0
      %v671 = vmax.f32 %v607, 0.0
      %v672 = vmax.f32 %v608, 0.0
      %v673 = vmax.f32 %v609, 0.0
      %v674 = vmax.f32 %v610, 0.0
      %v675 = vmax.f32 %v611, 0.0
      %v676 = vmax.f32 %v612, 0.0
      %v677 = vmax.f32 %v613, 0.0
      %v678 = vmax.f32 %v614, 0.0
      %v679 = vmax.f32 %v615, 0.0
      %v680 = vmax.f32 %v616, 0.0
      %v681 = vmax.f32 %v617, 0.0
      %v682 = vmax.f32 %v618, 0.0
      %v683 = vmax.f32 %v619, 0.0
      %v684 = vmax.f32 %v620, 0.0
      %v685 = vmax.f32 %v621, 0.0
      %v686 = vmax.f32 %v622, 0.0
      %v687 = vmax.f32 %v623, 0.0
      %v688 = vmax.f32 %v624, 0.0
      %v689 = vmax.f32 %v625, 0.0
      %v690 = vmax.f32 %v626, 0.0
      %v691 = vmax.f32 %v627, 0.0
      %v692 = vmax.f32 %v628, 0.0
      %v693 = vmax.f32 %v629, 0.0
      %v694 = vmax.f32 %v630, 0.0
      %v695 = vmax.f32 %v631, 0.0
      %v696 = vmax.f32 %v632, 0.0
      %v697 = vmax.f32 %v633, 0.0
      %v698 = vmax.f32 %v634, 0.0
      %v699 = vmax.f32 %v635, 0.0
      %v700 = vmax.f32 %v636, 0.0
      %v701 = vmax.f32 %v637, 0.0
      %v702 = vmax.f32 %v638, 0.0
      %v703 = vmax.f32 %v639, 0.0
      %v704 = vmax.f32 %v640, 0.0
      %v705 = vmax.f32 %v641, 0.0
      %v706 = vmax.f32 %v642, 0.0
      %v707 = vmax.f32 %v643, 0.0
      %v708 = vmax.f32 %v644, 0.0
      %v709 = vmax.f32 %v645, 0.0
      %v710 = vmax.f32 %v646, 0.0
      %v711 = vmax.f32 %v647, 0.0
      %v712 = vmax.f32 %v648, 0.0
      %v713 = vmax.f32 %v649, 0.0
      %v714 = vmax.f32 %v650, 0.0
      %v715 = vmax.f32 %v651, 0.0
      %v716 = vmax.f32 %v652, 0.0
      %v717 = vpack.c.bf16 %v654, %v653
      %v718 = vpack.c.bf16 %v656, %v655
      %v719 = vpack.c.bf16 %v658, %v657
      %v720 = vpack.c.bf16 %v660, %v659
      %v721 = vpack.c.bf16 %v662, %v661
      %v722 = vpack.c.bf16 %v664, %v663
      %v723 = vpack.c.bf16 %v666, %v665
      %v724 = vpack.c.bf16 %v668, %v667
      %v725 = vpack.c.bf16 %v670, %v669
      %v726 = vpack.c.bf16 %v672, %v671
      %v727 = vpack.c.bf16 %v674, %v673
      %v728 = vpack.c.bf16 %v676, %v675
      %v729 = vpack.c.bf16 %v678, %v677
      %v730 = vpack.c.bf16 %v680, %v679
      %v731 = vpack.c.bf16 %v682, %v681
      %v732 = vpack.c.bf16 %v684, %v683
      %v733 = vpack.c.bf16 %v686, %v685
      %v734 = vpack.c.bf16 %v688, %v687
      %v735 = vpack.c.bf16 %v690, %v689
      %v736 = vpack.c.bf16 %v692, %v691
      %v737 = vpack.c.bf16 %v694, %v693
      %v738 = vpack.c.bf16 %v696, %v695
      %v739 = vpack.c.bf16 %v698, %v697
      %v740 = vpack.c.bf16 %v700, %v699
      %v741 = vpack.c.bf16 %v702, %v701
      %v742 = vpack.c.bf16 %v704, %v703
      %v743 = vpack.c.bf16 %v706, %v705
      %v744 = vpack.c.bf16 %v708, %v707
      %v745 = vpack.c.bf16 %v710, %v709
      %v746 = vpack.c.bf16 %v712, %v711
      %v747 = vpack.c.bf16 %v714, %v713
      %v748 = vpack.c.bf16 %v716, %v715
      %v749 = vld [vmem:[%s3] sm:$0xf]
      %vm750 = vcmask 64512
      %v752 = vsel %vm750, %v717, 0
      %v755 = vsel %vm750, %v718, 0
      %v758 = vsel %vm750, %v719, 0
      %v761 = vsel %vm750, %v720, 0
      %v764 = vsel %vm750, %v721, 0
      %v767 = vsel %vm750, %v722, 0
      %v770 = vsel %vm750, %v723, 0
      %v773 = vsel %vm750, %v724, 0
      %v776 = vsel %vm750, %v725, 0
      %v779 = vsel %vm750, %v726, 0
      %v782 = vsel %vm750, %v727, 0
      %v785 = vsel %vm750, %v728, 0
      %v788 = vsel %vm750, %v729, 0
      %v791 = vsel %vm750, %v730, 0
      %v794 = vsel %vm750, %v731, 0
      %v797 = vsel %vm750, %v732, 0
      %v800 = vsel %vm750, %v733, 0
      %v803 = vsel %vm750, %v734, 0
      %v806 = vsel %vm750, %v735, 0
      %v809 = vsel %vm750, %v736, 0
      %v812 = vsel %vm750, %v737, 0
      %v815 = vsel %vm750, %v738, 0
      %v818 = vsel %vm750, %v739, 0
      %v821 = vsel %vm750, %v740, 0
      %v824 = vsel %vm750, %v741, 0
      %v827 = vsel %vm750, %v742, 0
      %v830 = vsel %vm750, %v743, 0
      %v833 = vsel %vm750, %v744, 0
      %v836 = vsel %vm750, %v745, 0
      %v839 = vsel %vm750, %v746, 0
      %v842 = vsel %vm750, %v747, 0
      %v845 = vsel %vm750, %v748, 0
      %vm847 = vcmask 1043456
      %v849 = vsel %vm847, %v749, 0
      %851 = vmatprep.subr.bf16.mxu0 0
      %852 = vmatpush1.bf16.msra.mxu0 %v849
      %853 = vmatprep.subr.bf16.mxu0 0
      %854 = vmatpush1.bf16.msra.mxu0 0
      %855 = vmatprep.subr.bf16.mxu0 0
      %856 = vmatpush1.bf16.msra.mxu0 0
      %857 = vmatprep.subr.bf16.mxu0 0
      %858 = vmatpush1.bf16.msra.mxu0 0
      %859 = vmatprep.subr.bf16.mxu0 0
      %860 = vmatpush1.bf16.msra.mxu0 0
      %861 = vmatprep.subr.bf16.mxu0 0
      %862 = vmatpush1.bf16.msra.mxu0 0
      %863 = vmatprep.subr.bf16.mxu0 0
      %864 = vmatpush1.bf16.msra.mxu0 0
      %865 = vmatprep.subr.bf16.mxu0 0
      %866 = vmatpush1.bf16.msra.mxu0 0
      %867 = vmatprep.subr.bf16.mxu0 0
      %868 = vmatpush1.bf16.msra.mxu0 0
      %869 = vmatprep.subr.bf16.mxu0 0
      %870 = vmatpush1.bf16.msra.mxu0 0
      %871 = vmatprep.subr.bf16.mxu0 0
      %872 = vmatpush1.bf16.msra.mxu0 0
      %873 = vmatprep.subr.bf16.mxu0 0
      %874 = vmatpush1.bf16.msra.mxu0 0
      %875 = vmatprep.subr.bf16.mxu0 0
      %876 = vmatpush1.bf16.msra.mxu0 0
      %877 = vmatprep.subr.bf16.mxu0 0
      %878 = vmatpush1.bf16.msra.mxu0 0
      %879 = vmatprep.subr.bf16.mxu0 0
      %880 = vmatpush1.bf16.msra.mxu0 0
      %881 = vmatprep.subr.bf16.mxu0 0
      %882 = vmatpush1.bf16.msra.mxu0 0
      %883 = vmatprep.mubr.bf16.mxu0 0
      %884 = vmatmul.mubr.bf16.gmra.mrb[0].mxu0 %v752
      %v885 = vpop.f32.mrb[0].mxu0
      %v886 = vadd.f32 0.0, %v885
      %v887 = vpop.f32.mrb[0].mxu0
      %v888 = vpop.f32.mrb[0].mxu0
      %v889 = vadd.f32 0.0, %v888
      %v890 = vpop.f32.mrb[0].mxu0
      %891 = vmatprep.mubr.bf16.mxu0 0
      %892 = vmatmul.mubr.bf16.gmra.mrb[0].mxu0 %v755
      %v893 = vpop.f32.mrb[0].mxu0
      %v894 = vadd.f32 0.0, %v893
      %v895 = vpop.f32.mrb[0].mxu0
      %v896 = vpop.f32.mrb[0].mxu0
      %v897 = vadd.f32 0.0, %v896
      %v898 = vpop.f32.mrb[0].mxu0
      %899 = vmatprep.mubr.bf16.mxu0 0
      %900 = vmatmul.mubr.bf16.gmra.mrb[0].mxu0 %v758
      %v901 = vpop.f32.mrb[0].mxu0
      %v902 = vadd.f32 0.0, %v901
      %v903 = vpop.f32.mrb[0].mxu0
      %v904 = vpop.f32.mrb[0].mxu0
      %v905 = vadd.f32 0.0, %v904
      %v906 = vpop.f32.mrb[0].mxu0
      %907 = vmatprep.mubr.bf16.mxu0 0
      %908 = vmatmul.mubr.bf16.gmra.mrb[0].mxu0 %v761
      %v909 = vpop.f32.mrb[0].mxu0
      %v910 = vadd.f32 0.0, %v909
      %v911 = vpop.f32.mrb[0].mxu0
      %v912 = vpop.f32.mrb[0].mxu0
      %v913 = vadd.f32 0.0, %v912
      %v914 = vpop.f32.mrb[0].mxu0
      %915 = vmatprep.mubr.bf16.mxu0 0
      %916 = vmatmul.mubr.bf16.gmra.mrb[0].mxu0 %v764
      %v917 = vpop.f32.mrb[0].mxu0
      %v918 = vadd.f32 0.0, %v917
      %v919 = vpop.f32.mrb[0].mxu0
      %v920 = vpop.f32.mrb[0].mxu0
      %v921 = vadd.f32 0.0, %v920
      %v922 = vpop.f32.mrb[0].mxu0
      %923 = vmatprep.mubr.bf16.mxu0 0
      %924 = vmatmul.mubr.bf16.gmra.mrb[0].mxu0 %v767
      %v925 = vpop.f32.mrb[0].mxu0
      %v926 = vadd.f32 0.0, %v925
      %v927 = vpop.f32.mrb[0].mxu0
      %v928 = vpop.f32.mrb[0].mxu0
      %v929 = vadd.f32 0.0, %v928
      %v930 = vpop.f32.mrb[0].mxu0
      %931 = vmatprep.mubr.bf16.mxu0 0
      %932 = vmatmul.mubr.bf16.gmra.mrb[0].mxu0 %v770
      %v933 = vpop.f32.mrb[0].mxu0
      %v934 = vadd.f32 0.0, %v933
      %v935 = vpop.f32.mrb[0].mxu0
      %v936 = vpop.f32.mrb[0].mxu0
      %v937 = vadd.f32 0.0, %v936
      %v938 = vpop.f32.mrb[0].mxu0
      %939 = vmatprep.mubr.bf16.mxu0 0
      %940 = vmatmul.mubr.bf16.gmra.mrb[0].mxu0 %v773
      %v941 = vpop.f32.mrb[0].mxu0
      %v942 = vadd.f32 0.0, %v941
      %v943 = vpop.f32.mrb[0].mxu0
      %v944 = vpop.f32.mrb[0].mxu0
      %v945 = vadd.f32 0.0, %v944
      %v946 = vpop.f32.mrb[0].mxu0
      %947 = vmatprep.mubr.bf16.mxu0 0
      %948 = vmatmul.mubr.bf16.gmra.mrb[0].mxu0 %v776
      %v949 = vpop.f32.mrb[0].mxu0
      %v950 = vadd.f32 0.0, %v949
      %v951 = vpop.f32.mrb[0].mxu0
      %v952 = vpop.f32.mrb[0].mxu0
      %v953 = vadd.f32 0.0, %v952
      %v954 = vpop.f32.mrb[0].mxu0
      %955 = vmatprep.mubr.bf16.mxu0 0
      %956 = vmatmul.mubr.bf16.gmra.mrb[0].mxu0 %v779
      %v957 = vpop.f32.mrb[0].mxu0
      %v958 = vadd.f32 0.0, %v957
      %v959 = vpop.f32.mrb[0].mxu0
      %v960 = vpop.f32.mrb[0].mxu0
      %v961 = vadd.f32 0.0, %v960
      %v962 = vpop.f32.mrb[0].mxu0
      %963 = vmatprep.mubr.bf16.mxu0 0
      %964 = vmatmul.mubr.bf16.gmra.mrb[0].mxu0 %v782
      %v965 = vpop.f32.mrb[0].mxu0
      %v966 = vadd.f32 0.0, %v965
      %v967 = vpop.f32.mrb[0].mxu0
      %v968 = vpop.f32.mrb[0].mxu0
      %v969 = vadd.f32 0.0, %v968
      %v970 = vpop.f32.mrb[0].mxu0
      %971 = vmatprep.mubr.bf16.mxu0 0
      %972 = vmatmul.mubr.bf16.gmra.mrb[0].mxu0 %v785
      %v973 = vpop.f32.mrb[0].mxu0
      %v974 = vadd.f32 0.0, %v973
      %v975 = vpop.f32.mrb[0].mxu0
      %v976 = vpop.f32.mrb[0].mxu0
      %v977 = vadd.f32 0.0, %v976
      %v978 = vpop.f32.mrb[0].mxu0
      %979 = vmatprep.mubr.bf16.mxu0 0
      %980 = vmatmul.mubr.bf16.gmra.mrb[0].mxu0 %v788
      %v981 = vpop.f32.mrb[0].mxu0
      %v982 = vadd.f32 0.0, %v981
      %v983 = vpop.f32.mrb[0].mxu0
      %v984 = vpop.f32.mrb[0].mxu0
      %v985 = vadd.f32 0.0, %v984
      %v986 = vpop.f32.mrb[0].mxu0
      %987 = vmatprep.mubr.bf16.mxu0 0
      %988 = vmatmul.mubr.bf16.gmra.mrb[0].mxu0 %v791
      %v989 = vpop.f32.mrb[0].mxu0
      %v990 = vadd.f32 0.0, %v989
      %v991 = vpop.f32.mrb[0].mxu0
      %v992 = vpop.f32.mrb[0].mxu0
      %v993 = vadd.f32 0.0, %v992
      %v994 = vpop.f32.mrb[0].mxu0
      %995 = vmatprep.mubr.bf16.mxu0 0
      %996 = vmatmul.mubr.bf16.gmra.mrb[0].mxu0 %v794
      %v997 = vpop.f32.mrb[0].mxu0
      %v998 = vadd.f32 0.0, %v997
      %v999 = vpop.f32.mrb[0].mxu0
      %v1000 = vpop.f32.mrb[0].mxu0
      %v1001 = vadd.f32 0.0, %v1000
      %v1002 = vpop.f32.mrb[0].mxu0
      %1003 = vmatprep.mubr.bf16.mxu0 0
      %1004 = vmatmul.mubr.bf16.gmra.mrb[0].mxu0 %v797
      %v1005 = vpop.f32.mrb[0].mxu0
      %v1006 = vadd.f32 0.0, %v1005
      %v1007 = vpop.f32.mrb[0].mxu0
      %v1008 = vpop.f32.mrb[0].mxu0
      %v1009 = vadd.f32 0.0, %v1008
      %v1010 = vpop.f32.mrb[0].mxu0
      %1011 = vmatprep.mubr.bf16.mxu0 0
      %1012 = vmatmul.mubr.bf16.gmra.mrb[0].mxu0 %v800
      %v1013 = vpop.f32.mrb[0].mxu0
      %v1014 = vadd.f32 0.0, %v1013
      %v1015 = vpop.f32.mrb[0].mxu0
      %v1016 = vpop.f32.mrb[0].mxu0
      %v1017 = vadd.f32 0.0, %v1016
      %v1018 = vpop.f32.mrb[0].mxu0
      %1019 = vmatprep.mubr.bf16.mxu0 0
      %1020 = vmatmul.mubr.bf16.gmra.mrb[0].mxu0 %v803
      %v1021 = vpop.f32.mrb[0].mxu0
      %v1022 = vadd.f32 0.0, %v1021
      %v1023 = vpop.f32.mrb[0].mxu0
      %v1024 = vpop.f32.mrb[0].mxu0
      %v1025 = vadd.f32 0.0, %v1024
      %v1026 = vpop.f32.mrb[0].mxu0
      %1027 = vmatprep.mubr.bf16.mxu0 0
      %1028 = vmatmul.mubr.bf16.gmra.mrb[0].mxu0 %v806
      %v1029 = vpop.f32.mrb[0].mxu0
      %v1030 = vadd.f32 0.0, %v1029
      %v1031 = vpop.f32.mrb[0].mxu0
      %v1032 = vpop.f32.mrb[0].mxu0
      %v1033 = vadd.f32 0.0, %v1032
      %v1034 = vpop.f32.mrb[0].mxu0
      %1035 = vmatprep.mubr.bf16.mxu0 0
      %1036 = vmatmul.mubr.bf16.gmra.mrb[0].mxu0 %v809
      %v1037 = vpop.f32.mrb[0].mxu0
      %v1038 = vadd.f32 0.0, %v1037
      %v1039 = vpop.f32.mrb[0].mxu0
      %v1040 = vpop.f32.mrb[0].mxu0
      %v1041 = vadd.f32 0.0, %v1040
      %v1042 = vpop.f32.mrb[0].mxu0
      %1043 = vmatprep.mubr.bf16.mxu0 0
      %1044 = vmatmul.mubr.bf16.gmra.mrb[0].mxu0 %v812
      %v1045 = vpop.f32.mrb[0].mxu0
      %v1046 = vadd.f32 0.0, %v1045
      %v1047 = vpop.f32.mrb[0].mxu0
      %v1048 = vpop.f32.mrb[0].mxu0
      %v1049 = vadd.f32 0.0, %v1048
      %v1050 = vpop.f32.mrb[0].mxu0
      %1051 = vmatprep.mubr.bf16.mxu0 0
      %1052 = vmatmul.mubr.bf16.gmra.mrb[0].mxu0 %v815
      %v1053 = vpop.f32.mrb[0].mxu0
      %v1054 = vadd.f32 0.0, %v1053
      %v1055 = vpop.f32.mrb[0].mxu0
      %v1056 = vpop.f32.mrb[0].mxu0
      %v1057 = vadd.f32 0.0, %v1056
      %v1058 = vpop.f32.mrb[0].mxu0
      %1059 = vmatprep.mubr.bf16.mxu0 0
      %1060 = vmatmul.mubr.bf16.gmra.mrb[0].mxu0 %v818
      %v1061 = vpop.f32.mrb[0].mxu0
      %v1062 = vadd.f32 0.0, %v1061
      %v1063 = vpop.f32.mrb[0].mxu0
      %v1064 = vpop.f32.mrb[0].mxu0
      %v1065 = vadd.f32 0.0, %v1064
      %v1066 = vpop.f32.mrb[0].mxu0
      %1067 = vmatprep.mubr.bf16.mxu0 0
      %1068 = vmatmul.mubr.bf16.gmra.mrb[0].mxu0 %v821
      %v1069 = vpop.f32.mrb[0].mxu0
      %v1070 = vadd.f32 0.0, %v1069
      %v1071 = vpop.f32.mrb[0].mxu0
      %v1072 = vpop.f32.mrb[0].mxu0
      %v1073 = vadd.f32 0.0, %v1072
      %v1074 = vpop.f32.mrb[0].mxu0
      %1075 = vmatprep.mubr.bf16.mxu0 0
      %1076 = vmatmul.mubr.bf16.gmra.mrb[0].mxu0 %v824
      %v1077 = vpop.f32.mrb[0].mxu0
      %v1078 = vadd.f32 0.0, %v1077
      %v1079 = vpop.f32.mrb[0].mxu0
      %v1080 = vpop.f32.mrb[0].mxu0
      %v1081 = vadd.f32 0.0, %v1080
      %v1082 = vpop.f32.mrb[0].mxu0
      %1083 = vmatprep.mubr.bf16.mxu0 0
      %1084 = vmatmul.mubr.bf16.gmra.mrb[0].mxu0 %v827
      %v1085 = vpop.f32.mrb[0].mxu0
      %v1086 = vadd.f32 0.0, %v1085
      %v1087 = vpop.f32.mrb[0].mxu0
      %v1088 = vpop.f32.mrb[0].mxu0
      %v1089 = vadd.f32 0.0, %v1088
      %v1090 = vpop.f32.mrb[0].mxu0
      %1091 = vmatprep.mubr.bf16.mxu0 0
      %1092 = vmatmul.mubr.bf16.gmra.mrb[0].mxu0 %v830
      %v1093 = vpop.f32.mrb[0].mxu0
      %v1094 = vadd.f32 0.0, %v1093
      %v1095 = vpop.f32.mrb[0].mxu0
      %v1096 = vpop.f32.mrb[0].mxu0
      %v1097 = vadd.f32 0.0, %v1096
      %v1098 = vpop.f32.mrb[0].mxu0
      %1099 = vmatprep.mubr.bf16.mxu0 0
      %1100 = vmatmul.mubr.bf16.gmra.mrb[0].mxu0 %v833
      %v1101 = vpop.f32.mrb[0].mxu0
      %v1102 = vadd.f32 0.0, %v1101
      %v1103 = vpop.f32.mrb[0].mxu0
      %v1104 = vpop.f32.mrb[0].mxu0
      %v1105 = vadd.f32 0.0, %v1104
      %v1106 = vpop.f32.mrb[0].mxu0
      %1107 = vmatprep.mubr.bf16.mxu0 0
      %1108 = vmatmul.mubr.bf16.gmra.mrb[0].mxu0 %v836
      %v1109 = vpop.f32.mrb[0].mxu0
      %v1110 = vadd.f32 0.0, %v1109
      %v1111 = vpop.f32.mrb[0].mxu0
      %v1112 = vpop.f32.mrb[0].mxu0
      %v1113 = vadd.f32 0.0, %v1112
      %v1114 = vpop.f32.mrb[0].mxu0
      %1115 = vmatprep.mubr.bf16.mxu0 0
      %1116 = vmatmul.mubr.bf16.gmra.mrb[0].mxu0 %v839
      %v1117 = vpop.f32.mrb[0].mxu0
      %v1118 = vadd.f32 0.0, %v1117
      %v1119 = vpop.f32.mrb[0].mxu0
      %v1120 = vpop.f32.mrb[0].mxu0
      %v1121 = vadd.f32 0.0, %v1120
      %v1122 = vpop.f32.mrb[0].mxu0
      %1123 = vmatprep.mubr.bf16.mxu0 0
      %1124 = vmatmul.mubr.bf16.gmra.mrb[0].mxu0 %v842
      %v1125 = vpop.f32.mrb[0].mxu0
      %v1126 = vadd.f32 0.0, %v1125
      %v1127 = vpop.f32.mrb[0].mxu0
      %v1128 = vpop.f32.mrb[0].mxu0
      %v1129 = vadd.f32 0.0, %v1128
      %v1130 = vpop.f32.mrb[0].mxu0
      %1131 = vmatprep.mubr.bf16.mxu0 0
      %1132 = vmatmul.mubr.bf16.gmra.mrb[0].mxu0 %v845
      %v1133 = vpop.f32.mrb[0].mxu0
      %v1134 = vadd.f32 0.0, %v1133
      %v1135 = vpop.f32.mrb[0].mxu0
      %v1136 = vpop.f32.mrb[0].mxu0
      %v1137 = vadd.f32 0.0, %v1136
      %v1138 = vpop.f32.mrb[0].mxu0
      %1139 = vdwg.mxu0
      %p1140 = scmp.eq.s32.totalorder %s24, 0
      %p1141 = scmp.eq.s32.totalorder %s25, 0
      %p1142 = pnand %p1140, %p1141
      %p1143 = pneg %p1142
      // Predicated region
      $region57: #{bottleneck_forward.5} parent=55 // pred_check
        _
      $region58: #{bottleneck_forward.5} parent=55 // pred_check_branch
        %1145 = sbr.rel (%p1142) target = $region60
      $region59: #{bottleneck_forward.5} parent=55 // pred_region
        %vm1146 = vcmask 123904
        %1147 = vst.msk [vmem:[#allocation2] sm:$0x3] %vm1146, 0.0
        %vm1148 = vcmask 130048
        %1149 = vst.msk [vmem:[%s379] sm:$0xff] %vm1148, 0.0
        %1150 = vst.msk [vmem:[%s379 + $0x8] sm:$0xff] %vm1148, 0.0
        %1151 = vst.msk [vmem:[%s379 + $0x10] sm:$0xff] %vm1148, 0.0
        %1152 = vst.msk [vmem:[%s379 + $0x18] sm:$0xff] %vm1148, 0.0
        %1153 = vst.msk [vmem:[%s379 + $0x20] sm:$0xff] %vm1148, 0.0
        %1154 = vst.msk [vmem:[%s379 + $0x28] sm:$0xff] %vm1148, 0.0
        %1155 = vst.msk [vmem:[%s379 + $0x30] sm:$0xff] %vm1148, 0.0
        %1156 = vst.msk [vmem:[%s379 + $0x38] sm:$0xff] %vm1148, 0.0
        %1157 = vst.msk [vmem:[%s379 + $0x40] sm:$0xff] %vm1148, 0.0
        %1158 = vst.msk [vmem:[%s379 + $0x48] sm:$0xff] %vm1148, 0.0
        %1159 = vst.msk [vmem:[%s379 + $0x50] sm:$0xff] %vm1148, 0.0
        %1160 = vst.msk [vmem:[%s379 + $0x58] sm:$0xff] %vm1148, 0.0
        %1161 = vst.msk [vmem:[%s379 + $0x60] sm:$0xff] %vm1148, 0.0
        %1162 = vst.msk [vmem:[%s379 + $0x68] sm:$0xff] %vm1148, 0.0
        %1163 = vst.msk [vmem:[%s379 + $0x70] sm:$0xff] %vm1148, 0.0
        %1164 = vst.msk [vmem:[%s379 + $0x78] sm:$0xff] %vm1148, 0.0
        %1165 = vst.msk [vmem:[%s379 + $0x80] sm:$0xff] %vm1148, 0.0
        %1166 = vst.msk [vmem:[%s379 + $0x88] sm:$0xff] %vm1148, 0.0
        %1167 = vst.msk [vmem:[%s379 + $0x90] sm:$0xff] %vm1148, 0.0
        %1168 = vst.msk [vmem:[%s379 + $0x98] sm:$0xff] %vm1148, 0.0
        %1169 = vst.msk [vmem:[%s379 + $0xa0] sm:$0xff] %vm1148, 0.0
        %1170 = vst.msk [vmem:[%s379 + $0xa8] sm:$0xff] %vm1148, 0.0
        %1171 = vst.msk [vmem:[%s379 + $0xb0] sm:$0xff] %vm1148, 0.0
        %1172 = vst.msk [vmem:[%s379 + $0xb8] sm:$0xff] %vm1148, 0.0
        %1173 = vst.msk [vmem:[%s379 + $0xc0] sm:$0xff] %vm1148, 0.0
        %1174 = vst.msk [vmem:[%s379 + $0xc8] sm:$0xff] %vm1148, 0.0
        %1175 = vst.msk [vmem:[%s379 + $0xd0] sm:$0xff] %vm1148, 0.0
        %1176 = vst.msk [vmem:[%s379 + $0xd8] sm:$0xff] %vm1148, 0.0
        %1177 = vst.msk [vmem:[%s379 + $0xe0] sm:$0xff] %vm1148, 0.0
        %1178 = vst.msk [vmem:[%s379 + $0xe8] sm:$0xff] %vm1148, 0.0
        %1179 = vst.msk [vmem:[%s379 + $0xf0] sm:$0xff] %vm1148, 0.0
        %1180 = vst.msk [vmem:[%s379 + $0xf8] sm:$0xff] %vm1148, 0.0
        %1181 = vst.msk [vmem:[%s379 + $0x100] sm:$0xff] %vm1148, 0.0
        %1182 = vst.msk [vmem:[%s379 + $0x108] sm:$0xff] %vm1148, 0.0
        %1183 = vst.msk [vmem:[%s379 + $0x110] sm:$0xff] %vm1148, 0.0
        %1184 = vst.msk [vmem:[%s379 + $0x118] sm:$0xff] %vm1148, 0.0
        %1185 = vst.msk [vmem:[%s379 + $0x120] sm:$0xff] %vm1148, 0.0
        %1186 = vst.msk [vmem:[%s379 + $0x128] sm:$0xff] %vm1148, 0.0
        %1187 = vst.msk [vmem:[%s379 + $0x130] sm:$0xff] %vm1148, 0.0
        %1188 = vst.msk [vmem:[%s379 + $0x138] sm:$0xff] %vm1148, 0.0
        %1189 = vst.msk [vmem:[%s379 + $0x140] sm:$0xff] %vm1148, 0.0
        %1190 = vst.msk [vmem:[%s379 + $0x148] sm:$0xff] %vm1148, 0.0
        %1191 = vst.msk [vmem:[%s379 + $0x150] sm:$0xff] %vm1148, 0.0
        %1192 = vst.msk [vmem:[%s379 + $0x158] sm:$0xff] %vm1148, 0.0
        %1193 = vst.msk [vmem:[%s379 + $0x160] sm:$0xff] %vm1148, 0.0
        %1194 = vst.msk [vmem:[%s379 + $0x168] sm:$0xff] %vm1148, 0.0
        %1195 = vst.msk [vmem:[%s379 + $0x170] sm:$0xff] %vm1148, 0.0
        %1196 = vst.msk [vmem:[%s379 + $0x178] sm:$0xff] %vm1148, 0.0
        %1197 = vst.msk [vmem:[%s379 + $0x180] sm:$0xff] %vm1148, 0.0
        %1198 = vst.msk [vmem:[%s379 + $0x188] sm:$0xff] %vm1148, 0.0
        %1199 = vst.msk [vmem:[%s379 + $0x190] sm:$0xff] %vm1148, 0.0
        %1200 = vst.msk [vmem:[%s379 + $0x198] sm:$0xff] %vm1148, 0.0
        %1201 = vst.msk [vmem:[%s379 + $0x1a0] sm:$0xff] %vm1148, 0.0
        %1202 = vst.msk [vmem:[%s379 + $0x1a8] sm:$0xff] %vm1148, 0.0
        %1203 = vst.msk [vmem:[%s379 + $0x1b0] sm:$0xff] %vm1148, 0.0
        %1204 = vst.msk [vmem:[%s379 + $0x1b8] sm:$0xff] %vm1148, 0.0
        %1205 = vst.msk [vmem:[%s379 + $0x1c0] sm:$0xff] %vm1148, 0.0
        %1206 = vst.msk [vmem:[%s379 + $0x1c8] sm:$0xff] %vm1148, 0.0
        %1207 = vst.msk [vmem:[%s379 + $0x1d0] sm:$0xff] %vm1148, 0.0
        %1208 = vst.msk [vmem:[%s379 + $0x1d8] sm:$0xff] %vm1148, 0.0
        %1209 = vst.msk [vmem:[%s379 + $0x1e0] sm:$0xff] %vm1148, 0.0
        %1210 = vst.msk [vmem:[%s379 + $0x1e8] sm:$0xff] %vm1148, 0.0
        %1211 = vst.msk [vmem:[%s379 + $0x1f0] sm:$0xff] %vm1148, 0.0
        %1212 = vst.msk [vmem:[%s379 + $0x1f8] sm:$0xff] %vm1148, 0.0
      $region60: #{bottleneck_forward.5} parent=55 // pred_fallthru
        _
      // Predicated region
      $region61: #{bottleneck_forward.5} parent=55 // pred_check
        %p1213 = pneg %p1140
      $region62: #{bottleneck_forward.5} parent=55 // pred_check_branch
        %1215 = sbr.rel (%p1213) target = $region64
      $region63: #{bottleneck_forward.5} parent=55 // pred_region
        %v1216 = vld [vmem:[#allocation2] sm:$0x3]
        %vm1217 = vcmask 130048
        %v1218 = vsel %vm1217, %v886, 0.0
        %v1219 = vsel %vm1217, %v889, 0.0
        %v1220 = vadd.f32 %v1218, %v1219
        %v1221 = vsel %vm1217, %v894, 0.0
        %v1222 = vadd.f32 %v1220, %v1221
        %v1223 = vsel %vm1217, %v897, 0.0
        %v1224 = vadd.f32 %v1222, %v1223
        %v1225 = vsel %vm1217, %v902, 0.0
        %v1226 = vadd.f32 %v1224, %v1225
        %v1227 = vsel %vm1217, %v905, 0.0
        %v1228 = vadd.f32 %v1226, %v1227
        %v1229 = vsel %vm1217, %v910, 0.0
        %v1230 = vadd.f32 %v1228, %v1229
        %v1231 = vsel %vm1217, %v913, 0.0
        %v1232 = vadd.f32 %v1230, %v1231
        %v1233 = vsel %vm1217, %v918, 0.0
        %v1234 = vadd.f32 %v1232, %v1233
        %v1235 = vsel %vm1217, %v921, 0.0
        %v1236 = vadd.f32 %v1234, %v1235
        %v1237 = vsel %vm1217, %v926, 0.0
        %v1238 = vadd.f32 %v1236, %v1237
        %v1239 = vsel %vm1217, %v929, 0.0
        %v1240 = vadd.f32 %v1238, %v1239
        %v1241 = vsel %vm1217, %v934, 0.0
        %v1242 = vadd.f32 %v1240, %v1241
        %v1243 = vsel %vm1217, %v937, 0.0
        %v1244 = vadd.f32 %v1242, %v1243
        %v1245 = vsel %vm1217, %v942, 0.0
        %v1246 = vadd.f32 %v1244, %v1245
        %v1247 = vsel %vm1217, %v945, 0.0
        %v1248 = vadd.f32 %v1246, %v1247
        %v1249 = vsel %vm1217, %v950, 0.0
        %v1250 = vadd.f32 %v1248, %v1249
        %v1251 = vsel %vm1217, %v953, 0.0
        %v1252 = vadd.f32 %v1250, %v1251
        %v1253 = vsel %vm1217, %v958, 0.0
        %v1254 = vadd.f32 %v1252, %v1253
        %v1255 = vsel %vm1217, %v961, 0.0
        %v1256 = vadd.f32 %v1254, %v1255
        %v1257 = vsel %vm1217, %v966, 0.0
        %v1258 = vadd.f32 %v1256, %v1257
        %v1259 = vsel %vm1217, %v969, 0.0
        %v1260 = vadd.f32 %v1258, %v1259
        %v1261 = vsel %vm1217, %v974, 0.0
        %v1262 = vadd.f32 %v1260, %v1261
        %v1263 = vsel %vm1217, %v977, 0.0
        %v1264 = vadd.f32 %v1262, %v1263
        %v1265 = vsel %vm1217, %v982, 0.0
        %v1266 = vadd.f32 %v1264, %v1265
        %v1267 = vsel %vm1217, %v985, 0.0
        %v1268 = vadd.f32 %v1266, %v1267
        %v1269 = vsel %vm1217, %v990, 0.0
        %v1270 = vadd.f32 %v1268, %v1269
        %v1271 = vsel %vm1217, %v993, 0.0
        %v1272 = vadd.f32 %v1270, %v1271
        %v1273 = vsel %vm1217, %v998, 0.0
        %v1274 = vadd.f32 %v1272, %v1273
        %v1275 = vsel %vm1217, %v1001, 0.0
        %v1276 = vadd.f32 %v1274, %v1275
        %v1277 = vsel %vm1217, %v1006, 0.0
        %v1278 = vadd.f32 %v1276, %v1277
        %v1279 = vsel %vm1217, %v1009, 0.0
        %v1280 = vadd.f32 %v1278, %v1279
        %v1281 = vsel %vm1217, %v1014, 0.0
        %v1282 = vadd.f32 %v1280, %v1281
        %v1283 = vsel %vm1217, %v1017, 0.0
        %v1284 = vadd.f32 %v1282, %v1283
        %v1285 = vsel %vm1217, %v1022, 0.0
        %v1286 = vadd.f32 %v1284, %v1285
        %v1287 = vsel %vm1217, %v1025, 0.0
        %v1288 = vadd.f32 %v1286, %v1287
        %v1289 = vsel %vm1217, %v1030, 0.0
        %v1290 = vadd.f32 %v1288, %v1289
        %v1291 = vsel %vm1217, %v1033, 0.0
        %v1292 = vadd.f32 %v1290, %v1291
        %v1293 = vsel %vm1217, %v1038, 0.0
        %v1294 = vadd.f32 %v1292, %v1293
        %v1295 = vsel %vm1217, %v1041, 0.0
        %v1296 = vadd.f32 %v1294, %v1295
        %v1297 = vsel %vm1217, %v1046, 0.0
        %v1298 = vadd.f32 %v1296, %v1297
        %v1299 = vsel %vm1217, %v1049, 0.0
        %v1300 = vadd.f32 %v1298, %v1299
        %v1301 = vsel %vm1217, %v1054, 0.0
        %v1302 = vadd.f32 %v1300, %v1301
        %v1303 = vsel %vm1217, %v1057, 0.0
        %v1304 = vadd.f32 %v1302, %v1303
        %v1305 = vsel %vm1217, %v1062, 0.0
        %v1306 = vadd.f32 %v1304, %v1305
        %v1307 = vsel %vm1217, %v1065, 0.0
        %v1308 = vadd.f32 %v1306, %v1307
        %v1309 = vsel %vm1217, %v1070, 0.0
        %v1310 = vadd.f32 %v1308, %v1309
        %v1311 = vsel %vm1217, %v1073, 0.0
        %v1312 = vadd.f32 %v1310, %v1311
        %v1313 = vsel %vm1217, %v1078, 0.0
        %v1314 = vadd.f32 %v1312, %v1313
        %v1315 = vsel %vm1217, %v1081, 0.0
        %v1316 = vadd.f32 %v1314, %v1315
        %v1317 = vsel %vm1217, %v1086, 0.0
        %v1318 = vadd.f32 %v1316, %v1317
        %v1319 = vsel %vm1217, %v1089, 0.0
        %v1320 = vadd.f32 %v1318, %v1319
        %v1321 = vsel %vm1217, %v1094, 0.0
        %v1322 = vadd.f32 %v1320, %v1321
        %v1323 = vsel %vm1217, %v1097, 0.0
        %v1324 = vadd.f32 %v1322, %v1323
        %v1325 = vsel %vm1217, %v1102, 0.0
        %v1326 = vadd.f32 %v1324, %v1325
        %v1327 = vsel %vm1217, %v1105, 0.0
        %v1328 = vadd.f32 %v1326, %v1327
        %v1329 = vsel %vm1217, %v1110, 0.0
        %v1330 = vadd.f32 %v1328, %v1329
        %v1331 = vsel %vm1217, %v1113, 0.0
        %v1332 = vadd.f32 %v1330, %v1331
        %v1333 = vsel %vm1217, %v1118, 0.0
        %v1334 = vadd.f32 %v1332, %v1333
        %v1335 = vsel %vm1217, %v1121, 0.0
        %v1336 = vadd.f32 %v1334, %v1335
        %v1337 = vsel %vm1217, %v1126, 0.0
        %v1338 = vadd.f32 %v1336, %v1337
        %v1339 = vsel %vm1217, %v1129, 0.0
        %v1340 = vadd.f32 %v1338, %v1339
        %v1341 = vsel %vm1217, %v1134, 0.0
        %v1342 = vadd.f32 %v1340, %v1341
        %v1343 = vsel %vm1217, %v1137, 0.0
        %v1344 = vadd.f32 %v1342, %v1343
        %v1345 = vrot.slane %v1344, 4
        %v1346 = vadd.f32 %v1344, %v1345
        %v1347 = vrot.slane %v1346, 2
        %v1348 = vadd.f32 %v1346, %v1347
        %v1349 = vrot.slane %v1348, 1
        %v1350 = vadd.f32 %v1348, %v1349
        %v1351 = vmul.f32 %v886, %v886
        %v1352 = vmul.f32 %v889, %v889
        %v1353 = vmul.f32 %v894, %v894
        %v1354 = vmul.f32 %v897, %v897
        %v1355 = vmul.f32 %v902, %v902
        %v1356 = vmul.f32 %v905, %v905
        %v1357 = vmul.f32 %v910, %v910
        %v1358 = vmul.f32 %v913, %v913
        %v1359 = vmul.f32 %v918, %v918
        %v1360 = vmul.f32 %v921, %v921
        %v1361 = vmul.f32 %v926, %v926
        %v1362 = vmul.f32 %v929, %v929
        %v1363 = vmul.f32 %v934, %v934
        %v1364 = vmul.f32 %v937, %v937
        %v1365 = vmul.f32 %v942, %v942
        %v1366 = vmul.f32 %v945, %v945
        %v1367 = vmul.f32 %v950, %v950
        %v1368 = vmul.f32 %v953, %v953
        %v1369 = vmul.f32 %v958, %v958
        %v1370 = vmul.f32 %v961, %v961
        %v1371 = vmul.f32 %v966, %v966
        %v1372 = vmul.f32 %v969, %v969
        %v1373 = vmul.f32 %v974, %v974
        %v1374 = vmul.f32 %v977, %v977
        %v1375 = vmul.f32 %v982, %v982
        %v1376 = vmul.f32 %v985, %v985
        %v1377 = vmul.f32 %v990, %v990
        %v1378 = vmul.f32 %v993, %v993
        %v1379 = vmul.f32 %v998, %v998
        %v1380 = vmul.f32 %v1001, %v1001
        %v1381 = vmul.f32 %v1006, %v1006
        %v1382 = vmul.f32 %v1009, %v1009
        %v1383 = vmul.f32 %v1014, %v1014
        %v1384 = vmul.f32 %v1017, %v1017
        %v1385 = vmul.f32 %v1022, %v1022
        %v1386 = vmul.f32 %v1025, %v1025
        %v1387 = vmul.f32 %v1030, %v1030
        %v1388 = vmul.f32 %v1033, %v1033
        %v1389 = vmul.f32 %v1038, %v1038
        %v1390 = vmul.f32 %v1041, %v1041
        %v1391 = vmul.f32 %v1046, %v1046
        %v1392 = vmul.f32 %v1049, %v1049
        %v1393 = vmul.f32 %v1054, %v1054
        %v1394 = vmul.f32 %v1057, %v1057
        %v1395 = vmul.f32 %v1062, %v1062
        %v1396 = vmul.f32 %v1065, %v1065
        %v1397 = vmul.f32 %v1070, %v1070
        %v1398 = vmul.f32 %v1073, %v1073
        %v1399 = vmul.f32 %v1078, %v1078
        %v1400 = vmul.f32 %v1081, %v1081
        %v1401 = vmul.f32 %v1086, %v1086
        %v1402 = vmul.f32 %v1089, %v1089
        %v1403 = vmul.f32 %v1094, %v1094
        %v1404 = vmul.f32 %v1097, %v1097
        %v1405 = vmul.f32 %v1102, %v1102
        %v1406 = vmul.f32 %v1105, %v1105
        %v1407 = vmul.f32 %v1110, %v1110
        %v1408 = vmul.f32 %v1113, %v1113
        %v1409 = vmul.f32 %v1118, %v1118
        %v1410 = vmul.f32 %v1121, %v1121
        %v1411 = vmul.f32 %v1126, %v1126
        %v1412 = vmul.f32 %v1129, %v1129
        %v1413 = vmul.f32 %v1134, %v1134
        %v1414 = vmul.f32 %v1137, %v1137
        %v1415 = vsel %vm1217, %v1351, 0.0
        %v1416 = vsel %vm1217, %v1352, 0.0
        %v1417 = vadd.f32 %v1415, %v1416
        %v1418 = vsel %vm1217, %v1353, 0.0
        %v1419 = vadd.f32 %v1417, %v1418
        %v1420 = vsel %vm1217, %v1354, 0.0
        %v1421 = vadd.f32 %v1419, %v1420
        %v1422 = vsel %vm1217, %v1355, 0.0
        %v1423 = vadd.f32 %v1421, %v1422
        %v1424 = vsel %vm1217, %v1356, 0.0
        %v1425 = vadd.f32 %v1423, %v1424
        %v1426 = vsel %vm1217, %v1357, 0.0
        %v1427 = vadd.f32 %v1425, %v1426
        %v1428 = vsel %vm1217, %v1358, 0.0
        %v1429 = vadd.f32 %v1427, %v1428
        %v1430 = vsel %vm1217, %v1359, 0.0
        %v1431 = vadd.f32 %v1429, %v1430
        %v1432 = vsel %vm1217, %v1360, 0.0
        %v1433 = vadd.f32 %v1431, %v1432
        %v1434 = vsel %vm1217, %v1361, 0.0
        %v1435 = vadd.f32 %v1433, %v1434
        %v1436 = vsel %vm1217, %v1362, 0.0
        %v1437 = vadd.f32 %v1435, %v1436
        %v1438 = vsel %vm1217, %v1363, 0.0
        %v1439 = vadd.f32 %v1437, %v1438
        %v1440 = vsel %vm1217, %v1364, 0.0
        %v1441 = vadd.f32 %v1439, %v1440
        %v1442 = vsel %vm1217, %v1365, 0.0
        %v1443 = vadd.f32 %v1441, %v1442
        %v1444 = vsel %vm1217, %v1366, 0.0
        %v1445 = vadd.f32 %v1443, %v1444
        %v1446 = vsel %vm1217, %v1367, 0.0
        %v1447 = vadd.f32 %v1445, %v1446
        %v1448 = vsel %vm1217, %v1368, 0.0
        %v1449 = vadd.f32 %v1447, %v1448
        %v1450 = vsel %vm1217, %v1369, 0.0
        %v1451 = vadd.f32 %v1449, %v1450
        %v1452 = vsel %vm1217, %v1370, 0.0
        %v1453 = vadd.f32 %v1451, %v1452
        %v1454 = vsel %vm1217, %v1371, 0.0
        %v1455 = vadd.f32 %v1453, %v1454
        %v1456 = vsel %vm1217, %v1372, 0.0
        %v1457 = vadd.f32 %v1455, %v1456
        %v1458 = vsel %vm1217, %v1373, 0.0
        %v1459 = vadd.f32 %v1457, %v1458
        %v1460 = vsel %vm1217, %v1374, 0.0
        %v1461 = vadd.f32 %v1459, %v1460
        %v1462 = vsel %vm1217, %v1375, 0.0
        %v1463 = vadd.f32 %v1461, %v1462
        %v1464 = vsel %vm1217, %v1376, 0.0
        %v1465 = vadd.f32 %v1463, %v1464
        %v1466 = vsel %vm1217, %v1377, 0.0
        %v1467 = vadd.f32 %v1465, %v1466
        %v1468 = vsel %vm1217, %v1378, 0.0
        %v1469 = vadd.f32 %v1467, %v1468
        %v1470 = vsel %vm1217, %v1379, 0.0
        %v1471 = vadd.f32 %v1469, %v1470
        %v1472 = vsel %vm1217, %v1380, 0.0
        %v1473 = vadd.f32 %v1471, %v1472
        %v1474 = vsel %vm1217, %v1381, 0.0
        %v1475 = vadd.f32 %v1473, %v1474
        %v1476 = vsel %vm1217, %v1382, 0.0
        %v1477 = vadd.f32 %v1475, %v1476
        %v1478 = vsel %vm1217, %v1383, 0.0
        %v1479 = vadd.f32 %v1477, %v1478
        %v1480 = vsel %vm1217, %v1384, 0.0
        %v1481 = vadd.f32 %v1479, %v1480
        %v1482 = vsel %vm1217, %v1385, 0.0
        %v1483 = vadd.f32 %v1481, %v1482
        %v1484 = vsel %vm1217, %v1386, 0.0
        %v1485 = vadd.f32 %v1483, %v1484
        %v1486 = vsel %vm1217, %v1387, 0.0
        %v1487 = vadd.f32 %v1485, %v1486
        %v1488 = vsel %vm1217, %v1388, 0.0
        %v1489 = vadd.f32 %v1487, %v1488
        %v1490 = vsel %vm1217, %v1389, 0.0
        %v1491 = vadd.f32 %v1489, %v1490
        %v1492 = vsel %vm1217, %v1390, 0.0
        %v1493 = vadd.f32 %v1491, %v1492
        %v1494 = vsel %vm1217, %v1391, 0.0
        %v1495 = vadd.f32 %v1493, %v1494
        %v1496 = vsel %vm1217, %v1392, 0.0
        %v1497 = vadd.f32 %v1495, %v1496
        %v1498 = vsel %vm1217, %v1393, 0.0
        %v1499 = vadd.f32 %v1497, %v1498
        %v1500 = vsel %vm1217, %v1394, 0.0
        %v1501 = vadd.f32 %v1499, %v1500
        %v1502 = vsel %vm1217, %v1395, 0.0
        %v1503 = vadd.f32 %v1501, %v1502
        %v1504 = vsel %vm1217, %v1396, 0.0
        %v1505 = vadd.f32 %v1503, %v1504
        %v1506 = vsel %vm1217, %v1397, 0.0
        %v1507 = vadd.f32 %v1505, %v1506
        %v1508 = vsel %vm1217, %v1398, 0.0
        %v1509 = vadd.f32 %v1507, %v1508
        %v1510 = vsel %vm1217, %v1399, 0.0
        %v1511 = vadd.f32 %v1509, %v1510
        %v1512 = vsel %vm1217, %v1400, 0.0
        %v1513 = vadd.f32 %v1511, %v1512
        %v1514 = vsel %vm1217, %v1401, 0.0
        %v1515 = vadd.f32 %v1513, %v1514
        %v1516 = vsel %vm1217, %v1402, 0.0
        %v1517 = vadd.f32 %v1515, %v1516
        %v1518 = vsel %vm1217, %v1403, 0.0
        %v1519 = vadd.f32 %v1517, %v1518
        %v1520 = vsel %vm1217, %v1404, 0.0
        %v1521 = vadd.f32 %v1519, %v1520
        %v1522 = vsel %vm1217, %v1405, 0.0
        %v1523 = vadd.f32 %v1521, %v1522
        %v1524 = vsel %vm1217, %v1406, 0.0
        %v1525 = vadd.f32 %v1523, %v1524
        %v1526 = vsel %vm1217, %v1407, 0.0
        %v1527 = vadd.f32 %v1525, %v1526
        %v1528 = vsel %vm1217, %v1408, 0.0
        %v1529 = vadd.f32 %v1527, %v1528
        %v1530 = vsel %vm1217, %v1409, 0.0
        %v1531 = vadd.f32 %v1529, %v1530
        %v1532 = vsel %vm1217, %v1410, 0.0
        %v1533 = vadd.f32 %v1531, %v1532
        %v1534 = vsel %vm1217, %v1411, 0.0
        %v1535 = vadd.f32 %v1533, %v1534
        %v1536 = vsel %vm1217, %v1412, 0.0
        %v1537 = vadd.f32 %v1535, %v1536
        %v1538 = vsel %vm1217, %v1413, 0.0
        %v1539 = vadd.f32 %v1537, %v1538
        %v1540 = vsel %vm1217, %v1414, 0.0
        %v1541 = vadd.f32 %v1539, %v1540
        %v1542 = vrot.slane %v1541, 4
        %v1543 = vadd.f32 %v1541, %v1542
        %v1544 = vrot.slane %v1543, 2
        %v1545 = vadd.f32 %v1543, %v1544
        %v1546 = vrot.slane %v1545, 1
        %v1547 = vadd.f32 %v1545, %v1546
        %vm1548 = vcmask 1040384
        %v1549 = vsel %vm1548, %v1350, %v1547
        %v1550 = vadd.f32 %v1216, %v1549
        %vm1551 = vcmask 123904
        %1552 = vst.msk [vmem:[#allocation2] sm:$0x3] %vm1551, %v1550
      $region64: #{bottleneck_forward.5} parent=55 // pred_fallthru
        _
      %p1553 = scmp.eq.s32.totalorder %s24, 1
      // Predicated region
      $region65: #{bottleneck_forward.5} parent=55 // pred_check
        %p1554 = pneg %p1553
      $region66: #{bottleneck_forward.5} parent=55 // pred_check_branch
        %1556 = sbr.rel (%p1554) target = $region68
      $region67: #{bottleneck_forward.5} parent=55 // pred_region
        %v1557 = vld [vmem:[%s371] sm:$0xff]
        %v1558 = vld [vmem:[%s371 + $0x8] sm:$0xff]
        %v1559 = vld [vmem:[%s371 + $0x10] sm:$0xff]
        %v1560 = vld [vmem:[%s371 + $0x18] sm:$0xff]
        %v1561 = vld [vmem:[%s371 + $0x20] sm:$0xff]
        %v1562 = vld [vmem:[%s371 + $0x28] sm:$0xff]
        %v1563 = vld [vmem:[%s371 + $0x30] sm:$0xff]
        %v1564 = vld [vmem:[%s371 + $0x38] sm:$0xff]
        %v1565 = vld [vmem:[%s371 + $0x40] sm:$0xff]
        %v1566 = vld [vmem:[%s371 + $0x48] sm:$0xff]
        %v1567 = vld [vmem:[%s371 + $0x50] sm:$0xff]
        %v1568 = vld [vmem:[%s371 + $0x58] sm:$0xff]
        %v1569 = vld [vmem:[%s371 + $0x60] sm:$0xff]
        %v1570 = vld [vmem:[%s371 + $0x68] sm:$0xff]
        %v1571 = vld [vmem:[%s371 + $0x70] sm:$0xff]
        %v1572 = vld [vmem:[%s371 + $0x78] sm:$0xff]
        %v1573 = vld [vmem:[%s371 + $0x80] sm:$0xff]
        %v1574 = vld [vmem:[%s371 + $0x88] sm:$0xff]
        %v1575 = vld [vmem:[%s371 + $0x90] sm:$0xff]
        %v1576 = vld [vmem:[%s371 + $0x98] sm:$0xff]
        %v1577 = vld [vmem:[%s371 + $0xa0] sm:$0xff]
        %v1578 = vld [vmem:[%s371 + $0xa8] sm:$0xff]
        %v1579 = vld [vmem:[%s371 + $0xb0] sm:$0xff]
        %v1580 = vld [vmem:[%s371 + $0xb8] sm:$0xff]
        %v1581 = vld [vmem:[%s371 + $0xc0] sm:$0xff]
        %v1582 = vld [vmem:[%s371 + $0xc8] sm:$0xff]
        %v1583 = vld [vmem:[%s371 + $0xd0] sm:$0xff]
        %v1584 = vld [vmem:[%s371 + $0xd8] sm:$0xff]
        %v1585 = vld [vmem:[%s371 + $0xe0] sm:$0xff]
        %v1586 = vld [vmem:[%s371 + $0xe8] sm:$0xff]
        %v1587 = vld [vmem:[%s371 + $0xf0] sm:$0xff]
        %v1588 = vld [vmem:[%s371 + $0xf8] sm:$0xff]
        %v1589 = vld [vmem:[%s371 + $0x100] sm:$0xff]
        %v1590 = vld [vmem:[%s371 + $0x108] sm:$0xff]
        %v1591 = vld [vmem:[%s371 + $0x110] sm:$0xff]
        %v1592 = vld [vmem:[%s371 + $0x118] sm:$0xff]
        %v1593 = vld [vmem:[%s371 + $0x120] sm:$0xff]
        %v1594 = vld [vmem:[%s371 + $0x128] sm:$0xff]
        %v1595 = vld [vmem:[%s371 + $0x130] sm:$0xff]
        %v1596 = vld [vmem:[%s371 + $0x138] sm:$0xff]
        %v1597 = vld [vmem:[%s371 + $0x140] sm:$0xff]
        %v1598 = vld [vmem:[%s371 + $0x148] sm:$0xff]
        %v1599 = vld [vmem:[%s371 + $0x150] sm:$0xff]
        %v1600 = vld [vmem:[%s371 + $0x158] sm:$0xff]
        %v1601 = vld [vmem:[%s371 + $0x160] sm:$0xff]
        %v1602 = vld [vmem:[%s371 + $0x168] sm:$0xff]
        %v1603 = vld [vmem:[%s371 + $0x170] sm:$0xff]
        %v1604 = vld [vmem:[%s371 + $0x178] sm:$0xff]
        %v1605 = vld [vmem:[%s371 + $0x180] sm:$0xff]
        %v1606 = vld [vmem:[%s371 + $0x188] sm:$0xff]
        %v1607 = vld [vmem:[%s371 + $0x190] sm:$0xff]
        %v1608 = vld [vmem:[%s371 + $0x198] sm:$0xff]
        %v1609 = vld [vmem:[%s371 + $0x1a0] sm:$0xff]
        %v1610 = vld [vmem:[%s371 + $0x1a8] sm:$0xff]
        %v1611 = vld [vmem:[%s371 + $0x1b0] sm:$0xff]
        %v1612 = vld [vmem:[%s371 + $0x1b8] sm:$0xff]
        %v1613 = vld [vmem:[%s371 + $0x1c0] sm:$0xff]
        %v1614 = vld [vmem:[%s371 + $0x1c8] sm:$0xff]
        %v1615 = vld [vmem:[%s371 + $0x1d0] sm:$0xff]
        %v1616 = vld [vmem:[%s371 + $0x1d8] sm:$0xff]
        %v1617 = vld [vmem:[%s371 + $0x1e0] sm:$0xff]
        %v1618 = vld [vmem:[%s371 + $0x1e8] sm:$0xff]
        %v1619 = vld [vmem:[%s371 + $0x1f0] sm:$0xff]
        %v1620 = vld [vmem:[%s371 + $0x1f8] sm:$0xff]
        %v1621 = vpack.c.bf16 %v1558, %v1557
        %v1622 = vpack.c.bf16 %v1560, %v1559
        %v1623 = vpack.c.bf16 %v1562, %v1561
        %v1624 = vpack.c.bf16 %v1564, %v1563
        %v1625 = vpack.c.bf16 %v1566, %v1565
        %v1626 = vpack.c.bf16 %v1568, %v1567
        %v1627 = vpack.c.bf16 %v1570, %v1569
        %v1628 = vpack.c.bf16 %v1572, %v1571
        %v1629 = vpack.c.bf16 %v1574, %v1573
        %v1630 = vpack.c.bf16 %v1576, %v1575
        %v1631 = vpack.c.bf16 %v1578, %v1577
        %v1632 = vpack.c.bf16 %v1580, %v1579
        %v1633 = vpack.c.bf16 %v1582, %v1581
        %v1634 = vpack.c.bf16 %v1584, %v1583
        %v1635 = vpack.c.bf16 %v1586, %v1585
        %v1636 = vpack.c.bf16 %v1588, %v1587
        %v1637 = vpack.c.bf16 %v1590, %v1589
        %v1638 = vpack.c.bf16 %v1592, %v1591
        %v1639 = vpack.c.bf16 %v1594, %v1593
        %v1640 = vpack.c.bf16 %v1596, %v1595
        %v1641 = vpack.c.bf16 %v1598, %v1597
        %v1642 = vpack.c.bf16 %v1600, %v1599
        %v1643 = vpack.c.bf16 %v1602, %v1601
        %v1644 = vpack.c.bf16 %v1604, %v1603
        %v1645 = vpack.c.bf16 %v1606, %v1605
        %v1646 = vpack.c.bf16 %v1608, %v1607
        %v1647 = vpack.c.bf16 %v1610, %v1609
        %v1648 = vpack.c.bf16 %v1612, %v1611
        %v1649 = vpack.c.bf16 %v1614, %v1613
        %v1650 = vpack.c.bf16 %v1616, %v1615
        %v1651 = vpack.c.bf16 %v1618, %v1617
        %v1652 = vpack.c.bf16 %v1620, %v1619
        %v1653 = vld [vmem:[%s7] sm:$0x3]
        %v1654 = vld [vmem:[%s8] sm:$0x1]
        %v1656 = vlaneseq
        %v1657 = vshrl.u32 %v1656, 7
        %v1658 = vsub.s32 0, %v1657
        %v1659 = vrot.slane %v1654, %v1658
        %vm1661 = vcmask 31744
        %v1663 = vsel %vm1661, %v1621, 0
        %v1666 = vsel %vm1661, %v1622, 0
        %v1669 = vsel %vm1661, %v1623, 0
        %v1672 = vsel %vm1661, %v1624, 0
        %v1675 = vsel %vm1661, %v1625, 0
        %v1678 = vsel %vm1661, %v1626, 0
        %v1681 = vsel %vm1661, %v1627, 0
        %v1684 = vsel %vm1661, %v1628, 0
        %v1687 = vsel %vm1661, %v1629, 0
        %v1690 = vsel %vm1661, %v1630, 0
        %v1693 = vsel %vm1661, %v1631, 0
        %v1696 = vsel %vm1661, %v1632, 0
        %v1699 = vsel %vm1661, %v1633, 0
        %v1702 = vsel %vm1661, %v1634, 0
        %v1705 = vsel %vm1661, %v1635, 0
        %v1708 = vsel %vm1661, %v1636, 0
        %v1711 = vsel %vm1661, %v1637, 0
        %v1714 = vsel %vm1661, %v1638, 0
        %v1717 = vsel %vm1661, %v1639, 0
        %v1720 = vsel %vm1661, %v1640, 0
        %v1723 = vsel %vm1661, %v1641, 0
        %v1726 = vsel %vm1661, %v1642, 0
        %v1729 = vsel %vm1661, %v1643, 0
        %v1732 = vsel %vm1661, %v1644, 0
        %v1735 = vsel %vm1661, %v1645, 0
        %v1738 = vsel %vm1661, %v1646, 0
        %v1741 = vsel %vm1661, %v1647, 0
        %v1744 = vsel %vm1661, %v1648, 0
        %v1747 = vsel %vm1661, %v1649, 0
        %v1750 = vsel %vm1661, %v1650, 0
        %v1753 = vsel %vm1661, %v1651, 0
        %v1756 = vsel %vm1661, %v1652, 0
        %vm1758 = vcmask 1041408
        %v1760 = vsel %vm1758, %v1653, 0
        %1762 = vmatprep.subr.bf16.mxu0 0
        %1763 = vmatpush1.bf16.msra.mxu0 %v1760
        %1764 = vmatprep.subr.bf16.mxu0 0
        %1765 = vmatpush1.bf16.msra.mxu0 0
        %1766 = vmatprep.subr.bf16.mxu0 0
        %1767 = vmatpush1.bf16.msra.mxu0 0
        %1768 = vmatprep.subr.bf16.mxu0 0
        %1769 = vmatpush1.bf16.msra.mxu0 0
        %1770 = vmatprep.subr.bf16.mxu0 0
        %1771 = vmatpush1.bf16.msra.mxu0 0
        %1772 = vmatprep.subr.bf16.mxu0 0
        %1773 = vmatpush1.bf16.msra.mxu0 0
        %1774 = vmatprep.subr.bf16.mxu0 0
        %1775 = vmatpush1.bf16.msra.mxu0 0
        %1776 = vmatprep.subr.bf16.mxu0 0
        %1777 = vmatpush1.bf16.msra.mxu0 0
        %1778 = vmatprep.subr.bf16.mxu0 0
        %1779 = vmatpush1.bf16.msra.mxu0 0
        %1780 = vmatprep.subr.bf16.mxu0 0
        %1781 = vmatpush1.bf16.msra.mxu0 0
        %1782 = vmatprep.subr.bf16.mxu0 0
        %1783 = vmatpush1.bf16.msra.mxu0 0
        %1784 = vmatprep.subr.bf16.mxu0 0
        %1785 = vmatpush1.bf16.msra.mxu0 0
        %1786 = vmatprep.subr.bf16.mxu0 0
        %1787 = vmatpush1.bf16.msra.mxu0 0
        %1788 = vmatprep.subr.bf16.mxu0 0
        %1789 = vmatpush1.bf16.msra.mxu0 0
        %1790 = vmatprep.subr.bf16.mxu0 0
        %1791 = vmatpush1.bf16.msra.mxu0 0
        %1792 = vmatprep.subr.bf16.mxu0 0
        %1793 = vmatpush1.bf16.msra.mxu0 0
        %1794 = vmatprep.mubr.bf16.mxu0 0
        %1795 = vmatmul.mubr.bf16.gmra.mrb[0].mxu0 %v1663
        %v1796 = vpop.f32.mrb[0].mxu0
        %v1797 = vadd.f32 %v1659, %v1796
        %v1798 = vpop.f32.mrb[0].mxu0
        %v1799 = vpop.f32.mrb[0].mxu0
        %v1800 = vadd.f32 %v1659, %v1799
        %v1801 = vpop.f32.mrb[0].mxu0
        %1802 = vmatprep.mubr.bf16.mxu0 0
        %1803 = vmatmul.mubr.bf16.gmra.mrb[0].mxu0 %v1666
        %v1804 = vpop.f32.mrb[0].mxu0
        %v1805 = vadd.f32 %v1659, %v1804
        %v1806 = vpop.f32.mrb[0].mxu0
        %v1807 = vpop.f32.mrb[0].mxu0
        %v1808 = vadd.f32 %v1659, %v1807
        %v1809 = vpop.f32.mrb[0].mxu0
        %1810 = vmatprep.mubr.bf16.mxu0 0
        %1811 = vmatmul.mubr.bf16.gmra.mrb[0].mxu0 %v1669
        %v1812 = vpop.f32.mrb[0].mxu0
        %v1813 = vadd.f32 %v1659, %v1812
        %v1814 = vpop.f32.mrb[0].mxu0
        %v1815 = vpop.f32.mrb[0].mxu0
        %v1816 = vadd.f32 %v1659, %v1815
        %v1817 = vpop.f32.mrb[0].mxu0
        %1818 = vmatprep.mubr.bf16.mxu0 0
        %1819 = vmatmul.mubr.bf16.gmra.mrb[0].mxu0 %v1672
        %v1820 = vpop.f32.mrb[0].mxu0
        %v1821 = vadd.f32 %v1659, %v1820
        %v1822 = vpop.f32.mrb[0].mxu0
        %v1823 = vpop.f32.mrb[0].mxu0
        %v1824 = vadd.f32 %v1659, %v1823
        %v1825 = vpop.f32.mrb[0].mxu0
        %1826 = vmatprep.mubr.bf16.mxu0 0
        %1827 = vmatmul.mubr.bf16.gmra.mrb[0].mxu0 %v1675
        %v1828 = vpop.f32.mrb[0].mxu0
        %v1829 = vadd.f32 %v1659, %v1828
        %v1830 = vpop.f32.mrb[0].mxu0
        %v1831 = vpop.f32.mrb[0].mxu0
        %v1832 = vadd.f32 %v1659, %v1831
        %v1833 = vpop.f32.mrb[0].mxu0
        %1834 = vmatprep.mubr.bf16.mxu0 0
        %1835 = vmatmul.mubr.bf16.gmra.mrb[0].mxu0 %v1678
        %v1836 = vpop.f32.mrb[0].mxu0
        %v1837 = vadd.f32 %v1659, %v1836
        %v1838 = vpop.f32.mrb[0].mxu0
        %v1839 = vpop.f32.mrb[0].mxu0
        %v1840 = vadd.f32 %v1659, %v1839
        %v1841 = vpop.f32.mrb[0].mxu0
        %1842 = vmatprep.mubr.bf16.mxu0 0
        %1843 = vmatmul.mubr.bf16.gmra.mrb[0].mxu0 %v1681
        %v1844 = vpop.f32.mrb[0].mxu0
        %v1845 = vadd.f32 %v1659, %v1844
        %v1846 = vpop.f32.mrb[0].mxu0
        %v1847 = vpop.f32.mrb[0].mxu0
        %v1848 = vadd.f32 %v1659, %v1847
        %v1849 = vpop.f32.mrb[0].mxu0
        %1850 = vmatprep.mubr.bf16.mxu0 0
        %1851 = vmatmul.mubr.bf16.gmra.mrb[0].mxu0 %v1684
        %v1852 = vpop.f32.mrb[0].mxu0
        %v1853 = vadd.f32 %v1659, %v1852
        %v1854 = vpop.f32.mrb[0].mxu0
        %v1855 = vpop.f32.mrb[0].mxu0
        %v1856 = vadd.f32 %v1659, %v1855
        %v1857 = vpop.f32.mrb[0].mxu0
        %1858 = vmatprep.mubr.bf16.mxu0 0
        %1859 = vmatmul.mubr.bf16.gmra.mrb[0].mxu0 %v1687
        %v1860 = vpop.f32.mrb[0].mxu0
        %v1861 = vadd.f32 %v1659, %v1860
        %v1862 = vpop.f32.mrb[0].mxu0
        %v1863 = vpop.f32.mrb[0].mxu0
        %v1864 = vadd.f32 %v1659, %v1863
        %v1865 = vpop.f32.mrb[0].mxu0
        %1866 = vmatprep.mubr.bf16.mxu0 0
        %1867 = vmatmul.mubr.bf16.gmra.mrb[0].mxu0 %v1690
        %v1868 = vpop.f32.mrb[0].mxu0
        %v1869 = vadd.f32 %v1659, %v1868
        %v1870 = vpop.f32.mrb[0].mxu0
        %v1871 = vpop.f32.mrb[0].mxu0
        %v1872 = vadd.f32 %v1659, %v1871
        %v1873 = vpop.f32.mrb[0].mxu0
        %1874 = vmatprep.mubr.bf16.mxu0 0
        %1875 = vmatmul.mubr.bf16.gmra.mrb[0].mxu0 %v1693
        %v1876 = vpop.f32.mrb[0].mxu0
        %v1877 = vadd.f32 %v1659, %v1876
        %v1878 = vpop.f32.mrb[0].mxu0
        %v1879 = vpop.f32.mrb[0].mxu0
        %v1880 = vadd.f32 %v1659, %v1879
        %v1881 = vpop.f32.mrb[0].mxu0
        %1882 = vmatprep.mubr.bf16.mxu0 0
        %1883 = vmatmul.mubr.bf16.gmra.mrb[0].mxu0 %v1696
        %v1884 = vpop.f32.mrb[0].mxu0
        %v1885 = vadd.f32 %v1659, %v1884
        %v1886 = vpop.f32.mrb[0].mxu0
        %v1887 = vpop.f32.mrb[0].mxu0
        %v1888 = vadd.f32 %v1659, %v1887
        %v1889 = vpop.f32.mrb[0].mxu0
        %1890 = vmatprep.mubr.bf16.mxu0 0
        %1891 = vmatmul.mubr.bf16.gmra.mrb[0].mxu0 %v1699
        %v1892 = vpop.f32.mrb[0].mxu0
        %v1893 = vadd.f32 %v1659, %v1892
        %v1894 = vpop.f32.mrb[0].mxu0
        %v1895 = vpop.f32.mrb[0].mxu0
        %v1896 = vadd.f32 %v1659, %v1895
        %v1897 = vpop.f32.mrb[0].mxu0
        %1898 = vmatprep.mubr.bf16.mxu0 0
        %1899 = vmatmul.mubr.bf16.gmra.mrb[0].mxu0 %v1702
        %v1900 = vpop.f32.mrb[0].mxu0
        %v1901 = vadd.f32 %v1659, %v1900
        %v1902 = vpop.f32.mrb[0].mxu0
        %v1903 = vpop.f32.mrb[0].mxu0
        %v1904 = vadd.f32 %v1659, %v1903
        %v1905 = vpop.f32.mrb[0].mxu0
        %1906 = vmatprep.mubr.bf16.mxu0 0
        %1907 = vmatmul.mubr.bf16.gmra.mrb[0].mxu0 %v1705
        %v1908 = vpop.f32.mrb[0].mxu0
        %v1909 = vadd.f32 %v1659, %v1908
        %v1910 = vpop.f32.mrb[0].mxu0
        %v1911 = vpop.f32.mrb[0].mxu0
        %v1912 = vadd.f32 %v1659, %v1911
        %v1913 = vpop.f32.mrb[0].mxu0
        %1914 = vmatprep.mubr.bf16.mxu0 0
        %1915 = vmatmul.mubr.bf16.gmra.mrb[0].mxu0 %v1708
        %v1916 = vpop.f32.mrb[0].mxu0
        %v1917 = vadd.f32 %v1659, %v1916
        %v1918 = vpop.f32.mrb[0].mxu0
        %v1919 = vpop.f32.mrb[0].mxu0
        %v1920 = vadd.f32 %v1659, %v1919
        %v1921 = vpop.f32.mrb[0].mxu0
        %1922 = vmatprep.mubr.bf16.mxu0 0
        %1923 = vmatmul.mubr.bf16.gmra.mrb[0].mxu0 %v1711
        %v1924 = vpop.f32.mrb[0].mxu0
        %v1925 = vadd.f32 %v1659, %v1924
        %v1926 = vpop.f32.mrb[0].mxu0
        %v1927 = vpop.f32.mrb[0].mxu0
        %v1928 = vadd.f32 %v1659, %v1927
        %v1929 = vpop.f32.mrb[0].mxu0
        %1930 = vmatprep.mubr.bf16.mxu0 0
        %1931 = vmatmul.mubr.bf16.gmra.mrb[0].mxu0 %v1714
        %v1932 = vpop.f32.mrb[0].mxu0
        %v1933 = vadd.f32 %v1659, %v1932
        %v1934 = vpop.f32.mrb[0].mxu0
        %v1935 = vpop.f32.mrb[0].mxu0
        %v1936 = vadd.f32 %v1659, %v1935
        %v1937 = vpop.f32.mrb[0].mxu0
        %1938 = vmatprep.mubr.bf16.mxu0 0
        %1939 = vmatmul.mubr.bf16.gmra.mrb[0].mxu0 %v1717
        %v1940 = vpop.f32.mrb[0].mxu0
        %v1941 = vadd.f32 %v1659, %v1940
        %v1942 = vpop.f32.mrb[0].mxu0
        %v1943 = vpop.f32.mrb[0].mxu0
        %v1944 = vadd.f32 %v1659, %v1943
        %v1945 = vpop.f32.mrb[0].mxu0
        %1946 = vmatprep.mubr.bf16.mxu0 0
        %1947 = vmatmul.mubr.bf16.gmra.mrb[0].mxu0 %v1720
        %v1948 = vpop.f32.mrb[0].mxu0
        %v1949 = vadd.f32 %v1659, %v1948
        %v1950 = vpop.f32.mrb[0].mxu0
        %v1951 = vpop.f32.mrb[0].mxu0
        %v1952 = vadd.f32 %v1659, %v1951
        %v1953 = vpop.f32.mrb[0].mxu0
        %1954 = vmatprep.mubr.bf16.mxu0 0
        %1955 = vmatmul.mubr.bf16.gmra.mrb[0].mxu0 %v1723
        %v1956 = vpop.f32.mrb[0].mxu0
        %v1957 = vadd.f32 %v1659, %v1956
        %v1958 = vpop.f32.mrb[0].mxu0
        %v1959 = vpop.f32.mrb[0].mxu0
        %v1960 = vadd.f32 %v1659, %v1959
        %v1961 = vpop.f32.mrb[0].mxu0
        %1962 = vmatprep.mubr.bf16.mxu0 0
        %1963 = vmatmul.mubr.bf16.gmra.mrb[0].mxu0 %v1726
        %v1964 = vpop.f32.mrb[0].mxu0
        %v1965 = vadd.f32 %v1659, %v1964
        %v1966 = vpop.f32.mrb[0].mxu0
        %v1967 = vpop.f32.mrb[0].mxu0
        %v1968 = vadd.f32 %v1659, %v1967
        %v1969 = vpop.f32.mrb[0].mxu0
        %1970 = vmatprep.mubr.bf16.mxu0 0
        %1971 = vmatmul.mubr.bf16.gmra.mrb[0].mxu0 %v1729
        %v1972 = vpop.f32.mrb[0].mxu0
        %v1973 = vadd.f32 %v1659, %v1972
        %v1974 = vpop.f32.mrb[0].mxu0
        %v1975 = vpop.f32.mrb[0].mxu0
        %v1976 = vadd.f32 %v1659, %v1975
        %v1977 = vpop.f32.mrb[0].mxu0
        %1978 = vmatprep.mubr.bf16.mxu0 0
        %1979 = vmatmul.mubr.bf16.gmra.mrb[0].mxu0 %v1732
        %v1980 = vpop.f32.mrb[0].mxu0
        %v1981 = vadd.f32 %v1659, %v1980
        %v1982 = vpop.f32.mrb[0].mxu0
        %v1983 = vpop.f32.mrb[0].mxu0
        %v1984 = vadd.f32 %v1659, %v1983
        %v1985 = vpop.f32.mrb[0].mxu0
        %1986 = vmatprep.mubr.bf16.mxu0 0
        %1987 = vmatmul.mubr.bf16.gmra.mrb[0].mxu0 %v1735
        %v1988 = vpop.f32.mrb[0].mxu0
        %v1989 = vadd.f32 %v1659, %v1988
        %v1990 = vpop.f32.mrb[0].mxu0
        %v1991 = vpop.f32.mrb[0].mxu0
        %v1992 = vadd.f32 %v1659, %v1991
        %v1993 = vpop.f32.mrb[0].mxu0
        %1994 = vmatprep.mubr.bf16.mxu0 0
        %1995 = vmatmul.mubr.bf16.gmra.mrb[0].mxu0 %v1738
        %v1996 = vpop.f32.mrb[0].mxu0
        %v1997 = vadd.f32 %v1659, %v1996
        %v1998 = vpop.f32.mrb[0].mxu0
        %v1999 = vpop.f32.mrb[0].mxu0
        %v2000 = vadd.f32 %v1659, %v1999
        %v2001 = vpop.f32.mrb[0].mxu0
        %2002 = vmatprep.mubr.bf16.mxu0 0
        %2003 = vmatmul.mubr.bf16.gmra.mrb[0].mxu0 %v1741
        %v2004 = vpop.f32.mrb[0].mxu0
        %v2005 = vadd.f32 %v1659, %v2004
        %v2006 = vpop.f32.mrb[0].mxu0
        %v2007 = vpop.f32.mrb[0].mxu0
        %v2008 = vadd.f32 %v1659, %v2007
        %v2009 = vpop.f32.mrb[0].mxu0
        %2010 = vmatprep.mubr.bf16.mxu0 0
        %2011 = vmatmul.mubr.bf16.gmra.mrb[0].mxu0 %v1744
        %v2012 = vpop.f32.mrb[0].mxu0
        %v2013 = vadd.f32 %v1659, %v2012
        %v2014 = vpop.f32.mrb[0].mxu0
        %v2015 = vpop.f32.mrb[0].mxu0
        %v2016 = vadd.f32 %v1659, %v2015
        %v2017 = vpop.f32.mrb[0].mxu0
        %2018 = vmatprep.mubr.bf16.mxu0 0
        %2019 = vmatmul.mubr.bf16.gmra.mrb[0].mxu0 %v1747
        %v2020 = vpop.f32.mrb[0].mxu0
        %v2021 = vadd.f32 %v1659, %v2020
        %v2022 = vpop.f32.mrb[0].mxu0
        %v2023 = vpop.f32.mrb[0].mxu0
        %v2024 = vadd.f32 %v1659, %v2023
        %v2025 = vpop.f32.mrb[0].mxu0
        %2026 = vmatprep.mubr.bf16.mxu0 0
        %2027 = vmatmul.mubr.bf16.gmra.mrb[0].mxu0 %v1750
        %v2028 = vpop.f32.mrb[0].mxu0
        %v2029 = vadd.f32 %v1659, %v2028
        %v2030 = vpop.f32.mrb[0].mxu0
        %v2031 = vpop.f32.mrb[0].mxu0
        %v2032 = vadd.f32 %v1659, %v2031
        %v2033 = vpop.f32.mrb[0].mxu0
        %2034 = vmatprep.mubr.bf16.mxu0 0
        %2035 = vmatmul.mubr.bf16.gmra.mrb[0].mxu0 %v1753
        %v2036 = vpop.f32.mrb[0].mxu0
        %v2037 = vadd.f32 %v1659, %v2036
        %v2038 = vpop.f32.mrb[0].mxu0
        %v2039 = vpop.f32.mrb[0].mxu0
        %v2040 = vadd.f32 %v1659, %v2039
        %v2041 = vpop.f32.mrb[0].mxu0
        %2042 = vmatprep.mubr.bf16.mxu0 0
        %2043 = vmatmul.mubr.bf16.gmra.mrb[0].mxu0 %v1756
        %v2044 = vpop.f32.mrb[0].mxu0
        %v2045 = vadd.f32 %v1659, %v2044
        %v2046 = vpop.f32.mrb[0].mxu0
        %v2047 = vpop.f32.mrb[0].mxu0
        %v2048 = vadd.f32 %v1659, %v2047
        %v2049 = vpop.f32.mrb[0].mxu0
        %2050 = vdwg.mxu0
        %v2051 = vld [vmem:[#allocation2] sm:$0x3]
        %v2052 = vmul.f32 %v2051, 0.001953125
        %v2053 = vmul.f32 %v2052, %v2052
        %v2055 = vrot.slane %v2053, 7
        %v2057 = vsub.f32 %v2052, %v2055
        %v2058 = vmax.f32 %v2057, 0.0
        %v2059 = vlaneseq
        %v2060 = vshrl.u32 %v2059, 7
        %v2061 = vsub.s32 0, %v2060
        %v2062 = vrot.slane %v2052, %v2061
        %v2063 = vsub.f32 %v886, %v2062
        %v2064 = vsub.f32 %v889, %v2062
        %v2065 = vsub.f32 %v894, %v2062
        %v2066 = vsub.f32 %v897, %v2062
        %v2067 = vsub.f32 %v902, %v2062
        %v2068 = vsub.f32 %v905, %v2062
        %v2069 = vsub.f32 %v910, %v2062
        %v2070 = vsub.f32 %v913, %v2062
        %v2071 = vsub.f32 %v918, %v2062
        %v2072 = vsub.f32 %v921, %v2062
        %v2073 = vsub.f32 %v926, %v2062
        %v2074 = vsub.f32 %v929, %v2062
        %v2075 = vsub.f32 %v934, %v2062
        %v2076 = vsub.f32 %v937, %v2062
        %v2077 = vsub.f32 %v942, %v2062
        %v2078 = vsub.f32 %v945, %v2062
        %v2079 = vsub.f32 %v950, %v2062
        %v2080 = vsub.f32 %v953, %v2062
        %v2081 = vsub.f32 %v958, %v2062
        %v2082 = vsub.f32 %v961, %v2062
        %v2083 = vsub.f32 %v966, %v2062
        %v2084 = vsub.f32 %v969, %v2062
        %v2085 = vsub.f32 %v974, %v2062
        %v2086 = vsub.f32 %v977, %v2062
        %v2087 = vsub.f32 %v982, %v2062
        %v2088 = vsub.f32 %v985, %v2062
        %v2089 = vsub.f32 %v990, %v2062
        %v2090 = vsub.f32 %v993, %v2062
        %v2091 = vsub.f32 %v998, %v2062
        %v2092 = vsub.f32 %v1001, %v2062
        %v2093 = vsub.f32 %v1006, %v2062
        %v2094 = vsub.f32 %v1009, %v2062
        %v2095 = vsub.f32 %v1014, %v2062
        %v2096 = vsub.f32 %v1017, %v2062
        %v2097 = vsub.f32 %v1022, %v2062
        %v2098 = vsub.f32 %v1025, %v2062
        %v2099 = vsub.f32 %v1030, %v2062
        %v2100 = vsub.f32 %v1033, %v2062
        %v2101 = vsub.f32 %v1038, %v2062
        %v2102 = vsub.f32 %v1041, %v2062
        %v2103 = vsub.f32 %v1046, %v2062
        %v2104 = vsub.f32 %v1049, %v2062
        %v2105 = vsub.f32 %v1054, %v2062
        %v2106 = vsub.f32 %v1057, %v2062
        %v2107 = vsub.f32 %v1062, %v2062
        %v2108 = vsub.f32 %v1065, %v2062
        %v2109 = vsub.f32 %v1070, %v2062
        %v2110 = vsub.f32 %v1073, %v2062
        %v2111 = vsub.f32 %v1078, %v2062
        %v2112 = vsub.f32 %v1081, %v2062
        %v2113 = vsub.f32 %v1086, %v2062
        %v2114 = vsub.f32 %v1089, %v2062
        %v2115 = vsub.f32 %v1094, %v2062
        %v2116 = vsub.f32 %v1097, %v2062
        %v2117 = vsub.f32 %v1102, %v2062
        %v2118 = vsub.f32 %v1105, %v2062
        %v2119 = vsub.f32 %v1110, %v2062
        %v2120 = vsub.f32 %v1113, %v2062
        %v2121 = vsub.f32 %v1118, %v2062
        %v2122 = vsub.f32 %v1121, %v2062
        %v2123 = vsub.f32 %v1126, %v2062
        %v2124 = vsub.f32 %v1129, %v2062
        %v2125 = vsub.f32 %v1134, %v2062
        %v2126 = vsub.f32 %v1137, %v2062
        %v2127 = vadd.f32 %v2058, 1e-05
        %v2128 = vrsqrt.pop %v2127
        %v2129 = vlaneseq
        %v2130 = vshrl.u32 %v2129, 7
        %v2131 = vsub.s32 1, %v2130
        %v2132 = vrot.slane %v2128, %v2131
        %v2133 = vmul.f32 %v2063, %v2132
        %v2134 = vmul.f32 %v2064, %v2132
        %v2135 = vmul.f32 %v2065, %v2132
        %v2136 = vmul.f32 %v2066, %v2132
        %v2137 = vmul.f32 %v2067, %v2132
        %v2138 = vmul.f32 %v2068, %v2132
        %v2139 = vmul.f32 %v2069, %v2132
        %v2140 = vmul.f32 %v2070, %v2132
        %v2141 = vmul.f32 %v2071, %v2132
        %v2142 = vmul.f32 %v2072, %v2132
        %v2143 = vmul.f32 %v2073, %v2132
        %v2144 = vmul.f32 %v2074, %v2132
        %v2145 = vmul.f32 %v2075, %v2132
        %v2146 = vmul.f32 %v2076, %v2132
        %v2147 = vmul.f32 %v2077, %v2132
        %v2148 = vmul.f32 %v2078, %v2132
        %v2149 = vmul.f32 %v2079, %v2132
        %v2150 = vmul.f32 %v2080, %v2132
        %v2151 = vmul.f32 %v2081, %v2132
        %v2152 = vmul.f32 %v2082, %v2132
        %v2153 = vmul.f32 %v2083, %v2132
        %v2154 = vmul.f32 %v2084, %v2132
        %v2155 = vmul.f32 %v2085, %v2132
        %v2156 = vmul.f32 %v2086, %v2132
        %v2157 = vmul.f32 %v2087, %v2132
        %v2158 = vmul.f32 %v2088, %v2132
        %v2159 = vmul.f32 %v2089, %v2132
        %v2160 = vmul.f32 %v2090, %v2132
        %v2161 = vmul.f32 %v2091, %v2132
        %v2162 = vmul.f32 %v2092, %v2132
        %v2163 = vmul.f32 %v2093, %v2132
        %v2164 = vmul.f32 %v2094, %v2132
        %v2165 = vmul.f32 %v2095, %v2132
        %v2166 = vmul.f32 %v2096, %v2132
        %v2167 = vmul.f32 %v2097, %v2132
        %v2168 = vmul.f32 %v2098, %v2132
        %v2169 = vmul.f32 %v2099, %v2132
        %v2170 = vmul.f32 %v2100, %v2132
        %v2171 = vmul.f32 %v2101, %v2132
        %v2172 = vmul.f32 %v2102, %v2132
        %v2173 = vmul.f32 %v2103, %v2132
        %v2174 = vmul.f32 %v2104, %v2132
        %v2175 = vmul.f32 %v2105, %v2132
        %v2176 = vmul.f32 %v2106, %v2132
        %v2177 = vmul.f32 %v2107, %v2132
        %v2178 = vmul.f32 %v2108, %v2132
        %v2179 = vmul.f32 %v2109, %v2132
        %v2180 = vmul.f32 %v2110, %v2132
        %v2181 = vmul.f32 %v2111, %v2132
        %v2182 = vmul.f32 %v2112, %v2132
        %v2183 = vmul.f32 %v2113, %v2132
        %v2184 = vmul.f32 %v2114, %v2132
        %v2185 = vmul.f32 %v2115, %v2132
        %v2186 = vmul.f32 %v2116, %v2132
        %v2187 = vmul.f32 %v2117, %v2132
        %v2188 = vmul.f32 %v2118, %v2132
        %v2189 = vmul.f32 %v2119, %v2132
        %v2190 = vmul.f32 %v2120, %v2132
        %v2191 = vmul.f32 %v2121, %v2132
        %v2192 = vmul.f32 %v2122, %v2132
        %v2193 = vmul.f32 %v2123, %v2132
        %v2194 = vmul.f32 %v2124, %v2132
        %v2195 = vmul.f32 %v2125, %v2132
        %v2196 = vmul.f32 %v2126, %v2132
        %v2197 = vld [vmem:[%s4] sm:$0x1]
        %v2199 = vlaneseq
        %v2200 = vshrl.u32 %v2199, 7
        %v2201 = vsub.s32 0, %v2200
        %v2202 = vrot.slane %v2197, %v2201
        %v2204 = vmul.f32 %v2133, %v2202
        %v2205 = vmul.f32 %v2134, %v2202
        %v2206 = vmul.f32 %v2135, %v2202
        %v2207 = vmul.f32 %v2136, %v2202
        %v2208 = vmul.f32 %v2137, %v2202
        %v2209 = vmul.f32 %v2138, %v2202
        %v2210 = vmul.f32 %v2139, %v2202
        %v2211 = vmul.f32 %v2140, %v2202
        %v2212 = vmul.f32 %v2141, %v2202
        %v2213 = vmul.f32 %v2142, %v2202
        %v2214 = vmul.f32 %v2143, %v2202
        %v2215 = vmul.f32 %v2144, %v2202
        %v2216 = vmul.f32 %v2145, %v2202
        %v2217 = vmul.f32 %v2146, %v2202
        %v2218 = vmul.f32 %v2147, %v2202
        %v2219 = vmul.f32 %v2148, %v2202
        %v2220 = vmul.f32 %v2149, %v2202
        %v2221 = vmul.f32 %v2150, %v2202
        %v2222 = vmul.f32 %v2151, %v2202
        %v2223 = vmul.f32 %v2152, %v2202
        %v2224 = vmul.f32 %v2153, %v2202
        %v2225 = vmul.f32 %v2154, %v2202
        %v2226 = vmul.f32 %v2155, %v2202
        %v2227 = vmul.f32 %v2156, %v2202
        %v2228 = vmul.f32 %v2157, %v2202
        %v2229 = vmul.f32 %v2158, %v2202
        %v2230 = vmul.f32 %v2159, %v2202
        %v2231 = vmul.f32 %v2160, %v2202
        %v2232 = vmul.f32 %v2161, %v2202
        %v2233 = vmul.f32 %v2162, %v2202
        %v2234 = vmul.f32 %v2163, %v2202
        %v2235 = vmul.f32 %v2164, %v2202
        %v2236 = vmul.f32 %v2165, %v2202
        %v2237 = vmul.f32 %v2166, %v2202
        %v2238 = vmul.f32 %v2167, %v2202
        %v2239 = vmul.f32 %v2168, %v2202
        %v2240 = vmul.f32 %v2169, %v2202
        %v2241 = vmul.f32 %v2170, %v2202
        %v2242 = vmul.f32 %v2171, %v2202
        %v2243 = vmul.f32 %v2172, %v2202
        %v2244 = vmul.f32 %v2173, %v2202
        %v2245 = vmul.f32 %v2174, %v2202
        %v2246 = vmul.f32 %v2175, %v2202
        %v2247 = vmul.f32 %v2176, %v2202
        %v2248 = vmul.f32 %v2177, %v2202
        %v2249 = vmul.f32 %v2178, %v2202
        %v2250 = vmul.f32 %v2179, %v2202
        %v2251 = vmul.f32 %v2180, %v2202
        %v2252 = vmul.f32 %v2181, %v2202
        %v2253 = vmul.f32 %v2182, %v2202
        %v2254 = vmul.f32 %v2183, %v2202
        %v2255 = vmul.f32 %v2184, %v2202
        %v2256 = vmul.f32 %v2185, %v2202
        %v2257 = vmul.f32 %v2186, %v2202
        %v2258 = vmul.f32 %v2187, %v2202
        %v2259 = vmul.f32 %v2188, %v2202
        %v2260 = vmul.f32 %v2189, %v2202
        %v2261 = vmul.f32 %v2190, %v2202
        %v2262 = vmul.f32 %v2191, %v2202
        %v2263 = vmul.f32 %v2192, %v2202
        %v2264 = vmul.f32 %v2193, %v2202
        %v2265 = vmul.f32 %v2194, %v2202
        %v2266 = vmul.f32 %v2195, %v2202
        %v2267 = vmul.f32 %v2196, %v2202
        %v2268 = vld [vmem:[%s5] sm:$0x1]
        %v2270 = vlaneseq
        %v2271 = vshrl.u32 %v2270, 7
        %v2272 = vsub.s32 0, %v2271
        %v2273 = vrot.slane %v2268, %v2272
        %v2275 = vadd.f32 %v2204, %v2273
        %v2276 = vadd.f32 %v2205, %v2273
        %v2277 = vadd.f32 %v2206, %v2273
        %v2278 = vadd.f32 %v2207, %v2273
        %v2279 = vadd.f32 %v2208, %v2273
        %v2280 = vadd.f32 %v2209, %v2273
        %v2281 = vadd.f32 %v2210, %v2273
        %v2282 = vadd.f32 %v2211, %v2273
        %v2283 = vadd.f32 %v2212, %v2273
        %v2284 = vadd.f32 %v2213, %v2273
        %v2285 = vadd.f32 %v2214, %v2273
        %v2286 = vadd.f32 %v2215, %v2273
        %v2287 = vadd.f32 %v2216, %v2273
        %v2288 = vadd.f32 %v2217, %v2273
        %v2289 = vadd.f32 %v2218, %v2273
        %v2290 = vadd.f32 %v2219, %v2273
        %v2291 = vadd.f32 %v2220, %v2273
        %v2292 = vadd.f32 %v2221, %v2273
        %v2293 = vadd.f32 %v2222, %v2273
        %v2294 = vadd.f32 %v2223, %v2273
        %v2295 = vadd.f32 %v2224, %v2273
        %v2296 = vadd.f32 %v2225, %v2273
        %v2297 = vadd.f32 %v2226, %v2273
        %v2298 = vadd.f32 %v2227, %v2273
        %v2299 = vadd.f32 %v2228, %v2273
        %v2300 = vadd.f32 %v2229, %v2273
        %v2301 = vadd.f32 %v2230, %v2273
        %v2302 = vadd.f32 %v2231, %v2273
        %v2303 = vadd.f32 %v2232, %v2273
        %v2304 = vadd.f32 %v2233, %v2273
        %v2305 = vadd.f32 %v2234, %v2273
        %v2306 = vadd.f32 %v2235, %v2273
        %v2307 = vadd.f32 %v2236, %v2273
        %v2308 = vadd.f32 %v2237, %v2273
        %v2309 = vadd.f32 %v2238, %v2273
        %v2310 = vadd.f32 %v2239, %v2273
        %v2311 = vadd.f32 %v2240, %v2273
        %v2312 = vadd.f32 %v2241, %v2273
        %v2313 = vadd.f32 %v2242, %v2273
        %v2314 = vadd.f32 %v2243, %v2273
        %v2315 = vadd.f32 %v2244, %v2273
        %v2316 = vadd.f32 %v2245, %v2273
        %v2317 = vadd.f32 %v2246, %v2273
        %v2318 = vadd.f32 %v2247, %v2273
        %v2319 = vadd.f32 %v2248, %v2273
        %v2320 = vadd.f32 %v2249, %v2273
        %v2321 = vadd.f32 %v2250, %v2273
        %v2322 = vadd.f32 %v2251, %v2273
        %v2323 = vadd.f32 %v2252, %v2273
        %v2324 = vadd.f32 %v2253, %v2273
        %v2325 = vadd.f32 %v2254, %v2273
        %v2326 = vadd.f32 %v2255, %v2273
        %v2327 = vadd.f32 %v2256, %v2273
        %v2328 = vadd.f32 %v2257, %v2273
        %v2329 = vadd.f32 %v2258, %v2273
        %v2330 = vadd.f32 %v2259, %v2273
        %v2331 = vadd.f32 %v2260, %v2273
        %v2332 = vadd.f32 %v2261, %v2273
        %v2333 = vadd.f32 %v2262, %v2273
        %v2334 = vadd.f32 %v2263, %v2273
        %v2335 = vadd.f32 %v2264, %v2273
        %v2336 = vadd.f32 %v2265, %v2273
        %v2337 = vadd.f32 %v2266, %v2273
        %v2338 = vadd.f32 %v2267, %v2273
        %v2339 = vadd.f32 %v2275, %v1797
        %v2340 = vadd.f32 %v2276, %v1800
        %v2341 = vadd.f32 %v2277, %v1805
        %v2342 = vadd.f32 %v2278, %v1808
        %v2343 = vadd.f32 %v2279, %v1813
        %v2344 = vadd.f32 %v2280, %v1816
        %v2345 = vadd.f32 %v2281, %v1821
        %v2346 = vadd.f32 %v2282, %v1824
        %v2347 = vadd.f32 %v2283, %v1829
        %v2348 = vadd.f32 %v2284, %v1832
        %v2349 = vadd.f32 %v2285, %v1837
        %v2350 = vadd.f32 %v2286, %v1840
        %v2351 = vadd.f32 %v2287, %v1845
        %v2352 = vadd.f32 %v2288, %v1848
        %v2353 = vadd.f32 %v2289, %v1853
        %v2354 = vadd.f32 %v2290, %v1856
        %v2355 = vadd.f32 %v2291, %v1861
        %v2356 = vadd.f32 %v2292, %v1864
        %v2357 = vadd.f32 %v2293, %v1869
        %v2358 = vadd.f32 %v2294, %v1872
        %v2359 = vadd.f32 %v2295, %v1877
        %v2360 = vadd.f32 %v2296, %v1880
        %v2361 = vadd.f32 %v2297, %v1885
        %v2362 = vadd.f32 %v2298, %v1888
        %v2363 = vadd.f32 %v2299, %v1893
        %v2364 = vadd.f32 %v2300, %v1896
        %v2365 = vadd.f32 %v2301, %v1901
        %v2366 = vadd.f32 %v2302, %v1904
        %v2367 = vadd.f32 %v2303, %v1909
        %v2368 = vadd.f32 %v2304, %v1912
        %v2369 = vadd.f32 %v2305, %v1917
        %v2370 = vadd.f32 %v2306, %v1920
        %v2371 = vadd.f32 %v2307, %v1925
        %v2372 = vadd.f32 %v2308, %v1928
        %v2373 = vadd.f32 %v2309, %v1933
        %v2374 = vadd.f32 %v2310, %v1936
        %v2375 = vadd.f32 %v2311, %v1941
        %v2376 = vadd.f32 %v2312, %v1944
        %v2377 = vadd.f32 %v2313, %v1949
        %v2378 = vadd.f32 %v2314, %v1952
        %v2379 = vadd.f32 %v2315, %v1957
        %v2380 = vadd.f32 %v2316, %v1960
        %v2381 = vadd.f32 %v2317, %v1965
        %v2382 = vadd.f32 %v2318, %v1968
        %v2383 = vadd.f32 %v2319, %v1973
        %v2384 = vadd.f32 %v2320, %v1976
        %v2385 = vadd.f32 %v2321, %v1981
        %v2386 = vadd.f32 %v2322, %v1984
        %v2387 = vadd.f32 %v2323, %v1989
        %v2388 = vadd.f32 %v2324, %v1992
        %v2389 = vadd.f32 %v2325, %v1997
        %v2390 = vadd.f32 %v2326, %v2000
        %v2391 = vadd.f32 %v2327, %v2005
        %v2392 = vadd.f32 %v2328, %v2008
        %v2393 = vadd.f32 %v2329, %v2013
        %v2394 = vadd.f32 %v2330, %v2016
        %v2395 = vadd.f32 %v2331, %v2021
        %v2396 = vadd.f32 %v2332, %v2024
        %v2397 = vadd.f32 %v2333, %v2029
        %v2398 = vadd.f32 %v2334, %v2032
        %v2399 = vadd.f32 %v2335, %v2037
        %v2400 = vadd.f32 %v2336, %v2040
        %v2401 = vadd.f32 %v2337, %v2045
        %v2402 = vadd.f32 %v2338, %v2048
        %v2403 = vmax.f32 %v2339, 0.0
        %v2404 = vmax.f32 %v2340, 0.0
        %v2405 = vmax.f32 %v2341, 0.0
        %v2406 = vmax.f32 %v2342, 0.0
        %v2407 = vmax.f32 %v2343, 0.0
        %v2408 = vmax.f32 %v2344, 0.0
        %v2409 = vmax.f32 %v2345, 0.0
        %v2410 = vmax.f32 %v2346, 0.0
        %v2411 = vmax.f32 %v2347, 0.0
        %v2412 = vmax.f32 %v2348, 0.0
        %v2413 = vmax.f32 %v2349, 0.0
        %v2414 = vmax.f32 %v2350, 0.0
        %v2415 = vmax.f32 %v2351, 0.0
        %v2416 = vmax.f32 %v2352, 0.0
        %v2417 = vmax.f32 %v2353, 0.0
        %v2418 = vmax.f32 %v2354, 0.0
        %v2419 = vmax.f32 %v2355, 0.0
        %v2420 = vmax.f32 %v2356, 0.0
        %v2421 = vmax.f32 %v2357, 0.0
        %v2422 = vmax.f32 %v2358, 0.0
        %v2423 = vmax.f32 %v2359, 0.0
        %v2424 = vmax.f32 %v2360, 0.0
        %v2425 = vmax.f32 %v2361, 0.0
        %v2426 = vmax.f32 %v2362, 0.0
        %v2427 = vmax.f32 %v2363, 0.0
        %v2428 = vmax.f32 %v2364, 0.0
        %v2429 = vmax.f32 %v2365, 0.0
        %v2430 = vmax.f32 %v2366, 0.0
        %v2431 = vmax.f32 %v2367, 0.0
        %v2432 = vmax.f32 %v2368, 0.0
        %v2433 = vmax.f32 %v2369, 0.0
        %v2434 = vmax.f32 %v2370, 0.0
        %v2435 = vmax.f32 %v2371, 0.0
        %v2436 = vmax.f32 %v2372, 0.0
        %v2437 = vmax.f32 %v2373, 0.0
        %v2438 = vmax.f32 %v2374, 0.0
        %v2439 = vmax.f32 %v2375, 0.0
        %v2440 = vmax.f32 %v2376, 0.0
        %v2441 = vmax.f32 %v2377, 0.0
        %v2442 = vmax.f32 %v2378, 0.0
        %v2443 = vmax.f32 %v2379, 0.0
        %v2444 = vmax.f32 %v2380, 0.0
        %v2445 = vmax.f32 %v2381, 0.0
        %v2446 = vmax.f32 %v2382, 0.0
        %v2447 = vmax.f32 %v2383, 0.0
        %v2448 = vmax.f32 %v2384, 0.0
        %v2449 = vmax.f32 %v2385, 0.0
        %v2450 = vmax.f32 %v2386, 0.0
        %v2451 = vmax.f32 %v2387, 0.0
        %v2452 = vmax.f32 %v2388, 0.0
        %v2453 = vmax.f32 %v2389, 0.0
        %v2454 = vmax.f32 %v2390, 0.0
        %v2455 = vmax.f32 %v2391, 0.0
        %v2456 = vmax.f32 %v2392, 0.0
        %v2457 = vmax.f32 %v2393, 0.0
        %v2458 = vmax.f32 %v2394, 0.0
        %v2459 = vmax.f32 %v2395, 0.0
        %v2460 = vmax.f32 %v2396, 0.0
        %v2461 = vmax.f32 %v2397, 0.0
        %v2462 = vmax.f32 %v2398, 0.0
        %v2463 = vmax.f32 %v2399, 0.0
        %v2464 = vmax.f32 %v2400, 0.0
        %v2465 = vmax.f32 %v2401, 0.0
        %v2466 = vmax.f32 %v2402, 0.0
        %vm2467 = vcmask 130048
        %2468 = vst.msk [vmem:[%s379] sm:$0xff] %vm2467, %v2403
        %2469 = vst.msk [vmem:[%s379 + $0x8] sm:$0xff] %vm2467, %v2404
        %2470 = vst.msk [vmem:[%s379 + $0x10] sm:$0xff] %vm2467, %v2405
        %2471 = vst.msk [vmem:[%s379 + $0x18] sm:$0xff] %vm2467, %v2406
        %2472 = vst.msk [vmem:[%s379 + $0x20] sm:$0xff] %vm2467, %v2407
        %2473 = vst.msk [vmem:[%s379 + $0x28] sm:$0xff] %vm2467, %v2408
        %2474 = vst.msk [vmem:[%s379 + $0x30] sm:$0xff] %vm2467, %v2409
        %2475 = vst.msk [vmem:[%s379 + $0x38] sm:$0xff] %vm2467, %v2410
        %2476 = vst.msk [vmem:[%s379 + $0x40] sm:$0xff] %vm2467, %v2411
        %2477 = vst.msk [vmem:[%s379 + $0x48] sm:$0xff] %vm2467, %v2412
        %2478 = vst.msk [vmem:[%s379 + $0x50] sm:$0xff] %vm2467, %v2413
        %2479 = vst.msk [vmem:[%s379 + $0x58] sm:$0xff] %vm2467, %v2414
        %2480 = vst.msk [vmem:[%s379 + $0x60] sm:$0xff] %vm2467, %v2415
        %2481 = vst.msk [vmem:[%s379 + $0x68] sm:$0xff] %vm2467, %v2416
        %2482 = vst.msk [vmem:[%s379 + $0x70] sm:$0xff] %vm2467, %v2417
        %2483 = vst.msk [vmem:[%s379 + $0x78] sm:$0xff] %vm2467, %v2418
        %2484 = vst.msk [vmem:[%s379 + $0x80] sm:$0xff] %vm2467, %v2419
        %2485 = vst.msk [vmem:[%s379 + $0x88] sm:$0xff] %vm2467, %v2420
        %2486 = vst.msk [vmem:[%s379 + $0x90] sm:$0xff] %vm2467, %v2421
        %2487 = vst.msk [vmem:[%s379 + $0x98] sm:$0xff] %vm2467, %v2422
        %2488 = vst.msk [vmem:[%s379 + $0xa0] sm:$0xff] %vm2467, %v2423
        %2489 = vst.msk [vmem:[%s379 + $0xa8] sm:$0xff] %vm2467, %v2424
        %2490 = vst.msk [vmem:[%s379 + $0xb0] sm:$0xff] %vm2467, %v2425
        %2491 = vst.msk [vmem:[%s379 + $0xb8] sm:$0xff] %vm2467, %v2426
        %2492 = vst.msk [vmem:[%s379 + $0xc0] sm:$0xff] %vm2467, %v2427
        %2493 = vst.msk [vmem:[%s379 + $0xc8] sm:$0xff] %vm2467, %v2428
        %2494 = vst.msk [vmem:[%s379 + $0xd0] sm:$0xff] %vm2467, %v2429
        %2495 = vst.msk [vmem:[%s379 + $0xd8] sm:$0xff] %vm2467, %v2430
        %2496 = vst.msk [vmem:[%s379 + $0xe0] sm:$0xff] %vm2467, %v2431
        %2497 = vst.msk [vmem:[%s379 + $0xe8] sm:$0xff] %vm2467, %v2432
        %2498 = vst.msk [vmem:[%s379 + $0xf0] sm:$0xff] %vm2467, %v2433
        %2499 = vst.msk [vmem:[%s379 + $0xf8] sm:$0xff] %vm2467, %v2434
        %2500 = vst.msk [vmem:[%s379 + $0x100] sm:$0xff] %vm2467, %v2435
        %2501 = vst.msk [vmem:[%s379 + $0x108] sm:$0xff] %vm2467, %v2436
        %2502 = vst.msk [vmem:[%s379 + $0x110] sm:$0xff] %vm2467, %v2437
        %2503 = vst.msk [vmem:[%s379 + $0x118] sm:$0xff] %vm2467, %v2438
        %2504 = vst.msk [vmem:[%s379 + $0x120] sm:$0xff] %vm2467, %v2439
        %2505 = vst.msk [vmem:[%s379 + $0x128] sm:$0xff] %vm2467, %v2440
        %2506 = vst.msk [vmem:[%s379 + $0x130] sm:$0xff] %vm2467, %v2441
        %2507 = vst.msk [vmem:[%s379 + $0x138] sm:$0xff] %vm2467, %v2442
        %2508 = vst.msk [vmem:[%s379 + $0x140] sm:$0xff] %vm2467, %v2443
        %2509 = vst.msk [vmem:[%s379 + $0x148] sm:$0xff] %vm2467, %v2444
        %2510 = vst.msk [vmem:[%s379 + $0x150] sm:$0xff] %vm2467, %v2445
        %2511 = vst.msk [vmem:[%s379 + $0x158] sm:$0xff] %vm2467, %v2446
        %2512 = vst.msk [vmem:[%s379 + $0x160] sm:$0xff] %vm2467, %v2447
        %2513 = vst.msk [vmem:[%s379 + $0x168] sm:$0xff] %vm2467, %v2448
        %2514 = vst.msk [vmem:[%s379 + $0x170] sm:$0xff] %vm2467, %v2449
        %2515 = vst.msk [vmem:[%s379 + $0x178] sm:$0xff] %vm2467, %v2450
        %2516 = vst.msk [vmem:[%s379 + $0x180] sm:$0xff] %vm2467, %v2451
        %2517 = vst.msk [vmem:[%s379 + $0x188] sm:$0xff] %vm2467, %v2452
        %2518 = vst.msk [vmem:[%s379 + $0x190] sm:$0xff] %vm2467, %v2453
        %2519 = vst.msk [vmem:[%s379 + $0x198] sm:$0xff] %vm2467, %v2454
        %2520 = vst.msk [vmem:[%s379 + $0x1a0] sm:$0xff] %vm2467, %v2455
        %2521 = vst.msk [vmem:[%s379 + $0x1a8] sm:$0xff] %vm2467, %v2456
        %2522 = vst.msk [vmem:[%s379 + $0x1b0] sm:$0xff] %vm2467, %v2457
        %2523 = vst.msk [vmem:[%s379 + $0x1b8] sm:$0xff] %vm2467, %v2458
        %2524 = vst.msk [vmem:[%s379 + $0x1c0] sm:$0xff] %vm2467, %v2459
        %2525 = vst.msk [vmem:[%s379 + $0x1c8] sm:$0xff] %vm2467, %v2460
        %2526 = vst.msk [vmem:[%s379 + $0x1d0] sm:$0xff] %vm2467, %v2461
        %2527 = vst.msk [vmem:[%s379 + $0x1d8] sm:$0xff] %vm2467, %v2462
        %2528 = vst.msk [vmem:[%s379 + $0x1e0] sm:$0xff] %vm2467, %v2463
        %2529 = vst.msk [vmem:[%s379 + $0x1e8] sm:$0xff] %vm2467, %v2464
        %2530 = vst.msk [vmem:[%s379 + $0x1f0] sm:$0xff] %vm2467, %v2465
        %2531 = vst.msk [vmem:[%s379 + $0x1f8] sm:$0xff] %vm2467, %v2466
      $region68: #{bottleneck_forward.5} parent=55 // pred_fallthru
        _
      %s2532 = smul.u32 %s24, %s25
      %s2533 = smul.u32 64, %s2532
      %p2534 = scmp.lt.s32.totalorder %s2533, 63
      %s2535 = scalar_select %p2534, %s2533, 63
      %s2536 = smul.addr %s2535, 8
      %s2537 = scalar_lea.vmem %s9, %s2536
      // Predicated region
      $region69: #{bottleneck_forward.5} parent=55 // pred_check
        %p2538 = pneg %p253
      $region70: #{bottleneck_forward.5} parent=55 // pred_check_branch
        %2540 = sbr.rel (%p2538) target = $region72
      $region71: #{bottleneck_forward.5} parent=55 // pred_region
        %s2541 = smul.u32 %s24, %s25
        %s2542 = smul.u32 64, %s2541
      $region72: #{bottleneck_forward.5} parent=55 // pred_fallthru
        _
    $region56: #{bottleneck_forward.5} parent=5 // pred_fallthru
      _
    %p2543 = scmp.le.s32.totalorder 2, %s15
    // Predicated region
    $region73: #{bottleneck_forward.5} parent=5 // pred_check
      %p2544 = pneg %p2543
    $region74: #{bottleneck_forward.5} parent=5 // pred_check_branch
      %2546 = sbr.rel (%p2544) target = $region76
    $region75: #{bottleneck_forward.5} parent=5 // pred_region
      %s2547 = ssub.s32 %s15, 2
      // Predicated region
      $region77: #{bottleneck_forward.5} parent=75 // pred_check
        %p2548 = pneg %p259
      $region78: #{bottleneck_forward.5} parent=75 // pred_check_branch
        %2550 = sbr.rel (%p2548) target = $region80
      $region79: #{bottleneck_forward.5} parent=75 // pred_region
        %s2551 = smul.u32 %s26, %s27
        %s2552 = smul.u32 64, %s2551
        %p2553 = scmp.lt.s32.totalorder %s2552, 63
        %s2554 = scalar_select %p2553, %s2552, 63
        %s2555 = smul.addr %s2554, 8
        %s2556 = scalar_lea.vmem %s9, %s2555
      $region80: #{bottleneck_forward.5} parent=75 // pred_fallthru
        _
    $region76: #{bottleneck_forward.5} parent=5 // pred_fallthru
      _
  $region6: #{bottleneck_forward.5} parent=0 // loop_footer
    %s19 = sadd.s32 1, %s15
  $region7: #{bottleneck_forward.5} parent=0 // loop_footer_branch
    %14 = sbr.rel target = $region3
  $region8: #{bottleneck_forward.5} parent=0 // loop_exit
    _

// kernel: bottleneck_forward.4
$region0: #{bottleneck_forward.4}
  #allocation0 [shape = 'u32[]', space=smem, size = 0x4, offset = 0x4, fixed_abs, tag = 'smem constant byte address 0x4 - core index']
  #allocation1 [shape = 'u32[144,128]{1,0:T(1,128)}', space=vmem, size = 0x12000, scoped, tag = 'internal scratch']
  #allocation2 [shape = 'f32[2,8]{1,0:T(2,128)}', space=vmem, size = 0x400, scoped, tag = 'scratch operand']
  %s0 = inlined_call_operand.vmem [shape: bf16[2,16,16,8], index: 0, kind: input, shape index: {}]
  %s1 = inlined_call_operand.vmem [shape: f32[1,8], index: 1, kind: input, shape index: {}]
  %s2 = inlined_call_operand.vmem [shape: f32[1,8], index: 2, kind: input, shape index: {}]
  %s3 = inlined_call_operand.vmem [shape: bf16[3,3,8,8], index: 3, kind: input, shape index: {}]
  %s4 = inlined_call_operand.vmem [shape: bf16[2,16,16,8], index: 4, kind: output, shape index: {0}]
  %s5 = inlined_call_operand.vmem [shape: f32[2,8], index: 5, kind: output, shape index: {1}]
  %6 = xla_tuple %s4, %s5
  %s7 = sld [smem:[#allocation0]]
  $region61: #{bottleneck_forward.4} parent=0
    _
  %s9 = ssub.s32 1, %s7
  %s10 = scalar_select 0, %s9, %s7
  loop: start=0, step=1, limit=4
  $region2: #{bottleneck_forward.4} parent=0 // loop_pre_header
    _
  $region3: #{bottleneck_forward.4} parent=0 // loop_header
    %s12 = sphi 0, %s16
    %p13 = scmp.ge.s32.totalorder %s12, 4
    %s22 = sphi 0, %s24
    %s25 = sphi 0, %s22
    %s26 = sphi 0, %s25
    %s42 = sphi 0, %s26
    %s46 = sphi 0, %s46
    %s48 = sphi 0, %s46
    %s49 = sphi 0, %s48
    %s63 = sphi 0, %s49
    %s67 = sphi 0, %s67
    %s69 = sphi 0, %s67
    %s70 = sphi 0, %s69
    %s84 = sphi 0, %s70
    %s88 = sphi 0, %s88
    %s90 = sphi 0, %s88
    %s91 = sphi 0, %s90
    %s105 = sphi 0, %s91
    %s111 = sphi 0, %s113
    %s114 = sphi 0, %s111
    %s115 = sphi 0, %s114
    %s131 = sphi 0, %s115
    %s135 = sphi 0, %s135
    %s137 = sphi 0, %s135
    %s138 = sphi 0, %s137
    %s152 = sphi 0, %s138
  $region4: #{bottleneck_forward.4} parent=0 // loop_header_branch
    %15 = sbr.rel (%p13) target = $region8
  $region5: #{bottleneck_forward.4} parent=0 // loop_body
    %s17 = ssub.s32 %s12, 1
    %s18 = ssub.s32 %s12, 2
    %s19 = sadd.s32 %s12, 1
    %s20 = ssub.s32 %s12, %s19
    %p21 = scmp.eq.s32.totalorder %s20, 0
    %s23 = sadd.s32 %s22, 1
    %s24 = scalar_select %p21, %s22, %s23
    %p27 = pneg %p21
    %p28 = scmp.eq.s32.totalorder %s12, 1
    %p29 = por %p27, %p28
    %p30 = scmp.ne.s32.totalorder %s22, %s25
    %p31 = scmp.eq.s32.totalorder %s12, 0
    %p32 = por %p30, %p31
    %p33 = scmp.ne.s32.totalorder %s22, %s25
    %p34 = scmp.eq.s32.totalorder %s17, 1
    %p35 = por %p33, %p34
    %p36 = scmp.ne.s32.totalorder %s25, %s26
    %p37 = scmp.eq.s32.totalorder %s17, 0
    %p38 = por %p36, %p37
    %p39 = scmp.ne.s32.totalorder %s25, %s26
    %p40 = scmp.eq.s32.totalorder %s18, 1
    %p41 = por %p39, %p40
    %p43 = scmp.ne.s32.totalorder %s26, %s42
    %p44 = scmp.eq.s32.totalorder %s18, 0
    %p45 = por %p43, %p44
    %s47 = sadd.s32 %s46, 1
    %p50 = scmp.eq.s32.totalorder %s12, 1
    %p51 = scmp.ne.s32.totalorder %s46, %s48
    %p52 = scmp.eq.s32.totalorder %s12, 0
    %p53 = por %p51, %p52
    %p54 = scmp.ne.s32.totalorder %s46, %s48
    %p55 = scmp.eq.s32.totalorder %s17, 1
    %p56 = por %p54, %p55
    %p57 = scmp.ne.s32.totalorder %s48, %s49
    %p58 = scmp.eq.s32.totalorder %s17, 0
    %p59 = por %p57, %p58
    %p60 = scmp.ne.s32.totalorder %s48, %s49
    %p61 = scmp.eq.s32.totalorder %s18, 1
    %p62 = por %p60, %p61
    %p64 = scmp.ne.s32.totalorder %s49, %s63
    %p65 = scmp.eq.s32.totalorder %s18, 0
    %p66 = por %p64, %p65
    %s68 = sadd.s32 %s67, 1
    %p71 = scmp.eq.s32.totalorder %s12, 1
    %p72 = scmp.ne.s32.totalorder %s67, %s69
    %p73 = scmp.eq.s32.totalorder %s12, 0
    %p74 = por %p72, %p73
    %p75 = scmp.ne.s32.totalorder %s67, %s69
    %p76 = scmp.eq.s32.totalorder %s17, 1
    %p77 = por %p75, %p76
    %p78 = scmp.ne.s32.totalorder %s69, %s70
    %p79 = scmp.eq.s32.totalorder %s17, 0
    %p80 = por %p78, %p79
    %p81 = scmp.ne.s32.totalorder %s69, %s70
    %p82 = scmp.eq.s32.totalorder %s18, 1
    %p83 = por %p81, %p82
    %p85 = scmp.ne.s32.totalorder %s70, %s84
    %p86 = scmp.eq.s32.totalorder %s18, 0
    %p87 = por %p85, %p86
    %s89 = sadd.s32 %s88, 1
    %p92 = scmp.eq.s32.totalorder %s12, 1
    %p93 = scmp.ne.s32.totalorder %s88, %s90
    %p94 = scmp.eq.s32.totalorder %s12, 0
    %p95 = por %p93, %p94
    %p96 = scmp.ne.s32.totalorder %s88, %s90
    %p97 = scmp.eq.s32.totalorder %s17, 1
    %p98 = por %p96, %p97
    %p99 = scmp.ne.s32.totalorder %s90, %s91
    %p100 = scmp.eq.s32.totalorder %s17, 0
    %p101 = por %p99, %p100
    %p102 = scmp.ne.s32.totalorder %s90, %s91
    %p103 = scmp.eq.s32.totalorder %s18, 1
    %p104 = por %p102, %p103
    %p106 = scmp.ne.s32.totalorder %s91, %s105
    %p107 = scmp.eq.s32.totalorder %s18, 0
    %p108 = por %p106, %p107
    %s109 = ssub.s32 %s12, %s19
    %p110 = scmp.eq.s32.totalorder %s109, 0
    %s112 = sadd.s32 %s111, 1
    %s113 = scalar_select %p110, %s111, %s112
    %p116 = pneg %p110
    %p117 = scmp.eq.s32.totalorder %s12, 1
    %p118 = por %p116, %p117
    %p119 = scmp.ne.s32.totalorder %s111, %s114
    %p120 = scmp.eq.s32.totalorder %s12, 0
    %p121 = por %p119, %p120
    %p122 = scmp.ne.s32.totalorder %s111, %s114
    %p123 = scmp.eq.s32.totalorder %s17, 1
    %p124 = por %p122, %p123
    %p125 = scmp.ne.s32.totalorder %s114, %s115
    %p126 = scmp.eq.s32.totalorder %s17, 0
    %p127 = por %p125, %p126
    %p128 = scmp.ne.s32.totalorder %s114, %s115
    %p129 = scmp.eq.s32.totalorder %s18, 1
    %p130 = por %p128, %p129
    %p132 = scmp.ne.s32.totalorder %s115, %s131
    %p133 = scmp.eq.s32.totalorder %s18, 0
    %p134 = por %p132, %p133
    %s136 = sadd.s32 %s135, 1
    %p139 = scmp.eq.s32.totalorder %s12, 1
    %p140 = scmp.ne.s32.totalorder %s135, %s137
    %p141 = scmp.eq.s32.totalorder %s12, 0
    %p142 = por %p140, %p141
    %p143 = scmp.ne.s32.totalorder %s135, %s137
    %p144 = scmp.eq.s32.totalorder %s17, 1
    %p145 = por %p143, %p144
    %p146 = scmp.ne.s32.totalorder %s137, %s138
    %p147 = scmp.eq.s32.totalorder %s17, 0
    %p148 = por %p146, %p147
    %p149 = scmp.ne.s32.totalorder %s137, %s138
    %p150 = scmp.eq.s32.totalorder %s18, 1
    %p151 = por %p149, %p150
    %p153 = scmp.ne.s32.totalorder %s138, %s152
    %p154 = scmp.eq.s32.totalorder %s18, 0
    %p155 = por %p153, %p154
    %p156 = scmp.le.s32.totalorder 1, %s12
    %p157 = scmp.lt.s32.totalorder %s12, 3
    %p158 = pnand %p156, %p157
    %p159 = pneg %p158
    // Predicated region
    $region9: #{bottleneck_forward.4} parent=5 // pred_check
      _
    $region10: #{bottleneck_forward.4} parent=5 // pred_check_branch
      %161 = sbr.rel (%p158) target = $region12
    $region11: #{bottleneck_forward.4} parent=5 // pred_region
      %s162 = ssub.s32 %s12, 1
      // Predicated region
      $region13: #{bottleneck_forward.4} parent=11 // pred_check
        %p163 = pneg %p59
      $region14: #{bottleneck_forward.4} parent=11 // pred_check_branch
        %165 = sbr.rel (%p163) target = $region16
      $region15: #{bottleneck_forward.4} parent=11 // pred_region
        _
      $region16: #{bottleneck_forward.4} parent=11 // pred_fallthru
        _
      // Predicated region
      $region17: #{bottleneck_forward.4} parent=11 // pred_check
        %p166 = pneg %p80
      $region18: #{bottleneck_forward.4} parent=11 // pred_check_branch
        %168 = sbr.rel (%p166) target = $region20
      $region19: #{bottleneck_forward.4} parent=11 // pred_region
        _
      $region20: #{bottleneck_forward.4} parent=11 // pred_fallthru
        _
      // Predicated region
      $region21: #{bottleneck_forward.4} parent=11 // pred_check
        %p169 = pneg %p101
      $region22: #{bottleneck_forward.4} parent=11 // pred_check_branch
        %171 = sbr.rel (%p169) target = $region24
      $region23: #{bottleneck_forward.4} parent=11 // pred_region
        _
      $region24: #{bottleneck_forward.4} parent=11 // pred_fallthru
        _
    $region12: #{bottleneck_forward.4} parent=5 // pred_fallthru
      _
    %p172 = scmp.lt.s32.totalorder %s12, 2
    // Predicated region
    $region25: #{bottleneck_forward.4} parent=5 // pred_check
      %p173 = pneg %p172
    $region26: #{bottleneck_forward.4} parent=5 // pred_check_branch
      %175 = sbr.rel (%p173) target = $region28
    $region27: #{bottleneck_forward.4} parent=5 // pred_region
      // Predicated region
      $region29: #{bottleneck_forward.4} parent=27 // pred_check
        %p176 = pneg %p32
      $region30: #{bottleneck_forward.4} parent=27 // pred_check_branch
        %178 = sbr.rel (%p176) target = $region32
      $region31: #{bottleneck_forward.4} parent=27 // pred_region
        %p179 = scmp.lt.s32.totalorder %s12, 1
        %s180 = scalar_select %p179, %s12, 1
        %s181 = smul.addr %s180, 32
        %s182 = smul.addr %s181, 4
        %s183 = scalar_lea.vmem %s0, %s182
      $region32: #{bottleneck_forward.4} parent=27 // pred_fallthru
        _
    $region28: #{bottleneck_forward.4} parent=5 // pred_fallthru
      _
    %p184 = scmp.le.s32.totalorder 1, %s12
    %p185 = scmp.lt.s32.totalorder %s12, 3
    %p186 = pnand %p184, %p185
    %p187 = pneg %p186
    // Predicated region
    $region33: #{bottleneck_forward.4} parent=5 // pred_check
      _
    $region34: #{bottleneck_forward.4} parent=5 // pred_check_branch
      %189 = sbr.rel (%p186) target = $region36
    $region35: #{bottleneck_forward.4} parent=5 // pred_region
      %s190 = ssub.s32 %s12, 1
      %p191 = scmp.lt.s32.totalorder %s17, 1
      %s192 = scalar_select %p191, %s17, 1
      %s193 = smul.addr %s192, 32
      %s194 = smul.addr %s193, 4
      %s195 = scalar_lea.vmem %s0, %s194
      %p196 = pneg %p38
      %p197 = pneg %p35
      %p198 = pneg %p59
      %p199 = pneg %p56
      %p200 = pneg %p80
      %p201 = pneg %p77
      %p202 = pneg %p101
      %p203 = pneg %p98
      %p204 = pneg %p127
      %p205 = pneg %p124
      %p206 = scmp.lt.s32.totalorder %s17, 1
      %s207 = scalar_select %p206, %s17, 1
      %s208 = smul.addr %s207, 32
      %s209 = smul.addr %s208, 4
      %s210 = scalar_lea.vmem %s4, %s209
      %p211 = pneg %p148
      %p212 = pneg %p145
      %p213 = scmp.lt.s32.totalorder %s17, 1
      %s214 = scalar_select %p213, %s17, 1
      %s215 = smul.addr %s214, 32
      %s216 = smul.addr %s215, 4
      %s217 = scalar_lea.vmem %s0, %s216
      %p218 = scmp.lt.s32.totalorder %s17, 1
      %s219 = scalar_select %p218, %s17, 1
      %s220 = smul.addr %s219, 32
      %s221 = smul.addr %s220, 4
      %s222 = scalar_lea.vmem %s4, %s221
      %v224 = vld [vmem:[%s217] sm:$0xf]
      %v225 = vld [vmem:[%s217 + $0x4] sm:$0xf]
      %v226 = vld [vmem:[%s217 + $0x8] sm:$0xf]
      %v227 = vld [vmem:[%s217 + $0xc] sm:$0xf]
      %v228 = vld [vmem:[%s217 + $0x10] sm:$0xf]
      %v229 = vld [vmem:[%s217 + $0x14] sm:$0xf]
      %v230 = vld [vmem:[%s217 + $0x18] sm:$0xf]
      %v231 = vld [vmem:[%s217 + $0x1c] sm:$0xf]
      %v232 = vld [vmem:[%s217 + $0x20] sm:$0xf]
      %v233 = vld [vmem:[%s217 + $0x24] sm:$0xf]
      %v234 = vld [vmem:[%s217 + $0x28] sm:$0xf]
      %v235 = vld [vmem:[%s217 + $0x2c] sm:$0xf]
      %v236 = vld [vmem:[%s217 + $0x30] sm:$0xf]
      %v237 = vld [vmem:[%s217 + $0x34] sm:$0xf]
      %v238 = vld [vmem:[%s217 + $0x38] sm:$0xf]
      %v239 = vld [vmem:[%s217 + $0x3c] sm:$0xf]
      %v240 = vld [vmem:[%s217 + $0x40] sm:$0xf]
      %v241 = vld [vmem:[%s217 + $0x44] sm:$0xf]
      %v242 = vld [vmem:[%s217 + $0x48] sm:$0xf]
      %v243 = vld [vmem:[%s217 + $0x4c] sm:$0xf]
      %v244 = vld [vmem:[%s217 + $0x50] sm:$0xf]
      %v245 = vld [vmem:[%s217 + $0x54] sm:$0xf]
      %v246 = vld [vmem:[%s217 + $0x58] sm:$0xf]
      %v247 = vld [vmem:[%s217 + $0x5c] sm:$0xf]
      %v248 = vld [vmem:[%s217 + $0x60] sm:$0xf]
      %v249 = vld [vmem:[%s217 + $0x64] sm:$0xf]
      %v250 = vld [vmem:[%s217 + $0x68] sm:$0xf]
      %v251 = vld [vmem:[%s217 + $0x6c] sm:$0xf]
      %v252 = vld [vmem:[%s217 + $0x70] sm:$0xf]
      %v253 = vld [vmem:[%s217 + $0x74] sm:$0xf]
      %v254 = vld [vmem:[%s217 + $0x78] sm:$0xf]
      %v255 = vld [vmem:[%s217 + $0x7c] sm:$0xf]
      %v256 = vunpack.c.l.bf16 %v224
      %v257 = vunpack.c.l.bf16 %v225
      %v258 = vunpack.c.l.bf16 %v226
      %v259 = vunpack.c.l.bf16 %v227
      %v260 = vunpack.c.l.bf16 %v228
      %v261 = vunpack.c.l.bf16 %v229
      %v262 = vunpack.c.l.bf16 %v230
      %v263 = vunpack.c.l.bf16 %v231
      %v264 = vunpack.c.l.bf16 %v232
      %v265 = vunpack.c.l.bf16 %v233
      %v266 = vunpack.c.l.bf16 %v234
      %v267 = vunpack.c.l.bf16 %v235
      %v268 = vunpack.c.l.bf16 %v236
      %v269 = vunpack.c.l.bf16 %v237
      %v270 = vunpack.c.l.bf16 %v238
      %v271 = vunpack.c.l.bf16 %v239
      %v272 = vunpack.c.l.bf16 %v240
      %v273 = vunpack.c.l.bf16 %v241
      %v274 = vunpack.c.l.bf16 %v242
      %v275 = vunpack.c.l.bf16 %v243
      %v276 = vunpack.c.l.bf16 %v244
      %v277 = vunpack.c.l.bf16 %v245
      %v278 = vunpack.c.l.bf16 %v246
      %v279 = vunpack.c.l.bf16 %v247
      %v280 = vunpack.c.l.bf16 %v248
      %v281 = vunpack.c.l.bf16 %v249
      %v282 = vunpack.c.l.bf16 %v250
      %v283 = vunpack.c.l.bf16 %v251
      %v284 = vunpack.c.l.bf16 %v252
      %v285 = vunpack.c.l.bf16 %v253
      %v286 = vunpack.c.l.bf16 %v254
      %v287 = vunpack.c.l.bf16 %v255
      %v288 = vld [vmem:[%s1] sm:$0x1]
      %v290 = vlaneseq
      %v291 = vshrl.u32 %v290, 7
      %v292 = vsub.s32 0, %v291
      %v293 = vrot.slane %v288, %v292
      %v295 = vmul.f32 %v256, %v293
      %v296 = vmul.f32 %v257, %v293
      %v297 = vmul.f32 %v258, %v293
      %v298 = vmul.f32 %v259, %v293
      %v299 = vmul.f32 %v260, %v293
      %v300 = vmul.f32 %v261, %v293
      %v301 = vmul.f32 %v262, %v293
      %v302 = vmul.f32 %v263, %v293
      %v303 = vmul.f32 %v264, %v293
      %v304 = vmul.f32 %v265, %v293
      %v305 = vmul.f32 %v266, %v293
      %v306 = vmul.f32 %v267, %v293
      %v307 = vmul.f32 %v268, %v293
      %v308 = vmul.f32 %v269, %v293
      %v309 = vmul.f32 %v270, %v293
      %v310 = vmul.f32 %v271, %v293
      %v311 = vmul.f32 %v272, %v293
      %v312 = vmul.f32 %v273, %v293
      %v313 = vmul.f32 %v274, %v293
      %v314 = vmul.f32 %v275, %v293
      %v315 = vmul.f32 %v276, %v293
      %v316 = vmul.f32 %v277, %v293
      %v317 = vmul.f32 %v278, %v293
      %v318 = vmul.f32 %v279, %v293
      %v319 = vmul.f32 %v280, %v293
      %v320 = vmul.f32 %v281, %v293
      %v321 = vmul.f32 %v282, %v293
      %v322 = vmul.f32 %v283, %v293
      %v323 = vmul.f32 %v284, %v293
      %v324 = vmul.f32 %v285, %v293
      %v325 = vmul.f32 %v286, %v293
      %v326 = vmul.f32 %v287, %v293
      %v327 = vld [vmem:[%s2] sm:$0x1]
      %v329 = vlaneseq
      %v330 = vshrl.u32 %v329, 7
      %v331 = vsub.s32 0, %v330
      %v332 = vrot.slane %v327, %v331
      %v334 = vadd.f32 %v295, %v332
      %v335 = vadd.f32 %v296, %v332
      %v336 = vadd.f32 %v297, %v332
      %v337 = vadd.f32 %v298, %v332
      %v338 = vadd.f32 %v299, %v332
      %v339 = vadd.f32 %v300, %v332
      %v340 = vadd.f32 %v301, %v332
      %v341 = vadd.f32 %v302, %v332
      %v342 = vadd.f32 %v303, %v332
      %v343 = vadd.f32 %v304, %v332
      %v344 = vadd.f32 %v305, %v332
      %v345 = vadd.f32 %v306, %v332
      %v346 = vadd.f32 %v307, %v332
      %v347 = vadd.f32 %v308, %v332
      %v348 = vadd.f32 %v309, %v332
      %v349 = vadd.f32 %v310, %v332
      %v350 = vadd.f32 %v311, %v332
      %v351 = vadd.f32 %v312, %v332
      %v352 = vadd.f32 %v313, %v332
      %v353 = vadd.f32 %v314, %v332
      %v354 = vadd.f32 %v315, %v332
      %v355 = vadd.f32 %v316, %v332
      %v356 = vadd.f32 %v317, %v332
      %v357 = vadd.f32 %v318, %v332
      %v358 = vadd.f32 %v319, %v332
      %v359 = vadd.f32 %v320, %v332
      %v360 = vadd.f32 %v321, %v332
      %v361 = vadd.f32 %v322, %v332
      %v362 = vadd.f32 %v323, %v332
      %v363 = vadd.f32 %v324, %v332
      %v364 = vadd.f32 %v325, %v332
      %v365 = vadd.f32 %v326, %v332
      %v366 = vmax.f32 %v334, 0.0
      %v367 = vmax.f32 %v335, 0.0
      %v368 = vmax.f32 %v336, 0.0
      %v369 = vmax.f32 %v337, 0.0
      %v370 = vmax.f32 %v338, 0.0
      %v371 = vmax.f32 %v339, 0.0
      %v372 = vmax.f32 %v340, 0.0
      %v373 = vmax.f32 %v341, 0.0
      %v374 = vmax.f32 %v342, 0.0
      %v375 = vmax.f32 %v343, 0.0
      %v376 = vmax.f32 %v344, 0.0
      %v377 = vmax.f32 %v345, 0.0
      %v378 = vmax.f32 %v346, 0.0
      %v379 = vmax.f32 %v347, 0.0
      %v380 = vmax.f32 %v348, 0.0
      %v381 = vmax.f32 %v349, 0.0
      %v382 = vmax.f32 %v350, 0.0
      %v383 = vmax.f32 %v351, 0.0
      %v384 = vmax.f32 %v352, 0.0
      %v385 = vmax.f32 %v353, 0.0
      %v386 = vmax.f32 %v354, 0.0
      %v387 = vmax.f32 %v355, 0.0
      %v388 = vmax.f32 %v356, 0.0
      %v389 = vmax.f32 %v357, 0.0
      %v390 = vmax.f32 %v358, 0.0
      %v391 = vmax.f32 %v359, 0.0
      %v392 = vmax.f32 %v360, 0.0
      %v393 = vmax.f32 %v361, 0.0
      %v394 = vmax.f32 %v362, 0.0
      %v395 = vmax.f32 %v363, 0.0
      %v396 = vmax.f32 %v364, 0.0
      %v397 = vmax.f32 %v365, 0.0
      %v398 = vlaneseq
      %v399 = vshrl.u32 %v398, 7
      %v400 = vadd.s32 %v399, 8
      %v401 = vadd.s32 %v399, 16
      %v402 = vadd.s32 %v399, 24
      %v403 = vadd.s32 %v399, 32
      %v404 = vadd.s32 %v399, 40
      %v405 = vadd.s32 %v399, 48
      %v406 = vadd.s32 %v399, 56
      %v407 = vadd.s32 %v399, 64
      %v408 = vadd.s32 %v399, 72
      %v409 = vadd.s32 %v399, 80
      %v410 = vadd.s32 %v399, 88
      %v411 = vadd.s32 %v399, 96
      %v412 = vadd.s32 %v399, 104
      %v413 = vadd.s32 %v399, 112
      %v414 = vadd.s32 %v399, 120
      %v415 = vadd.s32 %v399, 128
      %v416 = vadd.s32 %v399, 136
      %v417 = vadd.s32 %v399, 144
      %v418 = vadd.s32 %v399, 152
      %v419 = vadd.s32 %v399, 160
      %v420 = vadd.s32 %v399, 168
      %v421 = vadd.s32 %v399, 176
      %v422 = vadd.s32 %v399, 184
      %v423 = vadd.s32 %v399, 192
      %v424 = vadd.s32 %v399, 200
      %v425 = vadd.s32 %v399, 208
      %v426 = vadd.s32 %v399, 216
      %v427 = vadd.s32 %v399, 224
      %v428 = vadd.s32 %v399, 232
      %v429 = vadd.s32 %v399, 240
      %v430 = vadd.s32 %v399, 248
      %v431 = vadd.s32 %v399, 256
      %v432 = vadd.s32 %v399, 264
      %v433 = vadd.s32 %v399, 272
      %v434 = vadd.s32 %v399, 280
      %vm435 = vcmp.lt.s32.totalorder %v399, 0
      %v436 = vsub.s32 0, %v399
      %v437 = vsel %vm435, %v436, %v399
      %v438 = vshrl.u32 %v437, 4
      %v439 = vand.u32 %v437, 15
      %v440 = vsub.s32 0, %v439
      %v441 = vsel %vm435, %v440, %v439
      %vm442 = vcmp.lt.s32.totalorder %v400, 0
      %v443 = vsub.s32 0, %v400
      %v444 = vsel %vm442, %v443, %v400
      %v445 = vshrl.u32 %v444, 4
      %v446 = vand.u32 %v444, 15
      %v447 = vsub.s32 0, %v446
      %v448 = vsel %vm442, %v447, %v446
      %vm449 = vcmp.lt.s32.totalorder %v401, 0
      %v450 = vsub.s32 0, %v401
      %v451 = vsel %vm449, %v450, %v401
      %v452 = vshrl.u32 %v451, 4
      %v453 = vand.u32 %v451, 15
      %v454 = vsub.s32 0, %v453
      %v455 = vsel %vm449, %v454, %v453
      %vm456 = vcmp.lt.s32.totalorder %v402, 0
      %v457 = vsub.s32 0, %v402
      %v458 = vsel %vm456, %v457, %v402
      %v459 = vshrl.u32 %v458, 4
      %v460 = vand.u32 %v458, 15
      %v461 = vsub.s32 0, %v460
      %v462 = vsel %vm456, %v461, %v460
      %vm463 = vcmp.lt.s32.totalorder %v403, 0
      %v464 = vsub.s32 0, %v403
      %v465 = vsel %vm463, %v464, %v403
      %v466 = vshrl.u32 %v465, 4
      %v467 = vand.u32 %v465, 15
      %v468 = vsub.s32 0, %v467
      %v469 = vsel %vm463, %v468, %v467
      %vm470 = vcmp.lt.s32.totalorder %v404, 0
      %v471 = vsub.s32 0, %v404
      %v472 = vsel %vm470, %v471, %v404
      %v473 = vshrl.u32 %v472, 4
      %v474 = vand.u32 %v472, 15
      %v475 = vsub.s32 0, %v474
      %v476 = vsel %vm470, %v475, %v474
      %vm477 = vcmp.lt.s32.totalorder %v405, 0
      %v478 = vsub.s32 0, %v405
      %v479 = vsel %vm477, %v478, %v405
      %v480 = vshrl.u32 %v479, 4
      %v481 = vand.u32 %v479, 15
      %v482 = vsub.s32 0, %v481
      %v483 = vsel %vm477, %v482, %v481
      %vm484 = vcmp.lt.s32.totalorder %v406, 0
      %v485 = vsub.s32 0, %v406
      %v486 = vsel %vm484, %v485, %v406
      %v487 = vshrl.u32 %v486, 4
      %v488 = vand.u32 %v486, 15
      %v489 = vsub.s32 0, %v488
      %v490 = vsel %vm484, %v489, %v488
      %vm491 = vcmp.lt.s32.totalorder %v407, 0
      %v492 = vsub.s32 0, %v407
      %v493 = vsel %vm491, %v492, %v407
      %v494 = vshrl.u32 %v493, 4
      %v495 = vand.u32 %v493, 15
      %v496 = vsub.s32 0, %v495
      %v497 = vsel %vm491, %v496, %v495
      %vm498 = vcmp.lt.s32.totalorder %v408, 0
      %v499 = vsub.s32 0, %v408
      %v500 = vsel %vm498, %v499, %v408
      %v501 = vshrl.u32 %v500, 4
      %v502 = vand.u32 %v500, 15
      %v503 = vsub.s32 0, %v502
      %v504 = vsel %vm498, %v503, %v502
      %vm505 = vcmp.lt.s32.totalorder %v409, 0
      %v506 = vsub.s32 0, %v409
      %v507 = vsel %vm505, %v506, %v409
      %v508 = vshrl.u32 %v507, 4
      %v509 = vand.u32 %v507, 15
      %v510 = vsub.s32 0, %v509
      %v511 = vsel %vm505, %v510, %v509
      %vm512 = vcmp.lt.s32.totalorder %v410, 0
      %v513 = vsub.s32 0, %v410
      %v514 = vsel %vm512, %v513, %v410
      %v515 = vshrl.u32 %v514, 4
      %v516 = vand.u32 %v514, 15
      %v517 = vsub.s32 0, %v516
      %v518 = vsel %vm512, %v517, %v516
      %vm519 = vcmp.lt.s32.totalorder %v411, 0
      %v520 = vsub.s32 0, %v411
      %v521 = vsel %vm519, %v520, %v411
      %v522 = vshrl.u32 %v521, 4
      %v523 = vand.u32 %v521, 15
      %v524 = vsub.s32 0, %v523
      %v525 = vsel %vm519, %v524, %v523
      %vm526 = vcmp.lt.s32.totalorder %v412, 0
      %v527 = vsub.s32 0, %v412
      %v528 = vsel %vm526, %v527, %v412
      %v529 = vshrl.u32 %v528, 4
      %v530 = vand.u32 %v528, 15
      %v531 = vsub.s32 0, %v530
      %v532 = vsel %vm526, %v531, %v530
      %vm533 = vcmp.lt.s32.totalorder %v413, 0
      %v534 = vsub.s32 0, %v413
      %v535 = vsel %vm533, %v534, %v413
      %v536 = vshrl.u32 %v535, 4
      %v537 = vand.u32 %v535, 15
      %v538 = vsub.s32 0, %v537
      %v539 = vsel %vm533, %v538, %v537
      %vm540 = vcmp.lt.s32.totalorder %v414, 0
      %v541 = vsub.s32 0, %v414
      %v542 = vsel %vm540, %v541, %v414
      %v543 = vshrl.u32 %v542, 4
      %v544 = vand.u32 %v542, 15
      %v545 = vsub.s32 0, %v544
      %v546 = vsel %vm540, %v545, %v544
      %vm547 = vcmp.lt.s32.totalorder %v415, 0
      %v548 = vsub.s32 0, %v415
      %v549 = vsel %vm547, %v548, %v415
      %v550 = vshrl.u32 %v549, 4
      %v551 = vand.u32 %v549, 15
      %v552 = vsub.s32 0, %v551
      %v553 = vsel %vm547, %v552, %v551
      %vm554 = vcmp.lt.s32.totalorder %v416, 0
      %v555 = vsub.s32 0, %v416
      %v556 = vsel %vm554, %v555, %v416
      %v557 = vshrl.u32 %v556, 4
      %v558 = vand.u32 %v556, 15
      %v559 = vsub.s32 0, %v558
      %v560 = vsel %vm554, %v559, %v558
      %vm561 = vcmp.lt.s32.totalorder %v417, 0
      %v562 = vsub.s32 0, %v417
      %v563 = vsel %vm561, %v562, %v417
      %v564 = vshrl.u32 %v563, 4
      %v565 = vand.u32 %v563, 15
      %v566 = vsub.s32 0, %v565
      %v567 = vsel %vm561, %v566, %v565
      %vm568 = vcmp.lt.s32.totalorder %v418, 0
      %v569 = vsub.s32 0, %v418
      %v570 = vsel %vm568, %v569, %v418
      %v571 = vshrl.u32 %v570, 4
      %v572 = vand.u32 %v570, 15
      %v573 = vsub.s32 0, %v572
      %v574 = vsel %vm568, %v573, %v572
      %vm575 = vcmp.lt.s32.totalorder %v419, 0
      %v576 = vsub.s32 0, %v419
      %v577 = vsel %vm575, %v576, %v419
      %v578 = vshrl.u32 %v577, 4
      %v579 = vand.u32 %v577, 15
      %v580 = vsub.s32 0, %v579
      %v581 = vsel %vm575, %v580, %v579
      %vm582 = vcmp.lt.s32.totalorder %v420, 0
      %v583 = vsub.s32 0, %v420
      %v584 = vsel %vm582, %v583, %v420
      %v585 = vshrl.u32 %v584, 4
      %v586 = vand.u32 %v584, 15
      %v587 = vsub.s32 0, %v586
      %v588 = vsel %vm582, %v587, %v586
      %vm589 = vcmp.lt.s32.totalorder %v421, 0
      %v590 = vsub.s32 0, %v421
      %v591 = vsel %vm589, %v590, %v421
      %v592 = vshrl.u32 %v591, 4
      %v593 = vand.u32 %v591, 15
      %v594 = vsub.s32 0, %v593
      %v595 = vsel %vm589, %v594, %v593
      %vm596 = vcmp.lt.s32.totalorder %v422, 0
      %v597 = vsub.s32 0, %v422
      %v598 = vsel %vm596, %v597, %v422
      %v599 = vshrl.u32 %v598, 4
      %v600 = vand.u32 %v598, 15
      %v601 = vsub.s32 0, %v600
      %v602 = vsel %vm596, %v601, %v600
      %vm603 = vcmp.lt.s32.totalorder %v423, 0
      %v604 = vsub.s32 0, %v423
      %v605 = vsel %vm603, %v604, %v423
      %v606 = vshrl.u32 %v605, 4
      %v607 = vand.u32 %v605, 15
      %v608 = vsub.s32 0, %v607
      %v609 = vsel %vm603, %v608, %v607
      %vm610 = vcmp.lt.s32.totalorder %v424, 0
      %v611 = vsub.s32 0, %v424
      %v612 = vsel %vm610, %v611, %v424
      %v613 = vshrl.u32 %v612, 4
      %v614 = vand.u32 %v612, 15
      %v615 = vsub.s32 0, %v614
      %v616 = vsel %vm610, %v615, %v614
      %vm617 = vcmp.lt.s32.totalorder %v425, 0
      %v618 = vsub.s32 0, %v425
      %v619 = vsel %vm617, %v618, %v425
      %v620 = vshrl.u32 %v619, 4
      %v621 = vand.u32 %v619, 15
      %v622 = vsub.s32 0, %v621
      %v623 = vsel %vm617, %v622, %v621
      %vm624 = vcmp.lt.s32.totalorder %v426, 0
      %v625 = vsub.s32 0, %v426
      %v626 = vsel %vm624, %v625, %v426
      %v627 = vshrl.u32 %v626, 4
      %v628 = vand.u32 %v626, 15
      %v629 = vsub.s32 0, %v628
      %v630 = vsel %vm624, %v629, %v628
      %vm631 = vcmp.lt.s32.totalorder %v427, 0
      %v632 = vsub.s32 0, %v427
      %v633 = vsel %vm631, %v632, %v427
      %v634 = vshrl.u32 %v633, 4
      %v635 = vand.u32 %v633, 15
      %v636 = vsub.s32 0, %v635
      %v637 = vsel %vm631, %v636, %v635
      %vm638 = vcmp.lt.s32.totalorder %v428, 0
      %v639 = vsub.s32 0, %v428
      %v640 = vsel %vm638, %v639, %v428
      %v641 = vshrl.u32 %v640, 4
      %v642 = vand.u32 %v640, 15
      %v643 = vsub.s32 0, %v642
      %v644 = vsel %vm638, %v643, %v642
      %vm645 = vcmp.lt.s32.totalorder %v429, 0
      %v646 = vsub.s32 0, %v429
      %v647 = vsel %vm645, %v646, %v429
      %v648 = vshrl.u32 %v647, 4
      %v649 = vand.u32 %v647, 15
      %v650 = vsub.s32 0, %v649
      %v651 = vsel %vm645, %v650, %v649
      %vm652 = vcmp.lt.s32.totalorder %v430, 0
      %v653 = vsub.s32 0, %v430
      %v654 = vsel %vm652, %v653, %v430
      %v655 = vshrl.u32 %v654, 4
      %v656 = vand.u32 %v654, 15
      %v657 = vsub.s32 0, %v656
      %v658 = vsel %vm652, %v657, %v656
      %vm659 = vcmp.lt.s32.totalorder %v431, 0
      %v660 = vsub.s32 0, %v431
      %v661 = vsel %vm659, %v660, %v431
      %v662 = vshrl.u32 %v661, 4
      %v663 = vand.u32 %v661, 15
      %v664 = vsub.s32 0, %v663
      %v665 = vsel %vm659, %v664, %v663
      %vm666 = vcmp.lt.s32.totalorder %v432, 0
      %v667 = vsub.s32 0, %v432
      %v668 = vsel %vm666, %v667, %v432
      %v669 = vshrl.u32 %v668, 4
      %v670 = vand.u32 %v668, 15
      %v671 = vsub.s32 0, %v670
      %v672 = vsel %vm666, %v671, %v670
      %vm673 = vcmp.lt.s32.totalorder %v433, 0
      %v674 = vsub.s32 0, %v433
      %v675 = vsel %vm673, %v674, %v433
      %v676 = vshrl.u32 %v675, 4
      %v677 = vand.u32 %v675, 15
      %v678 = vsub.s32 0, %v677
      %v679 = vsel %vm673, %v678, %v677
      %vm680 = vcmp.lt.s32.totalorder %v434, 0
      %v681 = vsub.s32 0, %v434
      %v682 = vsel %vm680, %v681, %v434
      %v683 = vshrl.u32 %v682, 4
      %v684 = vand.u32 %v682, 15
      %v685 = vsub.s32 0, %v684
      %v686 = vsel %vm680, %v685, %v684
      %vm687 = vcmp.ne.s32.totalorder %v441, 0
      %vm688 = vcmp.ne.s32.totalorder %v448, 0
      %vm689 = vcmp.ne.s32.totalorder %v455, 0
      %vm690 = vcmp.ne.s32.totalorder %v462, 0
      %vm691 = vcmp.ne.s32.totalorder %v469, 0
      %vm692 = vcmp.ne.s32.totalorder %v476, 0
      %vm693 = vcmp.ne.s32.totalorder %v483, 0
      %vm694 = vcmp.ne.s32.totalorder %v490, 0
      %vm695 = vcmp.ne.s32.totalorder %v497, 0
      %vm696 = vcmp.ne.s32.totalorder %v504, 0
      %vm697 = vcmp.ne.s32.totalorder %v511, 0
      %vm698 = vcmp.ne.s32.totalorder %v518, 0
      %vm699 = vcmp.ne.s32.totalorder %v525, 0
      %vm700 = vcmp.ne.s32.totalorder %v532, 0
      %vm701 = vcmp.ne.s32.totalorder %v539, 0
      %vm702 = vcmp.ne.s32.totalorder %v546, 0
      %vm703 = vcmp.ne.s32.totalorder %v553, 0
      %vm704 = vcmp.ne.s32.totalorder %v560, 0
      %vm705 = vcmp.ne.s32.totalorder %v567, 0
      %vm706 = vcmp.ne.s32.totalorder %v574, 0
      %vm707 = vcmp.ne.s32.totalorder %v581, 0
      %vm708 = vcmp.ne.s32.totalorder %v588, 0
      %vm709 = vcmp.ne.s32.totalorder %v595, 0
      %vm710 = vcmp.ne.s32.totalorder %v602, 0
      %vm711 = vcmp.ne.s32.totalorder %v609, 0
      %vm712 = vcmp.ne.s32.totalorder %v616, 0
      %vm713 = vcmp.ne.s32.totalorder %v623, 0
      %vm714 = vcmp.ne.s32.totalorder %v630, 0
      %vm715 = vcmp.ne.s32.totalorder %v637, 0
      %vm716 = vcmp.ne.s32.totalorder %v644, 0
      %vm717 = vcmp.ne.s32.totalorder %v651, 0
      %vm718 = vcmp.ne.s32.totalorder %v658, 0
      %vm719 = vcmp.ne.s32.totalorder %v665, 0
      %vm720 = vcmp.ne.s32.totalorder %v672, 0
      %vm721 = vcmp.ne.s32.totalorder %v679, 0
      %vm722 = vcmp.ne.s32.totalorder %v686, 0
      %vm723 = vcmp.lt.s32.totalorder %v441, 0
      %vm724 = vcmp.lt.s32.totalorder %v448, 0
      %vm725 = vcmp.lt.s32.totalorder %v455, 0
      %vm726 = vcmp.lt.s32.totalorder %v462, 0
      %vm727 = vcmp.lt.s32.totalorder %v469, 0
      %vm728 = vcmp.lt.s32.totalorder %v476, 0
      %vm729 = vcmp.lt.s32.totalorder %v483, 0
      %vm730 = vcmp.lt.s32.totalorder %v490, 0
      %vm731 = vcmp.lt.s32.totalorder %v497, 0
      %vm732 = vcmp.lt.s32.totalorder %v504, 0
      %vm733 = vcmp.lt.s32.totalorder %v511, 0
      %vm734 = vcmp.lt.s32.totalorder %v518, 0
      %vm735 = vcmp.lt.s32.totalorder %v525, 0
      %vm736 = vcmp.lt.s32.totalorder %v532, 0
      %vm737 = vcmp.lt.s32.totalorder %v539, 0
      %vm738 = vcmp.lt.s32.totalorder %v546, 0
      %vm739 = vcmp.lt.s32.totalorder %v553, 0
      %vm740 = vcmp.lt.s32.totalorder %v560, 0
      %vm741 = vcmp.lt.s32.totalorder %v567, 0
      %vm742 = vcmp.lt.s32.totalorder %v574, 0
      %vm743 = vcmp.lt.s32.totalorder %v581, 0
      %vm744 = vcmp.lt.s32.totalorder %v588, 0
      %vm745 = vcmp.lt.s32.totalorder %v595, 0
      %vm746 = vcmp.lt.s32.totalorder %v602, 0
      %vm747 = vcmp.lt.s32.totalorder %v609, 0
      %vm748 = vcmp.lt.s32.totalorder %v616, 0
      %vm749 = vcmp.lt.s32.totalorder %v623, 0
      %vm750 = vcmp.lt.s32.totalorder %v630, 0
      %vm751 = vcmp.lt.s32.totalorder %v637, 0
      %vm752 = vcmp.lt.s32.totalorder %v644, 0
      %vm753 = vcmp.lt.s32.totalorder %v651, 0
      %vm754 = vcmp.lt.s32.totalorder %v658, 0
      %vm755 = vcmp.lt.s32.totalorder %v665, 0
      %vm756 = vcmp.lt.s32.totalorder %v672, 0
      %vm757 = vcmp.lt.s32.totalorder %v679, 0
      %vm758 = vcmp.lt.s32.totalorder %v686, 0
      %vm759 = vmand %vm723, %vm687
      %vm760 = vmand %vm724, %vm688
      %vm761 = vmand %vm725, %vm689
      %vm762 = vmand %vm726, %vm690
      %vm763 = vmand %vm727, %vm691
      %vm764 = vmand %vm728, %vm692
      %vm765 = vmand %vm729, %vm693
      %vm766 = vmand %vm730, %vm694
      %vm767 = vmand %vm731, %vm695
      %vm768 = vmand %vm732, %vm696
      %vm769 = vmand %vm733, %vm697
      %vm770 = vmand %vm734, %vm698
      %vm771 = vmand %vm735, %vm699
      %vm772 = vmand %vm736, %vm700
      %vm773 = vmand %vm737, %vm701
      %vm774 = vmand %vm738, %vm702
      %vm775 = vmand %vm739, %vm703
      %vm776 = vmand %vm740, %vm704
      %vm777 = vmand %vm741, %vm705
      %vm778 = vmand %vm742, %vm706
      %vm779 = vmand %vm743, %vm707
      %vm780 = vmand %vm744, %vm708
      %vm781 = vmand %vm745, %vm709
      %vm782 = vmand %vm746, %vm710
      %vm783 = vmand %vm747, %vm711
      %vm784 = vmand %vm748, %vm712
      %vm785 = vmand %vm749, %vm713
      %vm786 = vmand %vm750, %vm714
      %vm787 = vmand %vm751, %vm715
      %vm788 = vmand %vm752, %vm716
      %vm789 = vmand %vm753, %vm717
      %vm790 = vmand %vm754, %vm718
      %vm791 = vmand %vm755, %vm719
      %vm792 = vmand %vm756, %vm720
      %vm793 = vmand %vm757, %vm721
      %vm794 = vmand %vm758, %vm722
      %v795 = vadd.s32 %v441, 16
      %v796 = vadd.s32 %v448, 16
      %v797 = vadd.s32 %v455, 16
      %v798 = vadd.s32 %v462, 16
      %v799 = vadd.s32 %v469, 16
      %v800 = vadd.s32 %v476, 16
      %v801 = vadd.s32 %v483, 16
      %v802 = vadd.s32 %v490, 16
      %v803 = vadd.s32 %v497, 16
      %v804 = vadd.s32 %v504, 16
      %v805 = vadd.s32 %v511, 16
      %v806 = vadd.s32 %v518, 16
      %v807 = vadd.s32 %v525, 16
      %v808 = vadd.s32 %v532, 16
      %v809 = vadd.s32 %v539, 16
      %v810 = vadd.s32 %v546, 16
      %v811 = vadd.s32 %v553, 16
      %v812 = vadd.s32 %v560, 16
      %v813 = vadd.s32 %v567, 16
      %v814 = vadd.s32 %v574, 16
      %v815 = vadd.s32 %v581, 16
      %v816 = vadd.s32 %v588, 16
      %v817 = vadd.s32 %v595, 16
      %v818 = vadd.s32 %v602, 16
      %v819 = vadd.s32 %v609, 16
      %v820 = vadd.s32 %v616, 16
      %v821 = vadd.s32 %v623, 16
      %v822 = vadd.s32 %v630, 16
      %v823 = vadd.s32 %v637, 16
      %v824 = vadd.s32 %v644, 16
      %v825 = vadd.s32 %v651, 16
      %v826 = vadd.s32 %v658, 16
      %v827 = vadd.s32 %v665, 16
      %v828 = vadd.s32 %v672, 16
      %v829 = vadd.s32 %v679, 16
      %v830 = vadd.s32 %v686, 16
      %v831 = vsel %vm759, %v795, %v441
      %v832 = vsel %vm760, %v796, %v448
      %v833 = vsel %vm761, %v797, %v455
      %v834 = vsel %vm762, %v798, %v462
      %v835 = vsel %vm763, %v799, %v469
      %v836 = vsel %vm764, %v800, %v476
      %v837 = vsel %vm765, %v801, %v483
      %v838 = vsel %vm766, %v802, %v490
      %v839 = vsel %vm767, %v803, %v497
      %v840 = vsel %vm768, %v804, %v504
      %v841 = vsel %vm769, %v805, %v511
      %v842 = vsel %vm770, %v806, %v518
      %v843 = vsel %vm771, %v807, %v525
      %v844 = vsel %vm772, %v808, %v532
      %v845 = vsel %vm773, %v809, %v539
      %v846 = vsel %vm774, %v810, %v546
      %v847 = vsel %vm775, %v811, %v553
      %v848 = vsel %vm776, %v812, %v560
      %v849 = vsel %vm777, %v813, %v567
      %v850 = vsel %vm778, %v814, %v574
      %v851 = vsel %vm779, %v815, %v581
      %v852 = vsel %vm780, %v816, %v588
      %v853 = vsel %vm781, %v817, %v595
      %v854 = vsel %vm782, %v818, %v602
      %v855 = vsel %vm783, %v819, %v609
      %v856 = vsel %vm784, %v820, %v616
      %v857 = vsel %vm785, %v821, %v623
      %v858 = vsel %vm786, %v822, %v630
      %v859 = vsel %vm787, %v823, %v637
      %v860 = vsel %vm788, %v824, %v644
      %v861 = vsel %vm789, %v825, %v651
      %v862 = vsel %vm790, %v826, %v658
      %v863 = vsel %vm791, %v827, %v665
      %v864 = vsel %vm792, %v828, %v672
      %v865 = vsel %vm793, %v829, %v679
      %v866 = vsel %vm794, %v830, %v686
      %vm867 = vcmp.ge.s32.totalorder %v831, 1
      %vm868 = vcmp.ge.s32.totalorder %v832, 1
      %vm869 = vcmp.ge.s32.totalorder %v833, 1
      %vm870 = vcmp.ge.s32.totalorder %v834, 1
      %vm871 = vcmp.ge.s32.totalorder %v835, 1
      %vm872 = vcmp.ge.s32.totalorder %v836, 1
      %vm873 = vcmp.ge.s32.totalorder %v837, 1
      %vm874 = vcmp.ge.s32.totalorder %v838, 1
      %vm875 = vcmp.ge.s32.totalorder %v839, 1
      %vm876 = vcmp.ge.s32.totalorder %v840, 1
      %vm877 = vcmp.ge.s32.totalorder %v841, 1
      %vm878 = vcmp.ge.s32.totalorder %v842, 1
      %vm879 = vcmp.ge.s32.totalorder %v843, 1
      %vm880 = vcmp.ge.s32.totalorder %v844, 1
      %vm881 = vcmp.ge.s32.totalorder %v845, 1
      %vm882 = vcmp.ge.s32.totalorder %v846, 1
      %vm883 = vcmp.ge.s32.totalorder %v847, 1
      %vm884 = vcmp.ge.s32.totalorder %v848, 1
      %vm885 = vcmp.ge.s32.totalorder %v849, 1
      %vm886 = vcmp.ge.s32.totalorder %v850, 1
      %vm887 = vcmp.ge.s32.totalorder %v851, 1
      %vm888 = vcmp.ge.s32.totalorder %v852, 1
      %vm889 = vcmp.ge.s32.totalorder %v853, 1
      %vm890 = vcmp.ge.s32.totalorder %v854, 1
      %vm891 = vcmp.ge.s32.totalorder %v855, 1
      %vm892 = vcmp.ge.s32.totalorder %v856, 1
      %vm893 = vcmp.ge.s32.totalorder %v857, 1
      %vm894 = vcmp.ge.s32.totalorder %v858, 1
      %vm895 = vcmp.ge.s32.totalorder %v859, 1
      %vm896 = vcmp.ge.s32.totalorder %v860, 1
      %vm897 = vcmp.ge.s32.totalorder %v861, 1
      %vm898 = vcmp.ge.s32.totalorder %v862, 1
      %vm899 = vcmp.ge.s32.totalorder %v863, 1
      %vm900 = vcmp.ge.s32.totalorder %v864, 1
      %vm901 = vcmp.ge.s32.totalorder %v865, 1
      %vm902 = vcmp.ge.s32.totalorder %v866, 1
      %vm936 = vcmask 1040384
      %v937 = vrot.slane 0.0, 7
      %v938 = vsel %vm936, %v937, %v937
      %v939 = vrot.slane %v366, 7
      %v940 = vsel %vm936, %v937, %v939
      %v941 = vrot.slane %v367, 7
      %v942 = vsel %vm936, %v939, %v941
      %v943 = vrot.slane %v368, 7
      %v944 = vsel %vm936, %v941, %v943
      %v945 = vrot.slane %v369, 7
      %v946 = vsel %vm936, %v943, %v945
      %v947 = vrot.slane %v370, 7
      %v948 = vsel %vm936, %v945, %v947
      %v949 = vrot.slane %v371, 7
      %v950 = vsel %vm936, %v947, %v949
      %v951 = vrot.slane %v372, 7
      %v952 = vsel %vm936, %v949, %v951
      %v953 = vrot.slane %v373, 7
      %v954 = vsel %vm936, %v951, %v953
      %v955 = vrot.slane %v374, 7
      %v956 = vsel %vm936, %v953, %v955
      %v957 = vrot.slane %v375, 7
      %v958 = vsel %vm936, %v955, %v957
      %v959 = vrot.slane %v376, 7
      %v960 = vsel %vm936, %v957, %v959
      %v961 = vrot.slane %v377, 7
      %v962 = vsel %vm936, %v959, %v961
      %v963 = vrot.slane %v378, 7
      %v964 = vsel %vm936, %v961, %v963
      %v965 = vrot.slane %v379, 7
      %v966 = vsel %vm936, %v963, %v965
      %v967 = vrot.slane %v380, 7
      %v968 = vsel %vm936, %v965, %v967
      %v969 = vrot.slane %v381, 7
      %v970 = vsel %vm936, %v967, %v969
      %v971 = vrot.slane %v382, 7
      %v972 = vsel %vm936, %v969, %v971
      %v973 = vrot.slane %v383, 7
      %v974 = vsel %vm936, %v971, %v973
      %v975 = vrot.slane %v384, 7
      %v976 = vsel %vm936, %v973, %v975
      %v977 = vrot.slane %v385, 7
      %v978 = vsel %vm936, %v975, %v977
      %v979 = vrot.slane %v386, 7
      %v980 = vsel %vm936, %v977, %v979
      %v981 = vrot.slane %v387, 7
      %v982 = vsel %vm936, %v979, %v981
      %v983 = vrot.slane %v388, 7
      %v984 = vsel %vm936, %v981, %v983
      %v985 = vrot.slane %v389, 7
      %v986 = vsel %vm936, %v983, %v985
      %v987 = vrot.slane %v390, 7
      %v988 = vsel %vm936, %v985, %v987
      %v989 = vrot.slane %v391, 7
      %v990 = vsel %vm936, %v987, %v989
      %v991 = vrot.slane %v392, 7
      %v992 = vsel %vm936, %v989, %v991
      %v993 = vrot.slane %v393, 7
      %v994 = vsel %vm936, %v991, %v993
      %v995 = vrot.slane %v394, 7
      %v996 = vsel %vm936, %v993, %v995
      %v997 = vrot.slane %v395, 7
      %v998 = vsel %vm936, %v995, %v997
      %v999 = vrot.slane %v396, 7
      %v1000 = vsel %vm936, %v997, %v999
      %v1001 = vrot.slane %v397, 7
      %v1002 = vsel %vm936, %v999, %v1001
      %v1003 = vsel %vm936, %v1001, %v937
      %v1039 = vsel %vm936, 0.0, %v937
      %v1040 = vsel %vm867, 1, 0
      %v1041 = vsel %vm868, 1, 0
      %v1042 = vsel %vm869, 1, 0
      %v1043 = vsel %vm870, 1, 0
      %v1044 = vsel %vm871, 1, 0
      %v1045 = vsel %vm872, 1, 0
      %v1046 = vsel %vm873, 1, 0
      %v1047 = vsel %vm874, 1, 0
      %v1048 = vsel %vm875, 1, 0
      %v1049 = vsel %vm876, 1, 0
      %v1050 = vsel %vm877, 1, 0
      %v1051 = vsel %vm878, 1, 0
      %v1052 = vsel %vm879, 1, 0
      %v1053 = vsel %vm880, 1, 0
      %v1054 = vsel %vm881, 1, 0
      %v1055 = vsel %vm882, 1, 0
      %v1056 = vsel %vm883, 1, 0
      %v1057 = vsel %vm884, 1, 0
      %v1058 = vsel %vm885, 1, 0
      %v1059 = vsel %vm886, 1, 0
      %v1060 = vsel %vm887, 1, 0
      %v1061 = vsel %vm888, 1, 0
      %v1062 = vsel %vm889, 1, 0
      %v1063 = vsel %vm890, 1, 0
      %v1064 = vsel %vm891, 1, 0
      %v1065 = vsel %vm892, 1, 0
      %v1066 = vsel %vm893, 1, 0
      %v1067 = vsel %vm894, 1, 0
      %v1068 = vsel %vm895, 1, 0
      %v1069 = vsel %vm896, 1, 0
      %v1070 = vsel %vm897, 1, 0
      %v1071 = vsel %vm898, 1, 0
      %v1072 = vsel %vm899, 1, 0
      %v1073 = vsel %vm900, 1, 0
      %v1074 = vsel %vm901, 1, 0
      %v1075 = vsel %vm902, 1, 0
      %vm1076 = vcmp.eq.s32.totalorder %v1040, 1
      %vm1077 = vcmp.eq.s32.totalorder %v1041, 1
      %vm1078 = vcmp.eq.s32.totalorder %v1042, 1
      %vm1079 = vcmp.eq.s32.totalorder %v1043, 1
      %vm1080 = vcmp.eq.s32.totalorder %v1044, 1
      %vm1081 = vcmp.eq.s32.totalorder %v1045, 1
      %vm1082 = vcmp.eq.s32.totalorder %v1046, 1
      %vm1083 = vcmp.eq.s32.totalorder %v1047, 1
      %vm1084 = vcmp.eq.s32.totalorder %v1048, 1
      %vm1085 = vcmp.eq.s32.totalorder %v1049, 1
      %vm1086 = vcmp.eq.s32.totalorder %v1050, 1
      %vm1087 = vcmp.eq.s32.totalorder %v1051, 1
      %vm1088 = vcmp.eq.s32.totalorder %v1052, 1
      %vm1089 = vcmp.eq.s32.totalorder %v1053, 1
      %vm1090 = vcmp.eq.s32.totalorder %v1054, 1
      %vm1091 = vcmp.eq.s32.totalorder %v1055, 1
      %vm1092 = vcmp.eq.s32.totalorder %v1056, 1
      %vm1093 = vcmp.eq.s32.totalorder %v1057, 1
      %vm1094 = vcmp.eq.s32.totalorder %v1058, 1
      %vm1095 = vcmp.eq.s32.totalorder %v1059, 1
      %vm1096 = vcmp.eq.s32.totalorder %v1060, 1
      %vm1097 = vcmp.eq.s32.totalorder %v1061, 1
      %vm1098 = vcmp.eq.s32.totalorder %v1062, 1
      %vm1099 = vcmp.eq.s32.totalorder %v1063, 1
      %vm1100 = vcmp.eq.s32.totalorder %v1064, 1
      %vm1101 = vcmp.eq.s32.totalorder %v1065, 1
      %vm1102 = vcmp.eq.s32.totalorder %v1066, 1
      %vm1103 = vcmp.eq.s32.totalorder %v1067, 1
      %vm1104 = vcmp.eq.s32.totalorder %v1068, 1
      %vm1105 = vcmp.eq.s32.totalorder %v1069, 1
      %vm1106 = vcmp.eq.s32.totalorder %v1070, 1
      %vm1107 = vcmp.eq.s32.totalorder %v1071, 1
      %vm1108 = vcmp.eq.s32.totalorder %v1072, 1
      %vm1109 = vcmp.eq.s32.totalorder %v1073, 1
      %vm1110 = vcmp.eq.s32.totalorder %v1074, 1
      %vm1111 = vcmp.eq.s32.totalorder %v1075, 1
      %v1112 = vsel %vm1076, %v1039, 0.0
      %v1113 = vsel %vm1077, %v938, 0.0
      %v1114 = vsel %vm1078, %v940, 0.0
      %v1115 = vsel %vm1079, %v942, 0.0
      %v1116 = vsel %vm1080, %v944, 0.0
      %v1117 = vsel %vm1081, %v946, 0.0
      %v1118 = vsel %vm1082, %v948, 0.0
      %v1119 = vsel %vm1083, %v950, 0.0
      %v1120 = vsel %vm1084, %v952, 0.0
      %v1121 = vsel %vm1085, %v954, 0.0
      %v1122 = vsel %vm1086, %v956, 0.0
      %v1123 = vsel %vm1087, %v958, 0.0
      %v1124 = vsel %vm1088, %v960, 0.0
      %v1125 = vsel %vm1089, %v962, 0.0
      %v1126 = vsel %vm1090, %v964, 0.0
      %v1127 = vsel %vm1091, %v966, 0.0
      %v1128 = vsel %vm1092, %v968, 0.0
      %v1129 = vsel %vm1093, %v970, 0.0
      %v1130 = vsel %vm1094, %v972, 0.0
      %v1131 = vsel %vm1095, %v974, 0.0
      %v1132 = vsel %vm1096, %v976, 0.0
      %v1133 = vsel %vm1097, %v978, 0.0
      %v1134 = vsel %vm1098, %v980, 0.0
      %v1135 = vsel %vm1099, %v982, 0.0
      %v1136 = vsel %vm1100, %v984, 0.0
      %v1137 = vsel %vm1101, %v986, 0.0
      %v1138 = vsel %vm1102, %v988, 0.0
      %v1139 = vsel %vm1103, %v990, 0.0
      %v1140 = vsel %vm1104, %v992, 0.0
      %v1141 = vsel %vm1105, %v994, 0.0
      %v1142 = vsel %vm1106, %v996, 0.0
      %v1143 = vsel %vm1107, %v998, 0.0
      %v1144 = vsel %vm1108, %v1000, 0.0
      %v1145 = vsel %vm1109, %v1002, 0.0
      %v1146 = vsel %vm1110, %v1003, 0.0
      %v1147 = vsel %vm1111, %v938, 0.0
      %v1148 = vpack.c.bf16 %v1113, %v1112
      %v1149 = vpack.c.bf16 %v1115, %v1114
      %v1150 = vpack.c.bf16 %v1117, %v1116
      %v1151 = vpack.c.bf16 %v1119, %v1118
      %v1152 = vpack.c.bf16 %v1121, %v1120
      %v1153 = vpack.c.bf16 %v1123, %v1122
      %v1154 = vpack.c.bf16 %v1125, %v1124
      %v1155 = vpack.c.bf16 %v1127, %v1126
      %v1156 = vpack.c.bf16 %v1129, %v1128
      %v1157 = vpack.c.bf16 %v1131, %v1130
      %v1158 = vpack.c.bf16 %v1133, %v1132
      %v1159 = vpack.c.bf16 %v1135, %v1134
      %v1160 = vpack.c.bf16 %v1137, %v1136
      %v1161 = vpack.c.bf16 %v1139, %v1138
      %v1162 = vpack.c.bf16 %v1141, %v1140
      %v1163 = vpack.c.bf16 %v1143, %v1142
      %v1164 = vpack.c.bf16 %v1145, %v1144
      %v1165 = vpack.c.bf16 %v1147, %v1146
      %v1166 = vpack.c.bf16 0.0, 0.0
      %v1167 = vpack.c.bf16 %v367, %v366
      %v1168 = vpack.c.bf16 %v369, %v368
      %v1169 = vpack.c.bf16 %v371, %v370
      %v1170 = vpack.c.bf16 %v373, %v372
      %v1171 = vpack.c.bf16 %v375, %v374
      %v1172 = vpack.c.bf16 %v377, %v376
      %v1173 = vpack.c.bf16 %v379, %v378
      %v1174 = vpack.c.bf16 %v381, %v380
      %v1175 = vpack.c.bf16 %v383, %v382
      %v1176 = vpack.c.bf16 %v385, %v384
      %v1177 = vpack.c.bf16 %v387, %v386
      %v1178 = vpack.c.bf16 %v389, %v388
      %v1179 = vpack.c.bf16 %v391, %v390
      %v1180 = vpack.c.bf16 %v393, %v392
      %v1181 = vpack.c.bf16 %v395, %v394
      %v1182 = vpack.c.bf16 %v397, %v396
      %vm1183 = vcmp.lt.s32.totalorder %v831, 15
      %vm1184 = vcmp.lt.s32.totalorder %v832, 15
      %vm1185 = vcmp.lt.s32.totalorder %v833, 15
      %vm1186 = vcmp.lt.s32.totalorder %v834, 15
      %vm1187 = vcmp.lt.s32.totalorder %v835, 15
      %vm1188 = vcmp.lt.s32.totalorder %v836, 15
      %vm1189 = vcmp.lt.s32.totalorder %v837, 15
      %vm1190 = vcmp.lt.s32.totalorder %v838, 15
      %vm1191 = vcmp.lt.s32.totalorder %v839, 15
      %vm1192 = vcmp.lt.s32.totalorder %v840, 15
      %vm1193 = vcmp.lt.s32.totalorder %v841, 15
      %vm1194 = vcmp.lt.s32.totalorder %v842, 15
      %vm1195 = vcmp.lt.s32.totalorder %v843, 15
      %vm1196 = vcmp.lt.s32.totalorder %v844, 15
      %vm1197 = vcmp.lt.s32.totalorder %v845, 15
      %vm1198 = vcmp.lt.s32.totalorder %v846, 15
      %vm1199 = vcmp.lt.s32.totalorder %v847, 15
      %vm1200 = vcmp.lt.s32.totalorder %v848, 15
      %vm1201 = vcmp.lt.s32.totalorder %v849, 15
      %vm1202 = vcmp.lt.s32.totalorder %v850, 15
      %vm1203 = vcmp.lt.s32.totalorder %v851, 15
      %vm1204 = vcmp.lt.s32.totalorder %v852, 15
      %vm1205 = vcmp.lt.s32.totalorder %v853, 15
      %vm1206 = vcmp.lt.s32.totalorder %v854, 15
      %vm1207 = vcmp.lt.s32.totalorder %v855, 15
      %vm1208 = vcmp.lt.s32.totalorder %v856, 15
      %vm1209 = vcmp.lt.s32.totalorder %v857, 15
      %vm1210 = vcmp.lt.s32.totalorder %v858, 15
      %vm1211 = vcmp.lt.s32.totalorder %v859, 15
      %vm1212 = vcmp.lt.s32.totalorder %v860, 15
      %vm1213 = vcmp.lt.s32.totalorder %v861, 15
      %vm1214 = vcmp.lt.s32.totalorder %v862, 15
      %vm1215 = vcmp.lt.s32.totalorder %v863, 15
      %vm1216 = vcmp.lt.s32.totalorder %v864, 15
      %vm1217 = vcmp.lt.s32.totalorder %v865, 15
      %vm1218 = vcmp.lt.s32.totalorder %v866, 15
      %vm1219 = vcmask 1046528
      %v1220 = vrot.slane 0.0, 1
      %v1221 = vsel %vm1219, %v1220, %v1220
      %v1222 = vrot.slane %v366, 1
      %v1223 = vsel %vm1219, %v1220, %v1222
      %v1224 = vrot.slane %v367, 1
      %v1225 = vsel %vm1219, %v1222, %v1224
      %v1226 = vrot.slane %v368, 1
      %v1227 = vsel %vm1219, %v1224, %v1226
      %v1228 = vrot.slane %v369, 1
      %v1229 = vsel %vm1219, %v1226, %v1228
      %v1230 = vrot.slane %v370, 1
      %v1231 = vsel %vm1219, %v1228, %v1230
      %v1232 = vrot.slane %v371, 1
      %v1233 = vsel %vm1219, %v1230, %v1232
      %v1234 = vrot.slane %v372, 1
      %v1235 = vsel %vm1219, %v1232, %v1234
      %v1236 = vrot.slane %v373, 1
      %v1237 = vsel %vm1219, %v1234, %v1236
      %v1238 = vrot.slane %v374, 1
      %v1239 = vsel %vm1219, %v1236, %v1238
      %v1240 = vrot.slane %v375, 1
      %v1241 = vsel %vm1219, %v1238, %v1240
      %v1242 = vrot.slane %v376, 1
      %v1243 = vsel %vm1219, %v1240, %v1242
      %v1244 = vrot.slane %v377, 1
      %v1245 = vsel %vm1219, %v1242, %v1244
      %v1246 = vrot.slane %v378, 1
      %v1247 = vsel %vm1219, %v1244, %v1246
      %v1248 = vrot.slane %v379, 1
      %v1249 = vsel %vm1219, %v1246, %v1248
      %v1250 = vrot.slane %v380, 1
      %v1251 = vsel %vm1219, %v1248, %v1250
      %v1252 = vrot.slane %v381, 1
      %v1253 = vsel %vm1219, %v1250, %v1252
      %v1254 = vrot.slane %v382, 1
      %v1255 = vsel %vm1219, %v1252, %v1254
      %v1256 = vrot.slane %v383, 1
      %v1257 = vsel %vm1219, %v1254, %v1256
      %v1258 = vrot.slane %v384, 1
      %v1259 = vsel %vm1219, %v1256, %v1258
      %v1260 = vrot.slane %v385, 1
      %v1261 = vsel %vm1219, %v1258, %v1260
      %v1262 = vrot.slane %v386, 1
      %v1263 = vsel %vm1219, %v1260, %v1262
      %v1264 = vrot.slane %v387, 1
      %v1265 = vsel %vm1219, %v1262, %v1264
      %v1266 = vrot.slane %v388, 1
      %v1267 = vsel %vm1219, %v1264, %v1266
      %v1268 = vrot.slane %v389, 1
      %v1269 = vsel %vm1219, %v1266, %v1268
      %v1270 = vrot.slane %v390, 1
      %v1271 = vsel %vm1219, %v1268, %v1270
      %v1272 = vrot.slane %v391, 1
      %v1273 = vsel %vm1219, %v1270, %v1272
      %v1274 = vrot.slane %v392, 1
      %v1275 = vsel %vm1219, %v1272, %v1274
      %v1276 = vrot.slane %v393, 1
      %v1277 = vsel %vm1219, %v1274, %v1276
      %v1278 = vrot.slane %v394, 1
      %v1279 = vsel %vm1219, %v1276, %v1278
      %v1280 = vrot.slane %v395, 1
      %v1281 = vsel %vm1219, %v1278, %v1280
      %v1282 = vrot.slane %v396, 1
      %v1283 = vsel %vm1219, %v1280, %v1282
      %v1284 = vrot.slane %v397, 1
      %v1285 = vsel %vm1219, %v1282, %v1284
      %v1286 = vsel %vm1219, %v1284, %v1220
      %v1322 = vsel %vm1219, %v1220, 0.0
      %v1323 = vsel %vm1183, 1, 0
      %v1324 = vsel %vm1184, 1, 0
      %v1325 = vsel %vm1185, 1, 0
      %v1326 = vsel %vm1186, 1, 0
      %v1327 = vsel %vm1187, 1, 0
      %v1328 = vsel %vm1188, 1, 0
      %v1329 = vsel %vm1189, 1, 0
      %v1330 = vsel %vm1190, 1, 0
      %v1331 = vsel %vm1191, 1, 0
      %v1332 = vsel %vm1192, 1, 0
      %v1333 = vsel %vm1193, 1, 0
      %v1334 = vsel %vm1194, 1, 0
      %v1335 = vsel %vm1195, 1, 0
      %v1336 = vsel %vm1196, 1, 0
      %v1337 = vsel %vm1197, 1, 0
      %v1338 = vsel %vm1198, 1, 0
      %v1339 = vsel %vm1199, 1, 0
      %v1340 = vsel %vm1200, 1, 0
      %v1341 = vsel %vm1201, 1, 0
      %v1342 = vsel %vm1202, 1, 0
      %v1343 = vsel %vm1203, 1, 0
      %v1344 = vsel %vm1204, 1, 0
      %v1345 = vsel %vm1205, 1, 0
      %v1346 = vsel %vm1206, 1, 0
      %v1347 = vsel %vm1207, 1, 0
      %v1348 = vsel %vm1208, 1, 0
      %v1349 = vsel %vm1209, 1, 0
      %v1350 = vsel %vm1210, 1, 0
      %v1351 = vsel %vm1211, 1, 0
      %v1352 = vsel %vm1212, 1, 0
      %v1353 = vsel %vm1213, 1, 0
      %v1354 = vsel %vm1214, 1, 0
      %v1355 = vsel %vm1215, 1, 0
      %v1356 = vsel %vm1216, 1, 0
      %v1357 = vsel %vm1217, 1, 0
      %v1358 = vsel %vm1218, 1, 0
      %vm1359 = vcmp.eq.s32.totalorder %v1323, 1
      %vm1360 = vcmp.eq.s32.totalorder %v1324, 1
      %vm1361 = vcmp.eq.s32.totalorder %v1325, 1
      %vm1362 = vcmp.eq.s32.totalorder %v1326, 1
      %vm1363 = vcmp.eq.s32.totalorder %v1327, 1
      %vm1364 = vcmp.eq.s32.totalorder %v1328, 1
      %vm1365 = vcmp.eq.s32.totalorder %v1329, 1
      %vm1366 = vcmp.eq.s32.totalorder %v1330, 1
      %vm1367 = vcmp.eq.s32.totalorder %v1331, 1
      %vm1368 = vcmp.eq.s32.totalorder %v1332, 1
      %vm1369 = vcmp.eq.s32.totalorder %v1333, 1
      %vm1370 = vcmp.eq.s32.totalorder %v1334, 1
      %vm1371 = vcmp.eq.s32.totalorder %v1335, 1
      %vm1372 = vcmp.eq.s32.totalorder %v1336, 1
      %vm1373 = vcmp.eq.s32.totalorder %v1337, 1
      %vm1374 = vcmp.eq.s32.totalorder %v1338, 1
      %vm1375 = vcmp.eq.s32.totalorder %v1339, 1
      %vm1376 = vcmp.eq.s32.totalorder %v1340, 1
      %vm1377 = vcmp.eq.s32.totalorder %v1341, 1
      %vm1378 = vcmp.eq.s32.totalorder %v1342, 1
      %vm1379 = vcmp.eq.s32.totalorder %v1343, 1
      %vm1380 = vcmp.eq.s32.totalorder %v1344, 1
      %vm1381 = vcmp.eq.s32.totalorder %v1345, 1
      %vm1382 = vcmp.eq.s32.totalorder %v1346, 1
      %vm1383 = vcmp.eq.s32.totalorder %v1347, 1
      %vm1384 = vcmp.eq.s32.totalorder %v1348, 1
      %vm1385 = vcmp.eq.s32.totalorder %v1349, 1
      %vm1386 = vcmp.eq.s32.totalorder %v1350, 1
      %vm1387 = vcmp.eq.s32.totalorder %v1351, 1
      %vm1388 = vcmp.eq.s32.totalorder %v1352, 1
      %vm1389 = vcmp.eq.s32.totalorder %v1353, 1
      %vm1390 = vcmp.eq.s32.totalorder %v1354, 1
      %vm1391 = vcmp.eq.s32.totalorder %v1355, 1
      %vm1392 = vcmp.eq.s32.totalorder %v1356, 1
      %vm1393 = vcmp.eq.s32.totalorder %v1357, 1
      %vm1394 = vcmp.eq.s32.totalorder %v1358, 1
      %v1395 = vsel %vm1359, %v1221, 0.0
      %v1396 = vsel %vm1360, %v1223, 0.0
      %v1397 = vsel %vm1361, %v1225, 0.0
      %v1398 = vsel %vm1362, %v1227, 0.0
      %v1399 = vsel %vm1363, %v1229, 0.0
      %v1400 = vsel %vm1364, %v1231, 0.0
      %v1401 = vsel %vm1365, %v1233, 0.0
      %v1402 = vsel %vm1366, %v1235, 0.0
      %v1403 = vsel %vm1367, %v1237, 0.0
      %v1404 = vsel %vm1368, %v1239, 0.0
      %v1405 = vsel %vm1369, %v1241, 0.0
      %v1406 = vsel %vm1370, %v1243, 0.0
      %v1407 = vsel %vm1371, %v1245, 0.0
      %v1408 = vsel %vm1372, %v1247, 0.0
      %v1409 = vsel %vm1373, %v1249, 0.0
      %v1410 = vsel %vm1374, %v1251, 0.0
      %v1411 = vsel %vm1375, %v1253, 0.0
      %v1412 = vsel %vm1376, %v1255, 0.0
      %v1413 = vsel %vm1377, %v1257, 0.0
      %v1414 = vsel %vm1378, %v1259, 0.0
      %v1415 = vsel %vm1379, %v1261, 0.0
      %v1416 = vsel %vm1380, %v1263, 0.0
      %v1417 = vsel %vm1381, %v1265, 0.0
      %v1418 = vsel %vm1382, %v1267, 0.0
      %v1419 = vsel %vm1383, %v1269, 0.0
      %v1420 = vsel %vm1384, %v1271, 0.0
      %v1421 = vsel %vm1385, %v1273, 0.0
      %v1422 = vsel %vm1386, %v1275, 0.0
      %v1423 = vsel %vm1387, %v1277, 0.0
      %v1424 = vsel %vm1388, %v1279, 0.0
      %v1425 = vsel %vm1389, %v1281, 0.0
      %v1426 = vsel %vm1390, %v1283, 0.0
      %v1427 = vsel %vm1391, %v1285, 0.0
      %v1428 = vsel %vm1392, %v1286, 0.0
      %v1429 = vsel %vm1393, %v1221, 0.0
      %v1430 = vsel %vm1394, %v1322, 0.0
      %v1431 = vpack.c.bf16 %v1396, %v1395
      %v1432 = vpack.c.bf16 %v1398, %v1397
      %v1433 = vpack.c.bf16 %v1400, %v1399
      %v1434 = vpack.c.bf16 %v1402, %v1401
      %v1435 = vpack.c.bf16 %v1404, %v1403
      %v1436 = vpack.c.bf16 %v1406, %v1405
      %v1437 = vpack.c.bf16 %v1408, %v1407
      %v1438 = vpack.c.bf16 %v1410, %v1409
      %v1439 = vpack.c.bf16 %v1412, %v1411
      %v1440 = vpack.c.bf16 %v1414, %v1413
      %v1441 = vpack.c.bf16 %v1416, %v1415
      %v1442 = vpack.c.bf16 %v1418, %v1417
      %v1443 = vpack.c.bf16 %v1420, %v1419
      %v1444 = vpack.c.bf16 %v1422, %v1421
      %v1445 = vpack.c.bf16 %v1424, %v1423
      %v1446 = vpack.c.bf16 %v1426, %v1425
      %v1447 = vpack.c.bf16 %v1428, %v1427
      %v1448 = vpack.c.bf16 %v1430, %v1429
      %v1449 = vld [vmem:[%s3] sm:$0xf]
      %v1450 = vld [vmem:[%s3 + $0x4] sm:$0xf]
      %v1451 = vld [vmem:[%s3 + $0x8] sm:$0xf]
      %v1452 = vld [vmem:[%s3 + $0xc] sm:$0xf]
      %v1453 = vld [vmem:[%s3 + $0x10] sm:$0xf]
      %v1454 = vld [vmem:[%s3 + $0x14] sm:$0xf]
      %v1455 = vld [vmem:[%s3 + $0x18] sm:$0xf]
      %v1456 = vld [vmem:[%s3 + $0x1c] sm:$0xf]
      %v1457 = vld [vmem:[%s3 + $0x20] sm:$0xf]
      %vm1458 = vcmask 64512
      %v1460 = vsel %vm1458, %v1149, 0
      %v1463 = vsel %vm1458, %v1150, 0
      %v1466 = vsel %vm1458, %v1151, 0
      %v1469 = vsel %vm1458, %v1152, 0
      %v1472 = vsel %vm1458, %v1153, 0
      %v1475 = vsel %vm1458, %v1154, 0
      %v1478 = vsel %vm1458, %v1155, 0
      %v1481 = vsel %vm1458, %v1156, 0
      %v1484 = vsel %vm1458, %v1157, 0
      %v1487 = vsel %vm1458, %v1158, 0
      %v1490 = vsel %vm1458, %v1159, 0
      %v1493 = vsel %vm1458, %v1160, 0
      %v1496 = vsel %vm1458, %v1161, 0
      %v1499 = vsel %vm1458, %v1162, 0
      %v1502 = vsel %vm1458, %v1163, 0
      %v1505 = vsel %vm1458, %v1164, 0
      %vm1507 = vcmask 1043456
      %v1509 = vsel %vm1507, %v1452, 0
      %1511 = vmatprep.subr.bf16.mxu0 0
      %1512 = vmatpush1.bf16.msra.mxu0 %v1509
      %1513 = vmatprep.subr.bf16.mxu0 0
      %1514 = vmatpush1.bf16.msra.mxu0 0
      %1515 = vmatprep.subr.bf16.mxu0 0
      %1516 = vmatpush1.bf16.msra.mxu0 0
      %1517 = vmatprep.subr.bf16.mxu0 0
      %1518 = vmatpush1.bf16.msra.mxu0 0
      %1519 = vmatprep.subr.bf16.mxu0 0
      %1520 = vmatpush1.bf16.msra.mxu0 0
      %1521 = vmatprep.subr.bf16.mxu0 0
      %1522 = vmatpush1.bf16.msra.mxu0 0
      %1523 = vmatprep.subr.bf16.mxu0 0
      %1524 = vmatpush1.bf16.msra.mxu0 0
      %1525 = vmatprep.subr.bf16.mxu0 0
      %1526 = vmatpush1.bf16.msra.mxu0 0
      %1527 = vmatprep.subr.bf16.mxu0 0
      %1528 = vmatpush1.bf16.msra.mxu0 0
      %1529 = vmatprep.subr.bf16.mxu0 0
      %1530 = vmatpush1.bf16.msra.mxu0 0
      %1531 = vmatprep.subr.bf16.mxu0 0
      %1532 = vmatpush1.bf16.msra.mxu0 0
      %1533 = vmatprep.subr.bf16.mxu0 0
      %1534 = vmatpush1.bf16.msra.mxu0 0
      %1535 = vmatprep.subr.bf16.mxu0 0
      %1536 = vmatpush1.bf16.msra.mxu0 0
      %1537 = vmatprep.subr.bf16.mxu0 0
      %1538 = vmatpush1.bf16.msra.mxu0 0
      %1539 = vmatprep.subr.bf16.mxu0 0
      %1540 = vmatpush1.bf16.msra.mxu0 0
      %1541 = vmatprep.subr.bf16.mxu0 0
      %1542 = vmatpush1.bf16.msra.mxu0 0
      %1543 = vmatprep.mubr.bf16.mxu0 0
      %1544 = vmatmul.mubr.bf16.gmra.mrb[0].mxu0 %v1460
      %v1545 = vpop.f32.mrb[0].mxu0
      %v1546 = vadd.f32 0.0, %v1545
      %v1547 = vpop.f32.mrb[0].mxu0
      %v1548 = vpop.f32.mrb[0].mxu0
      %v1549 = vadd.f32 0.0, %v1548
      %v1550 = vpop.f32.mrb[0].mxu0
      %1551 = vmatprep.mubr.bf16.mxu0 0
      %1552 = vmatmul.mubr.bf16.gmra.mrb[0].mxu0 %v1463
      %v1553 = vpop.f32.mrb[0].mxu0
      %v1554 = vadd.f32 0.0, %v1553
      %v1555 = vpop.f32.mrb[0].mxu0
      %v1556 = vpop.f32.mrb[0].mxu0
      %v1557 = vadd.f32 0.0, %v1556
      %v1558 = vpop.f32.mrb[0].mxu0
      %1559 = vmatprep.mubr.bf16.mxu0 0
      %1560 = vmatmul.mubr.bf16.gmra.mrb[0].mxu0 %v1466
      %v1561 = vpop.f32.mrb[0].mxu0
      %v1562 = vadd.f32 0.0, %v1561
      %v1563 = vpop.f32.mrb[0].mxu0
      %v1564 = vpop.f32.mrb[0].mxu0
      %v1565 = vadd.f32 0.0, %v1564
      %v1566 = vpop.f32.mrb[0].mxu0
      %1567 = vmatprep.mubr.bf16.mxu0 0
      %1568 = vmatmul.mubr.bf16.gmra.mrb[0].mxu0 %v1469
      %v1569 = vpop.f32.mrb[0].mxu0
      %v1570 = vadd.f32 0.0, %v1569
      %v1571 = vpop.f32.mrb[0].mxu0
      %v1572 = vpop.f32.mrb[0].mxu0
      %v1573 = vadd.f32 0.0, %v1572
      %v1574 = vpop.f32.mrb[0].mxu0
      %1575 = vmatprep.mubr.bf16.mxu0 0
      %1576 = vmatmul.mubr.bf16.gmra.mrb[0].mxu0 %v1472
      %v1577 = vpop.f32.mrb[0].mxu0
      %v1578 = vadd.f32 0.0, %v1577
      %v1579 = vpop.f32.mrb[0].mxu0
      %v1580 = vpop.f32.mrb[0].mxu0
      %v1581 = vadd.f32 0.0, %v1580
      %v1582 = vpop.f32.mrb[0].mxu0
      %1583 = vmatprep.mubr.bf16.mxu0 0
      %1584 = vmatmul.mubr.bf16.gmra.mrb[0].mxu0 %v1475
      %v1585 = vpop.f32.mrb[0].mxu0
      %v1586 = vadd.f32 0.0, %v1585
      %v1587 = vpop.f32.mrb[0].mxu0
      %v1588 = vpop.f32.mrb[0].mxu0
      %v1589 = vadd.f32 0.0, %v1588
      %v1590 = vpop.f32.mrb[0].mxu0
      %1591 = vmatprep.mubr.bf16.mxu0 0
      %1592 = vmatmul.mubr.bf16.gmra.mrb[0].mxu0 %v1478
      %v1593 = vpop.f32.mrb[0].mxu0
      %v1594 = vadd.f32 0.0, %v1593
      %v1595 = vpop.f32.mrb[0].mxu0
      %v1596 = vpop.f32.mrb[0].mxu0
      %v1597 = vadd.f32 0.0, %v1596
      %v1598 = vpop.f32.mrb[0].mxu0
      %1599 = vmatprep.mubr.bf16.mxu0 0
      %1600 = vmatmul.mubr.bf16.gmra.mrb[0].mxu0 %v1481
      %v1601 = vpop.f32.mrb[0].mxu0
      %v1602 = vadd.f32 0.0, %v1601
      %v1603 = vpop.f32.mrb[0].mxu0
      %v1604 = vpop.f32.mrb[0].mxu0
      %v1605 = vadd.f32 0.0, %v1604
      %v1606 = vpop.f32.mrb[0].mxu0
      %1607 = vmatprep.mubr.bf16.mxu0 0
      %1608 = vmatmul.mubr.bf16.gmra.mrb[0].mxu0 %v1484
      %v1609 = vpop.f32.mrb[0].mxu0
      %v1610 = vadd.f32 0.0, %v1609
      %v1611 = vpop.f32.mrb[0].mxu0
      %v1612 = vpop.f32.mrb[0].mxu0
      %v1613 = vadd.f32 0.0, %v1612
      %v1614 = vpop.f32.mrb[0].mxu0
      %1615 = vmatprep.mubr.bf16.mxu0 0
      %1616 = vmatmul.mubr.bf16.gmra.mrb[0].mxu0 %v1487
      %v1617 = vpop.f32.mrb[0].mxu0
      %v1618 = vadd.f32 0.0, %v1617
      %v1619 = vpop.f32.mrb[0].mxu0
      %v1620 = vpop.f32.mrb[0].mxu0
      %v1621 = vadd.f32 0.0, %v1620
      %v1622 = vpop.f32.mrb[0].mxu0
      %1623 = vmatprep.mubr.bf16.mxu0 0
      %1624 = vmatmul.mubr.bf16.gmra.mrb[0].mxu0 %v1490
      %v1625 = vpop.f32.mrb[0].mxu0
      %v1626 = vadd.f32 0.0, %v1625
      %v1627 = vpop.f32.mrb[0].mxu0
      %v1628 = vpop.f32.mrb[0].mxu0
      %v1629 = vadd.f32 0.0, %v1628
      %v1630 = vpop.f32.mrb[0].mxu0
      %1631 = vmatprep.mubr.bf16.mxu0 0
      %1632 = vmatmul.mubr.bf16.gmra.mrb[0].mxu0 %v1493
      %v1633 = vpop.f32.mrb[0].mxu0
      %v1634 = vadd.f32 0.0, %v1633
      %v1635 = vpop.f32.mrb[0].mxu0
      %v1636 = vpop.f32.mrb[0].mxu0
      %v1637 = vadd.f32 0.0, %v1636
      %v1638 = vpop.f32.mrb[0].mxu0
      %1639 = vmatprep.mubr.bf16.mxu0 0
      %1640 = vmatmul.mubr.bf16.gmra.mrb[0].mxu0 %v1496
      %v1641 = vpop.f32.mrb[0].mxu0
      %v1642 = vadd.f32 0.0, %v1641
      %v1643 = vpop.f32.mrb[0].mxu0
      %v1644 = vpop.f32.mrb[0].mxu0
      %v1645 = vadd.f32 0.0, %v1644
      %v1646 = vpop.f32.mrb[0].mxu0
      %1647 = vmatprep.mubr.bf16.mxu0 0
      %1648 = vmatmul.mubr.bf16.gmra.mrb[0].mxu0 %v1499
      %v1649 = vpop.f32.mrb[0].mxu0
      %v1650 = vadd.f32 0.0, %v1649
      %v1651 = vpop.f32.mrb[0].mxu0
      %v1652 = vpop.f32.mrb[0].mxu0
      %v1653 = vadd.f32 0.0, %v1652
      %v1654 = vpop.f32.mrb[0].mxu0
      %1655 = vmatprep.mubr.bf16.mxu0 0
      %1656 = vmatmul.mubr.bf16.gmra.mrb[0].mxu0 %v1502
      %v1657 = vpop.f32.mrb[0].mxu0
      %v1658 = vadd.f32 0.0, %v1657
      %v1659 = vpop.f32.mrb[0].mxu0
      %v1660 = vpop.f32.mrb[0].mxu0
      %v1661 = vadd.f32 0.0, %v1660
      %v1662 = vpop.f32.mrb[0].mxu0
      %1663 = vmatprep.mubr.bf16.mxu0 0
      %1664 = vmatmul.mubr.bf16.gmra.mrb[0].mxu0 %v1505
      %v1665 = vpop.f32.mrb[0].mxu0
      %v1666 = vadd.f32 0.0, %v1665
      %v1667 = vpop.f32.mrb[0].mxu0
      %v1668 = vpop.f32.mrb[0].mxu0
      %v1669 = vadd.f32 0.0, %v1668
      %v1670 = vpop.f32.mrb[0].mxu0
      %1671 = vdwg.mxu0
      %v1673 = vsel %vm1458, %v1148, 0
      %v1676 = vsel %vm1507, %v1449, 0
      %1678 = vmatprep.subr.bf16.mxu0 0
      %1679 = vmatpush1.bf16.msra.mxu0 %v1676
      %1680 = vmatprep.subr.bf16.mxu0 0
      %1681 = vmatpush1.bf16.msra.mxu0 0
      %1682 = vmatprep.subr.bf16.mxu0 0
      %1683 = vmatpush1.bf16.msra.mxu0 0
      %1684 = vmatprep.subr.bf16.mxu0 0
      %1685 = vmatpush1.bf16.msra.mxu0 0
      %1686 = vmatprep.subr.bf16.mxu0 0
      %1687 = vmatpush1.bf16.msra.mxu0 0
      %1688 = vmatprep.subr.bf16.mxu0 0
      %1689 = vmatpush1.bf16.msra.mxu0 0
      %1690 = vmatprep.subr.bf16.mxu0 0
      %1691 = vmatpush1.bf16.msra.mxu0 0
      %1692 = vmatprep.subr.bf16.mxu0 0
      %1693 = vmatpush1.bf16.msra.mxu0 0
      %1694 = vmatprep.subr.bf16.mxu0 0
      %1695 = vmatpush1.bf16.msra.mxu0 0
      %1696 = vmatprep.subr.bf16.mxu0 0
      %1697 = vmatpush1.bf16.msra.mxu0 0
      %1698 = vmatprep.subr.bf16.mxu0 0
      %1699 = vmatpush1.bf16.msra.mxu0 0
      %1700 = vmatprep.subr.bf16.mxu0 0
      %1701 = vmatpush1.bf16.msra.mxu0 0
      %1702 = vmatprep.subr.bf16.mxu0 0
      %1703 = vmatpush1.bf16.msra.mxu0 0
      %1704 = vmatprep.subr.bf16.mxu0 0
      %1705 = vmatpush1.bf16.msra.mxu0 0
      %1706 = vmatprep.subr.bf16.mxu0 0
      %1707 = vmatpush1.bf16.msra.mxu0 0
      %1708 = vmatprep.subr.bf16.mxu0 0
      %1709 = vmatpush1.bf16.msra.mxu0 0
      %1710 = vmatprep.mubr.bf16.mxu0 0
      %1711 = vmatmul.mubr.bf16.gmra.mrb[0].mxu0 %v1673
      %v1712 = vpop.f32.mrb[0].mxu0
      %v1713 = vadd.f32 %v1546, %v1712
      %v1714 = vpop.f32.mrb[0].mxu0
      %v1715 = vpop.f32.mrb[0].mxu0
      %v1716 = vadd.f32 %v1549, %v1715
      %v1717 = vpop.f32.mrb[0].mxu0
      %1718 = vmatprep.mubr.bf16.mxu0 0
      %1719 = vmatmul.mubr.bf16.gmra.mrb[0].mxu0 %v1460
      %v1720 = vpop.f32.mrb[0].mxu0
      %v1721 = vadd.f32 %v1554, %v1720
      %v1722 = vpop.f32.mrb[0].mxu0
      %v1723 = vpop.f32.mrb[0].mxu0
      %v1724 = vadd.f32 %v1557, %v1723
      %v1725 = vpop.f32.mrb[0].mxu0
      %1726 = vmatprep.mubr.bf16.mxu0 0
      %1727 = vmatmul.mubr.bf16.gmra.mrb[0].mxu0 %v1463
      %v1728 = vpop.f32.mrb[0].mxu0
      %v1729 = vadd.f32 %v1562, %v1728
      %v1730 = vpop.f32.mrb[0].mxu0
      %v1731 = vpop.f32.mrb[0].mxu0
      %v1732 = vadd.f32 %v1565, %v1731
      %v1733 = vpop.f32.mrb[0].mxu0
      %1734 = vmatprep.mubr.bf16.mxu0 0
      %1735 = vmatmul.mubr.bf16.gmra.mrb[0].mxu0 %v1466
      %v1736 = vpop.f32.mrb[0].mxu0
      %v1737 = vadd.f32 %v1570, %v1736
      %v1738 = vpop.f32.mrb[0].mxu0
      %v1739 = vpop.f32.mrb[0].mxu0
      %v1740 = vadd.f32 %v1573, %v1739
      %v1741 = vpop.f32.mrb[0].mxu0
      %1742 = vmatprep.mubr.bf16.mxu0 0
      %1743 = vmatmul.mubr.bf16.gmra.mrb[0].mxu0 %v1469
      %v1744 = vpop.f32.mrb[0].mxu0
      %v1745 = vadd.f32 %v1578, %v1744
      %v1746 = vpop.f32.mrb[0].mxu0
      %v1747 = vpop.f32.mrb[0].mxu0
      %v1748 = vadd.f32 %v1581, %v1747
      %v1749 = vpop.f32.mrb[0].mxu0
      %1750 = vmatprep.mubr.bf16.mxu0 0
      %1751 = vmatmul.mubr.bf16.gmra.mrb[0].mxu0 %v1472
      %v1752 = vpop.f32.mrb[0].mxu0
      %v1753 = vadd.f32 %v1586, %v1752
      %v1754 = vpop.f32.mrb[0].mxu0
      %v1755 = vpop.f32.mrb[0].mxu0
      %v1756 = vadd.f32 %v1589, %v1755
      %v1757 = vpop.f32.mrb[0].mxu0
      %1758 = vmatprep.mubr.bf16.mxu0 0
      %1759 = vmatmul.mubr.bf16.gmra.mrb[0].mxu0 %v1475
      %v1760 = vpop.f32.mrb[0].mxu0
      %v1761 = vadd.f32 %v1594, %v1760
      %v1762 = vpop.f32.mrb[0].mxu0
      %v1763 = vpop.f32.mrb[0].mxu0
      %v1764 = vadd.f32 %v1597, %v1763
      %v1765 = vpop.f32.mrb[0].mxu0
      %1766 = vmatprep.mubr.bf16.mxu0 0
      %1767 = vmatmul.mubr.bf16.gmra.mrb[0].mxu0 %v1478
      %v1768 = vpop.f32.mrb[0].mxu0
      %v1769 = vadd.f32 %v1602, %v1768
      %v1770 = vpop.f32.mrb[0].mxu0
      %v1771 = vpop.f32.mrb[0].mxu0
      %v1772 = vadd.f32 %v1605, %v1771
      %v1773 = vpop.f32.mrb[0].mxu0
      %1774 = vmatprep.mubr.bf16.mxu0 0
      %1775 = vmatmul.mubr.bf16.gmra.mrb[0].mxu0 %v1481
      %v1776 = vpop.f32.mrb[0].mxu0
      %v1777 = vadd.f32 %v1610, %v1776
      %v1778 = vpop.f32.mrb[0].mxu0
      %v1779 = vpop.f32.mrb[0].mxu0
      %v1780 = vadd.f32 %v1613, %v1779
      %v1781 = vpop.f32.mrb[0].mxu0
      %1782 = vmatprep.mubr.bf16.mxu0 0
      %1783 = vmatmul.mubr.bf16.gmra.mrb[0].mxu0 %v1484
      %v1784 = vpop.f32.mrb[0].mxu0
      %v1785 = vadd.f32 %v1618, %v1784
      %v1786 = vpop.f32.mrb[0].mxu0
      %v1787 = vpop.f32.mrb[0].mxu0
      %v1788 = vadd.f32 %v1621, %v1787
      %v1789 = vpop.f32.mrb[0].mxu0
      %1790 = vmatprep.mubr.bf16.mxu0 0
      %1791 = vmatmul.mubr.bf16.gmra.mrb[0].mxu0 %v1487
      %v1792 = vpop.f32.mrb[0].mxu0
      %v1793 = vadd.f32 %v1626, %v1792
      %v1794 = vpop.f32.mrb[0].mxu0
      %v1795 = vpop.f32.mrb[0].mxu0
      %v1796 = vadd.f32 %v1629, %v1795
      %v1797 = vpop.f32.mrb[0].mxu0
      %1798 = vmatprep.mubr.bf16.mxu0 0
      %1799 = vmatmul.mubr.bf16.gmra.mrb[0].mxu0 %v1490
      %v1800 = vpop.f32.mrb[0].mxu0
      %v1801 = vadd.f32 %v1634, %v1800
      %v1802 = vpop.f32.mrb[0].mxu0
      %v1803 = vpop.f32.mrb[0].mxu0
      %v1804 = vadd.f32 %v1637, %v1803
      %v1805 = vpop.f32.mrb[0].mxu0
      %1806 = vmatprep.mubr.bf16.mxu0 0
      %1807 = vmatmul.mubr.bf16.gmra.mrb[0].mxu0 %v1493
      %v1808 = vpop.f32.mrb[0].mxu0
      %v1809 = vadd.f32 %v1642, %v1808
      %v1810 = vpop.f32.mrb[0].mxu0
      %v1811 = vpop.f32.mrb[0].mxu0
      %v1812 = vadd.f32 %v1645, %v1811
      %v1813 = vpop.f32.mrb[0].mxu0
      %1814 = vmatprep.mubr.bf16.mxu0 0
      %1815 = vmatmul.mubr.bf16.gmra.mrb[0].mxu0 %v1496
      %v1816 = vpop.f32.mrb[0].mxu0
      %v1817 = vadd.f32 %v1650, %v1816
      %v1818 = vpop.f32.mrb[0].mxu0
      %v1819 = vpop.f32.mrb[0].mxu0
      %v1820 = vadd.f32 %v1653, %v1819
      %v1821 = vpop.f32.mrb[0].mxu0
      %1822 = vmatprep.mubr.bf16.mxu0 0
      %1823 = vmatmul.mubr.bf16.gmra.mrb[0].mxu0 %v1499
      %v1824 = vpop.f32.mrb[0].mxu0
      %v1825 = vadd.f32 %v1658, %v1824
      %v1826 = vpop.f32.mrb[0].mxu0
      %v1827 = vpop.f32.mrb[0].mxu0
      %v1828 = vadd.f32 %v1661, %v1827
      %v1829 = vpop.f32.mrb[0].mxu0
      %1830 = vmatprep.mubr.bf16.mxu0 0
      %1831 = vmatmul.mubr.bf16.gmra.mrb[0].mxu0 %v1502
      %v1832 = vpop.f32.mrb[0].mxu0
      %v1833 = vadd.f32 %v1666, %v1832
      %v1834 = vpop.f32.mrb[0].mxu0
      %v1835 = vpop.f32.mrb[0].mxu0
      %v1836 = vadd.f32 %v1669, %v1835
      %v1837 = vpop.f32.mrb[0].mxu0
      %1838 = vdwg.mxu0
      %v1840 = vsel %vm1458, %v1165, 0
      %v1843 = vsel %vm1507, %v1455, 0
      %1845 = vmatprep.subr.bf16.mxu0 0
      %1846 = vmatpush1.bf16.msra.mxu0 %v1843
      %1847 = vmatprep.subr.bf16.mxu0 0
      %1848 = vmatpush1.bf16.msra.mxu0 0
      %1849 = vmatprep.subr.bf16.mxu0 0
      %1850 = vmatpush1.bf16.msra.mxu0 0
      %1851 = vmatprep.subr.bf16.mxu0 0
      %1852 = vmatpush1.bf16.msra.mxu0 0
      %1853 = vmatprep.subr.bf16.mxu0 0
      %1854 = vmatpush1.bf16.msra.mxu0 0
      %1855 = vmatprep.subr.bf16.mxu0 0
      %1856 = vmatpush1.bf16.msra.mxu0 0
      %1857 = vmatprep.subr.bf16.mxu0 0
      %1858 = vmatpush1.bf16.msra.mxu0 0
      %1859 = vmatprep.subr.bf16.mxu0 0
      %1860 = vmatpush1.bf16.msra.mxu0 0
      %1861 = vmatprep.subr.bf16.mxu0 0
      %1862 = vmatpush1.bf16.msra.mxu0 0
      %1863 = vmatprep.subr.bf16.mxu0 0
      %1864 = vmatpush1.bf16.msra.mxu0 0
      %1865 = vmatprep.subr.bf16.mxu0 0
      %1866 = vmatpush1.bf16.msra.mxu0 0
      %1867 = vmatprep.subr.bf16.mxu0 0
      %1868 = vmatpush1.bf16.msra.mxu0 0
      %1869 = vmatprep.subr.bf16.mxu0 0
      %1870 = vmatpush1.bf16.msra.mxu0 0
      %1871 = vmatprep.subr.bf16.mxu0 0
      %1872 = vmatpush1.bf16.msra.mxu0 0
      %1873 = vmatprep.subr.bf16.mxu0 0
      %1874 = vmatpush1.bf16.msra.mxu0 0
      %1875 = vmatprep.subr.bf16.mxu0 0
      %1876 = vmatpush1.bf16.msra.mxu0 0
      %1877 = vmatprep.mubr.bf16.mxu0 0
      %1878 = vmatmul.mubr.bf16.gmra.mrb[0].mxu0 %v1463
      %v1879 = vpop.f32.mrb[0].mxu0
      %v1880 = vadd.f32 0.0, %v1879
      %v1881 = vpop.f32.mrb[0].mxu0
      %v1882 = vpop.f32.mrb[0].mxu0
      %v1883 = vadd.f32 0.0, %v1882
      %v1884 = vpop.f32.mrb[0].mxu0
      %1885 = vmatprep.mubr.bf16.mxu0 0
      %1886 = vmatmul.mubr.bf16.gmra.mrb[0].mxu0 %v1466
      %v1887 = vpop.f32.mrb[0].mxu0
      %v1888 = vadd.f32 0.0, %v1887
      %v1889 = vpop.f32.mrb[0].mxu0
      %v1890 = vpop.f32.mrb[0].mxu0
      %v1891 = vadd.f32 0.0, %v1890
      %v1892 = vpop.f32.mrb[0].mxu0
      %1893 = vmatprep.mubr.bf16.mxu0 0
      %1894 = vmatmul.mubr.bf16.gmra.mrb[0].mxu0 %v1469
      %v1895 = vpop.f32.mrb[0].mxu0
      %v1896 = vadd.f32 0.0, %v1895
      %v1897 = vpop.f32.mrb[0].mxu0
      %v1898 = vpop.f32.mrb[0].mxu0
      %v1899 = vadd.f32 0.0, %v1898
      %v1900 = vpop.f32.mrb[0].mxu0
      %1901 = vmatprep.mubr.bf16.mxu0 0
      %1902 = vmatmul.mubr.bf16.gmra.mrb[0].mxu0 %v1472
      %v1903 = vpop.f32.mrb[0].mxu0
      %v1904 = vadd.f32 0.0, %v1903
      %v1905 = vpop.f32.mrb[0].mxu0
      %v1906 = vpop.f32.mrb[0].mxu0
      %v1907 = vadd.f32 0.0, %v1906
      %v1908 = vpop.f32.mrb[0].mxu0
      %1909 = vmatprep.mubr.bf16.mxu0 0
      %1910 = vmatmul.mubr.bf16.gmra.mrb[0].mxu0 %v1475
      %v1911 = vpop.f32.mrb[0].mxu0
      %v1912 = vadd.f32 0.0, %v1911
      %v1913 = vpop.f32.mrb[0].mxu0
      %v1914 = vpop.f32.mrb[0].mxu0
      %v1915 = vadd.f32 0.0, %v1914
      %v1916 = vpop.f32.mrb[0].mxu0
      %1917 = vmatprep.mubr.bf16.mxu0 0
      %1918 = vmatmul.mubr.bf16.gmra.mrb[0].mxu0 %v1478
      %v1919 = vpop.f32.mrb[0].mxu0
      %v1920 = vadd.f32 0.0, %v1919
      %v1921 = vpop.f32.mrb[0].mxu0
      %v1922 = vpop.f32.mrb[0].mxu0
      %v1923 = vadd.f32 0.0, %v1922
      %v1924 = vpop.f32.mrb[0].mxu0
      %1925 = vmatprep.mubr.bf16.mxu0 0
      %1926 = vmatmul.mubr.bf16.gmra.mrb[0].mxu0 %v1481
      %v1927 = vpop.f32.mrb[0].mxu0
      %v1928 = vadd.f32 0.0, %v1927
      %v1929 = vpop.f32.mrb[0].mxu0
      %v1930 = vpop.f32.mrb[0].mxu0
      %v1931 = vadd.f32 0.0, %v1930
      %v1932 = vpop.f32.mrb[0].mxu0
      %1933 = vmatprep.mubr.bf16.mxu0 0
      %1934 = vmatmul.mubr.bf16.gmra.mrb[0].mxu0 %v1484
      %v1935 = vpop.f32.mrb[0].mxu0
      %v1936 = vadd.f32 0.0, %v1935
      %v1937 = vpop.f32.mrb[0].mxu0
      %v1938 = vpop.f32.mrb[0].mxu0
      %v1939 = vadd.f32 0.0, %v1938
      %v1940 = vpop.f32.mrb[0].mxu0
      %1941 = vmatprep.mubr.bf16.mxu0 0
      %1942 = vmatmul.mubr.bf16.gmra.mrb[0].mxu0 %v1487
      %v1943 = vpop.f32.mrb[0].mxu0
      %v1944 = vadd.f32 0.0, %v1943
      %v1945 = vpop.f32.mrb[0].mxu0
      %v1946 = vpop.f32.mrb[0].mxu0
      %v1947 = vadd.f32 0.0, %v1946
      %v1948 = vpop.f32.mrb[0].mxu0
      %1949 = vmatprep.mubr.bf16.mxu0 0
      %1950 = vmatmul.mubr.bf16.gmra.mrb[0].mxu0 %v1490
      %v1951 = vpop.f32.mrb[0].mxu0
      %v1952 = vadd.f32 0.0, %v1951
      %v1953 = vpop.f32.mrb[0].mxu0
      %v1954 = vpop.f32.mrb[0].mxu0
      %v1955 = vadd.f32 0.0, %v1954
      %v1956 = vpop.f32.mrb[0].mxu0
      %1957 = vmatprep.mubr.bf16.mxu0 0
      %1958 = vmatmul.mubr.bf16.gmra.mrb[0].mxu0 %v1493
      %v1959 = vpop.f32.mrb[0].mxu0
      %v1960 = vadd.f32 0.0, %v1959
      %v1961 = vpop.f32.mrb[0].mxu0
      %v1962 = vpop.f32.mrb[0].mxu0
      %v1963 = vadd.f32 0.0, %v1962
      %v1964 = vpop.f32.mrb[0].mxu0
      %1965 = vmatprep.mubr.bf16.mxu0 0
      %1966 = vmatmul.mubr.bf16.gmra.mrb[0].mxu0 %v1496
      %v1967 = vpop.f32.mrb[0].mxu0
      %v1968 = vadd.f32 0.0, %v1967
      %v1969 = vpop.f32.mrb[0].mxu0
      %v1970 = vpop.f32.mrb[0].mxu0
      %v1971 = vadd.f32 0.0, %v1970
      %v1972 = vpop.f32.mrb[0].mxu0
      %1973 = vmatprep.mubr.bf16.mxu0 0
      %1974 = vmatmul.mubr.bf16.gmra.mrb[0].mxu0 %v1499
      %v1975 = vpop.f32.mrb[0].mxu0
      %v1976 = vadd.f32 0.0, %v1975
      %v1977 = vpop.f32.mrb[0].mxu0
      %v1978 = vpop.f32.mrb[0].mxu0
      %v1979 = vadd.f32 0.0, %v1978
      %v1980 = vpop.f32.mrb[0].mxu0
      %1981 = vmatprep.mubr.bf16.mxu0 0
      %1982 = vmatmul.mubr.bf16.gmra.mrb[0].mxu0 %v1502
      %v1983 = vpop.f32.mrb[0].mxu0
      %v1984 = vadd.f32 0.0, %v1983
      %v1985 = vpop.f32.mrb[0].mxu0
      %v1986 = vpop.f32.mrb[0].mxu0
      %v1987 = vadd.f32 0.0, %v1986
      %v1988 = vpop.f32.mrb[0].mxu0
      %1989 = vmatprep.mubr.bf16.mxu0 0
      %1990 = vmatmul.mubr.bf16.gmra.mrb[0].mxu0 %v1505
      %v1991 = vpop.f32.mrb[0].mxu0
      %v1992 = vadd.f32 0.0, %v1991
      %v1993 = vpop.f32.mrb[0].mxu0
      %v1994 = vpop.f32.mrb[0].mxu0
      %v1995 = vadd.f32 0.0, %v1994
      %v1996 = vpop.f32.mrb[0].mxu0
      %1997 = vmatprep.mubr.bf16.mxu0 0
      %1998 = vmatmul.mubr.bf16.gmra.mrb[0].mxu0 %v1840
      %v1999 = vpop.f32.mrb[0].mxu0
      %v2000 = vadd.f32 0.0, %v1999
      %v2001 = vpop.f32.mrb[0].mxu0
      %v2002 = vpop.f32.mrb[0].mxu0
      %v2003 = vadd.f32 0.0, %v2002
      %v2004 = vpop.f32.mrb[0].mxu0
      %2005 = vdwg.mxu0
      %v2006 = vadd.f32 %v1713, %v1880
      %v2007 = vadd.f32 %v1716, %v1883
      %v2008 = vadd.f32 %v1721, %v1888
      %v2009 = vadd.f32 %v1724, %v1891
      %v2010 = vadd.f32 %v1729, %v1896
      %v2011 = vadd.f32 %v1732, %v1899
      %v2012 = vadd.f32 %v1737, %v1904
      %v2013 = vadd.f32 %v1740, %v1907
      %v2014 = vadd.f32 %v1745, %v1912
      %v2015 = vadd.f32 %v1748, %v1915
      %v2016 = vadd.f32 %v1753, %v1920
      %v2017 = vadd.f32 %v1756, %v1923
      %v2018 = vadd.f32 %v1761, %v1928
      %v2019 = vadd.f32 %v1764, %v1931
      %v2020 = vadd.f32 %v1769, %v1936
      %v2021 = vadd.f32 %v1772, %v1939
      %v2022 = vadd.f32 %v1777, %v1944
      %v2023 = vadd.f32 %v1780, %v1947
      %v2024 = vadd.f32 %v1785, %v1952
      %v2025 = vadd.f32 %v1788, %v1955
      %v2026 = vadd.f32 %v1793, %v1960
      %v2027 = vadd.f32 %v1796, %v1963
      %v2028 = vadd.f32 %v1801, %v1968
      %v2029 = vadd.f32 %v1804, %v1971
      %v2030 = vadd.f32 %v1809, %v1976
      %v2031 = vadd.f32 %v1812, %v1979
      %v2032 = vadd.f32 %v1817, %v1984
      %v2033 = vadd.f32 %v1820, %v1987
      %v2034 = vadd.f32 %v1825, %v1992
      %v2035 = vadd.f32 %v1828, %v1995
      %v2036 = vadd.f32 %v1833, %v2000
      %v2037 = vadd.f32 %v1836, %v2003
      %v2039 = vsel %vm1458, %v1166, 0
      %v2042 = vsel %vm1458, %v1167, 0
      %v2045 = vsel %vm1458, %v1168, 0
      %v2048 = vsel %vm1458, %v1169, 0
      %v2051 = vsel %vm1458, %v1170, 0
      %v2054 = vsel %vm1458, %v1171, 0
      %v2057 = vsel %vm1458, %v1172, 0
      %v2060 = vsel %vm1458, %v1173, 0
      %v2063 = vsel %vm1458, %v1174, 0
      %v2066 = vsel %vm1458, %v1175, 0
      %v2069 = vsel %vm1458, %v1176, 0
      %v2072 = vsel %vm1458, %v1177, 0
      %v2075 = vsel %vm1458, %v1178, 0
      %v2078 = vsel %vm1458, %v1179, 0
      %v2081 = vsel %vm1458, %v1180, 0
      %v2084 = vsel %vm1458, %v1181, 0
      %v2087 = vsel %vm1507, %v1450, 0
      %2089 = vmatprep.subr.bf16.mxu0 0
      %2090 = vmatpush1.bf16.msra.mxu0 %v2087
      %2091 = vmatprep.subr.bf16.mxu0 0
      %2092 = vmatpush1.bf16.msra.mxu0 0
      %2093 = vmatprep.subr.bf16.mxu0 0
      %2094 = vmatpush1.bf16.msra.mxu0 0
      %2095 = vmatprep.subr.bf16.mxu0 0
      %2096 = vmatpush1.bf16.msra.mxu0 0
      %2097 = vmatprep.subr.bf16.mxu0 0
      %2098 = vmatpush1.bf16.msra.mxu0 0
      %2099 = vmatprep.subr.bf16.mxu0 0
      %2100 = vmatpush1.bf16.msra.mxu0 0
      %2101 = vmatprep.subr.bf16.mxu0 0
      %2102 = vmatpush1.bf16.msra.mxu0 0
      %2103 = vmatprep.subr.bf16.mxu0 0
      %2104 = vmatpush1.bf16.msra.mxu0 0
      %2105 = vmatprep.subr.bf16.mxu0 0
      %2106 = vmatpush1.bf16.msra.mxu0 0
      %2107 = vmatprep.subr.bf16.mxu0 0
      %2108 = vmatpush1.bf16.msra.mxu0 0
      %2109 = vmatprep.subr.bf16.mxu0 0
      %2110 = vmatpush1.bf16.msra.mxu0 0
      %2111 = vmatprep.subr.bf16.mxu0 0
      %2112 = vmatpush1.bf16.msra.mxu0 0
      %2113 = vmatprep.subr.bf16.mxu0 0
      %2114 = vmatpush1.bf16.msra.mxu0 0
      %2115 = vmatprep.subr.bf16.mxu0 0
      %2116 = vmatpush1.bf16.msra.mxu0 0
      %2117 = vmatprep.subr.bf16.mxu0 0
      %2118 = vmatpush1.bf16.msra.mxu0 0
      %2119 = vmatprep.subr.bf16.mxu0 0
      %2120 = vmatpush1.bf16.msra.mxu0 0
      %2121 = vmatprep.mubr.bf16.mxu0 0
      %2122 = vmatmul.mubr.bf16.gmra.mrb[0].mxu0 %v2039
      %v2123 = vpop.f32.mrb[0].mxu0
      %v2124 = vadd.f32 0.0, %v2123
      %v2125 = vpop.f32.mrb[0].mxu0
      %v2126 = vpop.f32.mrb[0].mxu0
      %v2127 = vadd.f32 0.0, %v2126
      %v2128 = vpop.f32.mrb[0].mxu0
      %2129 = vmatprep.mubr.bf16.mxu0 0
      %2130 = vmatmul.mubr.bf16.gmra.mrb[0].mxu0 %v2042
      %v2131 = vpop.f32.mrb[0].mxu0
      %v2132 = vadd.f32 0.0, %v2131
      %v2133 = vpop.f32.mrb[0].mxu0
      %v2134 = vpop.f32.mrb[0].mxu0
      %v2135 = vadd.f32 0.0, %v2134
      %v2136 = vpop.f32.mrb[0].mxu0
      %2137 = vmatprep.mubr.bf16.mxu0 0
      %2138 = vmatmul.mubr.bf16.gmra.mrb[0].mxu0 %v2045
      %v2139 = vpop.f32.mrb[0].mxu0
      %v2140 = vadd.f32 0.0, %v2139
      %v2141 = vpop.f32.mrb[0].mxu0
      %v2142 = vpop.f32.mrb[0].mxu0
      %v2143 = vadd.f32 0.0, %v2142
      %v2144 = vpop.f32.mrb[0].mxu0
      %2145 = vmatprep.mubr.bf16.mxu0 0
      %2146 = vmatmul.mubr.bf16.gmra.mrb[0].mxu0 %v2048
      %v2147 = vpop.f32.mrb[0].mxu0
      %v2148 = vadd.f32 0.0, %v2147
      %v2149 = vpop.f32.mrb[0].mxu0
      %v2150 = vpop.f32.mrb[0].mxu0
      %v2151 = vadd.f32 0.0, %v2150
      %v2152 = vpop.f32.mrb[0].mxu0
      %2153 = vmatprep.mubr.bf16.mxu0 0
      %2154 = vmatmul.mubr.bf16.gmra.mrb[0].mxu0 %v2051
      %v2155 = vpop.f32.mrb[0].mxu0
      %v2156 = vadd.f32 0.0, %v2155
      %v2157 = vpop.f32.mrb[0].mxu0
      %v2158 = vpop.f32.mrb[0].mxu0
      %v2159 = vadd.f32 0.0, %v2158
      %v2160 = vpop.f32.mrb[0].mxu0
      %2161 = vmatprep.mubr.bf16.mxu0 0
      %2162 = vmatmul.mubr.bf16.gmra.mrb[0].mxu0 %v2054
      %v2163 = vpop.f32.mrb[0].mxu0
      %v2164 = vadd.f32 0.0, %v2163
      %v2165 = vpop.f32.mrb[0].mxu0
      %v2166 = vpop.f32.mrb[0].mxu0
      %v2167 = vadd.f32 0.0, %v2166
      %v2168 = vpop.f32.mrb[0].mxu0
      %2169 = vmatprep.mubr.bf16.mxu0 0
      %2170 = vmatmul.mubr.bf16.gmra.mrb[0].mxu0 %v2057
      %v2171 = vpop.f32.mrb[0].mxu0
      %v2172 = vadd.f32 0.0, %v2171
      %v2173 = vpop.f32.mrb[0].mxu0
      %v2174 = vpop.f32.mrb[0].mxu0
      %v2175 = vadd.f32 0.0, %v2174
      %v2176 = vpop.f32.mrb[0].mxu0
      %2177 = vmatprep.mubr.bf16.mxu0 0
      %2178 = vmatmul.mubr.bf16.gmra.mrb[0].mxu0 %v2060
      %v2179 = vpop.f32.mrb[0].mxu0
      %v2180 = vadd.f32 0.0, %v2179
      %v2181 = vpop.f32.mrb[0].mxu0
      %v2182 = vpop.f32.mrb[0].mxu0
      %v2183 = vadd.f32 0.0, %v2182
      %v2184 = vpop.f32.mrb[0].mxu0
      %2185 = vmatprep.mubr.bf16.mxu0 0
      %2186 = vmatmul.mubr.bf16.gmra.mrb[0].mxu0 %v2063
      %v2187 = vpop.f32.mrb[0].mxu0
      %v2188 = vadd.f32 0.0, %v2187
      %v2189 = vpop.f32.mrb[0].mxu0
      %v2190 = vpop.f32.mrb[0].mxu0
      %v2191 = vadd.f32 0.0, %v2190
      %v2192 = vpop.f32.mrb[0].mxu0
      %2193 = vmatprep.mubr.bf16.mxu0 0
      %2194 = vmatmul.mubr.bf16.gmra.mrb[0].mxu0 %v2066
      %v2195 = vpop.f32.mrb[0].mxu0
      %v2196 = vadd.f32 0.0, %v2195
      %v2197 = vpop.f32.mrb[0].mxu0
      %v2198 = vpop.f32.mrb[0].mxu0
      %v2199 = vadd.f32 0.0, %v2198
      %v2200 = vpop.f32.mrb[0].mxu0
      %2201 = vmatprep.mubr.bf16.mxu0 0
      %2202 = vmatmul.mubr.bf16.gmra.mrb[0].mxu0 %v2069
      %v2203 = vpop.f32.mrb[0].mxu0
      %v2204 = vadd.f32 0.0, %v2203
      %v2205 = vpop.f32.mrb[0].mxu0
      %v2206 = vpop.f32.mrb[0].mxu0
      %v2207 = vadd.f32 0.0, %v2206
      %v2208 = vpop.f32.mrb[0].mxu0
      %2209 = vmatprep.mubr.bf16.mxu0 0
      %2210 = vmatmul.mubr.bf16.gmra.mrb[0].mxu0 %v2072
      %v2211 = vpop.f32.mrb[0].mxu0
      %v2212 = vadd.f32 0.0, %v2211
      %v2213 = vpop.f32.mrb[0].mxu0
      %v2214 = vpop.f32.mrb[0].mxu0
      %v2215 = vadd.f32 0.0, %v2214
      %v2216 = vpop.f32.mrb[0].mxu0
      %2217 = vmatprep.mubr.bf16.mxu0 0
      %2218 = vmatmul.mubr.bf16.gmra.mrb[0].mxu0 %v2075
      %v2219 = vpop.f32.mrb[0].mxu0
      %v2220 = vadd.f32 0.0, %v2219
      %v2221 = vpop.f32.mrb[0].mxu0
      %v2222 = vpop.f32.mrb[0].mxu0
      %v2223 = vadd.f32 0.0, %v2222
      %v2224 = vpop.f32.mrb[0].mxu0
      %2225 = vmatprep.mubr.bf16.mxu0 0
      %2226 = vmatmul.mubr.bf16.gmra.mrb[0].mxu0 %v2078
      %v2227 = vpop.f32.mrb[0].mxu0
      %v2228 = vadd.f32 0.0, %v2227
      %v2229 = vpop.f32.mrb[0].mxu0
      %v2230 = vpop.f32.mrb[0].mxu0
      %v2231 = vadd.f32 0.0, %v2230
      %v2232 = vpop.f32.mrb[0].mxu0
      %2233 = vmatprep.mubr.bf16.mxu0 0
      %2234 = vmatmul.mubr.bf16.gmra.mrb[0].mxu0 %v2081
      %v2235 = vpop.f32.mrb[0].mxu0
      %v2236 = vadd.f32 0.0, %v2235
      %v2237 = vpop.f32.mrb[0].mxu0
      %v2238 = vpop.f32.mrb[0].mxu0
      %v2239 = vadd.f32 0.0, %v2238
      %v2240 = vpop.f32.mrb[0].mxu0
      %2241 = vmatprep.mubr.bf16.mxu0 0
      %2242 = vmatmul.mubr.bf16.gmra.mrb[0].mxu0 %v2084
      %v2243 = vpop.f32.mrb[0].mxu0
      %v2244 = vadd.f32 0.0, %v2243
      %v2245 = vpop.f32.mrb[0].mxu0
      %v2246 = vpop.f32.mrb[0].mxu0
      %v2247 = vadd.f32 0.0, %v2246
      %v2248 = vpop.f32.mrb[0].mxu0
      %2249 = vdwg.mxu0
      %v2250 = vadd.f32 %v2006, %v2124
      %v2251 = vadd.f32 %v2007, %v2127
      %v2252 = vadd.f32 %v2008, %v2132
      %v2253 = vadd.f32 %v2009, %v2135
      %v2254 = vadd.f32 %v2010, %v2140
      %v2255 = vadd.f32 %v2011, %v2143
      %v2256 = vadd.f32 %v2012, %v2148
      %v2257 = vadd.f32 %v2013, %v2151
      %v2258 = vadd.f32 %v2014, %v2156
      %v2259 = vadd.f32 %v2015, %v2159
      %v2260 = vadd.f32 %v2016, %v2164
      %v2261 = vadd.f32 %v2017, %v2167
      %v2262 = vadd.f32 %v2018, %v2172
      %v2263 = vadd.f32 %v2019, %v2175
      %v2264 = vadd.f32 %v2020, %v2180
      %v2265 = vadd.f32 %v2021, %v2183
      %v2266 = vadd.f32 %v2022, %v2188
      %v2267 = vadd.f32 %v2023, %v2191
      %v2268 = vadd.f32 %v2024, %v2196
      %v2269 = vadd.f32 %v2025, %v2199
      %v2270 = vadd.f32 %v2026, %v2204
      %v2271 = vadd.f32 %v2027, %v2207
      %v2272 = vadd.f32 %v2028, %v2212
      %v2273 = vadd.f32 %v2029, %v2215
      %v2274 = vadd.f32 %v2030, %v2220
      %v2275 = vadd.f32 %v2031, %v2223
      %v2276 = vadd.f32 %v2032, %v2228
      %v2277 = vadd.f32 %v2033, %v2231
      %v2278 = vadd.f32 %v2034, %v2236
      %v2279 = vadd.f32 %v2035, %v2239
      %v2280 = vadd.f32 %v2036, %v2244
      %v2281 = vadd.f32 %v2037, %v2247
      %v2283 = vsel %vm1458, %v1182, 0
      %v2286 = vsel %vm1507, %v1453, 0
      %2288 = vmatprep.subr.bf16.mxu0 0
      %2289 = vmatpush1.bf16.msra.mxu0 %v2286
      %2290 = vmatprep.subr.bf16.mxu0 0
      %2291 = vmatpush1.bf16.msra.mxu0 0
      %2292 = vmatprep.subr.bf16.mxu0 0
      %2293 = vmatpush1.bf16.msra.mxu0 0
      %2294 = vmatprep.subr.bf16.mxu0 0
      %2295 = vmatpush1.bf16.msra.mxu0 0
      %2296 = vmatprep.subr.bf16.mxu0 0
      %2297 = vmatpush1.bf16.msra.mxu0 0
      %2298 = vmatprep.subr.bf16.mxu0 0
      %2299 = vmatpush1.bf16.msra.mxu0 0
      %2300 = vmatprep.subr.bf16.mxu0 0
      %2301 = vmatpush1.bf16.msra.mxu0 0
      %2302 = vmatprep.subr.bf16.mxu0 0
      %2303 = vmatpush1.bf16.msra.mxu0 0
      %2304 = vmatprep.subr.bf16.mxu0 0
      %2305 = vmatpush1.bf16.msra.mxu0 0
      %2306 = vmatprep.subr.bf16.mxu0 0
      %2307 = vmatpush1.bf16.msra.mxu0 0
      %2308 = vmatprep.subr.bf16.mxu0 0
      %2309 = vmatpush1.bf16.msra.mxu0 0
      %2310 = vmatprep.subr.bf16.mxu0 0
      %2311 = vmatpush1.bf16.msra.mxu0 0
      %2312 = vmatprep.subr.bf16.mxu0 0
      %2313 = vmatpush1.bf16.msra.mxu0 0
      %2314 = vmatprep.subr.bf16.mxu0 0
      %2315 = vmatpush1.bf16.msra.mxu0 0
      %2316 = vmatprep.subr.bf16.mxu0 0
      %2317 = vmatpush1.bf16.msra.mxu0 0
      %2318 = vmatprep.subr.bf16.mxu0 0
      %2319 = vmatpush1.bf16.msra.mxu0 0
      %2320 = vmatprep.mubr.bf16.mxu0 0
      %2321 = vmatmul.mubr.bf16.gmra.mrb[0].mxu0 %v2042
      %v2322 = vpop.f32.mrb[0].mxu0
      %v2323 = vadd.f32 0.0, %v2322
      %v2324 = vpop.f32.mrb[0].mxu0
      %v2325 = vpop.f32.mrb[0].mxu0
      %v2326 = vadd.f32 0.0, %v2325
      %v2327 = vpop.f32.mrb[0].mxu0
      %2328 = vmatprep.mubr.bf16.mxu0 0
      %2329 = vmatmul.mubr.bf16.gmra.mrb[0].mxu0 %v2045
      %v2330 = vpop.f32.mrb[0].mxu0
      %v2331 = vadd.f32 0.0, %v2330
      %v2332 = vpop.f32.mrb[0].mxu0
      %v2333 = vpop.f32.mrb[0].mxu0
      %v2334 = vadd.f32 0.0, %v2333
      %v2335 = vpop.f32.mrb[0].mxu0
      %2336 = vmatprep.mubr.bf16.mxu0 0
      %2337 = vmatmul.mubr.bf16.gmra.mrb[0].mxu0 %v2048
      %v2338 = vpop.f32.mrb[0].mxu0
      %v2339 = vadd.f32 0.0, %v2338
      %v2340 = vpop.f32.mrb[0].mxu0
      %v2341 = vpop.f32.mrb[0].mxu0
      %v2342 = vadd.f32 0.0, %v2341
      %v2343 = vpop.f32.mrb[0].mxu0
      %2344 = vmatprep.mubr.bf16.mxu0 0
      %2345 = vmatmul.mubr.bf16.gmra.mrb[0].mxu0 %v2051
      %v2346 = vpop.f32.mrb[0].mxu0
      %v2347 = vadd.f32 0.0, %v2346
      %v2348 = vpop.f32.mrb[0].mxu0
      %v2349 = vpop.f32.mrb[0].mxu0
      %v2350 = vadd.f32 0.0, %v2349
      %v2351 = vpop.f32.mrb[0].mxu0
      %2352 = vmatprep.mubr.bf16.mxu0 0
      %2353 = vmatmul.mubr.bf16.gmra.mrb[0].mxu0 %v2054
      %v2354 = vpop.f32.mrb[0].mxu0
      %v2355 = vadd.f32 0.0, %v2354
      %v2356 = vpop.f32.mrb[0].mxu0
      %v2357 = vpop.f32.mrb[0].mxu0
      %v2358 = vadd.f32 0.0, %v2357
      %v2359 = vpop.f32.mrb[0].mxu0
      %2360 = vmatprep.mubr.bf16.mxu0 0
      %2361 = vmatmul.mubr.bf16.gmra.mrb[0].mxu0 %v2057
      %v2362 = vpop.f32.mrb[0].mxu0
      %v2363 = vadd.f32 0.0, %v2362
      %v2364 = vpop.f32.mrb[0].mxu0
      %v2365 = vpop.f32.mrb[0].mxu0
      %v2366 = vadd.f32 0.0, %v2365
      %v2367 = vpop.f32.mrb[0].mxu0
      %2368 = vmatprep.mubr.bf16.mxu0 0
      %2369 = vmatmul.mubr.bf16.gmra.mrb[0].mxu0 %v2060
      %v2370 = vpop.f32.mrb[0].mxu0
      %v2371 = vadd.f32 0.0, %v2370
      %v2372 = vpop.f32.mrb[0].mxu0
      %v2373 = vpop.f32.mrb[0].mxu0
      %v2374 = vadd.f32 0.0, %v2373
      %v2375 = vpop.f32.mrb[0].mxu0
      %2376 = vmatprep.mubr.bf16.mxu0 0
      %2377 = vmatmul.mubr.bf16.gmra.mrb[0].mxu0 %v2063
      %v2378 = vpop.f32.mrb[0].mxu0
      %v2379 = vadd.f32 0.0, %v2378
      %v2380 = vpop.f32.mrb[0].mxu0
      %v2381 = vpop.f32.mrb[0].mxu0
      %v2382 = vadd.f32 0.0, %v2381
      %v2383 = vpop.f32.mrb[0].mxu0
      %2384 = vmatprep.mubr.bf16.mxu0 0
      %2385 = vmatmul.mubr.bf16.gmra.mrb[0].mxu0 %v2066
      %v2386 = vpop.f32.mrb[0].mxu0
      %v2387 = vadd.f32 0.0, %v2386
      %v2388 = vpop.f32.mrb[0].mxu0
      %v2389 = vpop.f32.mrb[0].mxu0
      %v2390 = vadd.f32 0.0, %v2389
      %v2391 = vpop.f32.mrb[0].mxu0
      %2392 = vmatprep.mubr.bf16.mxu0 0
      %2393 = vmatmul.mubr.bf16.gmra.mrb[0].mxu0 %v2069
      %v2394 = vpop.f32.mrb[0].mxu0
      %v2395 = vadd.f32 0.0, %v2394
      %v2396 = vpop.f32.mrb[0].mxu0
      %v2397 = vpop.f32.mrb[0].mxu0
      %v2398 = vadd.f32 0.0, %v2397
      %v2399 = vpop.f32.mrb[0].mxu0
      %2400 = vmatprep.mubr.bf16.mxu0 0
      %2401 = vmatmul.mubr.bf16.gmra.mrb[0].mxu0 %v2072
      %v2402 = vpop.f32.mrb[0].mxu0
      %v2403 = vadd.f32 0.0, %v2402
      %v2404 = vpop.f32.mrb[0].mxu0
      %v2405 = vpop.f32.mrb[0].mxu0
      %v2406 = vadd.f32 0.0, %v2405
      %v2407 = vpop.f32.mrb[0].mxu0
      %2408 = vmatprep.mubr.bf16.mxu0 0
      %2409 = vmatmul.mubr.bf16.gmra.mrb[0].mxu0 %v2075
      %v2410 = vpop.f32.mrb[0].mxu0
      %v2411 = vadd.f32 0.0, %v2410
      %v2412 = vpop.f32.mrb[0].mxu0
      %v2413 = vpop.f32.mrb[0].mxu0
      %v2414 = vadd.f32 0.0, %v2413
      %v2415 = vpop.f32.mrb[0].mxu0
      %2416 = vmatprep.mubr.bf16.mxu0 0
      %2417 = vmatmul.mubr.bf16.gmra.mrb[0].mxu0 %v2078
      %v2418 = vpop.f32.mrb[0].mxu0
      %v2419 = vadd.f32 0.0, %v2418
      %v2420 = vpop.f32.mrb[0].mxu0
      %v2421 = vpop.f32.mrb[0].mxu0
      %v2422 = vadd.f32 0.0, %v2421
      %v2423 = vpop.f32.mrb[0].mxu0
      %2424 = vmatprep.mubr.bf16.mxu0 0
      %2425 = vmatmul.mubr.bf16.gmra.mrb[0].mxu0 %v2081
      %v2426 = vpop.f32.mrb[0].mxu0
      %v2427 = vadd.f32 0.0, %v2426
      %v2428 = vpop.f32.mrb[0].mxu0
      %v2429 = vpop.f32.mrb[0].mxu0
      %v2430 = vadd.f32 0.0, %v2429
      %v2431 = vpop.f32.mrb[0].mxu0
      %2432 = vmatprep.mubr.bf16.mxu0 0
      %2433 = vmatmul.mubr.bf16.gmra.mrb[0].mxu0 %v2084
      %v2434 = vpop.f32.mrb[0].mxu0
      %v2435 = vadd.f32 0.0, %v2434
      %v2436 = vpop.f32.mrb[0].mxu0
      %v2437 = vpop.f32.mrb[0].mxu0
      %v2438 = vadd.f32 0.0, %v2437
      %v2439 = vpop.f32.mrb[0].mxu0
      %2440 = vmatprep.mubr.bf16.mxu0 0
      %2441 = vmatmul.mubr.bf16.gmra.mrb[0].mxu0 %v2283
      %v2442 = vpop.f32.mrb[0].mxu0
      %v2443 = vadd.f32 0.0, %v2442
      %v2444 = vpop.f32.mrb[0].mxu0
      %v2445 = vpop.f32.mrb[0].mxu0
      %v2446 = vadd.f32 0.0, %v2445
      %v2447 = vpop.f32.mrb[0].mxu0
      %2448 = vdwg.mxu0
      %v2449 = vadd.f32 %v2250, %v2323
      %v2450 = vadd.f32 %v2251, %v2326
      %v2451 = vadd.f32 %v2252, %v2331
      %v2452 = vadd.f32 %v2253, %v2334
      %v2453 = vadd.f32 %v2254, %v2339
      %v2454 = vadd.f32 %v2255, %v2342
      %v2455 = vadd.f32 %v2256, %v2347
      %v2456 = vadd.f32 %v2257, %v2350
      %v2457 = vadd.f32 %v2258, %v2355
      %v2458 = vadd.f32 %v2259, %v2358
      %v2459 = vadd.f32 %v2260, %v2363
      %v2460 = vadd.f32 %v2261, %v2366
      %v2461 = vadd.f32 %v2262, %v2371
      %v2462 = vadd.f32 %v2263, %v2374
      %v2463 = vadd.f32 %v2264, %v2379
      %v2464 = vadd.f32 %v2265, %v2382
      %v2465 = vadd.f32 %v2266, %v2387
      %v2466 = vadd.f32 %v2267, %v2390
      %v2467 = vadd.f32 %v2268, %v2395
      %v2468 = vadd.f32 %v2269, %v2398
      %v2469 = vadd.f32 %v2270, %v2403
      %v2470 = vadd.f32 %v2271, %v2406
      %v2471 = vadd.f32 %v2272, %v2411
      %v2472 = vadd.f32 %v2273, %v2414
      %v2473 = vadd.f32 %v2274, %v2419
      %v2474 = vadd.f32 %v2275, %v2422
      %v2475 = vadd.f32 %v2276, %v2427
      %v2476 = vadd.f32 %v2277, %v2430
      %v2477 = vadd.f32 %v2278, %v2435
      %v2478 = vadd.f32 %v2279, %v2438
      %v2479 = vadd.f32 %v2280, %v2443
      %v2480 = vadd.f32 %v2281, %v2446
      %v2482 = vsel %vm1507, %v1456, 0
      %2484 = vmatprep.subr.bf16.mxu0 0
      %2485 = vmatpush1.bf16.msra.mxu0 %v2482
      %2486 = vmatprep.subr.bf16.mxu0 0
      %2487 = vmatpush1.bf16.msra.mxu0 0
      %2488 = vmatprep.subr.bf16.mxu0 0
      %2489 = vmatpush1.bf16.msra.mxu0 0
      %2490 = vmatprep.subr.bf16.mxu0 0
      %2491 = vmatpush1.bf16.msra.mxu0 0
      %2492 = vmatprep.subr.bf16.mxu0 0
      %2493 = vmatpush1.bf16.msra.mxu0 0
      %2494 = vmatprep.subr.bf16.mxu0 0
      %2495 = vmatpush1.bf16.msra.mxu0 0
      %2496 = vmatprep.subr.bf16.mxu0 0
      %2497 = vmatpush1.bf16.msra.mxu0 0
      %2498 = vmatprep.subr.bf16.mxu0 0
      %2499 = vmatpush1.bf16.msra.mxu0 0
      %2500 = vmatprep.subr.bf16.mxu0 0
      %2501 = vmatpush1.bf16.msra.mxu0 0
      %2502 = vmatprep.subr.bf16.mxu0 0
      %2503 = vmatpush1.bf16.msra.mxu0 0
      %2504 = vmatprep.subr.bf16.mxu0 0
      %2505 = vmatpush1.bf16.msra.mxu0 0
      %2506 = vmatprep.subr.bf16.mxu0 0
      %2507 = vmatpush1.bf16.msra.mxu0 0
      %2508 = vmatprep.subr.bf16.mxu0 0
      %2509 = vmatpush1.bf16.msra.mxu0 0
      %2510 = vmatprep.subr.bf16.mxu0 0
      %2511 = vmatpush1.bf16.msra.mxu0 0
      %2512 = vmatprep.subr.bf16.mxu0 0
      %2513 = vmatpush1.bf16.msra.mxu0 0
      %2514 = vmatprep.subr.bf16.mxu0 0
      %2515 = vmatpush1.bf16.msra.mxu0 0
      %2516 = vmatprep.mubr.bf16.mxu0 0
      %2517 = vmatmul.mubr.bf16.gmra.mrb[0].mxu0 %v2045
      %v2518 = vpop.f32.mrb[0].mxu0
      %v2519 = vadd.f32 0.0, %v2518
      %v2520 = vpop.f32.mrb[0].mxu0
      %v2521 = vpop.f32.mrb[0].mxu0
      %v2522 = vadd.f32 0.0, %v2521
      %v2523 = vpop.f32.mrb[0].mxu0
      %2524 = vmatprep.mubr.bf16.mxu0 0
      %2525 = vmatmul.mubr.bf16.gmra.mrb[0].mxu0 %v2048
      %v2526 = vpop.f32.mrb[0].mxu0
      %v2527 = vadd.f32 0.0, %v2526
      %v2528 = vpop.f32.mrb[0].mxu0
      %v2529 = vpop.f32.mrb[0].mxu0
      %v2530 = vadd.f32 0.0, %v2529
      %v2531 = vpop.f32.mrb[0].mxu0
      %2532 = vmatprep.mubr.bf16.mxu0 0
      %2533 = vmatmul.mubr.bf16.gmra.mrb[0].mxu0 %v2051
      %v2534 = vpop.f32.mrb[0].mxu0
      %v2535 = vadd.f32 0.0, %v2534
      %v2536 = vpop.f32.mrb[0].mxu0
      %v2537 = vpop.f32.mrb[0].mxu0
      %v2538 = vadd.f32 0.0, %v2537
      %v2539 = vpop.f32.mrb[0].mxu0
      %2540 = vmatprep.mubr.bf16.mxu0 0
      %2541 = vmatmul.mubr.bf16.gmra.mrb[0].mxu0 %v2054
      %v2542 = vpop.f32.mrb[0].mxu0
      %v2543 = vadd.f32 0.0, %v2542
      %v2544 = vpop.f32.mrb[0].mxu0
      %v2545 = vpop.f32.mrb[0].mxu0
      %v2546 = vadd.f32 0.0, %v2545
      %v2547 = vpop.f32.mrb[0].mxu0
      %2548 = vmatprep.mubr.bf16.mxu0 0
      %2549 = vmatmul.mubr.bf16.gmra.mrb[0].mxu0 %v2057
      %v2550 = vpop.f32.mrb[0].mxu0
      %v2551 = vadd.f32 0.0, %v2550
      %v2552 = vpop.f32.mrb[0].mxu0
      %v2553 = vpop.f32.mrb[0].mxu0
      %v2554 = vadd.f32 0.0, %v2553
      %v2555 = vpop.f32.mrb[0].mxu0
      %2556 = vmatprep.mubr.bf16.mxu0 0
      %2557 = vmatmul.mubr.bf16.gmra.mrb[0].mxu0 %v2060
      %v2558 = vpop.f32.mrb[0].mxu0
      %v2559 = vadd.f32 0.0, %v2558
      %v2560 = vpop.f32.mrb[0].mxu0
      %v2561 = vpop.f32.mrb[0].mxu0
      %v2562 = vadd.f32 0.0, %v2561
      %v2563 = vpop.f32.mrb[0].mxu0
      %2564 = vmatprep.mubr.bf16.mxu0 0
      %2565 = vmatmul.mubr.bf16.gmra.mrb[0].mxu0 %v2063
      %v2566 = vpop.f32.mrb[0].mxu0
      %v2567 = vadd.f32 0.0, %v2566
      %v2568 = vpop.f32.mrb[0].mxu0
      %v2569 = vpop.f32.mrb[0].mxu0
      %v2570 = vadd.f32 0.0, %v2569
      %v2571 = vpop.f32.mrb[0].mxu0
      %2572 = vmatprep.mubr.bf16.mxu0 0
      %2573 = vmatmul.mubr.bf16.gmra.mrb[0].mxu0 %v2066
      %v2574 = vpop.f32.mrb[0].mxu0
      %v2575 = vadd.f32 0.0, %v2574
      %v2576 = vpop.f32.mrb[0].mxu0
      %v2577 = vpop.f32.mrb[0].mxu0
      %v2578 = vadd.f32 0.0, %v2577
      %v2579 = vpop.f32.mrb[0].mxu0
      %2580 = vmatprep.mubr.bf16.mxu0 0
      %2581 = vmatmul.mubr.bf16.gmra.mrb[0].mxu0 %v2069
      %v2582 = vpop.f32.mrb[0].mxu0
      %v2583 = vadd.f32 0.0, %v2582
      %v2584 = vpop.f32.mrb[0].mxu0
      %v2585 = vpop.f32.mrb[0].mxu0
      %v2586 = vadd.f32 0.0, %v2585
      %v2587 = vpop.f32.mrb[0].mxu0
      %2588 = vmatprep.mubr.bf16.mxu0 0
      %2589 = vmatmul.mubr.bf16.gmra.mrb[0].mxu0 %v2072
      %v2590 = vpop.f32.mrb[0].mxu0
      %v2591 = vadd.f32 0.0, %v2590
      %v2592 = vpop.f32.mrb[0].mxu0
      %v2593 = vpop.f32.mrb[0].mxu0
      %v2594 = vadd.f32 0.0, %v2593
      %v2595 = vpop.f32.mrb[0].mxu0
      %2596 = vmatprep.mubr.bf16.mxu0 0
      %2597 = vmatmul.mubr.bf16.gmra.mrb[0].mxu0 %v2075
      %v2598 = vpop.f32.mrb[0].mxu0
      %v2599 = vadd.f32 0.0, %v2598
      %v2600 = vpop.f32.mrb[0].mxu0
      %v2601 = vpop.f32.mrb[0].mxu0
      %v2602 = vadd.f32 0.0, %v2601
      %v2603 = vpop.f32.mrb[0].mxu0
      %2604 = vmatprep.mubr.bf16.mxu0 0
      %2605 = vmatmul.mubr.bf16.gmra.mrb[0].mxu0 %v2078
      %v2606 = vpop.f32.mrb[0].mxu0
      %v2607 = vadd.f32 0.0, %v2606
      %v2608 = vpop.f32.mrb[0].mxu0
      %v2609 = vpop.f32.mrb[0].mxu0
      %v2610 = vadd.f32 0.0, %v2609
      %v2611 = vpop.f32.mrb[0].mxu0
      %2612 = vmatprep.mubr.bf16.mxu0 0
      %2613 = vmatmul.mubr.bf16.gmra.mrb[0].mxu0 %v2081
      %v2614 = vpop.f32.mrb[0].mxu0
      %v2615 = vadd.f32 0.0, %v2614
      %v2616 = vpop.f32.mrb[0].mxu0
      %v2617 = vpop.f32.mrb[0].mxu0
      %v2618 = vadd.f32 0.0, %v2617
      %v2619 = vpop.f32.mrb[0].mxu0
      %2620 = vmatprep.mubr.bf16.mxu0 0
      %2621 = vmatmul.mubr.bf16.gmra.mrb[0].mxu0 %v2084
      %v2622 = vpop.f32.mrb[0].mxu0
      %v2623 = vadd.f32 0.0, %v2622
      %v2624 = vpop.f32.mrb[0].mxu0
      %v2625 = vpop.f32.mrb[0].mxu0
      %v2626 = vadd.f32 0.0, %v2625
      %v2627 = vpop.f32.mrb[0].mxu0
      %2628 = vmatprep.mubr.bf16.mxu0 0
      %2629 = vmatmul.mubr.bf16.gmra.mrb[0].mxu0 %v2283
      %v2630 = vpop.f32.mrb[0].mxu0
      %v2631 = vadd.f32 0.0, %v2630
      %v2632 = vpop.f32.mrb[0].mxu0
      %v2633 = vpop.f32.mrb[0].mxu0
      %v2634 = vadd.f32 0.0, %v2633
      %v2635 = vpop.f32.mrb[0].mxu0
      %2636 = vmatprep.mubr.bf16.mxu0 0
      %2637 = vmatmul.mubr.bf16.gmra.mrb[0].mxu0 %v2039
      %v2638 = vpop.f32.mrb[0].mxu0
      %v2639 = vadd.f32 0.0, %v2638
      %v2640 = vpop.f32.mrb[0].mxu0
      %v2641 = vpop.f32.mrb[0].mxu0
      %v2642 = vadd.f32 0.0, %v2641
      %v2643 = vpop.f32.mrb[0].mxu0
      %2644 = vdwg.mxu0
      %v2645 = vadd.f32 %v2449, %v2519
      %v2646 = vadd.f32 %v2450, %v2522
      %v2647 = vadd.f32 %v2451, %v2527
      %v2648 = vadd.f32 %v2452, %v2530
      %v2649 = vadd.f32 %v2453, %v2535
      %v2650 = vadd.f32 %v2454, %v2538
      %v2651 = vadd.f32 %v2455, %v2543
      %v2652 = vadd.f32 %v2456, %v2546
      %v2653 = vadd.f32 %v2457, %v2551
      %v2654 = vadd.f32 %v2458, %v2554
      %v2655 = vadd.f32 %v2459, %v2559
      %v2656 = vadd.f32 %v2460, %v2562
      %v2657 = vadd.f32 %v2461, %v2567
      %v2658 = vadd.f32 %v2462, %v2570
      %v2659 = vadd.f32 %v2463, %v2575
      %v2660 = vadd.f32 %v2464, %v2578
      %v2661 = vadd.f32 %v2465, %v2583
      %v2662 = vadd.f32 %v2466, %v2586
      %v2663 = vadd.f32 %v2467, %v2591
      %v2664 = vadd.f32 %v2468, %v2594
      %v2665 = vadd.f32 %v2469, %v2599
      %v2666 = vadd.f32 %v2470, %v2602
      %v2667 = vadd.f32 %v2471, %v2607
      %v2668 = vadd.f32 %v2472, %v2610
      %v2669 = vadd.f32 %v2473, %v2615
      %v2670 = vadd.f32 %v2474, %v2618
      %v2671 = vadd.f32 %v2475, %v2623
      %v2672 = vadd.f32 %v2476, %v2626
      %v2673 = vadd.f32 %v2477, %v2631
      %v2674 = vadd.f32 %v2478, %v2634
      %v2675 = vadd.f32 %v2479, %v2639
      %v2676 = vadd.f32 %v2480, %v2642
      %v2678 = vsel %vm1458, %v1431, 0
      %v2681 = vsel %vm1458, %v1432, 0
      %v2684 = vsel %vm1458, %v1433, 0
      %v2687 = vsel %vm1458, %v1434, 0
      %v2690 = vsel %vm1458, %v1435, 0
      %v2693 = vsel %vm1458, %v1436, 0
      %v2696 = vsel %vm1458, %v1437, 0
      %v2699 = vsel %vm1458, %v1438, 0
      %v2702 = vsel %vm1458, %v1439, 0
      %v2705 = vsel %vm1458, %v1440, 0
      %v2708 = vsel %vm1458, %v1441, 0
      %v2711 = vsel %vm1458, %v1442, 0
      %v2714 = vsel %vm1458, %v1443, 0
      %v2717 = vsel %vm1458, %v1444, 0
      %v2720 = vsel %vm1458, %v1445, 0
      %v2723 = vsel %vm1458, %v1446, 0
      %v2726 = vsel %vm1507, %v1451, 0
      %2728 = vmatprep.subr.bf16.mxu0 0
      %2729 = vmatpush1.bf16.msra.mxu0 %v2726
      %2730 = vmatprep.subr.bf16.mxu0 0
      %2731 = vmatpush1.bf16.msra.mxu0 0
      %2732 = vmatprep.subr.bf16.mxu0 0
      %2733 = vmatpush1.bf16.msra.mxu0 0
      %2734 = vmatprep.subr.bf16.mxu0 0
      %2735 = vmatpush1.bf16.msra.mxu0 0
      %2736 = vmatprep.subr.bf16.mxu0 0
      %2737 = vmatpush1.bf16.msra.mxu0 0
      %2738 = vmatprep.subr.bf16.mxu0 0
      %2739 = vmatpush1.bf16.msra.mxu0 0
      %2740 = vmatprep.subr.bf16.mxu0 0
      %2741 = vmatpush1.bf16.msra.mxu0 0
      %2742 = vmatprep.subr.bf16.mxu0 0
      %2743 = vmatpush1.bf16.msra.mxu0 0
      %2744 = vmatprep.subr.bf16.mxu0 0
      %2745 = vmatpush1.bf16.msra.mxu0 0
      %2746 = vmatprep.subr.bf16.mxu0 0
      %2747 = vmatpush1.bf16.msra.mxu0 0
      %2748 = vmatprep.subr.bf16.mxu0 0
      %2749 = vmatpush1.bf16.msra.mxu0 0
      %2750 = vmatprep.subr.bf16.mxu0 0
      %2751 = vmatpush1.bf16.msra.mxu0 0
      %2752 = vmatprep.subr.bf16.mxu0 0
      %2753 = vmatpush1.bf16.msra.mxu0 0
      %2754 = vmatprep.subr.bf16.mxu0 0
      %2755 = vmatpush1.bf16.msra.mxu0 0
      %2756 = vmatprep.subr.bf16.mxu0 0
      %2757 = vmatpush1.bf16.msra.mxu0 0
      %2758 = vmatprep.subr.bf16.mxu0 0
      %2759 = vmatpush1.bf16.msra.mxu0 0
      %2760 = vmatprep.mubr.bf16.mxu0 0
      %2761 = vmatmul.mubr.bf16.gmra.mrb[0].mxu0 %v2678
      %v2762 = vpop.f32.mrb[0].mxu0
      %v2763 = vadd.f32 0.0, %v2762
      %v2764 = vpop.f32.mrb[0].mxu0
      %v2765 = vpop.f32.mrb[0].mxu0
      %v2766 = vadd.f32 0.0, %v2765
      %v2767 = vpop.f32.mrb[0].mxu0
      %2768 = vmatprep.mubr.bf16.mxu0 0
      %2769 = vmatmul.mubr.bf16.gmra.mrb[0].mxu0 %v2681
      %v2770 = vpop.f32.mrb[0].mxu0
      %v2771 = vadd.f32 0.0, %v2770
      %v2772 = vpop.f32.mrb[0].mxu0
      %v2773 = vpop.f32.mrb[0].mxu0
      %v2774 = vadd.f32 0.0, %v2773
      %v2775 = vpop.f32.mrb[0].mxu0
      %2776 = vmatprep.mubr.bf16.mxu0 0
      %2777 = vmatmul.mubr.bf16.gmra.mrb[0].mxu0 %v2684
      %v2778 = vpop.f32.mrb[0].mxu0
      %v2779 = vadd.f32 0.0, %v2778
      %v2780 = vpop.f32.mrb[0].mxu0
      %v2781 = vpop.f32.mrb[0].mxu0
      %v2782 = vadd.f32 0.0, %v2781
      %v2783 = vpop.f32.mrb[0].mxu0
      %2784 = vmatprep.mubr.bf16.mxu0 0
      %2785 = vmatmul.mubr.bf16.gmra.mrb[0].mxu0 %v2687
      %v2786 = vpop.f32.mrb[0].mxu0
      %v2787 = vadd.f32 0.0, %v2786
      %v2788 = vpop.f32.mrb[0].mxu0
      %v2789 = vpop.f32.mrb[0].mxu0
      %v2790 = vadd.f32 0.0, %v2789
      %v2791 = vpop.f32.mrb[0].mxu0
      %2792 = vmatprep.mubr.bf16.mxu0 0
      %2793 = vmatmul.mubr.bf16.gmra.mrb[0].mxu0 %v2690
      %v2794 = vpop.f32.mrb[0].mxu0
      %v2795 = vadd.f32 0.0, %v2794
      %v2796 = vpop.f32.mrb[0].mxu0
      %v2797 = vpop.f32.mrb[0].mxu0
      %v2798 = vadd.f32 0.0, %v2797
      %v2799 = vpop.f32.mrb[0].mxu0
      %2800 = vmatprep.mubr.bf16.mxu0 0
      %2801 = vmatmul.mubr.bf16.gmra.mrb[0].mxu0 %v2693
      %v2802 = vpop.f32.mrb[0].mxu0
      %v2803 = vadd.f32 0.0, %v2802
      %v2804 = vpop.f32.mrb[0].mxu0
      %v2805 = vpop.f32.mrb[0].mxu0
      %v2806 = vadd.f32 0.0, %v2805
      %v2807 = vpop.f32.mrb[0].mxu0
      %2808 = vmatprep.mubr.bf16.mxu0 0
      %2809 = vmatmul.mubr.bf16.gmra.mrb[0].mxu0 %v2696
      %v2810 = vpop.f32.mrb[0].mxu0
      %v2811 = vadd.f32 0.0, %v2810
      %v2812 = vpop.f32.mrb[0].mxu0
      %v2813 = vpop.f32.mrb[0].mxu0
      %v2814 = vadd.f32 0.0, %v2813
      %v2815 = vpop.f32.mrb[0].mxu0
      %2816 = vmatprep.mubr.bf16.mxu0 0
      %2817 = vmatmul.mubr.bf16.gmra.mrb[0].mxu0 %v2699
      %v2818 = vpop.f32.mrb[0].mxu0
      %v2819 = vadd.f32 0.0, %v2818
      %v2820 = vpop.f32.mrb[0].mxu0
      %v2821 = vpop.f32.mrb[0].mxu0
      %v2822 = vadd.f32 0.0, %v2821
      %v2823 = vpop.f32.mrb[0].mxu0
      %2824 = vmatprep.mubr.bf16.mxu0 0
      %2825 = vmatmul.mubr.bf16.gmra.mrb[0].mxu0 %v2702
      %v2826 = vpop.f32.mrb[0].mxu0
      %v2827 = vadd.f32 0.0, %v2826
      %v2828 = vpop.f32.mrb[0].mxu0
      %v2829 = vpop.f32.mrb[0].mxu0
      %v2830 = vadd.f32 0.0, %v2829
      %v2831 = vpop.f32.mrb[0].mxu0
      %2832 = vmatprep.mubr.bf16.mxu0 0
      %2833 = vmatmul.mubr.bf16.gmra.mrb[0].mxu0 %v2705
      %v2834 = vpop.f32.mrb[0].mxu0
      %v2835 = vadd.f32 0.0, %v2834
      %v2836 = vpop.f32.mrb[0].mxu0
      %v2837 = vpop.f32.mrb[0].mxu0
      %v2838 = vadd.f32 0.0, %v2837
      %v2839 = vpop.f32.mrb[0].mxu0
      %2840 = vmatprep.mubr.bf16.mxu0 0
      %2841 = vmatmul.mubr.bf16.gmra.mrb[0].mxu0 %v2708
      %v2842 = vpop.f32.mrb[0].mxu0
      %v2843 = vadd.f32 0.0, %v2842
      %v2844 = vpop.f32.mrb[0].mxu0
      %v2845 = vpop.f32.mrb[0].mxu0
      %v2846 = vadd.f32 0.0, %v2845
      %v2847 = vpop.f32.mrb[0].mxu0
      %2848 = vmatprep.mubr.bf16.mxu0 0
      %2849 = vmatmul.mubr.bf16.gmra.mrb[0].mxu0 %v2711
      %v2850 = vpop.f32.mrb[0].mxu0
      %v2851 = vadd.f32 0.0, %v2850
      %v2852 = vpop.f32.mrb[0].mxu0
      %v2853 = vpop.f32.mrb[0].mxu0
      %v2854 = vadd.f32 0.0, %v2853
      %v2855 = vpop.f32.mrb[0].mxu0
      %2856 = vmatprep.mubr.bf16.mxu0 0
      %2857 = vmatmul.mubr.bf16.gmra.mrb[0].mxu0 %v2714
      %v2858 = vpop.f32.mrb[0].mxu0
      %v2859 = vadd.f32 0.0, %v2858
      %v2860 = vpop.f32.mrb[0].mxu0
      %v2861 = vpop.f32.mrb[0].mxu0
      %v2862 = vadd.f32 0.0, %v2861
      %v2863 = vpop.f32.mrb[0].mxu0
      %2864 = vmatprep.mubr.bf16.mxu0 0
      %2865 = vmatmul.mubr.bf16.gmra.mrb[0].mxu0 %v2717
      %v2866 = vpop.f32.mrb[0].mxu0
      %v2867 = vadd.f32 0.0, %v2866
      %v2868 = vpop.f32.mrb[0].mxu0
      %v2869 = vpop.f32.mrb[0].mxu0
      %v2870 = vadd.f32 0.0, %v2869
      %v2871 = vpop.f32.mrb[0].mxu0
      %2872 = vmatprep.mubr.bf16.mxu0 0
      %2873 = vmatmul.mubr.bf16.gmra.mrb[0].mxu0 %v2720
      %v2874 = vpop.f32.mrb[0].mxu0
      %v2875 = vadd.f32 0.0, %v2874
      %v2876 = vpop.f32.mrb[0].mxu0
      %v2877 = vpop.f32.mrb[0].mxu0
      %v2878 = vadd.f32 0.0, %v2877
      %v2879 = vpop.f32.mrb[0].mxu0
      %2880 = vmatprep.mubr.bf16.mxu0 0
      %2881 = vmatmul.mubr.bf16.gmra.mrb[0].mxu0 %v2723
      %v2882 = vpop.f32.mrb[0].mxu0
      %v2883 = vadd.f32 0.0, %v2882
      %v2884 = vpop.f32.mrb[0].mxu0
      %v2885 = vpop.f32.mrb[0].mxu0
      %v2886 = vadd.f32 0.0, %v2885
      %v2887 = vpop.f32.mrb[0].mxu0
      %2888 = vdwg.mxu0
      %v2889 = vadd.f32 %v2645, %v2763
      %v2890 = vadd.f32 %v2646, %v2766
      %v2891 = vadd.f32 %v2647, %v2771
      %v2892 = vadd.f32 %v2648, %v2774
      %v2893 = vadd.f32 %v2649, %v2779
      %v2894 = vadd.f32 %v2650, %v2782
      %v2895 = vadd.f32 %v2651, %v2787
      %v2896 = vadd.f32 %v2652, %v2790
      %v2897 = vadd.f32 %v2653, %v2795
      %v2898 = vadd.f32 %v2654, %v2798
      %v2899 = vadd.f32 %v2655, %v2803
      %v2900 = vadd.f32 %v2656, %v2806
      %v2901 = vadd.f32 %v2657, %v2811
      %v2902 = vadd.f32 %v2658, %v2814
      %v2903 = vadd.f32 %v2659, %v2819
      %v2904 = vadd.f32 %v2660, %v2822
      %v2905 = vadd.f32 %v2661, %v2827
      %v2906 = vadd.f32 %v2662, %v2830
      %v2907 = vadd.f32 %v2663, %v2835
      %v2908 = vadd.f32 %v2664, %v2838
      %v2909 = vadd.f32 %v2665, %v2843
      %v2910 = vadd.f32 %v2666, %v2846
      %v2911 = vadd.f32 %v2667, %v2851
      %v2912 = vadd.f32 %v2668, %v2854
      %v2913 = vadd.f32 %v2669, %v2859
      %v2914 = vadd.f32 %v2670, %v2862
      %v2915 = vadd.f32 %v2671, %v2867
      %v2916 = vadd.f32 %v2672, %v2870
      %v2917 = vadd.f32 %v2673, %v2875
      %v2918 = vadd.f32 %v2674, %v2878
      %v2919 = vadd.f32 %v2675, %v2883
      %v2920 = vadd.f32 %v2676, %v2886
      %v2922 = vsel %vm1458, %v1447, 0
      %v2925 = vsel %vm1507, %v1454, 0
      %2927 = vmatprep.subr.bf16.mxu0 0
      %2928 = vmatpush1.bf16.msra.mxu0 %v2925
      %2929 = vmatprep.subr.bf16.mxu0 0
      %2930 = vmatpush1.bf16.msra.mxu0 0
      %2931 = vmatprep.subr.bf16.mxu0 0
      %2932 = vmatpush1.bf16.msra.mxu0 0
      %2933 = vmatprep.subr.bf16.mxu0 0
      %2934 = vmatpush1.bf16.msra.mxu0 0
      %2935 = vmatprep.subr.bf16.mxu0 0
      %2936 = vmatpush1.bf16.msra.mxu0 0
      %2937 = vmatprep.subr.bf16.mxu0 0
      %2938 = vmatpush1.bf16.msra.mxu0 0
      %2939 = vmatprep.subr.bf16.mxu0 0
      %2940 = vmatpush1.bf16.msra.mxu0 0
      %2941 = vmatprep.subr.bf16.mxu0 0
      %2942 = vmatpush1.bf16.msra.mxu0 0
      %2943 = vmatprep.subr.bf16.mxu0 0
      %2944 = vmatpush1.bf16.msra.mxu0 0
      %2945 = vmatprep.subr.bf16.mxu0 0
      %2946 = vmatpush1.bf16.msra.mxu0 0
      %2947 = vmatprep.subr.bf16.mxu0 0
      %2948 = vmatpush1.bf16.msra.mxu0 0
      %2949 = vmatprep.subr.bf16.mxu0 0
      %2950 = vmatpush1.bf16.msra.mxu0 0
      %2951 = vmatprep.subr.bf16.mxu0 0
      %2952 = vmatpush1.bf16.msra.mxu0 0
      %2953 = vmatprep.subr.bf16.mxu0 0
      %2954 = vmatpush1.bf16.msra.mxu0 0
      %2955 = vmatprep.subr.bf16.mxu0 0
      %2956 = vmatpush1.bf16.msra.mxu0 0
      %2957 = vmatprep.subr.bf16.mxu0 0
      %2958 = vmatpush1.bf16.msra.mxu0 0
      %2959 = vmatprep.mubr.bf16.mxu0 0
      %2960 = vmatmul.mubr.bf16.gmra.mrb[0].mxu0 %v2681
      %v2961 = vpop.f32.mrb[0].mxu0
      %v2962 = vadd.f32 0.0, %v2961
      %v2963 = vpop.f32.mrb[0].mxu0
      %v2964 = vpop.f32.mrb[0].mxu0
      %v2965 = vadd.f32 0.0, %v2964
      %v2966 = vpop.f32.mrb[0].mxu0
      %2967 = vmatprep.mubr.bf16.mxu0 0
      %2968 = vmatmul.mubr.bf16.gmra.mrb[0].mxu0 %v2684
      %v2969 = vpop.f32.mrb[0].mxu0
      %v2970 = vadd.f32 0.0, %v2969
      %v2971 = vpop.f32.mrb[0].mxu0
      %v2972 = vpop.f32.mrb[0].mxu0
      %v2973 = vadd.f32 0.0, %v2972
      %v2974 = vpop.f32.mrb[0].mxu0
      %2975 = vmatprep.mubr.bf16.mxu0 0
      %2976 = vmatmul.mubr.bf16.gmra.mrb[0].mxu0 %v2687
      %v2977 = vpop.f32.mrb[0].mxu0
      %v2978 = vadd.f32 0.0, %v2977
      %v2979 = vpop.f32.mrb[0].mxu0
      %v2980 = vpop.f32.mrb[0].mxu0
      %v2981 = vadd.f32 0.0, %v2980
      %v2982 = vpop.f32.mrb[0].mxu0
      %2983 = vmatprep.mubr.bf16.mxu0 0
      %2984 = vmatmul.mubr.bf16.gmra.mrb[0].mxu0 %v2690
      %v2985 = vpop.f32.mrb[0].mxu0
      %v2986 = vadd.f32 0.0, %v2985
      %v2987 = vpop.f32.mrb[0].mxu0
      %v2988 = vpop.f32.mrb[0].mxu0
      %v2989 = vadd.f32 0.0, %v2988
      %v2990 = vpop.f32.mrb[0].mxu0
      %2991 = vmatprep.mubr.bf16.mxu0 0
      %2992 = vmatmul.mubr.bf16.gmra.mrb[0].mxu0 %v2693
      %v2993 = vpop.f32.mrb[0].mxu0
      %v2994 = vadd.f32 0.0, %v2993
      %v2995 = vpop.f32.mrb[0].mxu0
      %v2996 = vpop.f32.mrb[0].mxu0
      %v2997 = vadd.f32 0.0, %v2996
      %v2998 = vpop.f32.mrb[0].mxu0
      %2999 = vmatprep.mubr.bf16.mxu0 0
      %3000 = vmatmul.mubr.bf16.gmra.mrb[0].mxu0 %v2696
      %v3001 = vpop.f32.mrb[0].mxu0
      %v3002 = vadd.f32 0.0, %v3001
      %v3003 = vpop.f32.mrb[0].mxu0
      %v3004 = vpop.f32.mrb[0].mxu0
      %v3005 = vadd.f32 0.0, %v3004
      %v3006 = vpop.f32.mrb[0].mxu0
      %3007 = vmatprep.mubr.bf16.mxu0 0
      %3008 = vmatmul.mubr.bf16.gmra.mrb[0].mxu0 %v2699
      %v3009 = vpop.f32.mrb[0].mxu0
      %v3010 = vadd.f32 0.0, %v3009
      %v3011 = vpop.f32.mrb[0].mxu0
      %v3012 = vpop.f32.mrb[0].mxu0
      %v3013 = vadd.f32 0.0, %v3012
      %v3014 = vpop.f32.mrb[0].mxu0
      %3015 = vmatprep.mubr.bf16.mxu0 0
      %3016 = vmatmul.mubr.bf16.gmra.mrb[0].mxu0 %v2702
      %v3017 = vpop.f32.mrb[0].mxu0
      %v3018 = vadd.f32 0.0, %v3017
      %v3019 = vpop.f32.mrb[0].mxu0
      %v3020 = vpop.f32.mrb[0].mxu0
      %v3021 = vadd.f32 0.0, %v3020
      %v3022 = vpop.f32.mrb[0].mxu0
      %3023 = vmatprep.mubr.bf16.mxu0 0
      %3024 = vmatmul.mubr.bf16.gmra.mrb[0].mxu0 %v2705
      %v3025 = vpop.f32.mrb[0].mxu0
      %v3026 = vadd.f32 0.0, %v3025
      %v3027 = vpop.f32.mrb[0].mxu0
      %v3028 = vpop.f32.mrb[0].mxu0
      %v3029 = vadd.f32 0.0, %v3028
      %v3030 = vpop.f32.mrb[0].mxu0
      %3031 = vmatprep.mubr.bf16.mxu0 0
      %3032 = vmatmul.mubr.bf16.gmra.mrb[0].mxu0 %v2708
      %v3033 = vpop.f32.mrb[0].mxu0
      %v3034 = vadd.f32 0.0, %v3033
      %v3035 = vpop.f32.mrb[0].mxu0
      %v3036 = vpop.f32.mrb[0].mxu0
      %v3037 = vadd.f32 0.0, %v3036
      %v3038 = vpop.f32.mrb[0].mxu0
      %3039 = vmatprep.mubr.bf16.mxu0 0
      %3040 = vmatmul.mubr.bf16.gmra.mrb[0].mxu0 %v2711
      %v3041 = vpop.f32.mrb[0].mxu0
      %v3042 = vadd.f32 0.0, %v3041
      %v3043 = vpop.f32.mrb[0].mxu0
      %v3044 = vpop.f32.mrb[0].mxu0
      %v3045 = vadd.f32 0.0, %v3044
      %v3046 = vpop.f32.mrb[0].mxu0
      %3047 = vmatprep.mubr.bf16.mxu0 0
      %3048 = vmatmul.mubr.bf16.gmra.mrb[0].mxu0 %v2714
      %v3049 = vpop.f32.mrb[0].mxu0
      %v3050 = vadd.f32 0.0, %v3049
      %v3051 = vpop.f32.mrb[0].mxu0
      %v3052 = vpop.f32.mrb[0].mxu0
      %v3053 = vadd.f32 0.0, %v3052
      %v3054 = vpop.f32.mrb[0].mxu0
      %3055 = vmatprep.mubr.bf16.mxu0 0
      %3056 = vmatmul.mubr.bf16.gmra.mrb[0].mxu0 %v2717
      %v3057 = vpop.f32.mrb[0].mxu0
      %v3058 = vadd.f32 0.0, %v3057
      %v3059 = vpop.f32.mrb[0].mxu0
      %v3060 = vpop.f32.mrb[0].mxu0
      %v3061 = vadd.f32 0.0, %v3060
      %v3062 = vpop.f32.mrb[0].mxu0
      %3063 = vmatprep.mubr.bf16.mxu0 0
      %3064 = vmatmul.mubr.bf16.gmra.mrb[0].mxu0 %v2720
      %v3065 = vpop.f32.mrb[0].mxu0
      %v3066 = vadd.f32 0.0, %v3065
      %v3067 = vpop.f32.mrb[0].mxu0
      %v3068 = vpop.f32.mrb[0].mxu0
      %v3069 = vadd.f32 0.0, %v3068
      %v3070 = vpop.f32.mrb[0].mxu0
      %3071 = vmatprep.mubr.bf16.mxu0 0
      %3072 = vmatmul.mubr.bf16.gmra.mrb[0].mxu0 %v2723
      %v3073 = vpop.f32.mrb[0].mxu0
      %v3074 = vadd.f32 0.0, %v3073
      %v3075 = vpop.f32.mrb[0].mxu0
      %v3076 = vpop.f32.mrb[0].mxu0
      %v3077 = vadd.f32 0.0, %v3076
      %v3078 = vpop.f32.mrb[0].mxu0
      %3079 = vmatprep.mubr.bf16.mxu0 0
      %3080 = vmatmul.mubr.bf16.gmra.mrb[0].mxu0 %v2922
      %v3081 = vpop.f32.mrb[0].mxu0
      %v3082 = vadd.f32 0.0, %v3081
      %v3083 = vpop.f32.mrb[0].mxu0
      %v3084 = vpop.f32.mrb[0].mxu0
      %v3085 = vadd.f32 0.0, %v3084
      %v3086 = vpop.f32.mrb[0].mxu0
      %3087 = vdwg.mxu0
      %v3088 = vadd.f32 %v2889, %v2962
      %v3089 = vadd.f32 %v2890, %v2965
      %v3090 = vadd.f32 %v2891, %v2970
      %v3091 = vadd.f32 %v2892, %v2973
      %v3092 = vadd.f32 %v2893, %v2978
      %v3093 = vadd.f32 %v2894, %v2981
      %v3094 = vadd.f32 %v2895, %v2986
      %v3095 = vadd.f32 %v2896, %v2989
      %v3096 = vadd.f32 %v2897, %v2994
      %v3097 = vadd.f32 %v2898, %v2997
      %v3098 = vadd.f32 %v2899, %v3002
      %v3099 = vadd.f32 %v2900, %v3005
      %v3100 = vadd.f32 %v2901, %v3010
      %v3101 = vadd.f32 %v2902, %v3013
      %v3102 = vadd.f32 %v2903, %v3018
      %v3103 = vadd.f32 %v2904, %v3021
      %v3104 = vadd.f32 %v2905, %v3026
      %v3105 = vadd.f32 %v2906, %v3029
      %v3106 = vadd.f32 %v2907, %v3034
      %v3107 = vadd.f32 %v2908, %v3037
      %v3108 = vadd.f32 %v2909, %v3042
      %v3109 = vadd.f32 %v2910, %v3045
      %v3110 = vadd.f32 %v2911, %v3050
      %v3111 = vadd.f32 %v2912, %v3053
      %v3112 = vadd.f32 %v2913, %v3058
      %v3113 = vadd.f32 %v2914, %v3061
      %v3114 = vadd.f32 %v2915, %v3066
      %v3115 = vadd.f32 %v2916, %v3069
      %v3116 = vadd.f32 %v2917, %v3074
      %v3117 = vadd.f32 %v2918, %v3077
      %v3118 = vadd.f32 %v2919, %v3082
      %v3119 = vadd.f32 %v2920, %v3085
      %v3121 = vsel %vm1458, %v1448, 0
      %v3124 = vsel %vm1507, %v1457, 0
      %3126 = vmatprep.subr.bf16.mxu0 0
      %3127 = vmatpush1.bf16.msra.mxu0 %v3124
      %3128 = vmatprep.subr.bf16.mxu0 0
      %3129 = vmatpush1.bf16.msra.mxu0 0
      %3130 = vmatprep.subr.bf16.mxu0 0
      %3131 = vmatpush1.bf16.msra.mxu0 0
      %3132 = vmatprep.subr.bf16.mxu0 0
      %3133 = vmatpush1.bf16.msra.mxu0 0
      %3134 = vmatprep.subr.bf16.mxu0 0
      %3135 = vmatpush1.bf16.msra.mxu0 0
      %3136 = vmatprep.subr.bf16.mxu0 0
      %3137 = vmatpush1.bf16.msra.mxu0 0
      %3138 = vmatprep.subr.bf16.mxu0 0
      %3139 = vmatpush1.bf16.msra.mxu0 0
      %3140 = vmatprep.subr.bf16.mxu0 0
      %3141 = vmatpush1.bf16.msra.mxu0 0
      %3142 = vmatprep.subr.bf16.mxu0 0
      %3143 = vmatpush1.bf16.msra.mxu0 0
      %3144 = vmatprep.subr.bf16.mxu0 0
      %3145 = vmatpush1.bf16.msra.mxu0 0
      %3146 = vmatprep.subr.bf16.mxu0 0
      %3147 = vmatpush1.bf16.msra.mxu0 0
      %3148 = vmatprep.subr.bf16.mxu0 0
      %3149 = vmatpush1.bf16.msra.mxu0 0
      %3150 = vmatprep.subr.bf16.mxu0 0
      %3151 = vmatpush1.bf16.msra.mxu0 0
      %3152 = vmatprep.subr.bf16.mxu0 0
      %3153 = vmatpush1.bf16.msra.mxu0 0
      %3154 = vmatprep.subr.bf16.mxu0 0
      %3155 = vmatpush1.bf16.msra.mxu0 0
      %3156 = vmatprep.subr.bf16.mxu0 0
      %3157 = vmatpush1.bf16.msra.mxu0 0
      %3158 = vmatprep.mubr.bf16.mxu0 0
      %3159 = vmatmul.mubr.bf16.gmra.mrb[0].mxu0 %v2684
      %v3160 = vpop.f32.mrb[0].mxu0
      %v3161 = vadd.f32 0.0, %v3160
      %v3162 = vpop.f32.mrb[0].mxu0
      %v3163 = vpop.f32.mrb[0].mxu0
      %v3164 = vadd.f32 0.0, %v3163
      %v3165 = vpop.f32.mrb[0].mxu0
      %3166 = vmatprep.mubr.bf16.mxu0 0
      %3167 = vmatmul.mubr.bf16.gmra.mrb[0].mxu0 %v2687
      %v3168 = vpop.f32.mrb[0].mxu0
      %v3169 = vadd.f32 0.0, %v3168
      %v3170 = vpop.f32.mrb[0].mxu0
      %v3171 = vpop.f32.mrb[0].mxu0
      %v3172 = vadd.f32 0.0, %v3171
      %v3173 = vpop.f32.mrb[0].mxu0
      %3174 = vmatprep.mubr.bf16.mxu0 0
      %3175 = vmatmul.mubr.bf16.gmra.mrb[0].mxu0 %v2690
      %v3176 = vpop.f32.mrb[0].mxu0
      %v3177 = vadd.f32 0.0, %v3176
      %v3178 = vpop.f32.mrb[0].mxu0
      %v3179 = vpop.f32.mrb[0].mxu0
      %v3180 = vadd.f32 0.0, %v3179
      %v3181 = vpop.f32.mrb[0].mxu0
      %3182 = vmatprep.mubr.bf16.mxu0 0
      %3183 = vmatmul.mubr.bf16.gmra.mrb[0].mxu0 %v2693
      %v3184 = vpop.f32.mrb[0].mxu0
      %v3185 = vadd.f32 0.0, %v3184
      %v3186 = vpop.f32.mrb[0].mxu0
      %v3187 = vpop.f32.mrb[0].mxu0
      %v3188 = vadd.f32 0.0, %v3187
      %v3189 = vpop.f32.mrb[0].mxu0
      %3190 = vmatprep.mubr.bf16.mxu0 0
      %3191 = vmatmul.mubr.bf16.gmra.mrb[0].mxu0 %v2696
      %v3192 = vpop.f32.mrb[0].mxu0
      %v3193 = vadd.f32 0.0, %v3192
      %v3194 = vpop.f32.mrb[0].mxu0
      %v3195 = vpop.f32.mrb[0].mxu0
      %v3196 = vadd.f32 0.0, %v3195
      %v3197 = vpop.f32.mrb[0].mxu0
      %3198 = vmatprep.mubr.bf16.mxu0 0
      %3199 = vmatmul.mubr.bf16.gmra.mrb[0].mxu0 %v2699
      %v3200 = vpop.f32.mrb[0].mxu0
      %v3201 = vadd.f32 0.0, %v3200
      %v3202 = vpop.f32.mrb[0].mxu0
      %v3203 = vpop.f32.mrb[0].mxu0
      %v3204 = vadd.f32 0.0, %v3203
      %v3205 = vpop.f32.mrb[0].mxu0
      %3206 = vmatprep.mubr.bf16.mxu0 0
      %3207 = vmatmul.mubr.bf16.gmra.mrb[0].mxu0 %v2702
      %v3208 = vpop.f32.mrb[0].mxu0
      %v3209 = vadd.f32 0.0, %v3208
      %v3210 = vpop.f32.mrb[0].mxu0
      %v3211 = vpop.f32.mrb[0].mxu0
      %v3212 = vadd.f32 0.0, %v3211
      %v3213 = vpop.f32.mrb[0].mxu0
      %3214 = vmatprep.mubr.bf16.mxu0 0
      %3215 = vmatmul.mubr.bf16.gmra.mrb[0].mxu0 %v2705
      %v3216 = vpop.f32.mrb[0].mxu0
      %v3217 = vadd.f32 0.0, %v3216
      %v3218 = vpop.f32.mrb[0].mxu0
      %v3219 = vpop.f32.mrb[0].mxu0
      %v3220 = vadd.f32 0.0, %v3219
      %v3221 = vpop.f32.mrb[0].mxu0
      %3222 = vmatprep.mubr.bf16.mxu0 0
      %3223 = vmatmul.mubr.bf16.gmra.mrb[0].mxu0 %v2708
      %v3224 = vpop.f32.mrb[0].mxu0
      %v3225 = vadd.f32 0.0, %v3224
      %v3226 = vpop.f32.mrb[0].mxu0
      %v3227 = vpop.f32.mrb[0].mxu0
      %v3228 = vadd.f32 0.0, %v3227
      %v3229 = vpop.f32.mrb[0].mxu0
      %3230 = vmatprep.mubr.bf16.mxu0 0
      %3231 = vmatmul.mubr.bf16.gmra.mrb[0].mxu0 %v2711
      %v3232 = vpop.f32.mrb[0].mxu0
      %v3233 = vadd.f32 0.0, %v3232
      %v3234 = vpop.f32.mrb[0].mxu0
      %v3235 = vpop.f32.mrb[0].mxu0
      %v3236 = vadd.f32 0.0, %v3235
      %v3237 = vpop.f32.mrb[0].mxu0
      %3238 = vmatprep.mubr.bf16.mxu0 0
      %3239 = vmatmul.mubr.bf16.gmra.mrb[0].mxu0 %v2714
      %v3240 = vpop.f32.mrb[0].mxu0
      %v3241 = vadd.f32 0.0, %v3240
      %v3242 = vpop.f32.mrb[0].mxu0
      %v3243 = vpop.f32.mrb[0].mxu0
      %v3244 = vadd.f32 0.0, %v3243
      %v3245 = vpop.f32.mrb[0].mxu0
      %3246 = vmatprep.mubr.bf16.mxu0 0
      %3247 = vmatmul.mubr.bf16.gmra.mrb[0].mxu0 %v2717
      %v3248 = vpop.f32.mrb[0].mxu0
      %v3249 = vadd.f32 0.0, %v3248
      %v3250 = vpop.f32.mrb[0].mxu0
      %v3251 = vpop.f32.mrb[0].mxu0
      %v3252 = vadd.f32 0.0, %v3251
      %v3253 = vpop.f32.mrb[0].mxu0
      %3254 = vmatprep.mubr.bf16.mxu0 0
      %3255 = vmatmul.mubr.bf16.gmra.mrb[0].mxu0 %v2720
      %v3256 = vpop.f32.mrb[0].mxu0
      %v3257 = vadd.f32 0.0, %v3256
      %v3258 = vpop.f32.mrb[0].mxu0
      %v3259 = vpop.f32.mrb[0].mxu0
      %v3260 = vadd.f32 0.0, %v3259
      %v3261 = vpop.f32.mrb[0].mxu0
      %3262 = vmatprep.mubr.bf16.mxu0 0
      %3263 = vmatmul.mubr.bf16.gmra.mrb[0].mxu0 %v2723
      %v3264 = vpop.f32.mrb[0].mxu0
      %v3265 = vadd.f32 0.0, %v3264
      %v3266 = vpop.f32.mrb[0].mxu0
      %v3267 = vpop.f32.mrb[0].mxu0
      %v3268 = vadd.f32 0.0, %v3267
      %v3269 = vpop.f32.mrb[0].mxu0
      %3270 = vmatprep.mubr.bf16.mxu0 0
      %3271 = vmatmul.mubr.bf16.gmra.mrb[0].mxu0 %v2922
      %v3272 = vpop.f32.mrb[0].mxu0
      %v3273 = vadd.f32 0.0, %v3272
      %v3274 = vpop.f32.mrb[0].mxu0
      %v3275 = vpop.f32.mrb[0].mxu0
      %v3276 = vadd.f32 0.0, %v3275
      %v3277 = vpop.f32.mrb[0].mxu0
      %3278 = vmatprep.mubr.bf16.mxu0 0
      %3279 = vmatmul.mubr.bf16.gmra.mrb[0].mxu0 %v3121
      %v3280 = vpop.f32.mrb[0].mxu0
      %v3281 = vadd.f32 0.0, %v3280
      %v3282 = vpop.f32.mrb[0].mxu0
      %v3283 = vpop.f32.mrb[0].mxu0
      %v3284 = vadd.f32 0.0, %v3283
      %v3285 = vpop.f32.mrb[0].mxu0
      %3286 = vdwg.mxu0
      %v3287 = vadd.f32 %v3088, %v3161
      %v3288 = vadd.f32 %v3089, %v3164
      %v3289 = vadd.f32 %v3090, %v3169
      %v3290 = vadd.f32 %v3091, %v3172
      %v3291 = vadd.f32 %v3092, %v3177
      %v3292 = vadd.f32 %v3093, %v3180
      %v3293 = vadd.f32 %v3094, %v3185
      %v3294 = vadd.f32 %v3095, %v3188
      %v3295 = vadd.f32 %v3096, %v3193
      %v3296 = vadd.f32 %v3097, %v3196
      %v3297 = vadd.f32 %v3098, %v3201
      %v3298 = vadd.f32 %v3099, %v3204
      %v3299 = vadd.f32 %v3100, %v3209
      %v3300 = vadd.f32 %v3101, %v3212
      %v3301 = vadd.f32 %v3102, %v3217
      %v3302 = vadd.f32 %v3103, %v3220
      %v3303 = vadd.f32 %v3104, %v3225
      %v3304 = vadd.f32 %v3105, %v3228
      %v3305 = vadd.f32 %v3106, %v3233
      %v3306 = vadd.f32 %v3107, %v3236
      %v3307 = vadd.f32 %v3108, %v3241
      %v3308 = vadd.f32 %v3109, %v3244
      %v3309 = vadd.f32 %v3110, %v3249
      %v3310 = vadd.f32 %v3111, %v3252
      %v3311 = vadd.f32 %v3112, %v3257
      %v3312 = vadd.f32 %v3113, %v3260
      %v3313 = vadd.f32 %v3114, %v3265
      %v3314 = vadd.f32 %v3115, %v3268
      %v3315 = vadd.f32 %v3116, %v3273
      %v3316 = vadd.f32 %v3117, %v3276
      %v3317 = vadd.f32 %v3118, %v3281
      %v3318 = vadd.f32 %v3119, %v3284
      %v3319 = vpack.c.bf16 %v3288, %v3287
      %v3320 = vpack.c.bf16 %v3290, %v3289
      %v3321 = vpack.c.bf16 %v3292, %v3291
      %v3322 = vpack.c.bf16 %v3294, %v3293
      %v3323 = vpack.c.bf16 %v3296, %v3295
      %v3324 = vpack.c.bf16 %v3298, %v3297
      %v3325 = vpack.c.bf16 %v3300, %v3299
      %v3326 = vpack.c.bf16 %v3302, %v3301
      %v3327 = vpack.c.bf16 %v3304, %v3303
      %v3328 = vpack.c.bf16 %v3306, %v3305
      %v3329 = vpack.c.bf16 %v3308, %v3307
      %v3330 = vpack.c.bf16 %v3310, %v3309
      %v3331 = vpack.c.bf16 %v3312, %v3311
      %v3332 = vpack.c.bf16 %v3314, %v3313
      %v3333 = vpack.c.bf16 %v3316, %v3315
      %v3334 = vpack.c.bf16 %v3318, %v3317
      %v3335 = vunpack.c.l.bf16 %v3319
      %v3336 = vunpack.c.h.bf16 %v3319
      %v3337 = vunpack.c.l.bf16 %v3320
      %v3338 = vunpack.c.h.bf16 %v3320
      %v3339 = vunpack.c.l.bf16 %v3321
      %v3340 = vunpack.c.h.bf16 %v3321
      %v3341 = vunpack.c.l.bf16 %v3322
      %v3342 = vunpack.c.h.bf16 %v3322
      %v3343 = vunpack.c.l.bf16 %v3323
      %v3344 = vunpack.c.h.bf16 %v3323
      %v3345 = vunpack.c.l.bf16 %v3324
      %v3346 = vunpack.c.h.bf16 %v3324
      %v3347 = vunpack.c.l.bf16 %v3325
      %v3348 = vunpack.c.h.bf16 %v3325
      %v3349 = vunpack.c.l.bf16 %v3326
      %v3350 = vunpack.c.h.bf16 %v3326
      %v3351 = vunpack.c.l.bf16 %v3327
      %v3352 = vunpack.c.h.bf16 %v3327
      %v3353 = vunpack.c.l.bf16 %v3328
      %v3354 = vunpack.c.h.bf16 %v3328
      %v3355 = vunpack.c.l.bf16 %v3329
      %v3356 = vunpack.c.h.bf16 %v3329
      %v3357 = vunpack.c.l.bf16 %v3330
      %v3358 = vunpack.c.h.bf16 %v3330
      %v3359 = vunpack.c.l.bf16 %v3331
      %v3360 = vunpack.c.h.bf16 %v3331
      %v3361 = vunpack.c.l.bf16 %v3332
      %v3362 = vunpack.c.h.bf16 %v3332
      %v3363 = vunpack.c.l.bf16 %v3333
      %v3364 = vunpack.c.h.bf16 %v3333
      %v3365 = vunpack.c.l.bf16 %v3334
      %v3366 = vunpack.c.h.bf16 %v3334
      %p3367 = scmp.eq.s32.totalorder %s17, 0
      // Predicated region
      $region37: #{bottleneck_forward.4} parent=35 // pred_check
        %p3368 = pneg %p3367
      $region38: #{bottleneck_forward.4} parent=35 // pred_check_branch
        %3370 = sbr.rel (%p3368) target = $region40
      $region39: #{bottleneck_forward.4} parent=35 // pred_region
        %vm3371 = vcmask 58368
        %3372 = vst.msk [vmem:[#allocation2] sm:$0x3] %vm3371, 0.0
      $region40: #{bottleneck_forward.4} parent=35 // pred_fallthru
        _
      %v3373 = vld [vmem:[#allocation2] sm:$0x3]
      %v3374 = vsel %vm1458, %v3335, 0.0
      %v3375 = vsel %vm1458, %v3336, 0.0
      %v3376 = vadd.f32 %v3374, %v3375
      %v3377 = vsel %vm1458, %v3337, 0.0
      %v3378 = vadd.f32 %v3376, %v3377
      %v3379 = vsel %vm1458, %v3338, 0.0
      %v3380 = vadd.f32 %v3378, %v3379
      %v3381 = vsel %vm1458, %v3339, 0.0
      %v3382 = vadd.f32 %v3380, %v3381
      %v3383 = vsel %vm1458, %v3340, 0.0
      %v3384 = vadd.f32 %v3382, %v3383
      %v3385 = vsel %vm1458, %v3341, 0.0
      %v3386 = vadd.f32 %v3384, %v3385
      %v3387 = vsel %vm1458, %v3342, 0.0
      %v3388 = vadd.f32 %v3386, %v3387
      %v3389 = vsel %vm1458, %v3343, 0.0
      %v3390 = vadd.f32 %v3388, %v3389
      %v3391 = vsel %vm1458, %v3344, 0.0
      %v3392 = vadd.f32 %v3390, %v3391
      %v3393 = vsel %vm1458, %v3345, 0.0
      %v3394 = vadd.f32 %v3392, %v3393
      %v3395 = vsel %vm1458, %v3346, 0.0
      %v3396 = vadd.f32 %v3394, %v3395
      %v3397 = vsel %vm1458, %v3347, 0.0
      %v3398 = vadd.f32 %v3396, %v3397
      %v3399 = vsel %vm1458, %v3348, 0.0
      %v3400 = vadd.f32 %v3398, %v3399
      %v3401 = vsel %vm1458, %v3349, 0.0
      %v3402 = vadd.f32 %v3400, %v3401
      %v3403 = vsel %vm1458, %v3350, 0.0
      %v3404 = vadd.f32 %v3402, %v3403
      %v3405 = vsel %vm1458, %v3351, 0.0
      %v3406 = vadd.f32 %v3404, %v3405
      %v3407 = vsel %vm1458, %v3352, 0.0
      %v3408 = vadd.f32 %v3406, %v3407
      %v3409 = vsel %vm1458, %v3353, 0.0
      %v3410 = vadd.f32 %v3408, %v3409
      %v3411 = vsel %vm1458, %v3354, 0.0
      %v3412 = vadd.f32 %v3410, %v3411
      %v3413 = vsel %vm1458, %v3355, 0.0
      %v3414 = vadd.f32 %v3412, %v3413
      %v3415 = vsel %vm1458, %v3356, 0.0
      %v3416 = vadd.f32 %v3414, %v3415
      %v3417 = vsel %vm1458, %v3357, 0.0
      %v3418 = vadd.f32 %v3416, %v3417
      %v3419 = vsel %vm1458, %v3358, 0.0
      %v3420 = vadd.f32 %v3418, %v3419
      %v3421 = vsel %vm1458, %v3359, 0.0
      %v3422 = vadd.f32 %v3420, %v3421
      %v3423 = vsel %vm1458, %v3360, 0.0
      %v3424 = vadd.f32 %v3422, %v3423
      %v3425 = vsel %vm1458, %v3361, 0.0
      %v3426 = vadd.f32 %v3424, %v3425
      %v3427 = vsel %vm1458, %v3362, 0.0
      %v3428 = vadd.f32 %v3426, %v3427
      %v3429 = vsel %vm1458, %v3363, 0.0
      %v3430 = vadd.f32 %v3428, %v3429
      %v3431 = vsel %vm1458, %v3364, 0.0
      %v3432 = vadd.f32 %v3430, %v3431
      %v3433 = vsel %vm1458, %v3365, 0.0
      %v3434 = vadd.f32 %v3432, %v3433
      %v3435 = vsel %vm1458, %v3366, 0.0
      %v3436 = vadd.f32 %v3434, %v3435
      %v3437 = vrot.slane %v3436, 4
      %v3438 = vadd.f32 %v3436, %v3437
      %v3439 = vrot.slane %v3438, 2
      %v3440 = vadd.f32 %v3438, %v3439
      %v3441 = vrot.slane %v3440, 1
      %v3442 = vadd.f32 %v3440, %v3441
      %v3443 = vmul.f32 %v3335, %v3335
      %v3444 = vmul.f32 %v3336, %v3336
      %v3445 = vmul.f32 %v3337, %v3337
      %v3446 = vmul.f32 %v3338, %v3338
      %v3447 = vmul.f32 %v3339, %v3339
      %v3448 = vmul.f32 %v3340, %v3340
      %v3449 = vmul.f32 %v3341, %v3341
      %v3450 = vmul.f32 %v3342, %v3342
      %v3451 = vmul.f32 %v3343, %v3343
      %v3452 = vmul.f32 %v3344, %v3344
      %v3453 = vmul.f32 %v3345, %v3345
      %v3454 = vmul.f32 %v3346, %v3346
      %v3455 = vmul.f32 %v3347, %v3347
      %v3456 = vmul.f32 %v3348, %v3348
      %v3457 = vmul.f32 %v3349, %v3349
      %v3458 = vmul.f32 %v3350, %v3350
      %v3459 = vmul.f32 %v3351, %v3351
      %v3460 = vmul.f32 %v3352, %v3352
      %v3461 = vmul.f32 %v3353, %v3353
      %v3462 = vmul.f32 %v3354, %v3354
      %v3463 = vmul.f32 %v3355, %v3355
      %v3464 = vmul.f32 %v3356, %v3356
      %v3465 = vmul.f32 %v3357, %v3357
      %v3466 = vmul.f32 %v3358, %v3358
      %v3467 = vmul.f32 %v3359, %v3359
      %v3468 = vmul.f32 %v3360, %v3360
      %v3469 = vmul.f32 %v3361, %v3361
      %v3470 = vmul.f32 %v3362, %v3362
      %v3471 = vmul.f32 %v3363, %v3363
      %v3472 = vmul.f32 %v3364, %v3364
      %v3473 = vmul.f32 %v3365, %v3365
      %v3474 = vmul.f32 %v3366, %v3366
      %v3475 = vsel %vm1458, %v3443, 0.0
      %v3476 = vsel %vm1458, %v3444, 0.0
      %v3477 = vadd.f32 %v3475, %v3476
      %v3478 = vsel %vm1458, %v3445, 0.0
      %v3479 = vadd.f32 %v3477, %v3478
      %v3480 = vsel %vm1458, %v3446, 0.0
      %v3481 = vadd.f32 %v3479, %v3480
      %v3482 = vsel %vm1458, %v3447, 0.0
      %v3483 = vadd.f32 %v3481, %v3482
      %v3484 = vsel %vm1458, %v3448, 0.0
      %v3485 = vadd.f32 %v3483, %v3484
      %v3486 = vsel %vm1458, %v3449, 0.0
      %v3487 = vadd.f32 %v3485, %v3486
      %v3488 = vsel %vm1458, %v3450, 0.0
      %v3489 = vadd.f32 %v3487, %v3488
      %v3490 = vsel %vm1458, %v3451, 0.0
      %v3491 = vadd.f32 %v3489, %v3490
      %v3492 = vsel %vm1458, %v3452, 0.0
      %v3493 = vadd.f32 %v3491, %v3492
      %v3494 = vsel %vm1458, %v3453, 0.0
      %v3495 = vadd.f32 %v3493, %v3494
      %v3496 = vsel %vm1458, %v3454, 0.0
      %v3497 = vadd.f32 %v3495, %v3496
      %v3498 = vsel %vm1458, %v3455, 0.0
      %v3499 = vadd.f32 %v3497, %v3498
      %v3500 = vsel %vm1458, %v3456, 0.0
      %v3501 = vadd.f32 %v3499, %v3500
      %v3502 = vsel %vm1458, %v3457, 0.0
      %v3503 = vadd.f32 %v3501, %v3502
      %v3504 = vsel %vm1458, %v3458, 0.0
      %v3505 = vadd.f32 %v3503, %v3504
      %v3506 = vsel %vm1458, %v3459, 0.0
      %v3507 = vadd.f32 %v3505, %v3506
      %v3508 = vsel %vm1458, %v3460, 0.0
      %v3509 = vadd.f32 %v3507, %v3508
      %v3510 = vsel %vm1458, %v3461, 0.0
      %v3511 = vadd.f32 %v3509, %v3510
      %v3512 = vsel %vm1458, %v3462, 0.0
      %v3513 = vadd.f32 %v3511, %v3512
      %v3514 = vsel %vm1458, %v3463, 0.0
      %v3515 = vadd.f32 %v3513, %v3514
      %v3516 = vsel %vm1458, %v3464, 0.0
      %v3517 = vadd.f32 %v3515, %v3516
      %v3518 = vsel %vm1458, %v3465, 0.0
      %v3519 = vadd.f32 %v3517, %v3518
      %v3520 = vsel %vm1458, %v3466, 0.0
      %v3521 = vadd.f32 %v3519, %v3520
      %v3522 = vsel %vm1458, %v3467, 0.0
      %v3523 = vadd.f32 %v3521, %v3522
      %v3524 = vsel %vm1458, %v3468, 0.0
      %v3525 = vadd.f32 %v3523, %v3524
      %v3526 = vsel %vm1458, %v3469, 0.0
      %v3527 = vadd.f32 %v3525, %v3526
      %v3528 = vsel %vm1458, %v3470, 0.0
      %v3529 = vadd.f32 %v3527, %v3528
      %v3530 = vsel %vm1458, %v3471, 0.0
      %v3531 = vadd.f32 %v3529, %v3530
      %v3532 = vsel %vm1458, %v3472, 0.0
      %v3533 = vadd.f32 %v3531, %v3532
      %v3534 = vsel %vm1458, %v3473, 0.0
      %v3535 = vadd.f32 %v3533, %v3534
      %v3536 = vsel %vm1458, %v3474, 0.0
      %v3537 = vadd.f32 %v3535, %v3536
      %v3538 = vrot.slane %v3537, 4
      %v3539 = vadd.f32 %v3537, %v3538
      %v3540 = vrot.slane %v3539, 2
      %v3541 = vadd.f32 %v3539, %v3540
      %v3542 = vrot.slane %v3541, 1
      %v3543 = vadd.f32 %v3541, %v3542
      %v3544 = vsel %vm936, %v3442, %v3543
      %v3545 = vadd.f32 %v3373, %v3544
      %vm3546 = vcmask 58368
      %3547 = vst.msk [vmem:[#allocation2] sm:$0x3] %vm3546, %v3545
      %v3548 = vld [vmem:[#allocation2] sm:$0x3]
      %3549 = vst.msk [vmem:[%s5] sm:$0x3] %vm3546, %v3548
      %v3566 = vunpack.c.l.b16 %v3319
      %v3567 = vunpack.c.h.b16 %v3319
      %v3568 = vunpack.c.l.b16 %v3320
      %v3569 = vunpack.c.h.b16 %v3320
      %v3570 = vunpack.c.l.b16 %v3321
      %v3571 = vunpack.c.h.b16 %v3321
      %v3572 = vunpack.c.l.b16 %v3322
      %v3573 = vunpack.c.h.b16 %v3322
      %v3574 = vunpack.c.l.b16 %v3323
      %v3575 = vunpack.c.h.b16 %v3323
      %v3576 = vunpack.c.l.b16 %v3324
      %v3577 = vunpack.c.h.b16 %v3324
      %v3578 = vunpack.c.l.b16 %v3325
      %v3579 = vunpack.c.h.b16 %v3325
      %v3580 = vunpack.c.l.b16 %v3326
      %v3581 = vunpack.c.h.b16 %v3326
      %v3582 = vunpack.c.l.b16 %v3327
      %v3583 = vunpack.c.h.b16 %v3327
      %v3584 = vunpack.c.l.b16 %v3328
      %v3585 = vunpack.c.h.b16 %v3328
      %v3586 = vunpack.c.l.b16 %v3329
      %v3587 = vunpack.c.h.b16 %v3329
      %v3588 = vunpack.c.l.b16 %v3330
      %v3589 = vunpack.c.h.b16 %v3330
      %v3590 = vunpack.c.l.b16 %v3331
      %v3591 = vunpack.c.h.b16 %v3331
      %v3592 = vunpack.c.l.b16 %v3332
      %v3593 = vunpack.c.h.b16 %v3332
      %v3594 = vunpack.c.l.b16 %v3333
      %v3595 = vunpack.c.h.b16 %v3333
      %v3596 = vunpack.c.l.b16 %v3334
      %v3597 = vunpack.c.h.b16 %v3334
      %v3598 = vpack.c.b16 %v3566, %v3566
      %v3599 = vpack.c.b16 %v3567, %v3567
      %v3600 = vpack.c.b16 %v3568, %v3568
      %v3601 = vpack.c.b16 %v3569, %v3569
      %v3602 = vpack.c.b16 %v3570, %v3570
      %v3603 = vpack.c.b16 %v3571, %v3571
      %v3604 = vpack.c.b16 %v3572, %v3572
      %v3605 = vpack.c.b16 %v3573, %v3573
      %v3606 = vpack.c.b16 %v3574, %v3574
      %v3607 = vpack.c.b16 %v3575, %v3575
      %v3608 = vpack.c.b16 %v3576, %v3576
      %v3609 = vpack.c.b16 %v3577, %v3577
      %v3610 = vpack.c.b16 %v3578, %v3578
      %v3611 = vpack.c.b16 %v3579, %v3579
      %v3612 = vpack.c.b16 %v3580, %v3580
      %v3613 = vpack.c.b16 %v3581, %v3581
      %v3614 = vpack.c.b16 %v3582, %v3582
      %v3615 = vpack.c.b16 %v3583, %v3583
      %v3616 = vpack.c.b16 %v3584, %v3584
      %v3617 = vpack.c.b16 %v3585, %v3585
      %v3618 = vpack.c.b16 %v3586, %v3586
      %v3619 = vpack.c.b16 %v3587, %v3587
      %v3620 = vpack.c.b16 %v3588, %v3588
      %v3621 = vpack.c.b16 %v3589, %v3589
      %v3622 = vpack.c.b16 %v3590, %v3590
      %v3623 = vpack.c.b16 %v3591, %v3591
      %v3624 = vpack.c.b16 %v3592, %v3592
      %v3625 = vpack.c.b16 %v3593, %v3593
      %v3626 = vpack.c.b16 %v3594, %v3594
      %v3627 = vpack.c.b16 %v3595, %v3595
      %v3628 = vpack.c.b16 %v3596, %v3596
      %v3629 = vpack.c.b16 %v3597, %v3597
      %vm3662 = vcmask 60416
      %3663 = vst.msk [vmem:[%s222] sm:$0xf] %vm3662, %v3598
      %3664 = vst.msk [vmem:[%s222 + $0x4] sm:$0xf] %vm3662, %v3599
      %3665 = vst.msk [vmem:[%s222 + $0x8] sm:$0xf] %vm3662, %v3600
      %3666 = vst.msk [vmem:[%s222 + $0xc] sm:$0xf] %vm3662, %v3601
      %3667 = vst.msk [vmem:[%s222 + $0x10] sm:$0xf] %vm3662, %v3602
      %3668 = vst.msk [vmem:[%s222 + $0x14] sm:$0xf] %vm3662, %v3603
      %3669 = vst.msk [vmem:[%s222 + $0x18] sm:$0xf] %vm3662, %v3604
      %3670 = vst.msk [vmem:[%s222 + $0x1c] sm:$0xf] %vm3662, %v3605
      %3671 = vst.msk [vmem:[%s222 + $0x20] sm:$0xf] %vm3662, %v3606
      %3672 = vst.msk [vmem:[%s222 + $0x24] sm:$0xf] %vm3662, %v3607
      %3673 = vst.msk [vmem:[%s222 + $0x28] sm:$0xf] %vm3662, %v3608
      %3674 = vst.msk [vmem:[%s222 + $0x2c] sm:$0xf] %vm3662, %v3609
      %3675 = vst.msk [vmem:[%s222 + $0x30] sm:$0xf] %vm3662, %v3610
      %3676 = vst.msk [vmem:[%s222 + $0x34] sm:$0xf] %vm3662, %v3611
      %3677 = vst.msk [vmem:[%s222 + $0x38] sm:$0xf] %vm3662, %v3612
      %3678 = vst.msk [vmem:[%s222 + $0x3c] sm:$0xf] %vm3662, %v3613
      %3679 = vst.msk [vmem:[%s222 + $0x40] sm:$0xf] %vm3662, %v3614
      %3680 = vst.msk [vmem:[%s222 + $0x44] sm:$0xf] %vm3662, %v3615
      %3681 = vst.msk [vmem:[%s222 + $0x48] sm:$0xf] %vm3662, %v3616
      %3682 = vst.msk [vmem:[%s222 + $0x4c] sm:$0xf] %vm3662, %v3617
      %3683 = vst.msk [vmem:[%s222 + $0x50] sm:$0xf] %vm3662, %v3618
      %3684 = vst.msk [vmem:[%s222 + $0x54] sm:$0xf] %vm3662, %v3619
      %3685 = vst.msk [vmem:[%s222 + $0x58] sm:$0xf] %vm3662, %v3620
      %3686 = vst.msk [vmem:[%s222 + $0x5c] sm:$0xf] %vm3662, %v3621
      %3687 = vst.msk [vmem:[%s222 + $0x60] sm:$0xf] %vm3662, %v3622
      %3688 = vst.msk [vmem:[%s222 + $0x64] sm:$0xf] %vm3662, %v3623
      %3689 = vst.msk [vmem:[%s222 + $0x68] sm:$0xf] %vm3662, %v3624
      %3690 = vst.msk [vmem:[%s222 + $0x6c] sm:$0xf] %vm3662, %v3625
      %3691 = vst.msk [vmem:[%s222 + $0x70] sm:$0xf] %vm3662, %v3626
      %3692 = vst.msk [vmem:[%s222 + $0x74] sm:$0xf] %vm3662, %v3627
      %3693 = vst.msk [vmem:[%s222 + $0x78] sm:$0xf] %vm3662, %v3628
      %3694 = vst.msk [vmem:[%s222 + $0x7c] sm:$0xf] %vm3662, %v3629
      %p3695 = scmp.lt.s32.totalorder %s17, 1
      %s3696 = scalar_select %p3695, %s17, 1
      %s3697 = smul.addr %s3696, 32
      %s3698 = smul.addr %s3697, 4
      %s3699 = scalar_lea.vmem %s4, %s3698
      // Predicated region
      $region41: #{bottleneck_forward.4} parent=35 // pred_check
        %p3700 = pneg %p124
      $region42: #{bottleneck_forward.4} parent=35 // pred_check_branch
        %3702 = sbr.rel (%p3700) target = $region44
      $region43: #{bottleneck_forward.4} parent=35 // pred_region
        _
      $region44: #{bottleneck_forward.4} parent=35 // pred_fallthru
        _
      // Predicated region
      $region45: #{bottleneck_forward.4} parent=35 // pred_check
        %p3703 = pneg %p145
      $region46: #{bottleneck_forward.4} parent=35 // pred_check_branch
        %3705 = sbr.rel (%p3703) target = $region48
      $region47: #{bottleneck_forward.4} parent=35 // pred_region
        _
      $region48: #{bottleneck_forward.4} parent=35 // pred_fallthru
        _
      // Predicated region
      $region49: #{bottleneck_forward.4} parent=35 // pred_check
        %p3706 = pneg %p145
      $region50: #{bottleneck_forward.4} parent=35 // pred_check_branch
        %3708 = sbr.rel (%p3706) target = $region52
      $region51: #{bottleneck_forward.4} parent=35 // pred_region
        _
      $region52: #{bottleneck_forward.4} parent=35 // pred_fallthru
        _
    $region36: #{bottleneck_forward.4} parent=5 // pred_fallthru
      _
    %p3709 = scmp.le.s32.totalorder 2, %s12
    // Predicated region
    $region53: #{bottleneck_forward.4} parent=5 // pred_check
      %p3710 = pneg %p3709
    $region54: #{bottleneck_forward.4} parent=5 // pred_check_branch
      %3712 = sbr.rel (%p3710) target = $region56
    $region55: #{bottleneck_forward.4} parent=5 // pred_region
      %s3713 = ssub.s32 %s12, 2
      // Predicated region
      $region57: #{bottleneck_forward.4} parent=55 // pred_check
        %p3714 = pneg %p130
      $region58: #{bottleneck_forward.4} parent=55 // pred_check_branch
        %3716 = sbr.rel (%p3714) target = $region60
      $region59: #{bottleneck_forward.4} parent=55 // pred_region
        %p3717 = scmp.lt.s32.totalorder %s18, 1
        %s3718 = scalar_select %p3717, %s18, 1
        %s3719 = smul.addr %s3718, 32
        %s3720 = smul.addr %s3719, 4
        %s3721 = scalar_lea.vmem %s4, %s3720
      $region60: #{bottleneck_forward.4} parent=55 // pred_fallthru
        _
    $region56: #{bottleneck_forward.4} parent=5 // pred_fallthru
      _
  $region6: #{bottleneck_forward.4} parent=0 // loop_footer
    %s16 = sadd.s32 1, %s12
  $region7: #{bottleneck_forward.4} parent=0 // loop_footer_branch
    %11 = sbr.rel target = $region3
  $region8: #{bottleneck_forward.4} parent=0 // loop_exit
    _

</llo_original>
